<compile_context>
chip_gen: v7x
topology: tpu7x:2x2x1
jax: 0.10.0
libtpu: 0.0.40
codegen_flags: <defaults>
</compile_context>

<pallas_src>
import functools
import math

import jax
import jax.numpy as jnp
from jax import lax
from jax.experimental import pallas as pl
from jax.experimental.pallas import tpu as pltpu

# ----------------------------- config (small) --------------------------------
B = 2            # batch
L = 8            # sequence length
VOCAB = 100      # vocab size (synthetic)
MAX_POS = 16     # max positions
H = 32           # "bert" hidden size
N_HEADS = 4
DH = H // N_HEADS
FFN = 64         # feed-forward hidden
N_LAYERS = 2     # transformer layers
G = 32           # GRU hidden size (original module uses 256; kept small here)
C = 2            # num_labels
LN_EPS = 1e-12

VMEM = pltpu.MemorySpace.VMEM


# --------------------------- the single fused kernel --------------------------
def _fused_kernel(ids_ref, mask_ref, word_emb_ref, pos_emb_ref,
                  emb_g_ref, emb_b_ref,
                  wqkv_ref, bqkv_ref, wo_ref, bo_ref,
                  ln1_g_ref, ln1_b_ref, w1_ref, b1_ref, w2_ref, b2_ref,
                  ln2_g_ref, ln2_b_ref,
                  gru_wi_f_ref, gru_wi_b_ref, gru_bi_ref,
                  gru_wh_ref, gru_bh_ref,
                  attn_w_ref, attn_b_ref, cls_w_ref, cls_b_ref,
                  logits_ref, attw_ref, gru_sc,
                  *, n_layers, n_heads, dh, seq_len, batch, hidden, vocab, g,
                  eps):
    scale = 1.0 / math.sqrt(dh)

    def ln(x, gm, bt):
        mu = jnp.mean(x, axis=-1, keepdims=True)
        var = jnp.mean((x - mu) ** 2, axis=-1, keepdims=True)
        return (x - mu) * lax.rsqrt(var + eps) * gm + bt

    mask = mask_ref[...]                                       # [B, L] float
    neg = jnp.where(mask > 0.0, 0.0, -1e9)                     # additive key bias

    # ---- embeddings: in-kernel gather via one-hot matmul (no XLA gather) ----
    ids = ids_ref[...]                                         # [B*L, 1] int32
    iota_v = lax.broadcasted_iota(jnp.int32, (batch * seq_len, vocab), 1)
    onehot = (ids == iota_v).astype(jnp.float32)               # [B*L, V]
    pos = pos_emb_ref[0:seq_len, :]                            # [L, H]
    x2 = (jnp.dot(onehot, word_emb_ref[...], preferred_element_type=jnp.float32)
          + jnp.concatenate([pos] * batch, axis=0))            # [B*L, H]
    x2 = ln(x2, emb_g_ref[...], emb_b_ref[...])

    # per-head 0/1 lane masks over the hidden axis (hoisted, layer-invariant);
    # replaces the per-head dh=8 lane slices + concatenates with VPU multiplies.
    lane = lax.broadcasted_iota(jnp.int32, (1, hidden), 1)
    head_masks = [((lane >= hh * dh) & (lane < (hh + 1) * dh)).astype(jnp.float32)
                  for hh in range(n_heads)]

    # ---------------------- transformer encoder layers ----------------------
    for layer in range(n_layers):                              # static unrolled
        qkv = (jnp.dot(x2, wqkv_ref[layer], preferred_element_type=jnp.float32)
               + bqkv_ref[layer])                              # [B*L, 3H]
        q = qkv[:, 0:hidden]
        k = qkv[:, hidden:2 * hidden]
        v = qkv[:, 2 * hidden:3 * hidden]
        ctx_rows = []
        for b in range(batch):                                 # static
            r0 = b * seq_len
            qb = q[r0:r0 + seq_len, :]                         # sublane slice
            kb = k[r0:r0 + seq_len, :]
            vb = v[r0:r0 + seq_len, :]
            nb = neg[b:b + 1, :]                               # [1, L]
            ob = jnp.zeros((seq_len, hidden), jnp.float32)
            for hh in range(n_heads):                          # static
                hm = head_masks[hh]                            # [1, H] 0/1
                # masking q selects head-hh columns of the contraction;
                # masking v places the context in head-hh output columns.
                att = lax.dot_general(qb * hm, kb, (((1,), (1,)), ((), ())),
                                      preferred_element_type=jnp.float32)
                att = att * scale + nb
                att = att - jnp.max(att, axis=-1, keepdims=True)
                p = jnp.exp(att)
                p = p / jnp.sum(p, axis=-1, keepdims=True)
                ob = ob + jnp.dot(p, vb * hm,
                                  preferred_element_type=jnp.float32)
            ctx_rows.append(ob)
        ctx = jnp.concatenate(ctx_rows, axis=0)                # [B*L, H]

        attn_out = (jnp.dot(ctx, wo_ref[layer],
                            preferred_element_type=jnp.float32) + bo_ref[layer])
        x2 = ln(x2 + attn_out, ln1_g_ref[layer], ln1_b_ref[layer])

        # TODO(synk): HF DistilBERT uses exact erf GELU; tanh approximation here.
        hmid = jax.nn.gelu(
            jnp.dot(x2, w1_ref[layer], preferred_element_type=jnp.float32)
            + b1_ref[layer], approximate=True)
        ffn_out = (jnp.dot(hmid, w2_ref[layer],
                           preferred_element_type=jnp.float32) + b2_ref[layer])
        x2 = ln(x2 + ffn_out, ln2_g_ref[layer], ln2_b_ref[layer])

    # --------------------------------- BiGRU --------------------------------
    # Hoisted input projections; rows stay batch-major (row = b*L + t) because
    # matmuls are row-order agnostic, so no time-major reorder is materialized.
    # Column order is gate-major / direction-inner: [r_f r_b z_f z_b n_f n_b].
    a_f = (jnp.dot(x2, gru_wi_f_ref[...], preferred_element_type=jnp.float32)
           + gru_bi_ref[...])                                  # [B*L, 6G]
    a_b = jnp.dot(x2, gru_wi_b_ref[...], preferred_element_type=jnp.float32)
    wh = gru_wh_ref[...]                                       # [2G, 6G] block-diag
    bh = gru_bh_ref[...]                                       # [1, 6G]

    # NOTE: like the reference (unpacked nn.GRU over the padded batch), the
    # recurrence runs over padded timesteps in both directions.
    h = jnp.zeros((batch, 2 * g), jnp.float32)                 # [h_f | h_b]
    for s in range(seq_len):                                   # fully unrolled
        tb = seq_len - 1 - s
        # gate inputs: forward reads time s, backward reads time tb (h-independent,
        # so off the serialized critical path).
        gi = jnp.concatenate(
            [a_f[b * seq_len + s:b * seq_len + s + 1, :]
             + a_b[b * seq_len + tb:b * seq_len + tb + 1, :]
             for b in range(batch)], axis=0)                   # [B, 6G]
        # ONE block-diagonal recurrent matmul per step (both directions fused).
        gh = jnp.dot(h, wh, preferred_element_type=jnp.float32) + bh
        r = jax.nn.sigmoid(gi[:, 0:2 * g] + gh[:, 0:2 * g])
        z = jax.nn.sigmoid(gi[:, 2 * g:4 * g] + gh[:, 2 * g:4 * g])
        n = jnp.tanh(gi[:, 4 * g:6 * g] + r * gh[:, 4 * g:6 * g])
        h = (1.0 - z) * n + z * h                              # [B, 2G]
        # stream hidden states to VMEM scratch (row = b*L + t, [h_f(t) | h_b(t)])
        for b in range(batch):
            rf = b * seq_len + s
            rb = b * seq_len + tb
            gru_sc[rf:rf + 1, 0:g] = h[b:b + 1, 0:g]
            gru_sc[rb:rb + 1, g:2 * g] = h[b:b + 1, g:2 * g]

    # -------------------- attention pooling + classifier --------------------
    g2 = gru_sc[...]                                           # [B*L, 2G]
    g3 = g2.reshape(batch, seq_len, 2 * g)                     # free leading split
    wa = attn_w_ref[...].reshape(1, 1, 2 * g)
    scores = jnp.sum(g3 * wa, axis=-1) + attn_b_ref[...]       # [B, L]
    scores = jnp.where(mask > 0.0, scores, -1e9)               # masked_fill(mask==0)
    scores = scores - jnp.max(scores, axis=-1, keepdims=True)
    e = jnp.exp(scores)
    w = e / jnp.sum(e, axis=-1, keepdims=True)                 # softmax over L
    attw_ref[...] = w
    ctx = jnp.concatenate(
        [jnp.dot(w[b:b + 1, :], g3[b], preferred_element_type=jnp.float32)
         for b in range(batch)], axis=0)                       # [B, 2G]
    # dropout(0.3) is identity at inference time
    logits_ref[...] = (jnp.dot(ctx, cls_w_ref[...],
                               preferred_element_type=jnp.float32)
                       + cls_b_ref[...])


# ----------------------------- model wrapper ----------------------------------
def forward(params, input_ids, attention_mask):
    ids = input_ids.astype(jnp.int32).reshape(B * L, 1)
    mask_f = attention_mask.astype(jnp.float32)
    kernel = functools.partial(
        _fused_kernel, n_layers=N_LAYERS, n_heads=N_HEADS, dh=DH, seq_len=L,
        batch=B, hidden=H, vocab=VOCAB, g=G, eps=LN_EPS)
    logits, attw = pl.pallas_call(
        kernel,
        out_shape=(jax.ShapeDtypeStruct((B, C), jnp.float32),
                   jax.ShapeDtypeStruct((B, L), jnp.float32)),
        in_specs=[pl.BlockSpec(memory_space=VMEM)] * 27,
        out_specs=(pl.BlockSpec(memory_space=VMEM),
                   pl.BlockSpec(memory_space=VMEM)),
        scratch_shapes=[pltpu.VMEM((B * L, 2 * G), jnp.float32)],
    )(ids, mask_f,
      params["word_emb"], params["pos_emb"],
      params["emb_ln_g"], params["emb_ln_b"],
      params["wqkv"], params["bqkv"], params["wo"], params["bo"],
      params["ln1_g"], params["ln1_b"], params["w1"], params["b1"],
      params["w2"], params["b2"], params["ln2_g"], params["ln2_b"],
      params["gru_wi_f"], params["gru_wi_b"], params["gru_bi"],
      params["gru_wh"], params["gru_bh"],
      params["attn_w"], params["attn_b"], params["cls_w"], params["cls_b"])
    return logits, attw


# ----------------------------- parameter init ---------------------------------
def init_params(key):
    std = 0.02
    keys = iter(jax.random.split(key, 64))

    def nrm(shape):
        return std * jax.random.normal(next(keys), shape, jnp.float32)

    # raw per-direction GRU weights (PyTorch gate order [r, z, n])
    wif, wib = nrm((H, 3 * G)), nrm((H, 3 * G))
    whf, whb = nrm((G, 3 * G)), nrm((G, 3 * G))
    bif = jnp.zeros((1, 3 * G), jnp.float32)
    bib = jnp.zeros((1, 3 * G), jnp.float32)
    bhf = jnp.zeros((1, 3 * G), jnp.float32)
    bhb = jnp.zeros((1, 3 * G), jnp.float32)

    def interleave(fw, bw):
        # [*, 3G] x [*, 3G] -> [*, 6G] with columns [r_f r_b z_f z_b n_f n_b]
        parts = []
        for gate in range(3):
            parts.append(fw[:, gate * G:(gate + 1) * G])
            parts.append(bw[:, gate * G:(gate + 1) * G])
        return jnp.concatenate(parts, axis=1)

    gru_wi_f = interleave(wif, jnp.zeros_like(wib))   # fwd proj -> fwd gate slots
    gru_wi_b = interleave(jnp.zeros_like(wif), wib)   # bwd proj -> bwd gate slots
    gru_bi = interleave(bif, bib)
    gru_bh = interleave(bhf, bhb)
    # block-diagonal recurrent weight so h = [h_f | h_b] needs ONE matmul / step
    blk = jnp.zeros((2 * G, 6 * G), jnp.float32)
    for gate in range(3):
        blk = blk.at[0:G, (2 * gate) * G:(2 * gate + 1) * G].set(
            whf[:, gate * G:(gate + 1) * G])
        blk = blk.at[G:2 * G, (2 * gate + 1) * G:(2 * gate + 2) * G].set(
            whb[:, gate * G:(gate + 1) * G])

    params = {
        "word_emb": nrm((VOCAB, H)),
        "pos_emb": nrm((MAX_POS, H)),
        "emb_ln_g": jnp.ones((1, H), jnp.float32),
        "emb_ln_b": jnp.zeros((1, H), jnp.float32),
        # transformer layer weights, stacked along a leading N_LAYERS axis
        "wqkv": nrm((N_LAYERS, H, 3 * H)),                     # fused Q|K|V
        "bqkv": jnp.zeros((N_LAYERS, 1, 3 * H), jnp.float32),
        "wo": nrm((N_LAYERS, H, H)),
        "bo": jnp.zeros((N_LAYERS, 1, H), jnp.float32),
        "ln1_g": jnp.ones((N_LAYERS, 1, H), jnp.float32),
        "ln1_b": jnp.zeros((N_LAYERS, 1, H), jnp.float32),
        "w1": nrm((N_LAYERS, H, FFN)),
        "b1": jnp.zeros((N_LAYERS, 1, FFN), jnp.float32),
        "w2": nrm((N_LAYERS, FFN, H)),
        "b2": jnp.zeros((N_LAYERS, 1, H), jnp.float32),
        "ln2_g": jnp.ones((N_LAYERS, 1, H), jnp.float32),
        "ln2_b": jnp.zeros((N_LAYERS, 1, H), jnp.float32),
        # BiGRU (restructured layouts, see interleave/blockdiag above)
        "gru_wi_f": gru_wi_f,                                  # [H, 6G]
        "gru_wi_b": gru_wi_b,                                  # [H, 6G]
        "gru_bi": gru_bi,                                      # [1, 6G]
        "gru_wh": blk,                                         # [2G, 6G]
        "gru_bh": gru_bh,                                      # [1, 6G]
        # attention pooling Linear(2G -> 1) and classifier Linear(2G -> C)
        "attn_w": nrm((1, 2 * G)),
        "attn_b": jnp.zeros((1, 1), jnp.float32),
        "cls_w": nrm((2 * G, C)),
        "cls_b": jnp.zeros((1, C), jnp.float32),
    }
    return params


# ----------------------------- main --------------------------------------------
if __name__ == "__main__":
    key = jax.random.PRNGKey(0)
    k_ids, k_params = jax.random.split(key)

    input_ids = jax.random.randint(k_ids, (B, L), 0, VOCAB, dtype=jnp.int32)
    attention_mask = jnp.ones((B, L), jnp.int32).at[0, 6:].set(0)   # some padding

    params = init_params(k_params)
    # TODO(synk): pretrained DistilBERT weights are not loadable here; encoder is
    # a deterministically-initialized DistilBERT-style stack. Dropout = identity (eval).
    fwd = jax.jit(forward)
    logits, attn_weights = fwd(params, input_ids, attention_mask)
    jax.block_until_ready((logits, attn_weights))

    assert logits.shape == (B, C)
    assert attn_weights.shape == (B, L)
    assert bool(jnp.all(jnp.isfinite(logits)))
    assert bool(jnp.all(jnp.isfinite(attn_weights)))
    print("KERNEL_OK")
</pallas_src>

<mosaic_0001>
module attributes {stable_mosaic.version = 11 : i64} {
  func.func @_fused_kernel(%arg0: memref<16x1xi32, #tpu.memory_space<vmem>>, %arg1: memref<2x8xf32, #tpu.memory_space<vmem>>, %arg2: memref<100x32xf32, #tpu.memory_space<vmem>>, %arg3: memref<16x32xf32, #tpu.memory_space<vmem>>, %arg4: memref<1x32xf32, #tpu.memory_space<vmem>>, %arg5: memref<1x32xf32, #tpu.memory_space<vmem>>, %arg6: memref<2x32x96xf32, #tpu.memory_space<vmem>>, %arg7: memref<2x1x96xf32, #tpu.memory_space<vmem>>, %arg8: memref<2x32x32xf32, #tpu.memory_space<vmem>>, %arg9: memref<2x1x32xf32, #tpu.memory_space<vmem>>, %arg10: memref<2x1x32xf32, #tpu.memory_space<vmem>>, %arg11: memref<2x1x32xf32, #tpu.memory_space<vmem>>, %arg12: memref<2x32x64xf32, #tpu.memory_space<vmem>>, %arg13: memref<2x1x64xf32, #tpu.memory_space<vmem>>, %arg14: memref<2x64x32xf32, #tpu.memory_space<vmem>>, %arg15: memref<2x1x32xf32, #tpu.memory_space<vmem>>, %arg16: memref<2x1x32xf32, #tpu.memory_space<vmem>>, %arg17: memref<2x1x32xf32, #tpu.memory_space<vmem>>, %arg18: memref<32x192xf32, #tpu.memory_space<vmem>>, %arg19: memref<32x192xf32, #tpu.memory_space<vmem>>, %arg20: memref<1x192xf32, #tpu.memory_space<vmem>>, %arg21: memref<64x192xf32, #tpu.memory_space<vmem>>, %arg22: memref<1x192xf32, #tpu.memory_space<vmem>>, %arg23: memref<1x64xf32, #tpu.memory_space<vmem>>, %arg24: memref<1x1xf32, #tpu.memory_space<vmem>>, %arg25: memref<64x2xf32, #tpu.memory_space<vmem>>, %arg26: memref<1x2xf32, #tpu.memory_space<vmem>>, %arg27: memref<2x2xf32, #tpu.memory_space<vmem>>, %arg28: memref<2x8xf32, #tpu.memory_space<vmem>>, %arg29: memref<16x64xf32, #tpu.memory_space<vmem>>) attributes {dimension_semantics = [], scalar_prefetch = 0 : i64, scratch_operands = 1 : i64, tpu.core_type = #tpu.core_type<tc>} {
    %c0 = arith.constant 0 : index
    %c0_0 = arith.constant 0 : index
    %0 = vector.load %arg1[%c0, %c0_0] : memref<2x8xf32, #tpu.memory_space<vmem>>, vector<2x8xf32>
    %cst = arith.constant 0.000000e+00 : f32
    %1 = vector.broadcast %cst : f32 to vector<2x8xf32>
    %2 = arith.cmpf ogt, %0, %1 : vector<2x8xf32>
    %cst_1 = arith.constant 0.000000e+00 : f32
    %cst_2 = arith.constant -1.000000e+09 : f32
    %3 = vector.broadcast %cst_1 : f32 to vector<2x8xf32>
    %4 = vector.broadcast %cst_2 : f32 to vector<2x8xf32>
    %5 = arith.select %2, %3, %4 : vector<2x8xi1>, vector<2x8xf32>
    %c0_3 = arith.constant 0 : index
    %c0_4 = arith.constant 0 : index
    %6 = vector.load %arg0[%c0_3, %c0_4] : memref<16x1xi32, #tpu.memory_space<vmem>>, vector<16x1xi32>
    %7 = tpu.iota {dimensions = array<i32: 1>} : vector<16x100xi32>
    %8 = vector.broadcast %6 : vector<16x1xi32> to vector<16x100xi32>
    %9 = arith.cmpi eq, %8, %7 : vector<16x100xi32>
    %10 = arith.extui %9 : vector<16x100xi1> to vector<16x100xi32>
    %11 = arith.sitofp %10 : vector<16x100xi32> to vector<16x100xf32>
    %c0_5 = arith.constant 0 : index
    %c0_6 = arith.constant 0 : index
    %12 = vector.load %arg3[%c0_5, %c0_6] : memref<16x32xf32, #tpu.memory_space<vmem>>, vector<8x32xf32>
    %c0_7 = arith.constant 0 : index
    %c0_8 = arith.constant 0 : index
    %13 = vector.load %arg2[%c0_7, %c0_8] : memref<100x32xf32, #tpu.memory_space<vmem>>, vector<100x32xf32>
    %cst_9 = arith.constant dense<0.000000e+00> : vector<16x32xf32>
    %14 = tpu.matmul %11, %13, %cst_9 {dimension_numbers = #tpu.dot_dimension_numbers<[1], [0], [0], [1], [0, 0, 1, 1], [], []>} : vector<16x100xf32>, vector<100x32xf32>, vector<16x32xf32> -> vector<16x32xf32>
    %15 = tpu.concatenate %12, %12 in 0 : vector<8x32xf32>, vector<8x32xf32> -> vector<16x32xf32>
    %16 = arith.addf %14, %15 : vector<16x32xf32>
    %c0_10 = arith.constant 0 : index
    %c0_11 = arith.constant 0 : index
    %17 = vector.load %arg4[%c0_10, %c0_11] : memref<1x32xf32, #tpu.memory_space<vmem>>, vector<1x32xf32>
    %c0_12 = arith.constant 0 : index
    %c0_13 = arith.constant 0 : index
    %18 = vector.load %arg5[%c0_12, %c0_13] : memref<1x32xf32, #tpu.memory_space<vmem>>, vector<1x32xf32>
    %cst_14 = arith.constant dense<0.000000e+00> : vector<16xf32>
    %19 = vector.multi_reduction <add>, %16, %cst_14 [1] : vector<16x32xf32> to vector<16xf32>
    %20 = vector.shape_cast %19 : vector<16xf32> to vector<16x1xf32>
    %cst_15 = arith.constant 3.200000e+01 : f32
    %21 = vector.broadcast %cst_15 : f32 to vector<16x1xf32>
    %22 = arith.divf %20, %21 : vector<16x1xf32>
    %23 = vector.broadcast %22 : vector<16x1xf32> to vector<16x32xf32>
    %24 = arith.subf %16, %23 : vector<16x32xf32>
    %25 = arith.mulf %24, %24 : vector<16x32xf32>
    %cst_16 = arith.constant dense<0.000000e+00> : vector<16xf32>
    %26 = vector.multi_reduction <add>, %25, %cst_16 [1] : vector<16x32xf32> to vector<16xf32>
    %27 = vector.shape_cast %26 : vector<16xf32> to vector<16x1xf32>
    %cst_17 = arith.constant 3.200000e+01 : f32
    %28 = vector.broadcast %cst_17 : f32 to vector<16x1xf32>
    %29 = arith.divf %27, %28 : vector<16x1xf32>
    %30 = vector.broadcast %22 : vector<16x1xf32> to vector<16x32xf32>
    %31 = arith.subf %16, %30 : vector<16x32xf32>
    %cst_18 = arith.constant 9.99999996E-13 : f32
    %32 = vector.broadcast %cst_18 : f32 to vector<16x1xf32>
    %33 = arith.addf %29, %32 : vector<16x1xf32>
    %34 = math.rsqrt %33 : vector<16x1xf32>
    %35 = vector.broadcast %34 : vector<16x1xf32> to vector<16x32xf32>
    %36 = arith.mulf %31, %35 : vector<16x32xf32>
    %37 = vector.broadcast %17 : vector<1x32xf32> to vector<16x32xf32>
    %38 = arith.mulf %36, %37 : vector<16x32xf32>
    %39 = vector.broadcast %18 : vector<1x32xf32> to vector<16x32xf32>
    %40 = arith.addf %38, %39 : vector<16x32xf32>
    %41 = tpu.iota {dimensions = array<i32: 1>} : vector<1x32xi32>
    %c0_i32 = arith.constant 0 : i32
    %42 = vector.broadcast %c0_i32 : i32 to vector<1x32xi32>
    %43 = arith.cmpi sge, %41, %42 : vector<1x32xi32>
    %c8_i32 = arith.constant 8 : i32
    %44 = vector.broadcast %c8_i32 : i32 to vector<1x32xi32>
    %45 = arith.cmpi slt, %41, %44 : vector<1x32xi32>
    %46 = arith.andi %43, %45 : vector<1x32xi1>
    %47 = arith.extui %46 : vector<1x32xi1> to vector<1x32xi32>
    %48 = arith.sitofp %47 : vector<1x32xi32> to vector<1x32xf32>
    %c8_i32_19 = arith.constant 8 : i32
    %49 = vector.broadcast %c8_i32_19 : i32 to vector<1x32xi32>
    %50 = arith.cmpi sge, %41, %49 : vector<1x32xi32>
    %c16_i32 = arith.constant 16 : i32
    %51 = vector.broadcast %c16_i32 : i32 to vector<1x32xi32>
    %52 = arith.cmpi slt, %41, %51 : vector<1x32xi32>
    %53 = arith.andi %50, %52 : vector<1x32xi1>
    %54 = arith.extui %53 : vector<1x32xi1> to vector<1x32xi32>
    %55 = arith.sitofp %54 : vector<1x32xi32> to vector<1x32xf32>
    %c16_i32_20 = arith.constant 16 : i32
    %56 = vector.broadcast %c16_i32_20 : i32 to vector<1x32xi32>
    %57 = arith.cmpi sge, %41, %56 : vector<1x32xi32>
    %c24_i32 = arith.constant 24 : i32
    %58 = vector.broadcast %c24_i32 : i32 to vector<1x32xi32>
    %59 = arith.cmpi slt, %41, %58 : vector<1x32xi32>
    %60 = arith.andi %57, %59 : vector<1x32xi1>
    %61 = arith.extui %60 : vector<1x32xi1> to vector<1x32xi32>
    %62 = arith.sitofp %61 : vector<1x32xi32> to vector<1x32xf32>
    %c24_i32_21 = arith.constant 24 : i32
    %63 = vector.broadcast %c24_i32_21 : i32 to vector<1x32xi32>
    %64 = arith.cmpi sge, %41, %63 : vector<1x32xi32>
    %c32_i32 = arith.constant 32 : i32
    %65 = vector.broadcast %c32_i32 : i32 to vector<1x32xi32>
    %66 = arith.cmpi slt, %41, %65 : vector<1x32xi32>
    %67 = arith.andi %64, %66 : vector<1x32xi1>
    %68 = arith.extui %67 : vector<1x32xi1> to vector<1x32xi32>
    %69 = arith.sitofp %68 : vector<1x32xi32> to vector<1x32xf32>
    %c0_22 = arith.constant 0 : index
    %c0_23 = arith.constant 0 : index
    %c0_24 = arith.constant 0 : index
    %70 = vector.load %arg6[%c0_22, %c0_23, %c0_24] : memref<2x32x96xf32, #tpu.memory_space<vmem>>, vector<1x32x96xf32>
    %71 = vector.shape_cast %70 : vector<1x32x96xf32> to vector<32x96xf32>
    %cst_25 = arith.constant dense<0.000000e+00> : vector<16x96xf32>
    %72 = tpu.matmul %40, %71, %cst_25 {dimension_numbers = #tpu.dot_dimension_numbers<[1], [0], [0], [1], [0, 0, 1, 1], [], []>} : vector<16x32xf32>, vector<32x96xf32>, vector<16x96xf32> -> vector<16x96xf32>
    %c0_26 = arith.constant 0 : index
    %c0_27 = arith.constant 0 : index
    %c0_28 = arith.constant 0 : index
    %73 = vector.load %arg7[%c0_26, %c0_27, %c0_28] : memref<2x1x96xf32, #tpu.memory_space<vmem>>, vector<1x1x96xf32>
    %74 = vector.shape_cast %73 : vector<1x1x96xf32> to vector<1x96xf32>
    %75 = vector.broadcast %74 : vector<1x96xf32> to vector<16x96xf32>
    %76 = arith.addf %72, %75 : vector<16x96xf32>
    %77 = vector.extract_strided_slice %76 {offsets = [0, 0], sizes = [16, 32], strides = [1, 1]} : vector<16x96xf32> to vector<16x32xf32>
    %78 = vector.extract_strided_slice %76 {offsets = [0, 32], sizes = [16, 32], strides = [1, 1]} : vector<16x96xf32> to vector<16x32xf32>
    %79 = vector.extract_strided_slice %76 {offsets = [0, 64], sizes = [16, 32], strides = [1, 1]} : vector<16x96xf32> to vector<16x32xf32>
    %80 = vector.extract_strided_slice %77 {offsets = [0, 0], sizes = [8, 32], strides = [1, 1]} : vector<16x32xf32> to vector<8x32xf32>
    %81 = vector.extract_strided_slice %78 {offsets = [0, 0], sizes = [8, 32], strides = [1, 1]} : vector<16x32xf32> to vector<8x32xf32>
    %82 = vector.extract_strided_slice %79 {offsets = [0, 0], sizes = [8, 32], strides = [1, 1]} : vector<16x32xf32> to vector<8x32xf32>
    %83 = vector.extract_strided_slice %5 {offsets = [0, 0], sizes = [1, 8], strides = [1, 1]} : vector<2x8xf32> to vector<1x8xf32>
    %cst_29 = arith.constant 0.000000e+00 : f32
    %84 = vector.broadcast %cst_29 : f32 to vector<8x32xf32>
    %85 = vector.broadcast %48 : vector<1x32xf32> to vector<8x32xf32>
    %86 = arith.mulf %80, %85 : vector<8x32xf32>
    %cst_30 = arith.constant dense<0.000000e+00> : vector<8x8xf32>
    %87 = tpu.matmul %86, %81, %cst_30 {dimension_numbers = #tpu.dot_dimension_numbers<[1], [1], [0], [0], [0, 0, 1, 0], [], []>} : vector<8x32xf32>, vector<8x32xf32>, vector<8x8xf32> -> vector<8x8xf32>
    %cst_31 = arith.constant 0.353553385 : f32
    %88 = vector.broadcast %cst_31 : f32 to vector<8x8xf32>
    %89 = arith.mulf %87, %88 : vector<8x8xf32>
    %90 = vector.broadcast %83 : vector<1x8xf32> to vector<8x8xf32>
    %91 = arith.addf %89, %90 : vector<8x8xf32>
    %cst_32 = arith.constant dense<0xFF800000> : vector<8xf32>
    %92 = vector.multi_reduction <maximumf>, %91, %cst_32 [1] : vector<8x8xf32> to vector<8xf32>
    %93 = vector.shape_cast %92 : vector<8xf32> to vector<8x1xf32>
    %94 = vector.broadcast %93 : vector<8x1xf32> to vector<8x8xf32>
    %95 = arith.subf %91, %94 : vector<8x8xf32>
    %96 = math.exp %95 : vector<8x8xf32>
    %cst_33 = arith.constant dense<0.000000e+00> : vector<8xf32>
    %97 = vector.multi_reduction <add>, %96, %cst_33 [1] : vector<8x8xf32> to vector<8xf32>
    %98 = vector.shape_cast %97 : vector<8xf32> to vector<8x1xf32>
    %99 = vector.broadcast %98 : vector<8x1xf32> to vector<8x8xf32>
    %100 = arith.divf %96, %99 : vector<8x8xf32>
    %101 = vector.broadcast %48 : vector<1x32xf32> to vector<8x32xf32>
    %102 = arith.mulf %82, %101 : vector<8x32xf32>
    %cst_34 = arith.constant dense<0.000000e+00> : vector<8x32xf32>
    %103 = tpu.matmul %100, %102, %cst_34 {dimension_numbers = #tpu.dot_dimension_numbers<[1], [0], [0], [1], [0, 0, 1, 1], [], []>} : vector<8x8xf32>, vector<8x32xf32>, vector<8x32xf32> -> vector<8x32xf32>
    %104 = arith.addf %84, %103 : vector<8x32xf32>
    %105 = vector.broadcast %55 : vector<1x32xf32> to vector<8x32xf32>
    %106 = arith.mulf %80, %105 : vector<8x32xf32>
    %cst_35 = arith.constant dense<0.000000e+00> : vector<8x8xf32>
    %107 = tpu.matmul %106, %81, %cst_35 {dimension_numbers = #tpu.dot_dimension_numbers<[1], [1], [0], [0], [0, 0, 1, 0], [], []>} : vector<8x32xf32>, vector<8x32xf32>, vector<8x8xf32> -> vector<8x8xf32>
    %cst_36 = arith.constant 0.353553385 : f32
    %108 = vector.broadcast %cst_36 : f32 to vector<8x8xf32>
    %109 = arith.mulf %107, %108 : vector<8x8xf32>
    %110 = vector.broadcast %83 : vector<1x8xf32> to vector<8x8xf32>
    %111 = arith.addf %109, %110 : vector<8x8xf32>
    %cst_37 = arith.constant dense<0xFF800000> : vector<8xf32>
    %112 = vector.multi_reduction <maximumf>, %111, %cst_37 [1] : vector<8x8xf32> to vector<8xf32>
    %113 = vector.shape_cast %112 : vector<8xf32> to vector<8x1xf32>
    %114 = vector.broadcast %113 : vector<8x1xf32> to vector<8x8xf32>
    %115 = arith.subf %111, %114 : vector<8x8xf32>
    %116 = math.exp %115 : vector<8x8xf32>
    %cst_38 = arith.constant dense<0.000000e+00> : vector<8xf32>
    %117 = vector.multi_reduction <add>, %116, %cst_38 [1] : vector<8x8xf32> to vector<8xf32>
    %118 = vector.shape_cast %117 : vector<8xf32> to vector<8x1xf32>
    %119 = vector.broadcast %118 : vector<8x1xf32> to vector<8x8xf32>
    %120 = arith.divf %116, %119 : vector<8x8xf32>
    %121 = vector.broadcast %55 : vector<1x32xf32> to vector<8x32xf32>
    %122 = arith.mulf %82, %121 : vector<8x32xf32>
    %cst_39 = arith.constant dense<0.000000e+00> : vector<8x32xf32>
    %123 = tpu.matmul %120, %122, %cst_39 {dimension_numbers = #tpu.dot_dimension_numbers<[1], [0], [0], [1], [0, 0, 1, 1], [], []>} : vector<8x8xf32>, vector<8x32xf32>, vector<8x32xf32> -> vector<8x32xf32>
    %124 = arith.addf %104, %123 : vector<8x32xf32>
    %125 = vector.broadcast %62 : vector<1x32xf32> to vector<8x32xf32>
    %126 = arith.mulf %80, %125 : vector<8x32xf32>
    %cst_40 = arith.constant dense<0.000000e+00> : vector<8x8xf32>
    %127 = tpu.matmul %126, %81, %cst_40 {dimension_numbers = #tpu.dot_dimension_numbers<[1], [1], [0], [0], [0, 0, 1, 0], [], []>} : vector<8x32xf32>, vector<8x32xf32>, vector<8x8xf32> -> vector<8x8xf32>
    %cst_41 = arith.constant 0.353553385 : f32
    %128 = vector.broadcast %cst_41 : f32 to vector<8x8xf32>
    %129 = arith.mulf %127, %128 : vector<8x8xf32>
    %130 = vector.broadcast %83 : vector<1x8xf32> to vector<8x8xf32>
    %131 = arith.addf %129, %130 : vector<8x8xf32>
    %cst_42 = arith.constant dense<0xFF800000> : vector<8xf32>
    %132 = vector.multi_reduction <maximumf>, %131, %cst_42 [1] : vector<8x8xf32> to vector<8xf32>
    %133 = vector.shape_cast %132 : vector<8xf32> to vector<8x1xf32>
    %134 = vector.broadcast %133 : vector<8x1xf32> to vector<8x8xf32>
    %135 = arith.subf %131, %134 : vector<8x8xf32>
    %136 = math.exp %135 : vector<8x8xf32>
    %cst_43 = arith.constant dense<0.000000e+00> : vector<8xf32>
    %137 = vector.multi_reduction <add>, %136, %cst_43 [1] : vector<8x8xf32> to vector<8xf32>
    %138 = vector.shape_cast %137 : vector<8xf32> to vector<8x1xf32>
    %139 = vector.broadcast %138 : vector<8x1xf32> to vector<8x8xf32>
    %140 = arith.divf %136, %139 : vector<8x8xf32>
    %141 = vector.broadcast %62 : vector<1x32xf32> to vector<8x32xf32>
    %142 = arith.mulf %82, %141 : vector<8x32xf32>
    %cst_44 = arith.constant dense<0.000000e+00> : vector<8x32xf32>
    %143 = tpu.matmul %140, %142, %cst_44 {dimension_numbers = #tpu.dot_dimension_numbers<[1], [0], [0], [1], [0, 0, 1, 1], [], []>} : vector<8x8xf32>, vector<8x32xf32>, vector<8x32xf32> -> vector<8x32xf32>
    %144 = arith.addf %124, %143 : vector<8x32xf32>
    %145 = vector.broadcast %69 : vector<1x32xf32> to vector<8x32xf32>
    %146 = arith.mulf %80, %145 : vector<8x32xf32>
    %cst_45 = arith.constant dense<0.000000e+00> : vector<8x8xf32>
    %147 = tpu.matmul %146, %81, %cst_45 {dimension_numbers = #tpu.dot_dimension_numbers<[1], [1], [0], [0], [0, 0, 1, 0], [], []>} : vector<8x32xf32>, vector<8x32xf32>, vector<8x8xf32> -> vector<8x8xf32>
    %cst_46 = arith.constant 0.353553385 : f32
    %148 = vector.broadcast %cst_46 : f32 to vector<8x8xf32>
    %149 = arith.mulf %147, %148 : vector<8x8xf32>
    %150 = vector.broadcast %83 : vector<1x8xf32> to vector<8x8xf32>
    %151 = arith.addf %149, %150 : vector<8x8xf32>
    %cst_47 = arith.constant dense<0xFF800000> : vector<8xf32>
    %152 = vector.multi_reduction <maximumf>, %151, %cst_47 [1] : vector<8x8xf32> to vector<8xf32>
    %153 = vector.shape_cast %152 : vector<8xf32> to vector<8x1xf32>
    %154 = vector.broadcast %153 : vector<8x1xf32> to vector<8x8xf32>
    %155 = arith.subf %151, %154 : vector<8x8xf32>
    %156 = math.exp %155 : vector<8x8xf32>
    %cst_48 = arith.constant dense<0.000000e+00> : vector<8xf32>
    %157 = vector.multi_reduction <add>, %156, %cst_48 [1] : vector<8x8xf32> to vector<8xf32>
    %158 = vector.shape_cast %157 : vector<8xf32> to vector<8x1xf32>
    %159 = vector.broadcast %158 : vector<8x1xf32> to vector<8x8xf32>
    %160 = arith.divf %156, %159 : vector<8x8xf32>
    %161 = vector.broadcast %69 : vector<1x32xf32> to vector<8x32xf32>
    %162 = arith.mulf %82, %161 : vector<8x32xf32>
    %cst_49 = arith.constant dense<0.000000e+00> : vector<8x32xf32>
    %163 = tpu.matmul %160, %162, %cst_49 {dimension_numbers = #tpu.dot_dimension_numbers<[1], [0], [0], [1], [0, 0, 1, 1], [], []>} : vector<8x8xf32>, vector<8x32xf32>, vector<8x32xf32> -> vector<8x32xf32>
    %164 = arith.addf %144, %163 : vector<8x32xf32>
    %165 = vector.extract_strided_slice %77 {offsets = [8, 0], sizes = [8, 32], strides = [1, 1]} : vector<16x32xf32> to vector<8x32xf32>
    %166 = vector.extract_strided_slice %78 {offsets = [8, 0], sizes = [8, 32], strides = [1, 1]} : vector<16x32xf32> to vector<8x32xf32>
    %167 = vector.extract_strided_slice %79 {offsets = [8, 0], sizes = [8, 32], strides = [1, 1]} : vector<16x32xf32> to vector<8x32xf32>
    %168 = vector.extract_strided_slice %5 {offsets = [1, 0], sizes = [1, 8], strides = [1, 1]} : vector<2x8xf32> to vector<1x8xf32>
    %cst_50 = arith.constant 0.000000e+00 : f32
    %169 = vector.broadcast %cst_50 : f32 to vector<8x32xf32>
    %170 = vector.broadcast %48 : vector<1x32xf32> to vector<8x32xf32>
    %171 = arith.mulf %165, %170 : vector<8x32xf32>
    %cst_51 = arith.constant dense<0.000000e+00> : vector<8x8xf32>
    %172 = tpu.matmul %171, %166, %cst_51 {dimension_numbers = #tpu.dot_dimension_numbers<[1], [1], [0], [0], [0, 0, 1, 0], [], []>} : vector<8x32xf32>, vector<8x32xf32>, vector<8x8xf32> -> vector<8x8xf32>
    %cst_52 = arith.constant 0.353553385 : f32
    %173 = vector.broadcast %cst_52 : f32 to vector<8x8xf32>
    %174 = arith.mulf %172, %173 : vector<8x8xf32>
    %175 = vector.broadcast %168 : vector<1x8xf32> to vector<8x8xf32>
    %176 = arith.addf %174, %175 : vector<8x8xf32>
    %cst_53 = arith.constant dense<0xFF800000> : vector<8xf32>
    %177 = vector.multi_reduction <maximumf>, %176, %cst_53 [1] : vector<8x8xf32> to vector<8xf32>
    %178 = vector.shape_cast %177 : vector<8xf32> to vector<8x1xf32>
    %179 = vector.broadcast %178 : vector<8x1xf32> to vector<8x8xf32>
    %180 = arith.subf %176, %179 : vector<8x8xf32>
    %181 = math.exp %180 : vector<8x8xf32>
    %cst_54 = arith.constant dense<0.000000e+00> : vector<8xf32>
    %182 = vector.multi_reduction <add>, %181, %cst_54 [1] : vector<8x8xf32> to vector<8xf32>
    %183 = vector.shape_cast %182 : vector<8xf32> to vector<8x1xf32>
    %184 = vector.broadcast %183 : vector<8x1xf32> to vector<8x8xf32>
    %185 = arith.divf %181, %184 : vector<8x8xf32>
    %186 = vector.broadcast %48 : vector<1x32xf32> to vector<8x32xf32>
    %187 = arith.mulf %167, %186 : vector<8x32xf32>
    %cst_55 = arith.constant dense<0.000000e+00> : vector<8x32xf32>
    %188 = tpu.matmul %185, %187, %cst_55 {dimension_numbers = #tpu.dot_dimension_numbers<[1], [0], [0], [1], [0, 0, 1, 1], [], []>} : vector<8x8xf32>, vector<8x32xf32>, vector<8x32xf32> -> vector<8x32xf32>
    %189 = arith.addf %169, %188 : vector<8x32xf32>
    %190 = vector.broadcast %55 : vector<1x32xf32> to vector<8x32xf32>
    %191 = arith.mulf %165, %190 : vector<8x32xf32>
    %cst_56 = arith.constant dense<0.000000e+00> : vector<8x8xf32>
    %192 = tpu.matmul %191, %166, %cst_56 {dimension_numbers = #tpu.dot_dimension_numbers<[1], [1], [0], [0], [0, 0, 1, 0], [], []>} : vector<8x32xf32>, vector<8x32xf32>, vector<8x8xf32> -> vector<8x8xf32>
    %cst_57 = arith.constant 0.353553385 : f32
    %193 = vector.broadcast %cst_57 : f32 to vector<8x8xf32>
    %194 = arith.mulf %192, %193 : vector<8x8xf32>
    %195 = vector.broadcast %168 : vector<1x8xf32> to vector<8x8xf32>
    %196 = arith.addf %194, %195 : vector<8x8xf32>
    %cst_58 = arith.constant dense<0xFF800000> : vector<8xf32>
    %197 = vector.multi_reduction <maximumf>, %196, %cst_58 [1] : vector<8x8xf32> to vector<8xf32>
    %198 = vector.shape_cast %197 : vector<8xf32> to vector<8x1xf32>
    %199 = vector.broadcast %198 : vector<8x1xf32> to vector<8x8xf32>
    %200 = arith.subf %196, %199 : vector<8x8xf32>
    %201 = math.exp %200 : vector<8x8xf32>
    %cst_59 = arith.constant dense<0.000000e+00> : vector<8xf32>
    %202 = vector.multi_reduction <add>, %201, %cst_59 [1] : vector<8x8xf32> to vector<8xf32>
    %203 = vector.shape_cast %202 : vector<8xf32> to vector<8x1xf32>
    %204 = vector.broadcast %203 : vector<8x1xf32> to vector<8x8xf32>
    %205 = arith.divf %201, %204 : vector<8x8xf32>
    %206 = vector.broadcast %55 : vector<1x32xf32> to vector<8x32xf32>
    %207 = arith.mulf %167, %206 : vector<8x32xf32>
    %cst_60 = arith.constant dense<0.000000e+00> : vector<8x32xf32>
    %208 = tpu.matmul %205, %207, %cst_60 {dimension_numbers = #tpu.dot_dimension_numbers<[1], [0], [0], [1], [0, 0, 1, 1], [], []>} : vector<8x8xf32>, vector<8x32xf32>, vector<8x32xf32> -> vector<8x32xf32>
    %209 = arith.addf %189, %208 : vector<8x32xf32>
    %210 = vector.broadcast %62 : vector<1x32xf32> to vector<8x32xf32>
    %211 = arith.mulf %165, %210 : vector<8x32xf32>
    %cst_61 = arith.constant dense<0.000000e+00> : vector<8x8xf32>
    %212 = tpu.matmul %211, %166, %cst_61 {dimension_numbers = #tpu.dot_dimension_numbers<[1], [1], [0], [0], [0, 0, 1, 0], [], []>} : vector<8x32xf32>, vector<8x32xf32>, vector<8x8xf32> -> vector<8x8xf32>
    %cst_62 = arith.constant 0.353553385 : f32
    %213 = vector.broadcast %cst_62 : f32 to vector<8x8xf32>
    %214 = arith.mulf %212, %213 : vector<8x8xf32>
    %215 = vector.broadcast %168 : vector<1x8xf32> to vector<8x8xf32>
    %216 = arith.addf %214, %215 : vector<8x8xf32>
    %cst_63 = arith.constant dense<0xFF800000> : vector<8xf32>
    %217 = vector.multi_reduction <maximumf>, %216, %cst_63 [1] : vector<8x8xf32> to vector<8xf32>
    %218 = vector.shape_cast %217 : vector<8xf32> to vector<8x1xf32>
    %219 = vector.broadcast %218 : vector<8x1xf32> to vector<8x8xf32>
    %220 = arith.subf %216, %219 : vector<8x8xf32>
    %221 = math.exp %220 : vector<8x8xf32>
    %cst_64 = arith.constant dense<0.000000e+00> : vector<8xf32>
    %222 = vector.multi_reduction <add>, %221, %cst_64 [1] : vector<8x8xf32> to vector<8xf32>
    %223 = vector.shape_cast %222 : vector<8xf32> to vector<8x1xf32>
    %224 = vector.broadcast %223 : vector<8x1xf32> to vector<8x8xf32>
    %225 = arith.divf %221, %224 : vector<8x8xf32>
    %226 = vector.broadcast %62 : vector<1x32xf32> to vector<8x32xf32>
    %227 = arith.mulf %167, %226 : vector<8x32xf32>
    %cst_65 = arith.constant dense<0.000000e+00> : vector<8x32xf32>
    %228 = tpu.matmul %225, %227, %cst_65 {dimension_numbers = #tpu.dot_dimension_numbers<[1], [0], [0], [1], [0, 0, 1, 1], [], []>} : vector<8x8xf32>, vector<8x32xf32>, vector<8x32xf32> -> vector<8x32xf32>
    %229 = arith.addf %209, %228 : vector<8x32xf32>
    %230 = vector.broadcast %69 : vector<1x32xf32> to vector<8x32xf32>
    %231 = arith.mulf %165, %230 : vector<8x32xf32>
    %cst_66 = arith.constant dense<0.000000e+00> : vector<8x8xf32>
    %232 = tpu.matmul %231, %166, %cst_66 {dimension_numbers = #tpu.dot_dimension_numbers<[1], [1], [0], [0], [0, 0, 1, 0], [], []>} : vector<8x32xf32>, vector<8x32xf32>, vector<8x8xf32> -> vector<8x8xf32>
    %cst_67 = arith.constant 0.353553385 : f32
    %233 = vector.broadcast %cst_67 : f32 to vector<8x8xf32>
    %234 = arith.mulf %232, %233 : vector<8x8xf32>
    %235 = vector.broadcast %168 : vector<1x8xf32> to vector<8x8xf32>
    %236 = arith.addf %234, %235 : vector<8x8xf32>
    %cst_68 = arith.constant dense<0xFF800000> : vector<8xf32>
    %237 = vector.multi_reduction <maximumf>, %236, %cst_68 [1] : vector<8x8xf32> to vector<8xf32>
    %238 = vector.shape_cast %237 : vector<8xf32> to vector<8x1xf32>
    %239 = vector.broadcast %238 : vector<8x1xf32> to vector<8x8xf32>
    %240 = arith.subf %236, %239 : vector<8x8xf32>
    %241 = math.exp %240 : vector<8x8xf32>
    %cst_69 = arith.constant dense<0.000000e+00> : vector<8xf32>
    %242 = vector.multi_reduction <add>, %241, %cst_69 [1] : vector<8x8xf32> to vector<8xf32>
    %243 = vector.shape_cast %242 : vector<8xf32> to vector<8x1xf32>
    %244 = vector.broadcast %243 : vector<8x1xf32> to vector<8x8xf32>
    %245 = arith.divf %241, %244 : vector<8x8xf32>
    %246 = vector.broadcast %69 : vector<1x32xf32> to vector<8x32xf32>
    %247 = arith.mulf %167, %246 : vector<8x32xf32>
    %cst_70 = arith.constant dense<0.000000e+00> : vector<8x32xf32>
    %248 = tpu.matmul %245, %247, %cst_70 {dimension_numbers = #tpu.dot_dimension_numbers<[1], [0], [0], [1], [0, 0, 1, 1], [], []>} : vector<8x8xf32>, vector<8x32xf32>, vector<8x32xf32> -> vector<8x32xf32>
    %249 = arith.addf %229, %248 : vector<8x32xf32>
    %250 = tpu.concatenate %164, %249 in 0 : vector<8x32xf32>, vector<8x32xf32> -> vector<16x32xf32>
    %c0_71 = arith.constant 0 : index
    %c0_72 = arith.constant 0 : index
    %c0_73 = arith.constant 0 : index
    %251 = vector.load %arg8[%c0_71, %c0_72, %c0_73] : memref<2x32x32xf32, #tpu.memory_space<vmem>>, vector<1x32x32xf32>
    %252 = vector.shape_cast %251 : vector<1x32x32xf32> to vector<32x32xf32>
    %cst_74 = arith.constant dense<0.000000e+00> : vector<16x32xf32>
    %253 = tpu.matmul %250, %252, %cst_74 {dimension_numbers = #tpu.dot_dimension_numbers<[1], [0], [0], [1], [0, 0, 1, 1], [], []>} : vector<16x32xf32>, vector<32x32xf32>, vector<16x32xf32> -> vector<16x32xf32>
    %c0_75 = arith.constant 0 : index
    %c0_76 = arith.constant 0 : index
    %c0_77 = arith.constant 0 : index
    %254 = vector.load %arg9[%c0_75, %c0_76, %c0_77] : memref<2x1x32xf32, #tpu.memory_space<vmem>>, vector<1x1x32xf32>
    %255 = vector.shape_cast %254 : vector<1x1x32xf32> to vector<1x32xf32>
    %256 = vector.broadcast %255 : vector<1x32xf32> to vector<16x32xf32>
    %257 = arith.addf %253, %256 : vector<16x32xf32>
    %258 = arith.addf %40, %257 : vector<16x32xf32>
    %c0_78 = arith.constant 0 : index
    %c0_79 = arith.constant 0 : index
    %c0_80 = arith.constant 0 : index
    %259 = vector.load %arg10[%c0_78, %c0_79, %c0_80] : memref<2x1x32xf32, #tpu.memory_space<vmem>>, vector<1x1x32xf32>
    %260 = vector.shape_cast %259 : vector<1x1x32xf32> to vector<1x32xf32>
    %c0_81 = arith.constant 0 : index
    %c0_82 = arith.constant 0 : index
    %c0_83 = arith.constant 0 : index
    %261 = vector.load %arg11[%c0_81, %c0_82, %c0_83] : memref<2x1x32xf32, #tpu.memory_space<vmem>>, vector<1x1x32xf32>
    %262 = vector.shape_cast %261 : vector<1x1x32xf32> to vector<1x32xf32>
    %cst_84 = arith.constant dense<0.000000e+00> : vector<16xf32>
    %263 = vector.multi_reduction <add>, %258, %cst_84 [1] : vector<16x32xf32> to vector<16xf32>
    %264 = vector.shape_cast %263 : vector<16xf32> to vector<16x1xf32>
    %cst_85 = arith.constant 3.200000e+01 : f32
    %265 = vector.broadcast %cst_85 : f32 to vector<16x1xf32>
    %266 = arith.divf %264, %265 : vector<16x1xf32>
    %267 = vector.broadcast %266 : vector<16x1xf32> to vector<16x32xf32>
    %268 = arith.subf %258, %267 : vector<16x32xf32>
    %269 = arith.mulf %268, %268 : vector<16x32xf32>
    %cst_86 = arith.constant dense<0.000000e+00> : vector<16xf32>
    %270 = vector.multi_reduction <add>, %269, %cst_86 [1] : vector<16x32xf32> to vector<16xf32>
    %271 = vector.shape_cast %270 : vector<16xf32> to vector<16x1xf32>
    %cst_87 = arith.constant 3.200000e+01 : f32
    %272 = vector.broadcast %cst_87 : f32 to vector<16x1xf32>
    %273 = arith.divf %271, %272 : vector<16x1xf32>
    %274 = vector.broadcast %266 : vector<16x1xf32> to vector<16x32xf32>
    %275 = arith.subf %258, %274 : vector<16x32xf32>
    %cst_88 = arith.constant 9.99999996E-13 : f32
    %276 = vector.broadcast %cst_88 : f32 to vector<16x1xf32>
    %277 = arith.addf %273, %276 : vector<16x1xf32>
    %278 = math.rsqrt %277 : vector<16x1xf32>
    %279 = vector.broadcast %278 : vector<16x1xf32> to vector<16x32xf32>
    %280 = arith.mulf %275, %279 : vector<16x32xf32>
    %281 = vector.broadcast %260 : vector<1x32xf32> to vector<16x32xf32>
    %282 = arith.mulf %280, %281 : vector<16x32xf32>
    %283 = vector.broadcast %262 : vector<1x32xf32> to vector<16x32xf32>
    %284 = arith.addf %282, %283 : vector<16x32xf32>
    %c0_89 = arith.constant 0 : index
    %c0_90 = arith.constant 0 : index
    %c0_91 = arith.constant 0 : index
    %285 = vector.load %arg12[%c0_89, %c0_90, %c0_91] : memref<2x32x64xf32, #tpu.memory_space<vmem>>, vector<1x32x64xf32>
    %286 = vector.shape_cast %285 : vector<1x32x64xf32> to vector<32x64xf32>
    %cst_92 = arith.constant dense<0.000000e+00> : vector<16x64xf32>
    %287 = tpu.matmul %284, %286, %cst_92 {dimension_numbers = #tpu.dot_dimension_numbers<[1], [0], [0], [1], [0, 0, 1, 1], [], []>} : vector<16x32xf32>, vector<32x64xf32>, vector<16x64xf32> -> vector<16x64xf32>
    %c0_93 = arith.constant 0 : index
    %c0_94 = arith.constant 0 : index
    %c0_95 = arith.constant 0 : index
    %288 = vector.load %arg13[%c0_93, %c0_94, %c0_95] : memref<2x1x64xf32, #tpu.memory_space<vmem>>, vector<1x1x64xf32>
    %289 = vector.shape_cast %288 : vector<1x1x64xf32> to vector<1x64xf32>
    %290 = vector.broadcast %289 : vector<1x64xf32> to vector<16x64xf32>
    %291 = arith.addf %287, %290 : vector<16x64xf32>
    %292 = arith.mulf %291, %291 : vector<16x64xf32>
    %293 = arith.mulf %291, %292 : vector<16x64xf32>
    %cst_96 = arith.constant 4.471500e-02 : f32
    %294 = vector.broadcast %cst_96 : f32 to vector<16x64xf32>
    %295 = arith.mulf %294, %293 : vector<16x64xf32>
    %296 = arith.addf %291, %295 : vector<16x64xf32>
    %cst_97 = arith.constant 0.797884583 : f32
    %297 = vector.broadcast %cst_97 : f32 to vector<16x64xf32>
    %298 = arith.mulf %297, %296 : vector<16x64xf32>
    %299 = math.tanh %298 : vector<16x64xf32>
    %cst_98 = arith.constant 1.000000e+00 : f32
    %300 = vector.broadcast %cst_98 : f32 to vector<16x64xf32>
    %301 = arith.addf %300, %299 : vector<16x64xf32>
    %cst_99 = arith.constant 5.000000e-01 : f32
    %302 = vector.broadcast %cst_99 : f32 to vector<16x64xf32>
    %303 = arith.mulf %302, %301 : vector<16x64xf32>
    %304 = arith.mulf %291, %303 : vector<16x64xf32>
    %c0_100 = arith.constant 0 : index
    %c0_101 = arith.constant 0 : index
    %c0_102 = arith.constant 0 : index
    %305 = vector.load %arg14[%c0_100, %c0_101, %c0_102] : memref<2x64x32xf32, #tpu.memory_space<vmem>>, vector<1x64x32xf32>
    %306 = vector.shape_cast %305 : vector<1x64x32xf32> to vector<64x32xf32>
    %cst_103 = arith.constant dense<0.000000e+00> : vector<16x32xf32>
    %307 = tpu.matmul %304, %306, %cst_103 {dimension_numbers = #tpu.dot_dimension_numbers<[1], [0], [0], [1], [0, 0, 1, 1], [], []>} : vector<16x64xf32>, vector<64x32xf32>, vector<16x32xf32> -> vector<16x32xf32>
    %c0_104 = arith.constant 0 : index
    %c0_105 = arith.constant 0 : index
    %c0_106 = arith.constant 0 : index
    %308 = vector.load %arg15[%c0_104, %c0_105, %c0_106] : memref<2x1x32xf32, #tpu.memory_space<vmem>>, vector<1x1x32xf32>
    %309 = vector.shape_cast %308 : vector<1x1x32xf32> to vector<1x32xf32>
    %310 = vector.broadcast %309 : vector<1x32xf32> to vector<16x32xf32>
    %311 = arith.addf %307, %310 : vector<16x32xf32>
    %312 = arith.addf %284, %311 : vector<16x32xf32>
    %c0_107 = arith.constant 0 : index
    %c0_108 = arith.constant 0 : index
    %c0_109 = arith.constant 0 : index
    %313 = vector.load %arg16[%c0_107, %c0_108, %c0_109] : memref<2x1x32xf32, #tpu.memory_space<vmem>>, vector<1x1x32xf32>
    %314 = vector.shape_cast %313 : vector<1x1x32xf32> to vector<1x32xf32>
    %c0_110 = arith.constant 0 : index
    %c0_111 = arith.constant 0 : index
    %c0_112 = arith.constant 0 : index
    %315 = vector.load %arg17[%c0_110, %c0_111, %c0_112] : memref<2x1x32xf32, #tpu.memory_space<vmem>>, vector<1x1x32xf32>
    %316 = vector.shape_cast %315 : vector<1x1x32xf32> to vector<1x32xf32>
    %cst_113 = arith.constant dense<0.000000e+00> : vector<16xf32>
    %317 = vector.multi_reduction <add>, %312, %cst_113 [1] : vector<16x32xf32> to vector<16xf32>
    %318 = vector.shape_cast %317 : vector<16xf32> to vector<16x1xf32>
    %cst_114 = arith.constant 3.200000e+01 : f32
    %319 = vector.broadcast %cst_114 : f32 to vector<16x1xf32>
    %320 = arith.divf %318, %319 : vector<16x1xf32>
    %321 = vector.broadcast %320 : vector<16x1xf32> to vector<16x32xf32>
    %322 = arith.subf %312, %321 : vector<16x32xf32>
    %323 = arith.mulf %322, %322 : vector<16x32xf32>
    %cst_115 = arith.constant dense<0.000000e+00> : vector<16xf32>
    %324 = vector.multi_reduction <add>, %323, %cst_115 [1] : vector<16x32xf32> to vector<16xf32>
    %325 = vector.shape_cast %324 : vector<16xf32> to vector<16x1xf32>
    %cst_116 = arith.constant 3.200000e+01 : f32
    %326 = vector.broadcast %cst_116 : f32 to vector<16x1xf32>
    %327 = arith.divf %325, %326 : vector<16x1xf32>
    %328 = vector.broadcast %320 : vector<16x1xf32> to vector<16x32xf32>
    %329 = arith.subf %312, %328 : vector<16x32xf32>
    %cst_117 = arith.constant 9.99999996E-13 : f32
    %330 = vector.broadcast %cst_117 : f32 to vector<16x1xf32>
    %331 = arith.addf %327, %330 : vector<16x1xf32>
    %332 = math.rsqrt %331 : vector<16x1xf32>
    %333 = vector.broadcast %332 : vector<16x1xf32> to vector<16x32xf32>
    %334 = arith.mulf %329, %333 : vector<16x32xf32>
    %335 = vector.broadcast %314 : vector<1x32xf32> to vector<16x32xf32>
    %336 = arith.mulf %334, %335 : vector<16x32xf32>
    %337 = vector.broadcast %316 : vector<1x32xf32> to vector<16x32xf32>
    %338 = arith.addf %336, %337 : vector<16x32xf32>
    %c1 = arith.constant 1 : index
    %c0_118 = arith.constant 0 : index
    %c0_119 = arith.constant 0 : index
    %339 = vector.load %arg6[%c1, %c0_118, %c0_119] : memref<2x32x96xf32, #tpu.memory_space<vmem>>, vector<1x32x96xf32>
    %340 = vector.shape_cast %339 : vector<1x32x96xf32> to vector<32x96xf32>
    %cst_120 = arith.constant dense<0.000000e+00> : vector<16x96xf32>
    %341 = tpu.matmul %338, %340, %cst_120 {dimension_numbers = #tpu.dot_dimension_numbers<[1], [0], [0], [1], [0, 0, 1, 1], [], []>} : vector<16x32xf32>, vector<32x96xf32>, vector<16x96xf32> -> vector<16x96xf32>
    %c1_121 = arith.constant 1 : index
    %c0_122 = arith.constant 0 : index
    %c0_123 = arith.constant 0 : index
    %342 = vector.load %arg7[%c1_121, %c0_122, %c0_123] : memref<2x1x96xf32, #tpu.memory_space<vmem>>, vector<1x1x96xf32>
    %343 = vector.shape_cast %342 : vector<1x1x96xf32> to vector<1x96xf32>
    %344 = vector.broadcast %343 : vector<1x96xf32> to vector<16x96xf32>
    %345 = arith.addf %341, %344 : vector<16x96xf32>
    %346 = vector.extract_strided_slice %345 {offsets = [0, 0], sizes = [16, 32], strides = [1, 1]} : vector<16x96xf32> to vector<16x32xf32>
    %347 = vector.extract_strided_slice %345 {offsets = [0, 32], sizes = [16, 32], strides = [1, 1]} : vector<16x96xf32> to vector<16x32xf32>
    %348 = vector.extract_strided_slice %345 {offsets = [0, 64], sizes = [16, 32], strides = [1, 1]} : vector<16x96xf32> to vector<16x32xf32>
    %349 = vector.extract_strided_slice %346 {offsets = [0, 0], sizes = [8, 32], strides = [1, 1]} : vector<16x32xf32> to vector<8x32xf32>
    %350 = vector.extract_strided_slice %347 {offsets = [0, 0], sizes = [8, 32], strides = [1, 1]} : vector<16x32xf32> to vector<8x32xf32>
    %351 = vector.extract_strided_slice %348 {offsets = [0, 0], sizes = [8, 32], strides = [1, 1]} : vector<16x32xf32> to vector<8x32xf32>
    %352 = vector.extract_strided_slice %5 {offsets = [0, 0], sizes = [1, 8], strides = [1, 1]} : vector<2x8xf32> to vector<1x8xf32>
    %cst_124 = arith.constant 0.000000e+00 : f32
    %353 = vector.broadcast %cst_124 : f32 to vector<8x32xf32>
    %354 = vector.broadcast %48 : vector<1x32xf32> to vector<8x32xf32>
    %355 = arith.mulf %349, %354 : vector<8x32xf32>
    %cst_125 = arith.constant dense<0.000000e+00> : vector<8x8xf32>
    %356 = tpu.matmul %355, %350, %cst_125 {dimension_numbers = #tpu.dot_dimension_numbers<[1], [1], [0], [0], [0, 0, 1, 0], [], []>} : vector<8x32xf32>, vector<8x32xf32>, vector<8x8xf32> -> vector<8x8xf32>
    %cst_126 = arith.constant 0.353553385 : f32
    %357 = vector.broadcast %cst_126 : f32 to vector<8x8xf32>
    %358 = arith.mulf %356, %357 : vector<8x8xf32>
    %359 = vector.broadcast %352 : vector<1x8xf32> to vector<8x8xf32>
    %360 = arith.addf %358, %359 : vector<8x8xf32>
    %cst_127 = arith.constant dense<0xFF800000> : vector<8xf32>
    %361 = vector.multi_reduction <maximumf>, %360, %cst_127 [1] : vector<8x8xf32> to vector<8xf32>
    %362 = vector.shape_cast %361 : vector<8xf32> to vector<8x1xf32>
    %363 = vector.broadcast %362 : vector<8x1xf32> to vector<8x8xf32>
    %364 = arith.subf %360, %363 : vector<8x8xf32>
    %365 = math.exp %364 : vector<8x8xf32>
    %cst_128 = arith.constant dense<0.000000e+00> : vector<8xf32>
    %366 = vector.multi_reduction <add>, %365, %cst_128 [1] : vector<8x8xf32> to vector<8xf32>
    %367 = vector.shape_cast %366 : vector<8xf32> to vector<8x1xf32>
    %368 = vector.broadcast %367 : vector<8x1xf32> to vector<8x8xf32>
    %369 = arith.divf %365, %368 : vector<8x8xf32>
    %370 = vector.broadcast %48 : vector<1x32xf32> to vector<8x32xf32>
    %371 = arith.mulf %351, %370 : vector<8x32xf32>
    %cst_129 = arith.constant dense<0.000000e+00> : vector<8x32xf32>
    %372 = tpu.matmul %369, %371, %cst_129 {dimension_numbers = #tpu.dot_dimension_numbers<[1], [0], [0], [1], [0, 0, 1, 1], [], []>} : vector<8x8xf32>, vector<8x32xf32>, vector<8x32xf32> -> vector<8x32xf32>
    %373 = arith.addf %353, %372 : vector<8x32xf32>
    %374 = vector.broadcast %55 : vector<1x32xf32> to vector<8x32xf32>
    %375 = arith.mulf %349, %374 : vector<8x32xf32>
    %cst_130 = arith.constant dense<0.000000e+00> : vector<8x8xf32>
    %376 = tpu.matmul %375, %350, %cst_130 {dimension_numbers = #tpu.dot_dimension_numbers<[1], [1], [0], [0], [0, 0, 1, 0], [], []>} : vector<8x32xf32>, vector<8x32xf32>, vector<8x8xf32> -> vector<8x8xf32>
    %cst_131 = arith.constant 0.353553385 : f32
    %377 = vector.broadcast %cst_131 : f32 to vector<8x8xf32>
    %378 = arith.mulf %376, %377 : vector<8x8xf32>
    %379 = vector.broadcast %352 : vector<1x8xf32> to vector<8x8xf32>
    %380 = arith.addf %378, %379 : vector<8x8xf32>
    %cst_132 = arith.constant dense<0xFF800000> : vector<8xf32>
    %381 = vector.multi_reduction <maximumf>, %380, %cst_132 [1] : vector<8x8xf32> to vector<8xf32>
    %382 = vector.shape_cast %381 : vector<8xf32> to vector<8x1xf32>
    %383 = vector.broadcast %382 : vector<8x1xf32> to vector<8x8xf32>
    %384 = arith.subf %380, %383 : vector<8x8xf32>
    %385 = math.exp %384 : vector<8x8xf32>
    %cst_133 = arith.constant dense<0.000000e+00> : vector<8xf32>
    %386 = vector.multi_reduction <add>, %385, %cst_133 [1] : vector<8x8xf32> to vector<8xf32>
    %387 = vector.shape_cast %386 : vector<8xf32> to vector<8x1xf32>
    %388 = vector.broadcast %387 : vector<8x1xf32> to vector<8x8xf32>
    %389 = arith.divf %385, %388 : vector<8x8xf32>
    %390 = vector.broadcast %55 : vector<1x32xf32> to vector<8x32xf32>
    %391 = arith.mulf %351, %390 : vector<8x32xf32>
    %cst_134 = arith.constant dense<0.000000e+00> : vector<8x32xf32>
    %392 = tpu.matmul %389, %391, %cst_134 {dimension_numbers = #tpu.dot_dimension_numbers<[1], [0], [0], [1], [0, 0, 1, 1], [], []>} : vector<8x8xf32>, vector<8x32xf32>, vector<8x32xf32> -> vector<8x32xf32>
    %393 = arith.addf %373, %392 : vector<8x32xf32>
    %394 = vector.broadcast %62 : vector<1x32xf32> to vector<8x32xf32>
    %395 = arith.mulf %349, %394 : vector<8x32xf32>
    %cst_135 = arith.constant dense<0.000000e+00> : vector<8x8xf32>
    %396 = tpu.matmul %395, %350, %cst_135 {dimension_numbers = #tpu.dot_dimension_numbers<[1], [1], [0], [0], [0, 0, 1, 0], [], []>} : vector<8x32xf32>, vector<8x32xf32>, vector<8x8xf32> -> vector<8x8xf32>
    %cst_136 = arith.constant 0.353553385 : f32
    %397 = vector.broadcast %cst_136 : f32 to vector<8x8xf32>
    %398 = arith.mulf %396, %397 : vector<8x8xf32>
    %399 = vector.broadcast %352 : vector<1x8xf32> to vector<8x8xf32>
    %400 = arith.addf %398, %399 : vector<8x8xf32>
    %cst_137 = arith.constant dense<0xFF800000> : vector<8xf32>
    %401 = vector.multi_reduction <maximumf>, %400, %cst_137 [1] : vector<8x8xf32> to vector<8xf32>
    %402 = vector.shape_cast %401 : vector<8xf32> to vector<8x1xf32>
    %403 = vector.broadcast %402 : vector<8x1xf32> to vector<8x8xf32>
    %404 = arith.subf %400, %403 : vector<8x8xf32>
    %405 = math.exp %404 : vector<8x8xf32>
    %cst_138 = arith.constant dense<0.000000e+00> : vector<8xf32>
    %406 = vector.multi_reduction <add>, %405, %cst_138 [1] : vector<8x8xf32> to vector<8xf32>
    %407 = vector.shape_cast %406 : vector<8xf32> to vector<8x1xf32>
    %408 = vector.broadcast %407 : vector<8x1xf32> to vector<8x8xf32>
    %409 = arith.divf %405, %408 : vector<8x8xf32>
    %410 = vector.broadcast %62 : vector<1x32xf32> to vector<8x32xf32>
    %411 = arith.mulf %351, %410 : vector<8x32xf32>
    %cst_139 = arith.constant dense<0.000000e+00> : vector<8x32xf32>
    %412 = tpu.matmul %409, %411, %cst_139 {dimension_numbers = #tpu.dot_dimension_numbers<[1], [0], [0], [1], [0, 0, 1, 1], [], []>} : vector<8x8xf32>, vector<8x32xf32>, vector<8x32xf32> -> vector<8x32xf32>
    %413 = arith.addf %393, %412 : vector<8x32xf32>
    %414 = vector.broadcast %69 : vector<1x32xf32> to vector<8x32xf32>
    %415 = arith.mulf %349, %414 : vector<8x32xf32>
    %cst_140 = arith.constant dense<0.000000e+00> : vector<8x8xf32>
    %416 = tpu.matmul %415, %350, %cst_140 {dimension_numbers = #tpu.dot_dimension_numbers<[1], [1], [0], [0], [0, 0, 1, 0], [], []>} : vector<8x32xf32>, vector<8x32xf32>, vector<8x8xf32> -> vector<8x8xf32>
    %cst_141 = arith.constant 0.353553385 : f32
    %417 = vector.broadcast %cst_141 : f32 to vector<8x8xf32>
    %418 = arith.mulf %416, %417 : vector<8x8xf32>
    %419 = vector.broadcast %352 : vector<1x8xf32> to vector<8x8xf32>
    %420 = arith.addf %418, %419 : vector<8x8xf32>
    %cst_142 = arith.constant dense<0xFF800000> : vector<8xf32>
    %421 = vector.multi_reduction <maximumf>, %420, %cst_142 [1] : vector<8x8xf32> to vector<8xf32>
    %422 = vector.shape_cast %421 : vector<8xf32> to vector<8x1xf32>
    %423 = vector.broadcast %422 : vector<8x1xf32> to vector<8x8xf32>
    %424 = arith.subf %420, %423 : vector<8x8xf32>
    %425 = math.exp %424 : vector<8x8xf32>
    %cst_143 = arith.constant dense<0.000000e+00> : vector<8xf32>
    %426 = vector.multi_reduction <add>, %425, %cst_143 [1] : vector<8x8xf32> to vector<8xf32>
    %427 = vector.shape_cast %426 : vector<8xf32> to vector<8x1xf32>
    %428 = vector.broadcast %427 : vector<8x1xf32> to vector<8x8xf32>
    %429 = arith.divf %425, %428 : vector<8x8xf32>
    %430 = vector.broadcast %69 : vector<1x32xf32> to vector<8x32xf32>
    %431 = arith.mulf %351, %430 : vector<8x32xf32>
    %cst_144 = arith.constant dense<0.000000e+00> : vector<8x32xf32>
    %432 = tpu.matmul %429, %431, %cst_144 {dimension_numbers = #tpu.dot_dimension_numbers<[1], [0], [0], [1], [0, 0, 1, 1], [], []>} : vector<8x8xf32>, vector<8x32xf32>, vector<8x32xf32> -> vector<8x32xf32>
    %433 = arith.addf %413, %432 : vector<8x32xf32>
    %434 = vector.extract_strided_slice %346 {offsets = [8, 0], sizes = [8, 32], strides = [1, 1]} : vector<16x32xf32> to vector<8x32xf32>
    %435 = vector.extract_strided_slice %347 {offsets = [8, 0], sizes = [8, 32], strides = [1, 1]} : vector<16x32xf32> to vector<8x32xf32>
    %436 = vector.extract_strided_slice %348 {offsets = [8, 0], sizes = [8, 32], strides = [1, 1]} : vector<16x32xf32> to vector<8x32xf32>
    %437 = vector.extract_strided_slice %5 {offsets = [1, 0], sizes = [1, 8], strides = [1, 1]} : vector<2x8xf32> to vector<1x8xf32>
    %cst_145 = arith.constant 0.000000e+00 : f32
    %438 = vector.broadcast %cst_145 : f32 to vector<8x32xf32>
    %439 = vector.broadcast %48 : vector<1x32xf32> to vector<8x32xf32>
    %440 = arith.mulf %434, %439 : vector<8x32xf32>
    %cst_146 = arith.constant dense<0.000000e+00> : vector<8x8xf32>
    %441 = tpu.matmul %440, %435, %cst_146 {dimension_numbers = #tpu.dot_dimension_numbers<[1], [1], [0], [0], [0, 0, 1, 0], [], []>} : vector<8x32xf32>, vector<8x32xf32>, vector<8x8xf32> -> vector<8x8xf32>
    %cst_147 = arith.constant 0.353553385 : f32
    %442 = vector.broadcast %cst_147 : f32 to vector<8x8xf32>
    %443 = arith.mulf %441, %442 : vector<8x8xf32>
    %444 = vector.broadcast %437 : vector<1x8xf32> to vector<8x8xf32>
    %445 = arith.addf %443, %444 : vector<8x8xf32>
    %cst_148 = arith.constant dense<0xFF800000> : vector<8xf32>
    %446 = vector.multi_reduction <maximumf>, %445, %cst_148 [1] : vector<8x8xf32> to vector<8xf32>
    %447 = vector.shape_cast %446 : vector<8xf32> to vector<8x1xf32>
    %448 = vector.broadcast %447 : vector<8x1xf32> to vector<8x8xf32>
    %449 = arith.subf %445, %448 : vector<8x8xf32>
    %450 = math.exp %449 : vector<8x8xf32>
    %cst_149 = arith.constant dense<0.000000e+00> : vector<8xf32>
    %451 = vector.multi_reduction <add>, %450, %cst_149 [1] : vector<8x8xf32> to vector<8xf32>
    %452 = vector.shape_cast %451 : vector<8xf32> to vector<8x1xf32>
    %453 = vector.broadcast %452 : vector<8x1xf32> to vector<8x8xf32>
    %454 = arith.divf %450, %453 : vector<8x8xf32>
    %455 = vector.broadcast %48 : vector<1x32xf32> to vector<8x32xf32>
    %456 = arith.mulf %436, %455 : vector<8x32xf32>
    %cst_150 = arith.constant dense<0.000000e+00> : vector<8x32xf32>
    %457 = tpu.matmul %454, %456, %cst_150 {dimension_numbers = #tpu.dot_dimension_numbers<[1], [0], [0], [1], [0, 0, 1, 1], [], []>} : vector<8x8xf32>, vector<8x32xf32>, vector<8x32xf32> -> vector<8x32xf32>
    %458 = arith.addf %438, %457 : vector<8x32xf32>
    %459 = vector.broadcast %55 : vector<1x32xf32> to vector<8x32xf32>
    %460 = arith.mulf %434, %459 : vector<8x32xf32>
    %cst_151 = arith.constant dense<0.000000e+00> : vector<8x8xf32>
    %461 = tpu.matmul %460, %435, %cst_151 {dimension_numbers = #tpu.dot_dimension_numbers<[1], [1], [0], [0], [0, 0, 1, 0], [], []>} : vector<8x32xf32>, vector<8x32xf32>, vector<8x8xf32> -> vector<8x8xf32>
    %cst_152 = arith.constant 0.353553385 : f32
    %462 = vector.broadcast %cst_152 : f32 to vector<8x8xf32>
    %463 = arith.mulf %461, %462 : vector<8x8xf32>
    %464 = vector.broadcast %437 : vector<1x8xf32> to vector<8x8xf32>
    %465 = arith.addf %463, %464 : vector<8x8xf32>
    %cst_153 = arith.constant dense<0xFF800000> : vector<8xf32>
    %466 = vector.multi_reduction <maximumf>, %465, %cst_153 [1] : vector<8x8xf32> to vector<8xf32>
    %467 = vector.shape_cast %466 : vector<8xf32> to vector<8x1xf32>
    %468 = vector.broadcast %467 : vector<8x1xf32> to vector<8x8xf32>
    %469 = arith.subf %465, %468 : vector<8x8xf32>
    %470 = math.exp %469 : vector<8x8xf32>
    %cst_154 = arith.constant dense<0.000000e+00> : vector<8xf32>
    %471 = vector.multi_reduction <add>, %470, %cst_154 [1] : vector<8x8xf32> to vector<8xf32>
    %472 = vector.shape_cast %471 : vector<8xf32> to vector<8x1xf32>
    %473 = vector.broadcast %472 : vector<8x1xf32> to vector<8x8xf32>
    %474 = arith.divf %470, %473 : vector<8x8xf32>
    %475 = vector.broadcast %55 : vector<1x32xf32> to vector<8x32xf32>
    %476 = arith.mulf %436, %475 : vector<8x32xf32>
    %cst_155 = arith.constant dense<0.000000e+00> : vector<8x32xf32>
    %477 = tpu.matmul %474, %476, %cst_155 {dimension_numbers = #tpu.dot_dimension_numbers<[1], [0], [0], [1], [0, 0, 1, 1], [], []>} : vector<8x8xf32>, vector<8x32xf32>, vector<8x32xf32> -> vector<8x32xf32>
    %478 = arith.addf %458, %477 : vector<8x32xf32>
    %479 = vector.broadcast %62 : vector<1x32xf32> to vector<8x32xf32>
    %480 = arith.mulf %434, %479 : vector<8x32xf32>
    %cst_156 = arith.constant dense<0.000000e+00> : vector<8x8xf32>
    %481 = tpu.matmul %480, %435, %cst_156 {dimension_numbers = #tpu.dot_dimension_numbers<[1], [1], [0], [0], [0, 0, 1, 0], [], []>} : vector<8x32xf32>, vector<8x32xf32>, vector<8x8xf32> -> vector<8x8xf32>
    %cst_157 = arith.constant 0.353553385 : f32
    %482 = vector.broadcast %cst_157 : f32 to vector<8x8xf32>
    %483 = arith.mulf %481, %482 : vector<8x8xf32>
    %484 = vector.broadcast %437 : vector<1x8xf32> to vector<8x8xf32>
    %485 = arith.addf %483, %484 : vector<8x8xf32>
    %cst_158 = arith.constant dense<0xFF800000> : vector<8xf32>
    %486 = vector.multi_reduction <maximumf>, %485, %cst_158 [1] : vector<8x8xf32> to vector<8xf32>
    %487 = vector.shape_cast %486 : vector<8xf32> to vector<8x1xf32>
    %488 = vector.broadcast %487 : vector<8x1xf32> to vector<8x8xf32>
    %489 = arith.subf %485, %488 : vector<8x8xf32>
    %490 = math.exp %489 : vector<8x8xf32>
    %cst_159 = arith.constant dense<0.000000e+00> : vector<8xf32>
    %491 = vector.multi_reduction <add>, %490, %cst_159 [1] : vector<8x8xf32> to vector<8xf32>
    %492 = vector.shape_cast %491 : vector<8xf32> to vector<8x1xf32>
    %493 = vector.broadcast %492 : vector<8x1xf32> to vector<8x8xf32>
    %494 = arith.divf %490, %493 : vector<8x8xf32>
    %495 = vector.broadcast %62 : vector<1x32xf32> to vector<8x32xf32>
    %496 = arith.mulf %436, %495 : vector<8x32xf32>
    %cst_160 = arith.constant dense<0.000000e+00> : vector<8x32xf32>
    %497 = tpu.matmul %494, %496, %cst_160 {dimension_numbers = #tpu.dot_dimension_numbers<[1], [0], [0], [1], [0, 0, 1, 1], [], []>} : vector<8x8xf32>, vector<8x32xf32>, vector<8x32xf32> -> vector<8x32xf32>
    %498 = arith.addf %478, %497 : vector<8x32xf32>
    %499 = vector.broadcast %69 : vector<1x32xf32> to vector<8x32xf32>
    %500 = arith.mulf %434, %499 : vector<8x32xf32>
    %cst_161 = arith.constant dense<0.000000e+00> : vector<8x8xf32>
    %501 = tpu.matmul %500, %435, %cst_161 {dimension_numbers = #tpu.dot_dimension_numbers<[1], [1], [0], [0], [0, 0, 1, 0], [], []>} : vector<8x32xf32>, vector<8x32xf32>, vector<8x8xf32> -> vector<8x8xf32>
    %cst_162 = arith.constant 0.353553385 : f32
    %502 = vector.broadcast %cst_162 : f32 to vector<8x8xf32>
    %503 = arith.mulf %501, %502 : vector<8x8xf32>
    %504 = vector.broadcast %437 : vector<1x8xf32> to vector<8x8xf32>
    %505 = arith.addf %503, %504 : vector<8x8xf32>
    %cst_163 = arith.constant dense<0xFF800000> : vector<8xf32>
    %506 = vector.multi_reduction <maximumf>, %505, %cst_163 [1] : vector<8x8xf32> to vector<8xf32>
    %507 = vector.shape_cast %506 : vector<8xf32> to vector<8x1xf32>
    %508 = vector.broadcast %507 : vector<8x1xf32> to vector<8x8xf32>
    %509 = arith.subf %505, %508 : vector<8x8xf32>
    %510 = math.exp %509 : vector<8x8xf32>
    %cst_164 = arith.constant dense<0.000000e+00> : vector<8xf32>
    %511 = vector.multi_reduction <add>, %510, %cst_164 [1] : vector<8x8xf32> to vector<8xf32>
    %512 = vector.shape_cast %511 : vector<8xf32> to vector<8x1xf32>
    %513 = vector.broadcast %512 : vector<8x1xf32> to vector<8x8xf32>
    %514 = arith.divf %510, %513 : vector<8x8xf32>
    %515 = vector.broadcast %69 : vector<1x32xf32> to vector<8x32xf32>
    %516 = arith.mulf %436, %515 : vector<8x32xf32>
    %cst_165 = arith.constant dense<0.000000e+00> : vector<8x32xf32>
    %517 = tpu.matmul %514, %516, %cst_165 {dimension_numbers = #tpu.dot_dimension_numbers<[1], [0], [0], [1], [0, 0, 1, 1], [], []>} : vector<8x8xf32>, vector<8x32xf32>, vector<8x32xf32> -> vector<8x32xf32>
    %518 = arith.addf %498, %517 : vector<8x32xf32>
    %519 = tpu.concatenate %433, %518 in 0 : vector<8x32xf32>, vector<8x32xf32> -> vector<16x32xf32>
    %c1_166 = arith.constant 1 : index
    %c0_167 = arith.constant 0 : index
    %c0_168 = arith.constant 0 : index
    %520 = vector.load %arg8[%c1_166, %c0_167, %c0_168] : memref<2x32x32xf32, #tpu.memory_space<vmem>>, vector<1x32x32xf32>
    %521 = vector.shape_cast %520 : vector<1x32x32xf32> to vector<32x32xf32>
    %cst_169 = arith.constant dense<0.000000e+00> : vector<16x32xf32>
    %522 = tpu.matmul %519, %521, %cst_169 {dimension_numbers = #tpu.dot_dimension_numbers<[1], [0], [0], [1], [0, 0, 1, 1], [], []>} : vector<16x32xf32>, vector<32x32xf32>, vector<16x32xf32> -> vector<16x32xf32>
    %c1_170 = arith.constant 1 : index
    %c0_171 = arith.constant 0 : index
    %c0_172 = arith.constant 0 : index
    %523 = vector.load %arg9[%c1_170, %c0_171, %c0_172] : memref<2x1x32xf32, #tpu.memory_space<vmem>>, vector<1x1x32xf32>
    %524 = vector.shape_cast %523 : vector<1x1x32xf32> to vector<1x32xf32>
    %525 = vector.broadcast %524 : vector<1x32xf32> to vector<16x32xf32>
    %526 = arith.addf %522, %525 : vector<16x32xf32>
    %527 = arith.addf %338, %526 : vector<16x32xf32>
    %c1_173 = arith.constant 1 : index
    %c0_174 = arith.constant 0 : index
    %c0_175 = arith.constant 0 : index
    %528 = vector.load %arg10[%c1_173, %c0_174, %c0_175] : memref<2x1x32xf32, #tpu.memory_space<vmem>>, vector<1x1x32xf32>
    %529 = vector.shape_cast %528 : vector<1x1x32xf32> to vector<1x32xf32>
    %c1_176 = arith.constant 1 : index
    %c0_177 = arith.constant 0 : index
    %c0_178 = arith.constant 0 : index
    %530 = vector.load %arg11[%c1_176, %c0_177, %c0_178] : memref<2x1x32xf32, #tpu.memory_space<vmem>>, vector<1x1x32xf32>
    %531 = vector.shape_cast %530 : vector<1x1x32xf32> to vector<1x32xf32>
    %cst_179 = arith.constant dense<0.000000e+00> : vector<16xf32>
    %532 = vector.multi_reduction <add>, %527, %cst_179 [1] : vector<16x32xf32> to vector<16xf32>
    %533 = vector.shape_cast %532 : vector<16xf32> to vector<16x1xf32>
    %cst_180 = arith.constant 3.200000e+01 : f32
    %534 = vector.broadcast %cst_180 : f32 to vector<16x1xf32>
    %535 = arith.divf %533, %534 : vector<16x1xf32>
    %536 = vector.broadcast %535 : vector<16x1xf32> to vector<16x32xf32>
    %537 = arith.subf %527, %536 : vector<16x32xf32>
    %538 = arith.mulf %537, %537 : vector<16x32xf32>
    %cst_181 = arith.constant dense<0.000000e+00> : vector<16xf32>
    %539 = vector.multi_reduction <add>, %538, %cst_181 [1] : vector<16x32xf32> to vector<16xf32>
    %540 = vector.shape_cast %539 : vector<16xf32> to vector<16x1xf32>
    %cst_182 = arith.constant 3.200000e+01 : f32
    %541 = vector.broadcast %cst_182 : f32 to vector<16x1xf32>
    %542 = arith.divf %540, %541 : vector<16x1xf32>
    %543 = vector.broadcast %535 : vector<16x1xf32> to vector<16x32xf32>
    %544 = arith.subf %527, %543 : vector<16x32xf32>
    %cst_183 = arith.constant 9.99999996E-13 : f32
    %545 = vector.broadcast %cst_183 : f32 to vector<16x1xf32>
    %546 = arith.addf %542, %545 : vector<16x1xf32>
    %547 = math.rsqrt %546 : vector<16x1xf32>
    %548 = vector.broadcast %547 : vector<16x1xf32> to vector<16x32xf32>
    %549 = arith.mulf %544, %548 : vector<16x32xf32>
    %550 = vector.broadcast %529 : vector<1x32xf32> to vector<16x32xf32>
    %551 = arith.mulf %549, %550 : vector<16x32xf32>
    %552 = vector.broadcast %531 : vector<1x32xf32> to vector<16x32xf32>
    %553 = arith.addf %551, %552 : vector<16x32xf32>
    %c1_184 = arith.constant 1 : index
    %c0_185 = arith.constant 0 : index
    %c0_186 = arith.constant 0 : index
    %554 = vector.load %arg12[%c1_184, %c0_185, %c0_186] : memref<2x32x64xf32, #tpu.memory_space<vmem>>, vector<1x32x64xf32>
    %555 = vector.shape_cast %554 : vector<1x32x64xf32> to vector<32x64xf32>
    %cst_187 = arith.constant dense<0.000000e+00> : vector<16x64xf32>
    %556 = tpu.matmul %553, %555, %cst_187 {dimension_numbers = #tpu.dot_dimension_numbers<[1], [0], [0], [1], [0, 0, 1, 1], [], []>} : vector<16x32xf32>, vector<32x64xf32>, vector<16x64xf32> -> vector<16x64xf32>
    %c1_188 = arith.constant 1 : index
    %c0_189 = arith.constant 0 : index
    %c0_190 = arith.constant 0 : index
    %557 = vector.load %arg13[%c1_188, %c0_189, %c0_190] : memref<2x1x64xf32, #tpu.memory_space<vmem>>, vector<1x1x64xf32>
    %558 = vector.shape_cast %557 : vector<1x1x64xf32> to vector<1x64xf32>
    %559 = vector.broadcast %558 : vector<1x64xf32> to vector<16x64xf32>
    %560 = arith.addf %556, %559 : vector<16x64xf32>
    %561 = arith.mulf %560, %560 : vector<16x64xf32>
    %562 = arith.mulf %560, %561 : vector<16x64xf32>
    %cst_191 = arith.constant 4.471500e-02 : f32
    %563 = vector.broadcast %cst_191 : f32 to vector<16x64xf32>
    %564 = arith.mulf %563, %562 : vector<16x64xf32>
    %565 = arith.addf %560, %564 : vector<16x64xf32>
    %cst_192 = arith.constant 0.797884583 : f32
    %566 = vector.broadcast %cst_192 : f32 to vector<16x64xf32>
    %567 = arith.mulf %566, %565 : vector<16x64xf32>
    %568 = math.tanh %567 : vector<16x64xf32>
    %cst_193 = arith.constant 1.000000e+00 : f32
    %569 = vector.broadcast %cst_193 : f32 to vector<16x64xf32>
    %570 = arith.addf %569, %568 : vector<16x64xf32>
    %cst_194 = arith.constant 5.000000e-01 : f32
    %571 = vector.broadcast %cst_194 : f32 to vector<16x64xf32>
    %572 = arith.mulf %571, %570 : vector<16x64xf32>
    %573 = arith.mulf %560, %572 : vector<16x64xf32>
    %c1_195 = arith.constant 1 : index
    %c0_196 = arith.constant 0 : index
    %c0_197 = arith.constant 0 : index
    %574 = vector.load %arg14[%c1_195, %c0_196, %c0_197] : memref<2x64x32xf32, #tpu.memory_space<vmem>>, vector<1x64x32xf32>
    %575 = vector.shape_cast %574 : vector<1x64x32xf32> to vector<64x32xf32>
    %cst_198 = arith.constant dense<0.000000e+00> : vector<16x32xf32>
    %576 = tpu.matmul %573, %575, %cst_198 {dimension_numbers = #tpu.dot_dimension_numbers<[1], [0], [0], [1], [0, 0, 1, 1], [], []>} : vector<16x64xf32>, vector<64x32xf32>, vector<16x32xf32> -> vector<16x32xf32>
    %c1_199 = arith.constant 1 : index
    %c0_200 = arith.constant 0 : index
    %c0_201 = arith.constant 0 : index
    %577 = vector.load %arg15[%c1_199, %c0_200, %c0_201] : memref<2x1x32xf32, #tpu.memory_space<vmem>>, vector<1x1x32xf32>
    %578 = vector.shape_cast %577 : vector<1x1x32xf32> to vector<1x32xf32>
    %579 = vector.broadcast %578 : vector<1x32xf32> to vector<16x32xf32>
    %580 = arith.addf %576, %579 : vector<16x32xf32>
    %581 = arith.addf %553, %580 : vector<16x32xf32>
    %c1_202 = arith.constant 1 : index
    %c0_203 = arith.constant 0 : index
    %c0_204 = arith.constant 0 : index
    %582 = vector.load %arg16[%c1_202, %c0_203, %c0_204] : memref<2x1x32xf32, #tpu.memory_space<vmem>>, vector<1x1x32xf32>
    %583 = vector.shape_cast %582 : vector<1x1x32xf32> to vector<1x32xf32>
    %c1_205 = arith.constant 1 : index
    %c0_206 = arith.constant 0 : index
    %c0_207 = arith.constant 0 : index
    %584 = vector.load %arg17[%c1_205, %c0_206, %c0_207] : memref<2x1x32xf32, #tpu.memory_space<vmem>>, vector<1x1x32xf32>
    %585 = vector.shape_cast %584 : vector<1x1x32xf32> to vector<1x32xf32>
    %cst_208 = arith.constant dense<0.000000e+00> : vector<16xf32>
    %586 = vector.multi_reduction <add>, %581, %cst_208 [1] : vector<16x32xf32> to vector<16xf32>
    %587 = vector.shape_cast %586 : vector<16xf32> to vector<16x1xf32>
    %cst_209 = arith.constant 3.200000e+01 : f32
    %588 = vector.broadcast %cst_209 : f32 to vector<16x1xf32>
    %589 = arith.divf %587, %588 : vector<16x1xf32>
    %590 = vector.broadcast %589 : vector<16x1xf32> to vector<16x32xf32>
    %591 = arith.subf %581, %590 : vector<16x32xf32>
    %592 = arith.mulf %591, %591 : vector<16x32xf32>
    %cst_210 = arith.constant dense<0.000000e+00> : vector<16xf32>
    %593 = vector.multi_reduction <add>, %592, %cst_210 [1] : vector<16x32xf32> to vector<16xf32>
    %594 = vector.shape_cast %593 : vector<16xf32> to vector<16x1xf32>
    %cst_211 = arith.constant 3.200000e+01 : f32
    %595 = vector.broadcast %cst_211 : f32 to vector<16x1xf32>
    %596 = arith.divf %594, %595 : vector<16x1xf32>
    %597 = vector.broadcast %589 : vector<16x1xf32> to vector<16x32xf32>
    %598 = arith.subf %581, %597 : vector<16x32xf32>
    %cst_212 = arith.constant 9.99999996E-13 : f32
    %599 = vector.broadcast %cst_212 : f32 to vector<16x1xf32>
    %600 = arith.addf %596, %599 : vector<16x1xf32>
    %601 = math.rsqrt %600 : vector<16x1xf32>
    %602 = vector.broadcast %601 : vector<16x1xf32> to vector<16x32xf32>
    %603 = arith.mulf %598, %602 : vector<16x32xf32>
    %604 = vector.broadcast %583 : vector<1x32xf32> to vector<16x32xf32>
    %605 = arith.mulf %603, %604 : vector<16x32xf32>
    %606 = vector.broadcast %585 : vector<1x32xf32> to vector<16x32xf32>
    %607 = arith.addf %605, %606 : vector<16x32xf32>
    %c0_213 = arith.constant 0 : index
    %c0_214 = arith.constant 0 : index
    %608 = vector.load %arg18[%c0_213, %c0_214] : memref<32x192xf32, #tpu.memory_space<vmem>>, vector<32x192xf32>
    %cst_215 = arith.constant dense<0.000000e+00> : vector<16x192xf32>
    %609 = tpu.matmul %607, %608, %cst_215 {dimension_numbers = #tpu.dot_dimension_numbers<[1], [0], [0], [1], [0, 0, 1, 1], [], []>} : vector<16x32xf32>, vector<32x192xf32>, vector<16x192xf32> -> vector<16x192xf32>
    %c0_216 = arith.constant 0 : index
    %c0_217 = arith.constant 0 : index
    %610 = vector.load %arg20[%c0_216, %c0_217] : memref<1x192xf32, #tpu.memory_space<vmem>>, vector<1x192xf32>
    %611 = vector.broadcast %610 : vector<1x192xf32> to vector<16x192xf32>
    %612 = arith.addf %609, %611 : vector<16x192xf32>
    %c0_218 = arith.constant 0 : index
    %c0_219 = arith.constant 0 : index
    %613 = vector.load %arg19[%c0_218, %c0_219] : memref<32x192xf32, #tpu.memory_space<vmem>>, vector<32x192xf32>
    %cst_220 = arith.constant dense<0.000000e+00> : vector<16x192xf32>
    %614 = tpu.matmul %607, %613, %cst_220 {dimension_numbers = #tpu.dot_dimension_numbers<[1], [0], [0], [1], [0, 0, 1, 1], [], []>} : vector<16x32xf32>, vector<32x192xf32>, vector<16x192xf32> -> vector<16x192xf32>
    %c0_221 = arith.constant 0 : index
    %c0_222 = arith.constant 0 : index
    %615 = vector.load %arg21[%c0_221, %c0_222] : memref<64x192xf32, #tpu.memory_space<vmem>>, vector<64x192xf32>
    %c0_223 = arith.constant 0 : index
    %c0_224 = arith.constant 0 : index
    %616 = vector.load %arg22[%c0_223, %c0_224] : memref<1x192xf32, #tpu.memory_space<vmem>>, vector<1x192xf32>
    %cst_225 = arith.constant 0.000000e+00 : f32
    %617 = vector.broadcast %cst_225 : f32 to vector<2x64xf32>
    %618 = vector.extract_strided_slice %612 {offsets = [0, 0], sizes = [1, 192], strides = [1, 1]} : vector<16x192xf32> to vector<1x192xf32>
    %619 = vector.extract_strided_slice %614 {offsets = [7, 0], sizes = [1, 192], strides = [1, 1]} : vector<16x192xf32> to vector<1x192xf32>
    %620 = arith.addf %618, %619 : vector<1x192xf32>
    %621 = vector.extract_strided_slice %612 {offsets = [8, 0], sizes = [1, 192], strides = [1, 1]} : vector<16x192xf32> to vector<1x192xf32>
    %622 = vector.extract_strided_slice %614 {offsets = [15, 0], sizes = [1, 192], strides = [1, 1]} : vector<16x192xf32> to vector<1x192xf32>
    %623 = arith.addf %621, %622 : vector<1x192xf32>
    %624 = tpu.concatenate %620, %623 in 0 : vector<1x192xf32>, vector<1x192xf32> -> vector<2x192xf32>
    %cst_226 = arith.constant dense<0.000000e+00> : vector<2x192xf32>
    %625 = tpu.matmul %617, %615, %cst_226 {dimension_numbers = #tpu.dot_dimension_numbers<[1], [0], [0], [1], [0, 0, 1, 1], [], []>} : vector<2x64xf32>, vector<64x192xf32>, vector<2x192xf32> -> vector<2x192xf32>
    %626 = vector.broadcast %616 : vector<1x192xf32> to vector<2x192xf32>
    %627 = arith.addf %625, %626 : vector<2x192xf32>
    %628 = vector.extract_strided_slice %624 {offsets = [0, 0], sizes = [2, 64], strides = [1, 1]} : vector<2x192xf32> to vector<2x64xf32>
    %629 = vector.extract_strided_slice %627 {offsets = [0, 0], sizes = [2, 64], strides = [1, 1]} : vector<2x192xf32> to vector<2x64xf32>
    %630 = arith.addf %628, %629 : vector<2x64xf32>
    %631 = arith.negf %630 : vector<2x64xf32>
    %632 = math.exp %631 : vector<2x64xf32>
    %cst_227 = arith.constant 1.000000e+00 : f32
    %633 = vector.broadcast %cst_227 : f32 to vector<2x64xf32>
    %634 = arith.addf %633, %632 : vector<2x64xf32>
    %635 = arith.divf %633, %634 : vector<2x64xf32>
    %636 = vector.extract_strided_slice %624 {offsets = [0, 64], sizes = [2, 64], strides = [1, 1]} : vector<2x192xf32> to vector<2x64xf32>
    %637 = vector.extract_strided_slice %627 {offsets = [0, 64], sizes = [2, 64], strides = [1, 1]} : vector<2x192xf32> to vector<2x64xf32>
    %638 = arith.addf %636, %637 : vector<2x64xf32>
    %639 = arith.negf %638 : vector<2x64xf32>
    %640 = math.exp %639 : vector<2x64xf32>
    %cst_228 = arith.constant 1.000000e+00 : f32
    %641 = vector.broadcast %cst_228 : f32 to vector<2x64xf32>
    %642 = arith.addf %641, %640 : vector<2x64xf32>
    %643 = arith.divf %641, %642 : vector<2x64xf32>
    %644 = vector.extract_strided_slice %624 {offsets = [0, 128], sizes = [2, 64], strides = [1, 1]} : vector<2x192xf32> to vector<2x64xf32>
    %645 = vector.extract_strided_slice %627 {offsets = [0, 128], sizes = [2, 64], strides = [1, 1]} : vector<2x192xf32> to vector<2x64xf32>
    %646 = arith.mulf %635, %645 : vector<2x64xf32>
    %647 = arith.addf %644, %646 : vector<2x64xf32>
    %648 = math.tanh %647 : vector<2x64xf32>
    %cst_229 = arith.constant 1.000000e+00 : f32
    %649 = vector.broadcast %cst_229 : f32 to vector<2x64xf32>
    %650 = arith.subf %649, %643 : vector<2x64xf32>
    %651 = arith.mulf %650, %648 : vector<2x64xf32>
    %652 = arith.mulf %643, %617 : vector<2x64xf32>
    %653 = arith.addf %651, %652 : vector<2x64xf32>
    %654 = vector.extract_strided_slice %653 {offsets = [0, 0], sizes = [1, 32], strides = [1, 1]} : vector<2x64xf32> to vector<1x32xf32>
    %c0_230 = arith.constant 0 : index
    %c0_231 = arith.constant 0 : index
    %655 = vector.load %arg29[%c0_230, %c0_231] : memref<16x64xf32, #tpu.memory_space<vmem>>, vector<1x32xf32>
    tpu.vector_store %arg29[%c0_230, %c0_231], %654 {strides = array<i32>} : memref<16x64xf32, #tpu.memory_space<vmem>>, vector<1x32xf32>,
    %656 = vector.extract_strided_slice %653 {offsets = [0, 32], sizes = [1, 32], strides = [1, 1]} : vector<2x64xf32> to vector<1x32xf32>
    %c7 = arith.constant 7 : index
    %c32 = arith.constant 32 : index
    %657 = vector.load %arg29[%c7, %c32] : memref<16x64xf32, #tpu.memory_space<vmem>>, vector<1x32xf32>
    tpu.vector_store %arg29[%c7, %c32], %656 {strides = array<i32>} : memref<16x64xf32, #tpu.memory_space<vmem>>, vector<1x32xf32>,
    %658 = vector.extract_strided_slice %653 {offsets = [1, 0], sizes = [1, 32], strides = [1, 1]} : vector<2x64xf32> to vector<1x32xf32>
    %c8 = arith.constant 8 : index
    %c0_232 = arith.constant 0 : index
    %659 = vector.load %arg29[%c8, %c0_232] : memref<16x64xf32, #tpu.memory_space<vmem>>, vector<1x32xf32>
    tpu.vector_store %arg29[%c8, %c0_232], %658 {strides = array<i32>} : memref<16x64xf32, #tpu.memory_space<vmem>>, vector<1x32xf32>,
    %660 = vector.extract_strided_slice %653 {offsets = [1, 32], sizes = [1, 32], strides = [1, 1]} : vector<2x64xf32> to vector<1x32xf32>
    %c15 = arith.constant 15 : index
    %c32_233 = arith.constant 32 : index
    %661 = vector.load %arg29[%c15, %c32_233] : memref<16x64xf32, #tpu.memory_space<vmem>>, vector<1x32xf32>
    tpu.vector_store %arg29[%c15, %c32_233], %660 {strides = array<i32>} : memref<16x64xf32, #tpu.memory_space<vmem>>, vector<1x32xf32>,
    %662 = vector.extract_strided_slice %612 {offsets = [1, 0], sizes = [1, 192], strides = [1, 1]} : vector<16x192xf32> to vector<1x192xf32>
    %663 = vector.extract_strided_slice %614 {offsets = [6, 0], sizes = [1, 192], strides = [1, 1]} : vector<16x192xf32> to vector<1x192xf32>
    %664 = arith.addf %662, %663 : vector<1x192xf32>
    %665 = vector.extract_strided_slice %612 {offsets = [9, 0], sizes = [1, 192], strides = [1, 1]} : vector<16x192xf32> to vector<1x192xf32>
    %666 = vector.extract_strided_slice %614 {offsets = [14, 0], sizes = [1, 192], strides = [1, 1]} : vector<16x192xf32> to vector<1x192xf32>
    %667 = arith.addf %665, %666 : vector<1x192xf32>
    %668 = tpu.concatenate %664, %667 in 0 : vector<1x192xf32>, vector<1x192xf32> -> vector<2x192xf32>
    %cst_234 = arith.constant dense<0.000000e+00> : vector<2x192xf32>
    %669 = tpu.matmul %653, %615, %cst_234 {dimension_numbers = #tpu.dot_dimension_numbers<[1], [0], [0], [1], [0, 0, 1, 1], [], []>} : vector<2x64xf32>, vector<64x192xf32>, vector<2x192xf32> -> vector<2x192xf32>
    %670 = vector.broadcast %616 : vector<1x192xf32> to vector<2x192xf32>
    %671 = arith.addf %669, %670 : vector<2x192xf32>
    %672 = vector.extract_strided_slice %668 {offsets = [0, 0], sizes = [2, 64], strides = [1, 1]} : vector<2x192xf32> to vector<2x64xf32>
    %673 = vector.extract_strided_slice %671 {offsets = [0, 0], sizes = [2, 64], strides = [1, 1]} : vector<2x192xf32> to vector<2x64xf32>
    %674 = arith.addf %672, %673 : vector<2x64xf32>
    %675 = arith.negf %674 : vector<2x64xf32>
    %676 = math.exp %675 : vector<2x64xf32>
    %cst_235 = arith.constant 1.000000e+00 : f32
    %677 = vector.broadcast %cst_235 : f32 to vector<2x64xf32>
    %678 = arith.addf %677, %676 : vector<2x64xf32>
    %679 = arith.divf %677, %678 : vector<2x64xf32>
    %680 = vector.extract_strided_slice %668 {offsets = [0, 64], sizes = [2, 64], strides = [1, 1]} : vector<2x192xf32> to vector<2x64xf32>
    %681 = vector.extract_strided_slice %671 {offsets = [0, 64], sizes = [2, 64], strides = [1, 1]} : vector<2x192xf32> to vector<2x64xf32>
    %682 = arith.addf %680, %681 : vector<2x64xf32>
    %683 = arith.negf %682 : vector<2x64xf32>
    %684 = math.exp %683 : vector<2x64xf32>
    %cst_236 = arith.constant 1.000000e+00 : f32
    %685 = vector.broadcast %cst_236 : f32 to vector<2x64xf32>
    %686 = arith.addf %685, %684 : vector<2x64xf32>
    %687 = arith.divf %685, %686 : vector<2x64xf32>
    %688 = vector.extract_strided_slice %668 {offsets = [0, 128], sizes = [2, 64], strides = [1, 1]} : vector<2x192xf32> to vector<2x64xf32>
    %689 = vector.extract_strided_slice %671 {offsets = [0, 128], sizes = [2, 64], strides = [1, 1]} : vector<2x192xf32> to vector<2x64xf32>
    %690 = arith.mulf %679, %689 : vector<2x64xf32>
    %691 = arith.addf %688, %690 : vector<2x64xf32>
    %692 = math.tanh %691 : vector<2x64xf32>
    %cst_237 = arith.constant 1.000000e+00 : f32
    %693 = vector.broadcast %cst_237 : f32 to vector<2x64xf32>
    %694 = arith.subf %693, %687 : vector<2x64xf32>
    %695 = arith.mulf %694, %692 : vector<2x64xf32>
    %696 = arith.mulf %687, %653 : vector<2x64xf32>
    %697 = arith.addf %695, %696 : vector<2x64xf32>
    %698 = vector.extract_strided_slice %697 {offsets = [0, 0], sizes = [1, 32], strides = [1, 1]} : vector<2x64xf32> to vector<1x32xf32>
    %c1_238 = arith.constant 1 : index
    %c0_239 = arith.constant 0 : index
    %699 = vector.load %arg29[%c1_238, %c0_239] : memref<16x64xf32, #tpu.memory_space<vmem>>, vector<1x32xf32>
    tpu.vector_store %arg29[%c1_238, %c0_239], %698 {strides = array<i32>} : memref<16x64xf32, #tpu.memory_space<vmem>>, vector<1x32xf32>,
    %700 = vector.extract_strided_slice %697 {offsets = [0, 32], sizes = [1, 32], strides = [1, 1]} : vector<2x64xf32> to vector<1x32xf32>
    %c6 = arith.constant 6 : index
    %c32_240 = arith.constant 32 : index
    %701 = vector.load %arg29[%c6, %c32_240] : memref<16x64xf32, #tpu.memory_space<vmem>>, vector<1x32xf32>
    tpu.vector_store %arg29[%c6, %c32_240], %700 {strides = array<i32>} : memref<16x64xf32, #tpu.memory_space<vmem>>, vector<1x32xf32>,
    %702 = vector.extract_strided_slice %697 {offsets = [1, 0], sizes = [1, 32], strides = [1, 1]} : vector<2x64xf32> to vector<1x32xf32>
    %c9 = arith.constant 9 : index
    %c0_241 = arith.constant 0 : index
    %703 = vector.load %arg29[%c9, %c0_241] : memref<16x64xf32, #tpu.memory_space<vmem>>, vector<1x32xf32>
    tpu.vector_store %arg29[%c9, %c0_241], %702 {strides = array<i32>} : memref<16x64xf32, #tpu.memory_space<vmem>>, vector<1x32xf32>,
    %704 = vector.extract_strided_slice %697 {offsets = [1, 32], sizes = [1, 32], strides = [1, 1]} : vector<2x64xf32> to vector<1x32xf32>
    %c14 = arith.constant 14 : index
    %c32_242 = arith.constant 32 : index
    %705 = vector.load %arg29[%c14, %c32_242] : memref<16x64xf32, #tpu.memory_space<vmem>>, vector<1x32xf32>
    tpu.vector_store %arg29[%c14, %c32_242], %704 {strides = array<i32>} : memref<16x64xf32, #tpu.memory_space<vmem>>, vector<1x32xf32>,
    %706 = vector.extract_strided_slice %612 {offsets = [2, 0], sizes = [1, 192], strides = [1, 1]} : vector<16x192xf32> to vector<1x192xf32>
    %707 = vector.extract_strided_slice %614 {offsets = [5, 0], sizes = [1, 192], strides = [1, 1]} : vector<16x192xf32> to vector<1x192xf32>
    %708 = arith.addf %706, %707 : vector<1x192xf32>
    %709 = vector.extract_strided_slice %612 {offsets = [10, 0], sizes = [1, 192], strides = [1, 1]} : vector<16x192xf32> to vector<1x192xf32>
    %710 = vector.extract_strided_slice %614 {offsets = [13, 0], sizes = [1, 192], strides = [1, 1]} : vector<16x192xf32> to vector<1x192xf32>
    %711 = arith.addf %709, %710 : vector<1x192xf32>
    %712 = tpu.concatenate %708, %711 in 0 : vector<1x192xf32>, vector<1x192xf32> -> vector<2x192xf32>
    %cst_243 = arith.constant dense<0.000000e+00> : vector<2x192xf32>
    %713 = tpu.matmul %697, %615, %cst_243 {dimension_numbers = #tpu.dot_dimension_numbers<[1], [0], [0], [1], [0, 0, 1, 1], [], []>} : vector<2x64xf32>, vector<64x192xf32>, vector<2x192xf32> -> vector<2x192xf32>
    %714 = vector.broadcast %616 : vector<1x192xf32> to vector<2x192xf32>
    %715 = arith.addf %713, %714 : vector<2x192xf32>
    %716 = vector.extract_strided_slice %712 {offsets = [0, 0], sizes = [2, 64], strides = [1, 1]} : vector<2x192xf32> to vector<2x64xf32>
    %717 = vector.extract_strided_slice %715 {offsets = [0, 0], sizes = [2, 64], strides = [1, 1]} : vector<2x192xf32> to vector<2x64xf32>
    %718 = arith.addf %716, %717 : vector<2x64xf32>
    %719 = arith.negf %718 : vector<2x64xf32>
    %720 = math.exp %719 : vector<2x64xf32>
    %cst_244 = arith.constant 1.000000e+00 : f32
    %721 = vector.broadcast %cst_244 : f32 to vector<2x64xf32>
    %722 = arith.addf %721, %720 : vector<2x64xf32>
    %723 = arith.divf %721, %722 : vector<2x64xf32>
    %724 = vector.extract_strided_slice %712 {offsets = [0, 64], sizes = [2, 64], strides = [1, 1]} : vector<2x192xf32> to vector<2x64xf32>
    %725 = vector.extract_strided_slice %715 {offsets = [0, 64], sizes = [2, 64], strides = [1, 1]} : vector<2x192xf32> to vector<2x64xf32>
    %726 = arith.addf %724, %725 : vector<2x64xf32>
    %727 = arith.negf %726 : vector<2x64xf32>
    %728 = math.exp %727 : vector<2x64xf32>
    %cst_245 = arith.constant 1.000000e+00 : f32
    %729 = vector.broadcast %cst_245 : f32 to vector<2x64xf32>
    %730 = arith.addf %729, %728 : vector<2x64xf32>
    %731 = arith.divf %729, %730 : vector<2x64xf32>
    %732 = vector.extract_strided_slice %712 {offsets = [0, 128], sizes = [2, 64], strides = [1, 1]} : vector<2x192xf32> to vector<2x64xf32>
    %733 = vector.extract_strided_slice %715 {offsets = [0, 128], sizes = [2, 64], strides = [1, 1]} : vector<2x192xf32> to vector<2x64xf32>
    %734 = arith.mulf %723, %733 : vector<2x64xf32>
    %735 = arith.addf %732, %734 : vector<2x64xf32>
    %736 = math.tanh %735 : vector<2x64xf32>
    %cst_246 = arith.constant 1.000000e+00 : f32
    %737 = vector.broadcast %cst_246 : f32 to vector<2x64xf32>
    %738 = arith.subf %737, %731 : vector<2x64xf32>
    %739 = arith.mulf %738, %736 : vector<2x64xf32>
    %740 = arith.mulf %731, %697 : vector<2x64xf32>
    %741 = arith.addf %739, %740 : vector<2x64xf32>
    %742 = vector.extract_strided_slice %741 {offsets = [0, 0], sizes = [1, 32], strides = [1, 1]} : vector<2x64xf32> to vector<1x32xf32>
    %c2 = arith.constant 2 : index
    %c0_247 = arith.constant 0 : index
    %743 = vector.load %arg29[%c2, %c0_247] : memref<16x64xf32, #tpu.memory_space<vmem>>, vector<1x32xf32>
    tpu.vector_store %arg29[%c2, %c0_247], %742 {strides = array<i32>} : memref<16x64xf32, #tpu.memory_space<vmem>>, vector<1x32xf32>,
    %744 = vector.extract_strided_slice %741 {offsets = [0, 32], sizes = [1, 32], strides = [1, 1]} : vector<2x64xf32> to vector<1x32xf32>
    %c5 = arith.constant 5 : index
    %c32_248 = arith.constant 32 : index
    %745 = vector.load %arg29[%c5, %c32_248] : memref<16x64xf32, #tpu.memory_space<vmem>>, vector<1x32xf32>
    tpu.vector_store %arg29[%c5, %c32_248], %744 {strides = array<i32>} : memref<16x64xf32, #tpu.memory_space<vmem>>, vector<1x32xf32>,
    %746 = vector.extract_strided_slice %741 {offsets = [1, 0], sizes = [1, 32], strides = [1, 1]} : vector<2x64xf32> to vector<1x32xf32>
    %c10 = arith.constant 10 : index
    %c0_249 = arith.constant 0 : index
    %747 = vector.load %arg29[%c10, %c0_249] : memref<16x64xf32, #tpu.memory_space<vmem>>, vector<1x32xf32>
    tpu.vector_store %arg29[%c10, %c0_249], %746 {strides = array<i32>} : memref<16x64xf32, #tpu.memory_space<vmem>>, vector<1x32xf32>,
    %748 = vector.extract_strided_slice %741 {offsets = [1, 32], sizes = [1, 32], strides = [1, 1]} : vector<2x64xf32> to vector<1x32xf32>
    %c13 = arith.constant 13 : index
    %c32_250 = arith.constant 32 : index
    %749 = vector.load %arg29[%c13, %c32_250] : memref<16x64xf32, #tpu.memory_space<vmem>>, vector<1x32xf32>
    tpu.vector_store %arg29[%c13, %c32_250], %748 {strides = array<i32>} : memref<16x64xf32, #tpu.memory_space<vmem>>, vector<1x32xf32>,
    %750 = vector.extract_strided_slice %612 {offsets = [3, 0], sizes = [1, 192], strides = [1, 1]} : vector<16x192xf32> to vector<1x192xf32>
    %751 = vector.extract_strided_slice %614 {offsets = [4, 0], sizes = [1, 192], strides = [1, 1]} : vector<16x192xf32> to vector<1x192xf32>
    %752 = arith.addf %750, %751 : vector<1x192xf32>
    %753 = vector.extract_strided_slice %612 {offsets = [11, 0], sizes = [1, 192], strides = [1, 1]} : vector<16x192xf32> to vector<1x192xf32>
    %754 = vector.extract_strided_slice %614 {offsets = [12, 0], sizes = [1, 192], strides = [1, 1]} : vector<16x192xf32> to vector<1x192xf32>
    %755 = arith.addf %753, %754 : vector<1x192xf32>
    %756 = tpu.concatenate %752, %755 in 0 : vector<1x192xf32>, vector<1x192xf32> -> vector<2x192xf32>
    %cst_251 = arith.constant dense<0.000000e+00> : vector<2x192xf32>
    %757 = tpu.matmul %741, %615, %cst_251 {dimension_numbers = #tpu.dot_dimension_numbers<[1], [0], [0], [1], [0, 0, 1, 1], [], []>} : vector<2x64xf32>, vector<64x192xf32>, vector<2x192xf32> -> vector<2x192xf32>
    %758 = vector.broadcast %616 : vector<1x192xf32> to vector<2x192xf32>
    %759 = arith.addf %757, %758 : vector<2x192xf32>
    %760 = vector.extract_strided_slice %756 {offsets = [0, 0], sizes = [2, 64], strides = [1, 1]} : vector<2x192xf32> to vector<2x64xf32>
    %761 = vector.extract_strided_slice %759 {offsets = [0, 0], sizes = [2, 64], strides = [1, 1]} : vector<2x192xf32> to vector<2x64xf32>
    %762 = arith.addf %760, %761 : vector<2x64xf32>
    %763 = arith.negf %762 : vector<2x64xf32>
    %764 = math.exp %763 : vector<2x64xf32>
    %cst_252 = arith.constant 1.000000e+00 : f32
    %765 = vector.broadcast %cst_252 : f32 to vector<2x64xf32>
    %766 = arith.addf %765, %764 : vector<2x64xf32>
    %767 = arith.divf %765, %766 : vector<2x64xf32>
    %768 = vector.extract_strided_slice %756 {offsets = [0, 64], sizes = [2, 64], strides = [1, 1]} : vector<2x192xf32> to vector<2x64xf32>
    %769 = vector.extract_strided_slice %759 {offsets = [0, 64], sizes = [2, 64], strides = [1, 1]} : vector<2x192xf32> to vector<2x64xf32>
    %770 = arith.addf %768, %769 : vector<2x64xf32>
    %771 = arith.negf %770 : vector<2x64xf32>
    %772 = math.exp %771 : vector<2x64xf32>
    %cst_253 = arith.constant 1.000000e+00 : f32
    %773 = vector.broadcast %cst_253 : f32 to vector<2x64xf32>
    %774 = arith.addf %773, %772 : vector<2x64xf32>
    %775 = arith.divf %773, %774 : vector<2x64xf32>
    %776 = vector.extract_strided_slice %756 {offsets = [0, 128], sizes = [2, 64], strides = [1, 1]} : vector<2x192xf32> to vector<2x64xf32>
    %777 = vector.extract_strided_slice %759 {offsets = [0, 128], sizes = [2, 64], strides = [1, 1]} : vector<2x192xf32> to vector<2x64xf32>
    %778 = arith.mulf %767, %777 : vector<2x64xf32>
    %779 = arith.addf %776, %778 : vector<2x64xf32>
    %780 = math.tanh %779 : vector<2x64xf32>
    %cst_254 = arith.constant 1.000000e+00 : f32
    %781 = vector.broadcast %cst_254 : f32 to vector<2x64xf32>
    %782 = arith.subf %781, %775 : vector<2x64xf32>
    %783 = arith.mulf %782, %780 : vector<2x64xf32>
    %784 = arith.mulf %775, %741 : vector<2x64xf32>
    %785 = arith.addf %783, %784 : vector<2x64xf32>
    %786 = vector.extract_strided_slice %785 {offsets = [0, 0], sizes = [1, 32], strides = [1, 1]} : vector<2x64xf32> to vector<1x32xf32>
    %c3 = arith.constant 3 : index
    %c0_255 = arith.constant 0 : index
    %787 = vector.load %arg29[%c3, %c0_255] : memref<16x64xf32, #tpu.memory_space<vmem>>, vector<1x32xf32>
    tpu.vector_store %arg29[%c3, %c0_255], %786 {strides = array<i32>} : memref<16x64xf32, #tpu.memory_space<vmem>>, vector<1x32xf32>,
    %788 = vector.extract_strided_slice %785 {offsets = [0, 32], sizes = [1, 32], strides = [1, 1]} : vector<2x64xf32> to vector<1x32xf32>
    %c4 = arith.constant 4 : index
    %c32_256 = arith.constant 32 : index
    %789 = vector.load %arg29[%c4, %c32_256] : memref<16x64xf32, #tpu.memory_space<vmem>>, vector<1x32xf32>
    tpu.vector_store %arg29[%c4, %c32_256], %788 {strides = array<i32>} : memref<16x64xf32, #tpu.memory_space<vmem>>, vector<1x32xf32>,
    %790 = vector.extract_strided_slice %785 {offsets = [1, 0], sizes = [1, 32], strides = [1, 1]} : vector<2x64xf32> to vector<1x32xf32>
    %c11 = arith.constant 11 : index
    %c0_257 = arith.constant 0 : index
    %791 = vector.load %arg29[%c11, %c0_257] : memref<16x64xf32, #tpu.memory_space<vmem>>, vector<1x32xf32>
    tpu.vector_store %arg29[%c11, %c0_257], %790 {strides = array<i32>} : memref<16x64xf32, #tpu.memory_space<vmem>>, vector<1x32xf32>,
    %792 = vector.extract_strided_slice %785 {offsets = [1, 32], sizes = [1, 32], strides = [1, 1]} : vector<2x64xf32> to vector<1x32xf32>
    %c12 = arith.constant 12 : index
    %c32_258 = arith.constant 32 : index
    %793 = vector.load %arg29[%c12, %c32_258] : memref<16x64xf32, #tpu.memory_space<vmem>>, vector<1x32xf32>
    tpu.vector_store %arg29[%c12, %c32_258], %792 {strides = array<i32>} : memref<16x64xf32, #tpu.memory_space<vmem>>, vector<1x32xf32>,
    %794 = vector.extract_strided_slice %612 {offsets = [4, 0], sizes = [1, 192], strides = [1, 1]} : vector<16x192xf32> to vector<1x192xf32>
    %795 = vector.extract_strided_slice %614 {offsets = [3, 0], sizes = [1, 192], strides = [1, 1]} : vector<16x192xf32> to vector<1x192xf32>
    %796 = arith.addf %794, %795 : vector<1x192xf32>
    %797 = vector.extract_strided_slice %612 {offsets = [12, 0], sizes = [1, 192], strides = [1, 1]} : vector<16x192xf32> to vector<1x192xf32>
    %798 = vector.extract_strided_slice %614 {offsets = [11, 0], sizes = [1, 192], strides = [1, 1]} : vector<16x192xf32> to vector<1x192xf32>
    %799 = arith.addf %797, %798 : vector<1x192xf32>
    %800 = tpu.concatenate %796, %799 in 0 : vector<1x192xf32>, vector<1x192xf32> -> vector<2x192xf32>
    %cst_259 = arith.constant dense<0.000000e+00> : vector<2x192xf32>
    %801 = tpu.matmul %785, %615, %cst_259 {dimension_numbers = #tpu.dot_dimension_numbers<[1], [0], [0], [1], [0, 0, 1, 1], [], []>} : vector<2x64xf32>, vector<64x192xf32>, vector<2x192xf32> -> vector<2x192xf32>
    %802 = vector.broadcast %616 : vector<1x192xf32> to vector<2x192xf32>
    %803 = arith.addf %801, %802 : vector<2x192xf32>
    %804 = vector.extract_strided_slice %800 {offsets = [0, 0], sizes = [2, 64], strides = [1, 1]} : vector<2x192xf32> to vector<2x64xf32>
    %805 = vector.extract_strided_slice %803 {offsets = [0, 0], sizes = [2, 64], strides = [1, 1]} : vector<2x192xf32> to vector<2x64xf32>
    %806 = arith.addf %804, %805 : vector<2x64xf32>
    %807 = arith.negf %806 : vector<2x64xf32>
    %808 = math.exp %807 : vector<2x64xf32>
    %cst_260 = arith.constant 1.000000e+00 : f32
    %809 = vector.broadcast %cst_260 : f32 to vector<2x64xf32>
    %810 = arith.addf %809, %808 : vector<2x64xf32>
    %811 = arith.divf %809, %810 : vector<2x64xf32>
    %812 = vector.extract_strided_slice %800 {offsets = [0, 64], sizes = [2, 64], strides = [1, 1]} : vector<2x192xf32> to vector<2x64xf32>
    %813 = vector.extract_strided_slice %803 {offsets = [0, 64], sizes = [2, 64], strides = [1, 1]} : vector<2x192xf32> to vector<2x64xf32>
    %814 = arith.addf %812, %813 : vector<2x64xf32>
    %815 = arith.negf %814 : vector<2x64xf32>
    %816 = math.exp %815 : vector<2x64xf32>
    %cst_261 = arith.constant 1.000000e+00 : f32
    %817 = vector.broadcast %cst_261 : f32 to vector<2x64xf32>
    %818 = arith.addf %817, %816 : vector<2x64xf32>
    %819 = arith.divf %817, %818 : vector<2x64xf32>
    %820 = vector.extract_strided_slice %800 {offsets = [0, 128], sizes = [2, 64], strides = [1, 1]} : vector<2x192xf32> to vector<2x64xf32>
    %821 = vector.extract_strided_slice %803 {offsets = [0, 128], sizes = [2, 64], strides = [1, 1]} : vector<2x192xf32> to vector<2x64xf32>
    %822 = arith.mulf %811, %821 : vector<2x64xf32>
    %823 = arith.addf %820, %822 : vector<2x64xf32>
    %824 = math.tanh %823 : vector<2x64xf32>
    %cst_262 = arith.constant 1.000000e+00 : f32
    %825 = vector.broadcast %cst_262 : f32 to vector<2x64xf32>
    %826 = arith.subf %825, %819 : vector<2x64xf32>
    %827 = arith.mulf %826, %824 : vector<2x64xf32>
    %828 = arith.mulf %819, %785 : vector<2x64xf32>
    %829 = arith.addf %827, %828 : vector<2x64xf32>
    %830 = vector.extract_strided_slice %829 {offsets = [0, 0], sizes = [1, 32], strides = [1, 1]} : vector<2x64xf32> to vector<1x32xf32>
    %c4_263 = arith.constant 4 : index
    %c0_264 = arith.constant 0 : index
    %831 = vector.load %arg29[%c4_263, %c0_264] : memref<16x64xf32, #tpu.memory_space<vmem>>, vector<1x32xf32>
    tpu.vector_store %arg29[%c4_263, %c0_264], %830 {strides = array<i32>} : memref<16x64xf32, #tpu.memory_space<vmem>>, vector<1x32xf32>,
    %832 = vector.extract_strided_slice %829 {offsets = [0, 32], sizes = [1, 32], strides = [1, 1]} : vector<2x64xf32> to vector<1x32xf32>
    %c3_265 = arith.constant 3 : index
    %c32_266 = arith.constant 32 : index
    %833 = vector.load %arg29[%c3_265, %c32_266] : memref<16x64xf32, #tpu.memory_space<vmem>>, vector<1x32xf32>
    tpu.vector_store %arg29[%c3_265, %c32_266], %832 {strides = array<i32>} : memref<16x64xf32, #tpu.memory_space<vmem>>, vector<1x32xf32>,
    %834 = vector.extract_strided_slice %829 {offsets = [1, 0], sizes = [1, 32], strides = [1, 1]} : vector<2x64xf32> to vector<1x32xf32>
    %c12_267 = arith.constant 12 : index
    %c0_268 = arith.constant 0 : index
    %835 = vector.load %arg29[%c12_267, %c0_268] : memref<16x64xf32, #tpu.memory_space<vmem>>, vector<1x32xf32>
    tpu.vector_store %arg29[%c12_267, %c0_268], %834 {strides = array<i32>} : memref<16x64xf32, #tpu.memory_space<vmem>>, vector<1x32xf32>,
    %836 = vector.extract_strided_slice %829 {offsets = [1, 32], sizes = [1, 32], strides = [1, 1]} : vector<2x64xf32> to vector<1x32xf32>
    %c11_269 = arith.constant 11 : index
    %c32_270 = arith.constant 32 : index
    %837 = vector.load %arg29[%c11_269, %c32_270] : memref<16x64xf32, #tpu.memory_space<vmem>>, vector<1x32xf32>
    tpu.vector_store %arg29[%c11_269, %c32_270], %836 {strides = array<i32>} : memref<16x64xf32, #tpu.memory_space<vmem>>, vector<1x32xf32>,
    %838 = vector.extract_strided_slice %612 {offsets = [5, 0], sizes = [1, 192], strides = [1, 1]} : vector<16x192xf32> to vector<1x192xf32>
    %839 = vector.extract_strided_slice %614 {offsets = [2, 0], sizes = [1, 192], strides = [1, 1]} : vector<16x192xf32> to vector<1x192xf32>
    %840 = arith.addf %838, %839 : vector<1x192xf32>
    %841 = vector.extract_strided_slice %612 {offsets = [13, 0], sizes = [1, 192], strides = [1, 1]} : vector<16x192xf32> to vector<1x192xf32>
    %842 = vector.extract_strided_slice %614 {offsets = [10, 0], sizes = [1, 192], strides = [1, 1]} : vector<16x192xf32> to vector<1x192xf32>
    %843 = arith.addf %841, %842 : vector<1x192xf32>
    %844 = tpu.concatenate %840, %843 in 0 : vector<1x192xf32>, vector<1x192xf32> -> vector<2x192xf32>
    %cst_271 = arith.constant dense<0.000000e+00> : vector<2x192xf32>
    %845 = tpu.matmul %829, %615, %cst_271 {dimension_numbers = #tpu.dot_dimension_numbers<[1], [0], [0], [1], [0, 0, 1, 1], [], []>} : vector<2x64xf32>, vector<64x192xf32>, vector<2x192xf32> -> vector<2x192xf32>
    %846 = vector.broadcast %616 : vector<1x192xf32> to vector<2x192xf32>
    %847 = arith.addf %845, %846 : vector<2x192xf32>
    %848 = vector.extract_strided_slice %844 {offsets = [0, 0], sizes = [2, 64], strides = [1, 1]} : vector<2x192xf32> to vector<2x64xf32>
    %849 = vector.extract_strided_slice %847 {offsets = [0, 0], sizes = [2, 64], strides = [1, 1]} : vector<2x192xf32> to vector<2x64xf32>
    %850 = arith.addf %848, %849 : vector<2x64xf32>
    %851 = arith.negf %850 : vector<2x64xf32>
    %852 = math.exp %851 : vector<2x64xf32>
    %cst_272 = arith.constant 1.000000e+00 : f32
    %853 = vector.broadcast %cst_272 : f32 to vector<2x64xf32>
    %854 = arith.addf %853, %852 : vector<2x64xf32>
    %855 = arith.divf %853, %854 : vector<2x64xf32>
    %856 = vector.extract_strided_slice %844 {offsets = [0, 64], sizes = [2, 64], strides = [1, 1]} : vector<2x192xf32> to vector<2x64xf32>
    %857 = vector.extract_strided_slice %847 {offsets = [0, 64], sizes = [2, 64], strides = [1, 1]} : vector<2x192xf32> to vector<2x64xf32>
    %858 = arith.addf %856, %857 : vector<2x64xf32>
    %859 = arith.negf %858 : vector<2x64xf32>
    %860 = math.exp %859 : vector<2x64xf32>
    %cst_273 = arith.constant 1.000000e+00 : f32
    %861 = vector.broadcast %cst_273 : f32 to vector<2x64xf32>
    %862 = arith.addf %861, %860 : vector<2x64xf32>
    %863 = arith.divf %861, %862 : vector<2x64xf32>
    %864 = vector.extract_strided_slice %844 {offsets = [0, 128], sizes = [2, 64], strides = [1, 1]} : vector<2x192xf32> to vector<2x64xf32>
    %865 = vector.extract_strided_slice %847 {offsets = [0, 128], sizes = [2, 64], strides = [1, 1]} : vector<2x192xf32> to vector<2x64xf32>
    %866 = arith.mulf %855, %865 : vector<2x64xf32>
    %867 = arith.addf %864, %866 : vector<2x64xf32>
    %868 = math.tanh %867 : vector<2x64xf32>
    %cst_274 = arith.constant 1.000000e+00 : f32
    %869 = vector.broadcast %cst_274 : f32 to vector<2x64xf32>
    %870 = arith.subf %869, %863 : vector<2x64xf32>
    %871 = arith.mulf %870, %868 : vector<2x64xf32>
    %872 = arith.mulf %863, %829 : vector<2x64xf32>
    %873 = arith.addf %871, %872 : vector<2x64xf32>
    %874 = vector.extract_strided_slice %873 {offsets = [0, 0], sizes = [1, 32], strides = [1, 1]} : vector<2x64xf32> to vector<1x32xf32>
    %c5_275 = arith.constant 5 : index
    %c0_276 = arith.constant 0 : index
    %875 = vector.load %arg29[%c5_275, %c0_276] : memref<16x64xf32, #tpu.memory_space<vmem>>, vector<1x32xf32>
    tpu.vector_store %arg29[%c5_275, %c0_276], %874 {strides = array<i32>} : memref<16x64xf32, #tpu.memory_space<vmem>>, vector<1x32xf32>,
    %876 = vector.extract_strided_slice %873 {offsets = [0, 32], sizes = [1, 32], strides = [1, 1]} : vector<2x64xf32> to vector<1x32xf32>
    %c2_277 = arith.constant 2 : index
    %c32_278 = arith.constant 32 : index
    %877 = vector.load %arg29[%c2_277, %c32_278] : memref<16x64xf32, #tpu.memory_space<vmem>>, vector<1x32xf32>
    tpu.vector_store %arg29[%c2_277, %c32_278], %876 {strides = array<i32>} : memref<16x64xf32, #tpu.memory_space<vmem>>, vector<1x32xf32>,
    %878 = vector.extract_strided_slice %873 {offsets = [1, 0], sizes = [1, 32], strides = [1, 1]} : vector<2x64xf32> to vector<1x32xf32>
    %c13_279 = arith.constant 13 : index
    %c0_280 = arith.constant 0 : index
    %879 = vector.load %arg29[%c13_279, %c0_280] : memref<16x64xf32, #tpu.memory_space<vmem>>, vector<1x32xf32>
    tpu.vector_store %arg29[%c13_279, %c0_280], %878 {strides = array<i32>} : memref<16x64xf32, #tpu.memory_space<vmem>>, vector<1x32xf32>,
    %880 = vector.extract_strided_slice %873 {offsets = [1, 32], sizes = [1, 32], strides = [1, 1]} : vector<2x64xf32> to vector<1x32xf32>
    %c10_281 = arith.constant 10 : index
    %c32_282 = arith.constant 32 : index
    %881 = vector.load %arg29[%c10_281, %c32_282] : memref<16x64xf32, #tpu.memory_space<vmem>>, vector<1x32xf32>
    tpu.vector_store %arg29[%c10_281, %c32_282], %880 {strides = array<i32>} : memref<16x64xf32, #tpu.memory_space<vmem>>, vector<1x32xf32>,
    %882 = vector.extract_strided_slice %612 {offsets = [6, 0], sizes = [1, 192], strides = [1, 1]} : vector<16x192xf32> to vector<1x192xf32>
    %883 = vector.extract_strided_slice %614 {offsets = [1, 0], sizes = [1, 192], strides = [1, 1]} : vector<16x192xf32> to vector<1x192xf32>
    %884 = arith.addf %882, %883 : vector<1x192xf32>
    %885 = vector.extract_strided_slice %612 {offsets = [14, 0], sizes = [1, 192], strides = [1, 1]} : vector<16x192xf32> to vector<1x192xf32>
    %886 = vector.extract_strided_slice %614 {offsets = [9, 0], sizes = [1, 192], strides = [1, 1]} : vector<16x192xf32> to vector<1x192xf32>
    %887 = arith.addf %885, %886 : vector<1x192xf32>
    %888 = tpu.concatenate %884, %887 in 0 : vector<1x192xf32>, vector<1x192xf32> -> vector<2x192xf32>
    %cst_283 = arith.constant dense<0.000000e+00> : vector<2x192xf32>
    %889 = tpu.matmul %873, %615, %cst_283 {dimension_numbers = #tpu.dot_dimension_numbers<[1], [0], [0], [1], [0, 0, 1, 1], [], []>} : vector<2x64xf32>, vector<64x192xf32>, vector<2x192xf32> -> vector<2x192xf32>
    %890 = vector.broadcast %616 : vector<1x192xf32> to vector<2x192xf32>
    %891 = arith.addf %889, %890 : vector<2x192xf32>
    %892 = vector.extract_strided_slice %888 {offsets = [0, 0], sizes = [2, 64], strides = [1, 1]} : vector<2x192xf32> to vector<2x64xf32>
    %893 = vector.extract_strided_slice %891 {offsets = [0, 0], sizes = [2, 64], strides = [1, 1]} : vector<2x192xf32> to vector<2x64xf32>
    %894 = arith.addf %892, %893 : vector<2x64xf32>
    %895 = arith.negf %894 : vector<2x64xf32>
    %896 = math.exp %895 : vector<2x64xf32>
    %cst_284 = arith.constant 1.000000e+00 : f32
    %897 = vector.broadcast %cst_284 : f32 to vector<2x64xf32>
    %898 = arith.addf %897, %896 : vector<2x64xf32>
    %899 = arith.divf %897, %898 : vector<2x64xf32>
    %900 = vector.extract_strided_slice %888 {offsets = [0, 64], sizes = [2, 64], strides = [1, 1]} : vector<2x192xf32> to vector<2x64xf32>
    %901 = vector.extract_strided_slice %891 {offsets = [0, 64], sizes = [2, 64], strides = [1, 1]} : vector<2x192xf32> to vector<2x64xf32>
    %902 = arith.addf %900, %901 : vector<2x64xf32>
    %903 = arith.negf %902 : vector<2x64xf32>
    %904 = math.exp %903 : vector<2x64xf32>
    %cst_285 = arith.constant 1.000000e+00 : f32
    %905 = vector.broadcast %cst_285 : f32 to vector<2x64xf32>
    %906 = arith.addf %905, %904 : vector<2x64xf32>
    %907 = arith.divf %905, %906 : vector<2x64xf32>
    %908 = vector.extract_strided_slice %888 {offsets = [0, 128], sizes = [2, 64], strides = [1, 1]} : vector<2x192xf32> to vector<2x64xf32>
    %909 = vector.extract_strided_slice %891 {offsets = [0, 128], sizes = [2, 64], strides = [1, 1]} : vector<2x192xf32> to vector<2x64xf32>
    %910 = arith.mulf %899, %909 : vector<2x64xf32>
    %911 = arith.addf %908, %910 : vector<2x64xf32>
    %912 = math.tanh %911 : vector<2x64xf32>
    %cst_286 = arith.constant 1.000000e+00 : f32
    %913 = vector.broadcast %cst_286 : f32 to vector<2x64xf32>
    %914 = arith.subf %913, %907 : vector<2x64xf32>
    %915 = arith.mulf %914, %912 : vector<2x64xf32>
    %916 = arith.mulf %907, %873 : vector<2x64xf32>
    %917 = arith.addf %915, %916 : vector<2x64xf32>
    %918 = vector.extract_strided_slice %917 {offsets = [0, 0], sizes = [1, 32], strides = [1, 1]} : vector<2x64xf32> to vector<1x32xf32>
    %c6_287 = arith.constant 6 : index
    %c0_288 = arith.constant 0 : index
    %919 = vector.load %arg29[%c6_287, %c0_288] : memref<16x64xf32, #tpu.memory_space<vmem>>, vector<1x32xf32>
    tpu.vector_store %arg29[%c6_287, %c0_288], %918 {strides = array<i32>} : memref<16x64xf32, #tpu.memory_space<vmem>>, vector<1x32xf32>,
    %920 = vector.extract_strided_slice %917 {offsets = [0, 32], sizes = [1, 32], strides = [1, 1]} : vector<2x64xf32> to vector<1x32xf32>
    %c1_289 = arith.constant 1 : index
    %c32_290 = arith.constant 32 : index
    %921 = vector.load %arg29[%c1_289, %c32_290] : memref<16x64xf32, #tpu.memory_space<vmem>>, vector<1x32xf32>
    tpu.vector_store %arg29[%c1_289, %c32_290], %920 {strides = array<i32>} : memref<16x64xf32, #tpu.memory_space<vmem>>, vector<1x32xf32>,
    %922 = vector.extract_strided_slice %917 {offsets = [1, 0], sizes = [1, 32], strides = [1, 1]} : vector<2x64xf32> to vector<1x32xf32>
    %c14_291 = arith.constant 14 : index
    %c0_292 = arith.constant 0 : index
    %923 = vector.load %arg29[%c14_291, %c0_292] : memref<16x64xf32, #tpu.memory_space<vmem>>, vector<1x32xf32>
    tpu.vector_store %arg29[%c14_291, %c0_292], %922 {strides = array<i32>} : memref<16x64xf32, #tpu.memory_space<vmem>>, vector<1x32xf32>,
    %924 = vector.extract_strided_slice %917 {offsets = [1, 32], sizes = [1, 32], strides = [1, 1]} : vector<2x64xf32> to vector<1x32xf32>
    %c9_293 = arith.constant 9 : index
    %c32_294 = arith.constant 32 : index
    %925 = vector.load %arg29[%c9_293, %c32_294] : memref<16x64xf32, #tpu.memory_space<vmem>>, vector<1x32xf32>
    tpu.vector_store %arg29[%c9_293, %c32_294], %924 {strides = array<i32>} : memref<16x64xf32, #tpu.memory_space<vmem>>, vector<1x32xf32>,
    %926 = vector.extract_strided_slice %612 {offsets = [7, 0], sizes = [1, 192], strides = [1, 1]} : vector<16x192xf32> to vector<1x192xf32>
    %927 = vector.extract_strided_slice %614 {offsets = [0, 0], sizes = [1, 192], strides = [1, 1]} : vector<16x192xf32> to vector<1x192xf32>
    %928 = arith.addf %926, %927 : vector<1x192xf32>
    %929 = vector.extract_strided_slice %612 {offsets = [15, 0], sizes = [1, 192], strides = [1, 1]} : vector<16x192xf32> to vector<1x192xf32>
    %930 = vector.extract_strided_slice %614 {offsets = [8, 0], sizes = [1, 192], strides = [1, 1]} : vector<16x192xf32> to vector<1x192xf32>
    %931 = arith.addf %929, %930 : vector<1x192xf32>
    %932 = tpu.concatenate %928, %931 in 0 : vector<1x192xf32>, vector<1x192xf32> -> vector<2x192xf32>
    %cst_295 = arith.constant dense<0.000000e+00> : vector<2x192xf32>
    %933 = tpu.matmul %917, %615, %cst_295 {dimension_numbers = #tpu.dot_dimension_numbers<[1], [0], [0], [1], [0, 0, 1, 1], [], []>} : vector<2x64xf32>, vector<64x192xf32>, vector<2x192xf32> -> vector<2x192xf32>
    %934 = vector.broadcast %616 : vector<1x192xf32> to vector<2x192xf32>
    %935 = arith.addf %933, %934 : vector<2x192xf32>
    %936 = vector.extract_strided_slice %932 {offsets = [0, 0], sizes = [2, 64], strides = [1, 1]} : vector<2x192xf32> to vector<2x64xf32>
    %937 = vector.extract_strided_slice %935 {offsets = [0, 0], sizes = [2, 64], strides = [1, 1]} : vector<2x192xf32> to vector<2x64xf32>
    %938 = arith.addf %936, %937 : vector<2x64xf32>
    %939 = arith.negf %938 : vector<2x64xf32>
    %940 = math.exp %939 : vector<2x64xf32>
    %cst_296 = arith.constant 1.000000e+00 : f32
    %941 = vector.broadcast %cst_296 : f32 to vector<2x64xf32>
    %942 = arith.addf %941, %940 : vector<2x64xf32>
    %943 = arith.divf %941, %942 : vector<2x64xf32>
    %944 = vector.extract_strided_slice %932 {offsets = [0, 64], sizes = [2, 64], strides = [1, 1]} : vector<2x192xf32> to vector<2x64xf32>
    %945 = vector.extract_strided_slice %935 {offsets = [0, 64], sizes = [2, 64], strides = [1, 1]} : vector<2x192xf32> to vector<2x64xf32>
    %946 = arith.addf %944, %945 : vector<2x64xf32>
    %947 = arith.negf %946 : vector<2x64xf32>
    %948 = math.exp %947 : vector<2x64xf32>
    %cst_297 = arith.constant 1.000000e+00 : f32
    %949 = vector.broadcast %cst_297 : f32 to vector<2x64xf32>
    %950 = arith.addf %949, %948 : vector<2x64xf32>
    %951 = arith.divf %949, %950 : vector<2x64xf32>
    %952 = vector.extract_strided_slice %932 {offsets = [0, 128], sizes = [2, 64], strides = [1, 1]} : vector<2x192xf32> to vector<2x64xf32>
    %953 = vector.extract_strided_slice %935 {offsets = [0, 128], sizes = [2, 64], strides = [1, 1]} : vector<2x192xf32> to vector<2x64xf32>
    %954 = arith.mulf %943, %953 : vector<2x64xf32>
    %955 = arith.addf %952, %954 : vector<2x64xf32>
    %956 = math.tanh %955 : vector<2x64xf32>
    %cst_298 = arith.constant 1.000000e+00 : f32
    %957 = vector.broadcast %cst_298 : f32 to vector<2x64xf32>
    %958 = arith.subf %957, %951 : vector<2x64xf32>
    %959 = arith.mulf %958, %956 : vector<2x64xf32>
    %960 = arith.mulf %951, %917 : vector<2x64xf32>
    %961 = arith.addf %959, %960 : vector<2x64xf32>
    %962 = vector.extract_strided_slice %961 {offsets = [0, 0], sizes = [1, 32], strides = [1, 1]} : vector<2x64xf32> to vector<1x32xf32>
    %c7_299 = arith.constant 7 : index
    %c0_300 = arith.constant 0 : index
    %963 = vector.load %arg29[%c7_299, %c0_300] : memref<16x64xf32, #tpu.memory_space<vmem>>, vector<1x32xf32>
    tpu.vector_store %arg29[%c7_299, %c0_300], %962 {strides = array<i32>} : memref<16x64xf32, #tpu.memory_space<vmem>>, vector<1x32xf32>,
    %964 = vector.extract_strided_slice %961 {offsets = [0, 32], sizes = [1, 32], strides = [1, 1]} : vector<2x64xf32> to vector<1x32xf32>
    %c0_301 = arith.constant 0 : index
    %c32_302 = arith.constant 32 : index
    %965 = vector.load %arg29[%c0_301, %c32_302] : memref<16x64xf32, #tpu.memory_space<vmem>>, vector<1x32xf32>
    tpu.vector_store %arg29[%c0_301, %c32_302], %964 {strides = array<i32>} : memref<16x64xf32, #tpu.memory_space<vmem>>, vector<1x32xf32>,
    %966 = vector.extract_strided_slice %961 {offsets = [1, 0], sizes = [1, 32], strides = [1, 1]} : vector<2x64xf32> to vector<1x32xf32>
    %c15_303 = arith.constant 15 : index
    %c0_304 = arith.constant 0 : index
    %967 = vector.load %arg29[%c15_303, %c0_304] : memref<16x64xf32, #tpu.memory_space<vmem>>, vector<1x32xf32>
    tpu.vector_store %arg29[%c15_303, %c0_304], %966 {strides = array<i32>} : memref<16x64xf32, #tpu.memory_space<vmem>>, vector<1x32xf32>,
    %968 = vector.extract_strided_slice %961 {offsets = [1, 32], sizes = [1, 32], strides = [1, 1]} : vector<2x64xf32> to vector<1x32xf32>
    %c8_305 = arith.constant 8 : index
    %c32_306 = arith.constant 32 : index
    %969 = vector.load %arg29[%c8_305, %c32_306] : memref<16x64xf32, #tpu.memory_space<vmem>>, vector<1x32xf32>
    tpu.vector_store %arg29[%c8_305, %c32_306], %968 {strides = array<i32>} : memref<16x64xf32, #tpu.memory_space<vmem>>, vector<1x32xf32>,
    %c0_307 = arith.constant 0 : index
    %c0_308 = arith.constant 0 : index
    %970 = vector.load %arg29[%c0_307, %c0_308] : memref<16x64xf32, #tpu.memory_space<vmem>>, vector<16x64xf32>
    %971 = vector.shape_cast %970 : vector<16x64xf32> to vector<2x8x64xf32>
    %c0_309 = arith.constant 0 : index
    %c0_310 = arith.constant 0 : index
    %972 = vector.load %arg23[%c0_309, %c0_310] : memref<1x64xf32, #tpu.memory_space<vmem>>, vector<1x64xf32>
    %973 = vector.shape_cast %972 : vector<1x64xf32> to vector<1x1x64xf32>
    %974 = vector.broadcast %973 : vector<1x1x64xf32> to vector<2x8x64xf32>
    %975 = arith.mulf %971, %974 : vector<2x8x64xf32>
    %cst_311 = arith.constant dense<0.000000e+00> : vector<2x8xf32>
    %976 = vector.multi_reduction <add>, %975, %cst_311 [2] : vector<2x8x64xf32> to vector<2x8xf32>
    %c0_312 = arith.constant 0 : index
    %c0_313 = arith.constant 0 : index
    %977 = vector.load %arg24[%c0_312, %c0_313] : memref<1x1xf32, #tpu.memory_space<vmem>>, vector<1x1xf32>
    %978 = vector.broadcast %977 : vector<1x1xf32> to vector<2x8xf32>
    %979 = arith.addf %976, %978 : vector<2x8xf32>
    %cst_314 = arith.constant 0.000000e+00 : f32
    %980 = vector.broadcast %cst_314 : f32 to vector<2x8xf32>
    %981 = arith.cmpf ogt, %0, %980 : vector<2x8xf32>
    %cst_315 = arith.constant -1.000000e+09 : f32
    %982 = vector.broadcast %cst_315 : f32 to vector<2x8xf32>
    %983 = arith.select %981, %979, %982 : vector<2x8xi1>, vector<2x8xf32>
    %cst_316 = arith.constant dense<0xFF800000> : vector<2xf32>
    %984 = vector.multi_reduction <maximumf>, %983, %cst_316 [1] : vector<2x8xf32> to vector<2xf32>
    %985 = vector.shape_cast %984 : vector<2xf32> to vector<2x1xf32>
    %986 = vector.broadcast %985 : vector<2x1xf32> to vector<2x8xf32>
    %987 = arith.subf %983, %986 : vector<2x8xf32>
    %988 = math.exp %987 : vector<2x8xf32>
    %cst_317 = arith.constant dense<0.000000e+00> : vector<2xf32>
    %989 = vector.multi_reduction <add>, %988, %cst_317 [1] : vector<2x8xf32> to vector<2xf32>
    %990 = vector.shape_cast %989 : vector<2xf32> to vector<2x1xf32>
    %991 = vector.broadcast %990 : vector<2x1xf32> to vector<2x8xf32>
    %992 = arith.divf %988, %991 : vector<2x8xf32>
    %c0_318 = arith.constant 0 : index
    %c0_319 = arith.constant 0 : index
    %993 = vector.load %arg28[%c0_318, %c0_319] : memref<2x8xf32, #tpu.memory_space<vmem>>, vector<2x8xf32>
    tpu.vector_store %arg28[%c0_318, %c0_319], %992 {strides = array<i32>} : memref<2x8xf32, #tpu.memory_space<vmem>>, vector<2x8xf32>,
    %994 = vector.extract_strided_slice %992 {offsets = [0, 0], sizes = [1, 8], strides = [1, 1]} : vector<2x8xf32> to vector<1x8xf32>
    %995 = vector.extract_strided_slice %971 {offsets = [0, 0, 0], sizes = [1, 8, 64], strides = [1, 1, 1]} : vector<2x8x64xf32> to vector<1x8x64xf32>
    %996 = vector.shape_cast %995 : vector<1x8x64xf32> to vector<8x64xf32>
    %cst_320 = arith.constant dense<0.000000e+00> : vector<1x64xf32>
    %997 = tpu.matmul %994, %996, %cst_320 {dimension_numbers = #tpu.dot_dimension_numbers<[1], [0], [0], [1], [0, 0, 1, 1], [], []>} : vector<1x8xf32>, vector<8x64xf32>, vector<1x64xf32> -> vector<1x64xf32>
    %998 = vector.extract_strided_slice %992 {offsets = [1, 0], sizes = [1, 8], strides = [1, 1]} : vector<2x8xf32> to vector<1x8xf32>
    %999 = vector.extract_strided_slice %971 {offsets = [1, 0, 0], sizes = [1, 8, 64], strides = [1, 1, 1]} : vector<2x8x64xf32> to vector<1x8x64xf32>
    %1000 = vector.shape_cast %999 : vector<1x8x64xf32> to vector<8x64xf32>
    %cst_321 = arith.constant dense<0.000000e+00> : vector<1x64xf32>
    %1001 = tpu.matmul %998, %1000, %cst_321 {dimension_numbers = #tpu.dot_dimension_numbers<[1], [0], [0], [1], [0, 0, 1, 1], [], []>} : vector<1x8xf32>, vector<8x64xf32>, vector<1x64xf32> -> vector<1x64xf32>
    %1002 = tpu.concatenate %997, %1001 in 0 : vector<1x64xf32>, vector<1x64xf32> -> vector<2x64xf32>
    %c0_322 = arith.constant 0 : index
    %c0_323 = arith.constant 0 : index
    %1003 = vector.load %arg25[%c0_322, %c0_323] : memref<64x2xf32, #tpu.memory_space<vmem>>, vector<64x2xf32>
    %cst_324 = arith.constant dense<0.000000e+00> : vector<2x2xf32>
    %1004 = tpu.matmul %1002, %1003, %cst_324 {dimension_numbers = #tpu.dot_dimension_numbers<[1], [0], [0], [1], [0, 0, 1, 1], [], []>} : vector<2x64xf32>, vector<64x2xf32>, vector<2x2xf32> -> vector<2x2xf32>
    %c0_325 = arith.constant 0 : index
    %c0_326 = arith.constant 0 : index
    %1005 = vector.load %arg26[%c0_325, %c0_326] : memref<1x2xf32, #tpu.memory_space<vmem>>, vector<1x2xf32>
    %1006 = vector.broadcast %1005 : vector<1x2xf32> to vector<2x2xf32>
    %1007 = arith.addf %1004, %1006 : vector<2x2xf32>
    %c0_327 = arith.constant 0 : index
    %c0_328 = arith.constant 0 : index
    %1008 = vector.load %arg27[%c0_327, %c0_328] : memref<2x2xf32, #tpu.memory_space<vmem>>, vector<2x2xf32>
    tpu.vector_store %arg27[%c0_327, %c0_328], %1007 {strides = array<i32>} : memref<2x2xf32, #tpu.memory_space<vmem>>, vector<2x2xf32>,
    return
  }
}

</mosaic_0001>

<llo_original>
// kernel: forward.1
$region0: #{forward.1}
  #allocation0 [shape = 'u32[]', space=smem, size = 0x4, offset = 0x4, fixed_abs, tag = 'smem constant byte address 0x4 - core index']
  #allocation1 [shape = 'u32[144,128]{1,0:T(1,128)}', space=vmem, size = 0x12000, scoped, tag = 'internal scratch']
  #allocation2 [shape = 'f32[16,64]{1,0:T(8,128)}', space=vmem, size = 0x2000, scoped, tag = 'scratch operand']
  #allocation3 [shape = 'f32[1,1]{1,0:T(1,128)S(1)}', space=vmem, size = 0x200, scoped, tag = 'scoped memory for forward.1']
  %s0 = inlined_call_operand.vmem [shape: s32[16,1], index: 0, kind: input, shape index: {}]
  %s1 = inlined_call_operand.vmem [shape: f32[2,8], index: 1, kind: input, shape index: {}]
  %s2 = inlined_call_operand.vmem [shape: f32[100,32], index: 2, kind: input, shape index: {}]
  %s3 = inlined_call_operand.hbm [shape: f32[16,32], index: 3, kind: input, shape index: {}]
  %s4 = inlined_call_operand.hbm [shape: f32[1,32], index: 4, kind: input, shape index: {}]
  %s5 = inlined_call_operand.hbm [shape: f32[1,32], index: 5, kind: input, shape index: {}]
  %s6 = inlined_call_operand.vmem [shape: f32[2,32,96], index: 6, kind: input, shape index: {}]
  %s7 = inlined_call_operand.hbm [shape: f32[2,1,96], index: 7, kind: input, shape index: {}]
  %s8 = inlined_call_operand.vmem [shape: f32[2,32,32], index: 8, kind: input, shape index: {}]
  %s9 = inlined_call_operand.hbm [shape: f32[2,1,32], index: 9, kind: input, shape index: {}]
  %s10 = inlined_call_operand.hbm [shape: f32[2,1,32], index: 10, kind: input, shape index: {}]
  %s11 = inlined_call_operand.hbm [shape: f32[2,1,32], index: 11, kind: input, shape index: {}]
  %s12 = inlined_call_operand.vmem [shape: f32[2,32,64], index: 12, kind: input, shape index: {}]
  %s13 = inlined_call_operand.hbm [shape: f32[2,1,64], index: 13, kind: input, shape index: {}]
  %s14 = inlined_call_operand.vmem [shape: f32[2,64,32], index: 14, kind: input, shape index: {}]
  %s15 = inlined_call_operand.hbm [shape: f32[2,1,32], index: 15, kind: input, shape index: {}]
  %s16 = inlined_call_operand.hbm [shape: f32[2,1,32], index: 16, kind: input, shape index: {}]
  %s17 = inlined_call_operand.hbm [shape: f32[2,1,32], index: 17, kind: input, shape index: {}]
  %s18 = inlined_call_operand.vmem [shape: f32[32,192], index: 18, kind: input, shape index: {}]
  %s19 = inlined_call_operand.hbm [shape: f32[32,192], index: 19, kind: input, shape index: {}]
  %s20 = inlined_call_operand.hbm [shape: f32[1,192], index: 20, kind: input, shape index: {}]
  %s21 = inlined_call_operand.vmem [shape: f32[64,192], index: 21, kind: input, shape index: {}]
  %s22 = inlined_call_operand.hbm [shape: f32[1,192], index: 22, kind: input, shape index: {}]
  %s23 = inlined_call_operand.hbm [shape: f32[1,64], index: 23, kind: input, shape index: {}]
  %s24 = inlined_call_operand.<no memory space> [shape: f32[1,1], index: 24, kind: input, shape index: {}]
  %s25 = inlined_call_operand.vmem [shape: f32[64,2], index: 25, kind: input, shape index: {}]
  %s26 = inlined_call_operand.hbm [shape: f32[1,2], index: 26, kind: input, shape index: {}]
  %s27 = inlined_call_operand.hbm [shape: f32[2,2], index: 27, kind: output, shape index: {0}]
  %s28 = inlined_call_operand.hbm [shape: f32[2,8], index: 28, kind: output, shape index: {1}]
  %29 = xla_tuple %s27, %s28
  %s30 = sld [smem:[#allocation0]]
  $region190: #{forward.1} parent=0
    _
  %s32 = ssub.s32 1, %s30
  %s33 = scalar_select 0, %s32, %s30
  %v34 = vstv %s24
  %35 = vst [vmem:[#allocation3] sm:$0x1] %v34
  $region1: #{forward.1} parent=0
    #allocation4 [shape = 'u8[8192]{0}', space=vmem, size = 0x2000, scoped, tag = 'input window, operand 3, single buffered']
    #allocation5 [shape = 's32[1]{0}', space=sflag, size = 0x4, scoped, tag = 'scoped memory for forward.1']
    #allocation6 [shape = 's32[1]{0}', space=sflag, size = 0x4, scoped, tag = 'scoped memory for forward.1']
    #allocation7 [shape = 'u8[512]{0}', space=vmem, size = 0x400, scoped, tag = 'input window, operand 4, single buffered']
    #allocation8 [shape = 's32[1]{0}', space=sflag, size = 0x4, scoped, tag = 'scoped memory for forward.1']
    #allocation9 [shape = 'u8[512]{0}', space=vmem, size = 0x400, scoped, tag = 'input window, operand 5, single buffered']
    #allocation10 [shape = 'u8[1024]{0}', space=vmem, size = 0x400, scoped, tag = 'input window, operand 7, single buffered']
    #allocation11 [shape = 's32[1]{0}', space=sflag, size = 0x4, scoped, tag = 'scoped memory for forward.1']
    #allocation12 [shape = 'u8[1024]{0}', space=vmem, size = 0x400, scoped, tag = 'input window, operand 9, single buffered']
    #allocation13 [shape = 'u8[1024]{0}', space=vmem, size = 0x400, scoped, tag = 'input window, operand 10, single buffered']
    #allocation14 [shape = 's32[1]{0}', space=sflag, size = 0x4, scoped, tag = 'scoped memory for forward.1']
    #allocation15 [shape = 'u8[1024]{0}', space=vmem, size = 0x400, scoped, tag = 'input window, operand 11, single buffered']
    #allocation16 [shape = 'u8[1024]{0}', space=vmem, size = 0x400, scoped, tag = 'input window, operand 13, single buffered']
    #allocation17 [shape = 's32[1]{0}', space=sflag, size = 0x4, scoped, tag = 'scoped memory for forward.1']
    #allocation18 [shape = 'u8[1024]{0}', space=vmem, size = 0x400, scoped, tag = 'input window, operand 15, single buffered']
    #allocation19 [shape = 'u8[1024]{0}', space=vmem, size = 0x400, scoped, tag = 'input window, operand 16, single buffered']
    #allocation20 [shape = 's32[1]{0}', space=sflag, size = 0x4, scoped, tag = 'scoped memory for forward.1']
    #allocation21 [shape = 'u8[1024]{0}', space=vmem, size = 0x400, scoped, tag = 'input window, operand 17, single buffered']
    #allocation22 [shape = 'u8[32768]{0}', space=vmem, size = 0x8000, scoped, tag = 'input window, operand 19, single buffered']
    #allocation23 [shape = 's32[1]{0}', space=sflag, size = 0x4, scoped, tag = 'scoped memory for forward.1']
    #allocation24 [shape = 'u8[1024]{0}', space=vmem, size = 0x400, scoped, tag = 'input window, operand 20, single buffered']
    #allocation25 [shape = 'u8[1024]{0}', space=vmem, size = 0x400, scoped, tag = 'input window, operand 22, single buffered']
    #allocation26 [shape = 's32[1]{0}', space=sflag, size = 0x4, scoped, tag = 'scoped memory for forward.1']
    #allocation27 [shape = 'u8[512]{0}', space=vmem, size = 0x400, scoped, tag = 'input window, operand 23, single buffered']
    #allocation28 [shape = 'u8[512]{0}', space=vmem, size = 0x400, scoped, tag = 'input window, operand 26, single buffered']
    #allocation29 [shape = 's32[1]{0}', space=sflag, size = 0x4, scoped, tag = 'scoped memory for forward.1']
    #allocation30 [shape = 'u8[1024]{0}', space=vmem, size = 0x400, scoped, tag = 'output window, operand 0, single buffered']
    #allocation31 [shape = 'u8[1024]{0}', space=vmem, size = 0x400, scoped, tag = 'output window, operand 1, single buffered']
    #allocation32 [shape = 's32[1]{0}', space=sflag, size = 0x4, scoped, tag = 'scoped memory for forward.1']
    %36 = vsyncpa [#allocation5], 0
    %37 = vsyncpa [#allocation8], 0
    %38 = vsyncpa [#allocation11], 0
    %39 = vsyncpa [#allocation14], 0
    %40 = vsyncpa [#allocation17], 0
    %41 = vsyncpa [#allocation20], 0
    %42 = vsyncpa [#allocation23], 0
    %43 = vsyncpa [#allocation26], 0
    %44 = vsyncpa [#allocation29], 0
    %45 = vsyncpa [#allocation6], 0
    %46 = vsyncpa [#allocation32], 0
    // Predicated region
    $region2: #{forward.1} parent=1 // pred_check
      _
    $region3: #{forward.1} parent=1 // pred_check_branch
      %48 = sbr.rel (0) target = $region5
    $region4: #{forward.1} parent=1 // pred_region
      _
    $region5: #{forward.1} parent=1 // pred_fallthru
      _
    // Predicated region
    $region6: #{forward.1} parent=1 // pred_check
      _
    $region7: #{forward.1} parent=1 // pred_check_branch
      %50 = sbr.rel (0) target = $region9
    $region8: #{forward.1} parent=1 // pred_region
      _
    $region9: #{forward.1} parent=1 // pred_fallthru
      _
    // Predicated region
    $region10: #{forward.1} parent=1 // pred_check
      _
    $region11: #{forward.1} parent=1 // pred_check_branch
      %52 = sbr.rel (0) target = $region13
    $region12: #{forward.1} parent=1 // pred_region
      _
    $region13: #{forward.1} parent=1 // pred_fallthru
      _
    // Predicated region
    $region14: #{forward.1} parent=1 // pred_check
      _
    $region15: #{forward.1} parent=1 // pred_check_branch
      %54 = sbr.rel (0) target = $region17
    $region16: #{forward.1} parent=1 // pred_region
      %s56 = ssub.s32 256, 256
      %57 = vsyncadd [#allocation5], %s56
      %s58 = sshll.u32 [#allocation4], 4
      %s59 = int_to_ptr.vmem [resolvable:$true] %s58
      %64 = dma.hbm_to_vmem [thread:$0]  %s3, 256, %s59, [#allocation5], 128, 128, 8
    $region17: #{forward.1} parent=1 // pred_fallthru
      _
    // Predicated region
    $region18: #{forward.1} parent=1 // pred_check
      _
    $region19: #{forward.1} parent=1 // pred_check_branch
      %66 = sbr.rel (0) target = $region21
    $region20: #{forward.1} parent=1 // pred_region
      %s68 = ssub.s32 16, 16
      %69 = vsyncadd [#allocation8], %s68
      %s71 = sshll.u32 [#allocation7], 4
      %s72 = int_to_ptr.vmem [resolvable:$true] %s71
      %74 = dma.hbm_to_vmem [thread:$0]  %s4, 16, %s72, [#allocation8]
    $region21: #{forward.1} parent=1 // pred_fallthru
      _
    // Predicated region
    $region22: #{forward.1} parent=1 // pred_check
      _
    $region23: #{forward.1} parent=1 // pred_check_branch
      %76 = sbr.rel (0) target = $region25
    $region24: #{forward.1} parent=1 // pred_region
      %s78 = ssub.s32 16, 16
      %79 = vsyncadd [#allocation8], %s78
      %s81 = sshll.u32 [#allocation9], 4
      %s82 = int_to_ptr.vmem [resolvable:$true] %s81
      %84 = dma.hbm_to_vmem [thread:$0]  %s5, 16, %s82, [#allocation8]
    $region25: #{forward.1} parent=1 // pred_fallthru
      _
    // Predicated region
    $region26: #{forward.1} parent=1 // pred_check
      _
    $region27: #{forward.1} parent=1 // pred_check_branch
      %86 = sbr.rel (0) target = $region29
    $region28: #{forward.1} parent=1 // pred_region
      _
    $region29: #{forward.1} parent=1 // pred_fallthru
      _
    // Predicated region
    $region30: #{forward.1} parent=1 // pred_check
      _
    $region31: #{forward.1} parent=1 // pred_check_branch
      %88 = sbr.rel (0) target = $region33
    $region32: #{forward.1} parent=1 // pred_region
      %s90 = ssub.s32 32, 32
      %91 = vsyncadd [#allocation11], %s90
      %s92 = sshll.u32 [#allocation10], 4
      %s93 = int_to_ptr.vmem [resolvable:$true] %s92
      %98 = dma.hbm_to_vmem [thread:$0]  %s7, 32, %s93, [#allocation11], 16, 16, 1
    $region33: #{forward.1} parent=1 // pred_fallthru
      _
    // Predicated region
    $region34: #{forward.1} parent=1 // pred_check
      _
    $region35: #{forward.1} parent=1 // pred_check_branch
      %100 = sbr.rel (0) target = $region37
    $region36: #{forward.1} parent=1 // pred_region
      _
    $region37: #{forward.1} parent=1 // pred_fallthru
      _
    // Predicated region
    $region38: #{forward.1} parent=1 // pred_check
      _
    $region39: #{forward.1} parent=1 // pred_check_branch
      %102 = sbr.rel (0) target = $region41
    $region40: #{forward.1} parent=1 // pred_region
      %s104 = ssub.s32 32, 32
      %105 = vsyncadd [#allocation11], %s104
      %s106 = sshll.u32 [#allocation12], 4
      %s107 = int_to_ptr.vmem [resolvable:$true] %s106
      %112 = dma.hbm_to_vmem [thread:$0]  %s9, 32, %s107, [#allocation11], 16, 16, 1
    $region41: #{forward.1} parent=1 // pred_fallthru
      _
    // Predicated region
    $region42: #{forward.1} parent=1 // pred_check
      _
    $region43: #{forward.1} parent=1 // pred_check_branch
      %114 = sbr.rel (0) target = $region45
    $region44: #{forward.1} parent=1 // pred_region
      %s116 = ssub.s32 32, 32
      %117 = vsyncadd [#allocation14], %s116
      %s118 = sshll.u32 [#allocation13], 4
      %s119 = int_to_ptr.vmem [resolvable:$true] %s118
      %124 = dma.hbm_to_vmem [thread:$0]  %s10, 32, %s119, [#allocation14], 16, 16, 1
    $region45: #{forward.1} parent=1 // pred_fallthru
      _
    // Predicated region
    $region46: #{forward.1} parent=1 // pred_check
      _
    $region47: #{forward.1} parent=1 // pred_check_branch
      %126 = sbr.rel (0) target = $region49
    $region48: #{forward.1} parent=1 // pred_region
      %s128 = ssub.s32 32, 32
      %129 = vsyncadd [#allocation14], %s128
      %s130 = sshll.u32 [#allocation15], 4
      %s131 = int_to_ptr.vmem [resolvable:$true] %s130
      %136 = dma.hbm_to_vmem [thread:$0]  %s11, 32, %s131, [#allocation14], 16, 16, 1
    $region49: #{forward.1} parent=1 // pred_fallthru
      _
    // Predicated region
    $region50: #{forward.1} parent=1 // pred_check
      _
    $region51: #{forward.1} parent=1 // pred_check_branch
      %138 = sbr.rel (0) target = $region53
    $region52: #{forward.1} parent=1 // pred_region
      _
    $region53: #{forward.1} parent=1 // pred_fallthru
      _
    // Predicated region
    $region54: #{forward.1} parent=1 // pred_check
      _
    $region55: #{forward.1} parent=1 // pred_check_branch
      %140 = sbr.rel (0) target = $region57
    $region56: #{forward.1} parent=1 // pred_region
      %s142 = ssub.s32 32, 32
      %143 = vsyncadd [#allocation17], %s142
      %s144 = sshll.u32 [#allocation16], 4
      %s145 = int_to_ptr.vmem [resolvable:$true] %s144
      %150 = dma.hbm_to_vmem [thread:$0]  %s13, 32, %s145, [#allocation17], 16, 16, 1
    $region57: #{forward.1} parent=1 // pred_fallthru
      _
    // Predicated region
    $region58: #{forward.1} parent=1 // pred_check
      _
    $region59: #{forward.1} parent=1 // pred_check_branch
      %152 = sbr.rel (0) target = $region61
    $region60: #{forward.1} parent=1 // pred_region
      _
    $region61: #{forward.1} parent=1 // pred_fallthru
      _
    // Predicated region
    $region62: #{forward.1} parent=1 // pred_check
      _
    $region63: #{forward.1} parent=1 // pred_check_branch
      %154 = sbr.rel (0) target = $region65
    $region64: #{forward.1} parent=1 // pred_region
      %s156 = ssub.s32 32, 32
      %157 = vsyncadd [#allocation17], %s156
      %s158 = sshll.u32 [#allocation18], 4
      %s159 = int_to_ptr.vmem [resolvable:$true] %s158
      %164 = dma.hbm_to_vmem [thread:$0]  %s15, 32, %s159, [#allocation17], 16, 16, 1
    $region65: #{forward.1} parent=1 // pred_fallthru
      _
    // Predicated region
    $region66: #{forward.1} parent=1 // pred_check
      _
    $region67: #{forward.1} parent=1 // pred_check_branch
      %166 = sbr.rel (0) target = $region69
    $region68: #{forward.1} parent=1 // pred_region
      %s168 = ssub.s32 32, 32
      %169 = vsyncadd [#allocation20], %s168
      %s170 = sshll.u32 [#allocation19], 4
      %s171 = int_to_ptr.vmem [resolvable:$true] %s170
      %176 = dma.hbm_to_vmem [thread:$0]  %s16, 32, %s171, [#allocation20], 16, 16, 1
    $region69: #{forward.1} parent=1 // pred_fallthru
      _
    // Predicated region
    $region70: #{forward.1} parent=1 // pred_check
      _
    $region71: #{forward.1} parent=1 // pred_check_branch
      %178 = sbr.rel (0) target = $region73
    $region72: #{forward.1} parent=1 // pred_region
      %s180 = ssub.s32 32, 32
      %181 = vsyncadd [#allocation20], %s180
      %s182 = sshll.u32 [#allocation21], 4
      %s183 = int_to_ptr.vmem [resolvable:$true] %s182
      %188 = dma.hbm_to_vmem [thread:$0]  %s17, 32, %s183, [#allocation20], 16, 16, 1
    $region73: #{forward.1} parent=1 // pred_fallthru
      _
    // Predicated region
    $region74: #{forward.1} parent=1 // pred_check
      _
    $region75: #{forward.1} parent=1 // pred_check_branch
      %190 = sbr.rel (0) target = $region77
    $region76: #{forward.1} parent=1 // pred_region
      _
    $region77: #{forward.1} parent=1 // pred_fallthru
      _
    // Predicated region
    $region78: #{forward.1} parent=1 // pred_check
      _
    $region79: #{forward.1} parent=1 // pred_check_branch
      %192 = sbr.rel (0) target = $region81
    $region80: #{forward.1} parent=1 // pred_region
      %s194 = ssub.s32 1024, 1024
      %195 = vsyncadd [#allocation23], %s194
      %s196 = sshll.u32 [#allocation22], 4
      %s197 = int_to_ptr.vmem [resolvable:$true] %s196
      %202 = dma.hbm_to_vmem [thread:$0]  %s19, 1024, %s197, [#allocation23], 256, 256, 16
    $region81: #{forward.1} parent=1 // pred_fallthru
      _
    // Predicated region
    $region82: #{forward.1} parent=1 // pred_check
      _
    $region83: #{forward.1} parent=1 // pred_check_branch
      %204 = sbr.rel (0) target = $region85
    $region84: #{forward.1} parent=1 // pred_region
      %s206 = ssub.s32 32, 32
      %207 = vsyncadd [#allocation23], %s206
      %s209 = sshll.u32 [#allocation24], 4
      %s210 = int_to_ptr.vmem [resolvable:$true] %s209
      %212 = dma.hbm_to_vmem [thread:$0]  %s20, 32, %s210, [#allocation23]
    $region85: #{forward.1} parent=1 // pred_fallthru
      _
    // Predicated region
    $region86: #{forward.1} parent=1 // pred_check
      _
    $region87: #{forward.1} parent=1 // pred_check_branch
      %214 = sbr.rel (0) target = $region89
    $region88: #{forward.1} parent=1 // pred_region
      _
    $region89: #{forward.1} parent=1 // pred_fallthru
      _
    // Predicated region
    $region90: #{forward.1} parent=1 // pred_check
      _
    $region91: #{forward.1} parent=1 // pred_check_branch
      %216 = sbr.rel (0) target = $region93
    $region92: #{forward.1} parent=1 // pred_region
      %s218 = ssub.s32 32, 32
      %219 = vsyncadd [#allocation26], %s218
      %s221 = sshll.u32 [#allocation25], 4
      %s222 = int_to_ptr.vmem [resolvable:$true] %s221
      %224 = dma.hbm_to_vmem [thread:$0]  %s22, 32, %s222, [#allocation26]
    $region93: #{forward.1} parent=1 // pred_fallthru
      _
    // Predicated region
    $region94: #{forward.1} parent=1 // pred_check
      _
    $region95: #{forward.1} parent=1 // pred_check_branch
      %226 = sbr.rel (0) target = $region97
    $region96: #{forward.1} parent=1 // pred_region
      %s228 = ssub.s32 16, 16
      %229 = vsyncadd [#allocation26], %s228
      %s231 = sshll.u32 [#allocation27], 4
      %s232 = int_to_ptr.vmem [resolvable:$true] %s231
      %234 = dma.hbm_to_vmem [thread:$0]  %s23, 16, %s232, [#allocation26]
    $region97: #{forward.1} parent=1 // pred_fallthru
      _
    // Predicated region
    $region98: #{forward.1} parent=1 // pred_check
      _
    $region99: #{forward.1} parent=1 // pred_check_branch
      %236 = sbr.rel (0) target = $region101
    $region100: #{forward.1} parent=1 // pred_region
      _
    $region101: #{forward.1} parent=1 // pred_fallthru
      _
    // Predicated region
    $region102: #{forward.1} parent=1 // pred_check
      _
    $region103: #{forward.1} parent=1 // pred_check_branch
      %238 = sbr.rel (0) target = $region105
    $region104: #{forward.1} parent=1 // pred_region
      _
    $region105: #{forward.1} parent=1 // pred_fallthru
      _
    // Predicated region
    $region106: #{forward.1} parent=1 // pred_check
      _
    $region107: #{forward.1} parent=1 // pred_check_branch
      %240 = sbr.rel (0) target = $region109
    $region108: #{forward.1} parent=1 // pred_region
      %s242 = ssub.s32 16, 16
      %243 = vsyncadd [#allocation29], %s242
      %s245 = sshll.u32 [#allocation28], 4
      %s246 = int_to_ptr.vmem [resolvable:$true] %s245
      %248 = dma.hbm_to_vmem [thread:$0]  %s26, 16, %s246, [#allocation29]
    $region109: #{forward.1} parent=1 // pred_fallthru
      _
    // Predicated region
    $region110: #{forward.1} parent=1 // pred_check
      _
    $region111: #{forward.1} parent=1 // pred_check_branch
      %250 = sbr.rel (0) target = $region113
    $region112: #{forward.1} parent=1 // pred_region
      %251 = dma.done [#allocation5], 256
    $region113: #{forward.1} parent=1 // pred_fallthru
      _
    // Predicated region
    $region114: #{forward.1} parent=1 // pred_check
      _
    $region115: #{forward.1} parent=1 // pred_check_branch
      %253 = sbr.rel (0) target = $region117
    $region116: #{forward.1} parent=1 // pred_region
      %254 = dma.done [#allocation8], 16
    $region117: #{forward.1} parent=1 // pred_fallthru
      _
    // Predicated region
    $region118: #{forward.1} parent=1 // pred_check
      _
    $region119: #{forward.1} parent=1 // pred_check_branch
      %256 = sbr.rel (0) target = $region121
    $region120: #{forward.1} parent=1 // pred_region
      %257 = dma.done [#allocation8], 16
    $region121: #{forward.1} parent=1 // pred_fallthru
      _
    // Predicated region
    $region122: #{forward.1} parent=1 // pred_check
      _
    $region123: #{forward.1} parent=1 // pred_check_branch
      %259 = sbr.rel (0) target = $region125
    $region124: #{forward.1} parent=1 // pred_region
      %260 = dma.done [#allocation11], 32
    $region125: #{forward.1} parent=1 // pred_fallthru
      _
    // Predicated region
    $region126: #{forward.1} parent=1 // pred_check
      _
    $region127: #{forward.1} parent=1 // pred_check_branch
      %262 = sbr.rel (0) target = $region129
    $region128: #{forward.1} parent=1 // pred_region
      %263 = dma.done [#allocation11], 32
    $region129: #{forward.1} parent=1 // pred_fallthru
      _
    // Predicated region
    $region130: #{forward.1} parent=1 // pred_check
      _
    $region131: #{forward.1} parent=1 // pred_check_branch
      %265 = sbr.rel (0) target = $region133
    $region132: #{forward.1} parent=1 // pred_region
      %266 = dma.done [#allocation14], 32
    $region133: #{forward.1} parent=1 // pred_fallthru
      _
    // Predicated region
    $region134: #{forward.1} parent=1 // pred_check
      _
    $region135: #{forward.1} parent=1 // pred_check_branch
      %268 = sbr.rel (0) target = $region137
    $region136: #{forward.1} parent=1 // pred_region
      %269 = dma.done [#allocation14], 32
    $region137: #{forward.1} parent=1 // pred_fallthru
      _
    // Predicated region
    $region138: #{forward.1} parent=1 // pred_check
      _
    $region139: #{forward.1} parent=1 // pred_check_branch
      %271 = sbr.rel (0) target = $region141
    $region140: #{forward.1} parent=1 // pred_region
      %272 = dma.done [#allocation17], 32
    $region141: #{forward.1} parent=1 // pred_fallthru
      _
    // Predicated region
    $region142: #{forward.1} parent=1 // pred_check
      _
    $region143: #{forward.1} parent=1 // pred_check_branch
      %274 = sbr.rel (0) target = $region145
    $region144: #{forward.1} parent=1 // pred_region
      %275 = dma.done [#allocation17], 32
    $region145: #{forward.1} parent=1 // pred_fallthru
      _
    // Predicated region
    $region146: #{forward.1} parent=1 // pred_check
      _
    $region147: #{forward.1} parent=1 // pred_check_branch
      %277 = sbr.rel (0) target = $region149
    $region148: #{forward.1} parent=1 // pred_region
      %278 = dma.done [#allocation20], 32
    $region149: #{forward.1} parent=1 // pred_fallthru
      _
    // Predicated region
    $region150: #{forward.1} parent=1 // pred_check
      _
    $region151: #{forward.1} parent=1 // pred_check_branch
      %280 = sbr.rel (0) target = $region153
    $region152: #{forward.1} parent=1 // pred_region
      %281 = dma.done [#allocation20], 32
    $region153: #{forward.1} parent=1 // pred_fallthru
      _
    // Predicated region
    $region154: #{forward.1} parent=1 // pred_check
      _
    $region155: #{forward.1} parent=1 // pred_check_branch
      %283 = sbr.rel (0) target = $region157
    $region156: #{forward.1} parent=1 // pred_region
      %284 = dma.done [#allocation23], 1024
    $region157: #{forward.1} parent=1 // pred_fallthru
      _
    // Predicated region
    $region158: #{forward.1} parent=1 // pred_check
      _
    $region159: #{forward.1} parent=1 // pred_check_branch
      %286 = sbr.rel (0) target = $region161
    $region160: #{forward.1} parent=1 // pred_region
      %287 = dma.done [#allocation23], 32
    $region161: #{forward.1} parent=1 // pred_fallthru
      _
    // Predicated region
    $region162: #{forward.1} parent=1 // pred_check
      _
    $region163: #{forward.1} parent=1 // pred_check_branch
      %289 = sbr.rel (0) target = $region165
    $region164: #{forward.1} parent=1 // pred_region
      %290 = dma.done [#allocation26], 32
    $region165: #{forward.1} parent=1 // pred_fallthru
      _
    // Predicated region
    $region166: #{forward.1} parent=1 // pred_check
      _
    $region167: #{forward.1} parent=1 // pred_check_branch
      %292 = sbr.rel (0) target = $region169
    $region168: #{forward.1} parent=1 // pred_region
      %293 = dma.done [#allocation26], 16
    $region169: #{forward.1} parent=1 // pred_fallthru
      _
    // Predicated region
    $region170: #{forward.1} parent=1 // pred_check
      _
    $region171: #{forward.1} parent=1 // pred_check_branch
      %295 = sbr.rel (0) target = $region173
    $region172: #{forward.1} parent=1 // pred_region
      %296 = dma.done [#allocation29], 16
    $region173: #{forward.1} parent=1 // pred_fallthru
      _
    %v297 = vld [vmem:[%s1] sm:$0x3]
    %vm298 = vcmp.gt.f32.partialorder %v297, 0.0
    %v299 = vsel %vm298, 0.0, -1e+09
    %v300 = vld [vmem:[%s0] sm:$0xff]
    %v301 = vld [vmem:[%s0 + $0x8] sm:$0xff]
    %v302 = vlaneseq
    %v303 = vand.u32 %v302, 127
    %304 = vset.pattern.permute.xlu0 0
    %305 = vperm.xlu0 %304, %v300
    %v306 = vpop.permute.xlu0 %305
    %307 = vset.pattern.permute.xlu0 0
    %308 = vperm.xlu0 %307, %v301
    %v309 = vpop.permute.xlu0 %308
    %vm310 = vcmp.eq.s32.totalorder %v306, %v303
    %vm311 = vcmp.eq.s32.totalorder %v309, %v303
    %v312 = vsel %vm310, 1, 0
    %v313 = vsel %vm311, 1, 0
    %v314 = vcvt.s32.f32 %v312
    %v315 = vcvt.s32.f32 %v313
    %v316 = vld [vmem:[#allocation4] sm:$0xff]
    %v317 = vld [vmem:[%s2] sm:$0xff]
    %v318 = vld [vmem:[%s2 + $0x8] sm:$0xff]
    %v319 = vld [vmem:[%s2 + $0x10] sm:$0xff]
    %v320 = vld [vmem:[%s2 + $0x18] sm:$0xff]
    %v321 = vld [vmem:[%s2 + $0x20] sm:$0xff]
    %v322 = vld [vmem:[%s2 + $0x28] sm:$0xff]
    %v323 = vld [vmem:[%s2 + $0x30] sm:$0xff]
    %v324 = vld [vmem:[%s2 + $0x38] sm:$0xff]
    %v325 = vld [vmem:[%s2 + $0x40] sm:$0xff]
    %v326 = vld [vmem:[%s2 + $0x48] sm:$0xff]
    %v327 = vld [vmem:[%s2 + $0x50] sm:$0xff]
    %v328 = vld [vmem:[%s2 + $0x58] sm:$0xff]
    %v329 = vld [vmem:[%s2 + $0x60] sm:$0xf]
    %vm330 = vcmask 818176
    %v332 = vsel %vm330, %v314, 0
    %v335 = vsel %vm330, %v315, 0
    %vm337 = vcmask 1043456
    %v339 = vsel %vm337, %v329, 0
    %341 = vmatprep.subr.mxu0 0.0
    %342 = vmatpush1.msra.mxu0 %v317
    %343 = vmatprep.subr.mxu0 0.0
    %344 = vmatpush1.msra.mxu0 %v318
    %345 = vmatprep.subr.mxu0 0.0
    %346 = vmatpush1.msra.mxu0 %v319
    %347 = vmatprep.subr.mxu0 0.0
    %348 = vmatpush1.msra.mxu0 %v320
    %349 = vmatprep.subr.mxu0 0.0
    %350 = vmatpush1.msra.mxu0 %v321
    %351 = vmatprep.subr.mxu0 0.0
    %352 = vmatpush1.msra.mxu0 %v322
    %353 = vmatprep.subr.mxu0 0.0
    %354 = vmatpush1.msra.mxu0 %v323
    %355 = vmatprep.subr.mxu0 0.0
    %356 = vmatpush1.msra.mxu0 %v324
    %357 = vmatprep.subr.mxu0 0.0
    %358 = vmatpush1.msra.mxu0 %v325
    %359 = vmatprep.subr.mxu0 0.0
    %360 = vmatpush1.msra.mxu0 %v326
    %361 = vmatprep.subr.mxu0 0.0
    %362 = vmatpush1.msra.mxu0 %v327
    %363 = vmatprep.subr.mxu0 0.0
    %364 = vmatpush1.msra.mxu0 %v328
    %365 = vmatprep.subr.mxu0 0.0
    %366 = vmatpush1.msra.mxu0 %v339
    %367 = vmatprep.subr.mxu0 0.0
    %368 = vmatpush1.msra.mxu0 0.0
    %369 = vmatprep.subr.mxu0 0.0
    %370 = vmatpush1.msra.mxu0 0.0
    %371 = vmatprep.subr.mxu0 0.0
    %372 = vmatpush1.msra.mxu0 0.0
    %373 = vmatprep.subr.mxu0 0.0
    %374 = vmatpush1.msra.mxu0 0.0
    %375 = vmatprep.subr.mxu0 0.0
    %376 = vmatpush1.msra.mxu0 0.0
    %377 = vmatprep.subr.mxu0 0.0
    %378 = vmatpush1.msra.mxu0 0.0
    %379 = vmatprep.subr.mxu0 0.0
    %380 = vmatpush1.msra.mxu0 0.0
    %381 = vmatprep.subr.mxu0 0.0
    %382 = vmatpush1.msra.mxu0 0.0
    %383 = vmatprep.subr.mxu0 0.0
    %384 = vmatpush1.msra.mxu0 0.0
    %385 = vmatprep.subr.mxu0 0.0
    %386 = vmatpush1.msra.mxu0 0.0
    %387 = vmatprep.subr.mxu0 0.0
    %388 = vmatpush1.msra.mxu0 0.0
    %389 = vmatprep.subr.mxu0 0.0
    %390 = vmatpush1.msra.mxu0 0.0
    %391 = vmatprep.subr.mxu0 0.0
    %392 = vmatpush1.msra.mxu0 0.0
    %393 = vmatprep.subr.mxu0 0.0
    %394 = vmatpush1.msra.mxu0 0.0
    %395 = vmatprep.subr.mxu0 0.0
    %396 = vmatpush1.msra.mxu0 0.0
    %397 = vmatprep.subr.mxu0 0.0
    %398 = vmatpush1.msra.mxu0 0.0
    %399 = vmatprep.subr.mxu0 0.0
    %400 = vmatpush1.msra.mxu0 0.0
    %401 = vmatprep.subr.mxu0 0.0
    %402 = vmatpush1.msra.mxu0 0.0
    %403 = vmatprep.subr.mxu0 0.0
    %404 = vmatpush1.msra.mxu0 0.0
    %405 = vmatprep.mubr.f32.mxu0 0.0
    %406 = vmatmul.mubr.f32.gmra.mrb[0].mxu0 %v332
    %v407 = vpop.f32.mrb[0].mxu0
    %v408 = vadd.f32 %v316, %v407
    %v409 = vpop.f32.mrb[0].mxu0
    %410 = vmatprep.mubr.f32.mxu0 0.0
    %411 = vmatmul.mubr.f32.gmra.mrb[0].mxu0 %v335
    %v412 = vpop.f32.mrb[0].mxu0
    %v413 = vadd.f32 %v316, %v412
    %v414 = vpop.f32.mrb[0].mxu0
    %415 = vdwg.mxu0
    %v416 = vld [vmem:[#allocation7] sm:$0x1]
    %v417 = vld [vmem:[#allocation9] sm:$0x1]
    %vm418 = vcmask 261120
    %v419 = vsel %vm418, %v408, 0.0
    %420 = vadd.xlane.f32.xlu0 %v419
    %v421 = vpop.xlane.xlu0 %420
    %v422 = vsel %vm418, %v413, 0.0
    %423 = vadd.xlane.f32.xlu0 %v422
    %v424 = vpop.xlane.xlu0 %423
    %v425 = vrcp.pop 32.0
    %v426 = vmul.f32 %v421, %v425
    %v427 = vmul.f32 %v424, %v425
    %v428 = vsub.f32 %v408, %v426
    %v429 = vsub.f32 %v413, %v427
    %v430 = vmul.f32 %v428, %v428
    %v431 = vmul.f32 %v429, %v429
    %v432 = vsel %vm418, %v430, 0.0
    %433 = vadd.xlane.f32.xlu0 %v432
    %v434 = vpop.xlane.xlu0 %433
    %v435 = vsel %vm418, %v431, 0.0
    %436 = vadd.xlane.f32.xlu0 %v435
    %v437 = vpop.xlane.xlu0 %436
    %v438 = vmul.f32 %v434, %v425
    %v439 = vmul.f32 %v437, %v425
    %v440 = vadd.f32 %v438, 1e-12
    %v441 = vadd.f32 %v439, 1e-12
    %v442 = vrsqrt.pop %v440
    %v443 = vrsqrt.pop %v441
    %v444 = vmul.f32 %v428, %v442
    %v445 = vmul.f32 %v429, %v443
    %v447 = vlaneseq
    %v448 = vshrl.u32 %v447, 7
    %v449 = vsub.s32 0, %v448
    %v450 = vrot.slane %v416, %v449
    %v452 = vmul.f32 %v444, %v450
    %v453 = vmul.f32 %v445, %v450
    %v455 = vlaneseq
    %v456 = vshrl.u32 %v455, 7
    %v457 = vsub.s32 0, %v456
    %v458 = vrot.slane %v417, %v457
    %v460 = vadd.f32 %v452, %v458
    %v461 = vadd.f32 %v453, %v458
    %vm462 = vcmp.ge.s32.totalorder %v303, 0
    %vm463 = vcmp.lt.s32.totalorder %v303, 8
    %vm464 = vmand %vm462, %vm463
    %v465 = vsel %vm464, 1, 0
    %v466 = vcvt.s32.f32 %v465
    %vm467 = vcmp.ge.s32.totalorder %v303, 8
    %vm468 = vcmp.lt.s32.totalorder %v303, 16
    %vm469 = vmand %vm467, %vm468
    %v470 = vsel %vm469, 1, 0
    %v471 = vcvt.s32.f32 %v470
    %vm472 = vcmp.ge.s32.totalorder %v303, 16
    %vm473 = vcmp.lt.s32.totalorder %v303, 24
    %vm474 = vmand %vm472, %vm473
    %v475 = vsel %vm474, 1, 0
    %v476 = vcvt.s32.f32 %v475
    %vm477 = vcmp.ge.s32.totalorder %v303, 24
    %vm478 = vcmp.lt.s32.totalorder %v303, 32
    %vm479 = vmand %vm477, %vm478
    %v480 = vsel %vm479, 1, 0
    %v481 = vcvt.s32.f32 %v480
    %v482 = vld [vmem:[%s6] sm:$0xff]
    %v483 = vld [vmem:[%s6 + $0x8] sm:$0xff]
    %v484 = vld [vmem:[%s6 + $0x10] sm:$0xff]
    %v485 = vld [vmem:[%s6 + $0x18] sm:$0xff]
    %v486 = vld [vmem:[#allocation10] sm:$0x1]
    %v488 = vlaneseq
    %v489 = vshrl.u32 %v488, 7
    %v490 = vsub.s32 0, %v489
    %v491 = vrot.slane %v486, %v490
    %v494 = vsel %vm418, %v460, 0
    %v497 = vsel %vm418, %v461, 0
    %499 = vmatprep.subr.mxu0 0.0
    %500 = vmatpush1.msra.mxu0 %v482
    %501 = vmatprep.subr.mxu0 0.0
    %502 = vmatpush1.msra.mxu0 %v483
    %503 = vmatprep.subr.mxu0 0.0
    %504 = vmatpush1.msra.mxu0 %v484
    %505 = vmatprep.subr.mxu0 0.0
    %506 = vmatpush1.msra.mxu0 %v485
    %507 = vmatprep.subr.mxu0 0.0
    %508 = vmatpush1.msra.mxu0 0.0
    %509 = vmatprep.subr.mxu0 0.0
    %510 = vmatpush1.msra.mxu0 0.0
    %511 = vmatprep.subr.mxu0 0.0
    %512 = vmatpush1.msra.mxu0 0.0
    %513 = vmatprep.subr.mxu0 0.0
    %514 = vmatpush1.msra.mxu0 0.0
    %515 = vmatprep.subr.mxu0 0.0
    %516 = vmatpush1.msra.mxu0 0.0
    %517 = vmatprep.subr.mxu0 0.0
    %518 = vmatpush1.msra.mxu0 0.0
    %519 = vmatprep.subr.mxu0 0.0
    %520 = vmatpush1.msra.mxu0 0.0
    %521 = vmatprep.subr.mxu0 0.0
    %522 = vmatpush1.msra.mxu0 0.0
    %523 = vmatprep.subr.mxu0 0.0
    %524 = vmatpush1.msra.mxu0 0.0
    %525 = vmatprep.subr.mxu0 0.0
    %526 = vmatpush1.msra.mxu0 0.0
    %527 = vmatprep.subr.mxu0 0.0
    %528 = vmatpush1.msra.mxu0 0.0
    %529 = vmatprep.subr.mxu0 0.0
    %530 = vmatpush1.msra.mxu0 0.0
    %531 = vmatprep.subr.mxu0 0.0
    %532 = vmatpush1.msra.mxu0 0.0
    %533 = vmatprep.subr.mxu0 0.0
    %534 = vmatpush1.msra.mxu0 0.0
    %535 = vmatprep.subr.mxu0 0.0
    %536 = vmatpush1.msra.mxu0 0.0
    %537 = vmatprep.subr.mxu0 0.0
    %538 = vmatpush1.msra.mxu0 0.0
    %539 = vmatprep.subr.mxu0 0.0
    %540 = vmatpush1.msra.mxu0 0.0
    %541 = vmatprep.subr.mxu0 0.0
    %542 = vmatpush1.msra.mxu0 0.0
    %543 = vmatprep.subr.mxu0 0.0
    %544 = vmatpush1.msra.mxu0 0.0
    %545 = vmatprep.subr.mxu0 0.0
    %546 = vmatpush1.msra.mxu0 0.0
    %547 = vmatprep.subr.mxu0 0.0
    %548 = vmatpush1.msra.mxu0 0.0
    %549 = vmatprep.subr.mxu0 0.0
    %550 = vmatpush1.msra.mxu0 0.0
    %551 = vmatprep.subr.mxu0 0.0
    %552 = vmatpush1.msra.mxu0 0.0
    %553 = vmatprep.subr.mxu0 0.0
    %554 = vmatpush1.msra.mxu0 0.0
    %555 = vmatprep.subr.mxu0 0.0
    %556 = vmatpush1.msra.mxu0 0.0
    %557 = vmatprep.subr.mxu0 0.0
    %558 = vmatpush1.msra.mxu0 0.0
    %559 = vmatprep.subr.mxu0 0.0
    %560 = vmatpush1.msra.mxu0 0.0
    %561 = vmatprep.subr.mxu0 0.0
    %562 = vmatpush1.msra.mxu0 0.0
    %563 = vmatprep.mubr.f32.mxu0 0.0
    %564 = vmatmul.mubr.f32.gmra.mrb[0].mxu0 %v494
    %v565 = vpop.f32.mrb[0].mxu0
    %v566 = vadd.f32 %v491, %v565
    %v567 = vpop.f32.mrb[0].mxu0
    %568 = vmatprep.mubr.f32.mxu0 0.0
    %569 = vmatmul.mubr.f32.gmra.mrb[0].mxu0 %v497
    %v570 = vpop.f32.mrb[0].mxu0
    %v571 = vadd.f32 %v491, %v570
    %v572 = vpop.f32.mrb[0].mxu0
    %573 = vdwg.mxu0
    %v574 = vmul.f32 %v566, %v466
    %576 = vrot.lane.b32.xlu0 %v566, 96
    %v577 = vpop.permute.xlu0 %576
    %v579 = vsel %vm418, %v574, 0
    %v581 = vsel %vm418, %v577, 0
    %583 = vmatprep.subr.mxu0 0.0
    %584 = vmatpush1.xpose.msra.mxu0 %v581
    %585 = vmatprep.subr.mxu0 0.0
    %586 = vmatpush1.xpose.msra.mxu0 0.0
    %587 = vmatprep.subr.mxu0 0.0
    %588 = vmatpush1.xpose.msra.mxu0 0.0
    %589 = vmatprep.subr.mxu0 0.0
    %590 = vmatpush1.xpose.msra.mxu0 0.0
    %591 = vmatprep.subr.mxu0 0.0
    %592 = vmatpush1.xpose.msra.mxu0 0.0
    %593 = vmatprep.subr.mxu0 0.0
    %594 = vmatpush1.xpose.msra.mxu0 0.0
    %595 = vmatprep.subr.mxu0 0.0
    %596 = vmatpush1.xpose.msra.mxu0 0.0
    %597 = vmatprep.subr.mxu0 0.0
    %598 = vmatpush1.xpose.msra.mxu0 0.0
    %599 = vmatprep.subr.mxu0 0.0
    %600 = vmatpush1.xpose.msra.mxu0 0.0
    %601 = vmatprep.subr.mxu0 0.0
    %602 = vmatpush1.xpose.msra.mxu0 0.0
    %603 = vmatprep.subr.mxu0 0.0
    %604 = vmatpush1.xpose.msra.mxu0 0.0
    %605 = vmatprep.subr.mxu0 0.0
    %606 = vmatpush1.xpose.msra.mxu0 0.0
    %607 = vmatprep.subr.mxu0 0.0
    %608 = vmatpush1.xpose.msra.mxu0 0.0
    %609 = vmatprep.subr.mxu0 0.0
    %610 = vmatpush1.xpose.msra.mxu0 0.0
    %611 = vmatprep.subr.mxu0 0.0
    %612 = vmatpush1.xpose.msra.mxu0 0.0
    %613 = vmatprep.subr.mxu0 0.0
    %614 = vmatpush1.xpose.msra.mxu0 0.0
    %615 = vmatprep.subr.mxu0 0.0
    %616 = vmatpush1.xpose.msra.mxu0 0.0
    %617 = vmatprep.subr.mxu0 0.0
    %618 = vmatpush1.xpose.msra.mxu0 0.0
    %619 = vmatprep.subr.mxu0 0.0
    %620 = vmatpush1.xpose.msra.mxu0 0.0
    %621 = vmatprep.subr.mxu0 0.0
    %622 = vmatpush1.xpose.msra.mxu0 0.0
    %623 = vmatprep.subr.mxu0 0.0
    %624 = vmatpush1.xpose.msra.mxu0 0.0
    %625 = vmatprep.subr.mxu0 0.0
    %626 = vmatpush1.xpose.msra.mxu0 0.0
    %627 = vmatprep.subr.mxu0 0.0
    %628 = vmatpush1.xpose.msra.mxu0 0.0
    %629 = vmatprep.subr.mxu0 0.0
    %630 = vmatpush1.xpose.msra.mxu0 0.0
    %631 = vmatprep.subr.mxu0 0.0
    %632 = vmatpush1.xpose.msra.mxu0 0.0
    %633 = vmatprep.subr.mxu0 0.0
    %634 = vmatpush1.xpose.msra.mxu0 0.0
    %635 = vmatprep.subr.mxu0 0.0
    %636 = vmatpush1.xpose.msra.mxu0 0.0
    %637 = vmatprep.subr.mxu0 0.0
    %638 = vmatpush1.xpose.msra.mxu0 0.0
    %639 = vmatprep.subr.mxu0 0.0
    %640 = vmatpush1.xpose.msra.mxu0 0.0
    %641 = vmatprep.subr.mxu0 0.0
    %642 = vmatpush1.xpose.msra.mxu0 0.0
    %643 = vmatprep.subr.mxu0 0.0
    %644 = vmatpush1.xpose.msra.mxu0 0.0
    %645 = vmatprep.subr.mxu0 0.0
    %646 = vmatpush1.xpose.msra.mxu0 0.0
    %647 = vmatprep.mubr.f32.mxu0 0.0
    %648 = vmatmul.mubr.f32.gmra.mrb[0].mxu0 %v579
    %v649 = vpop.f32.mrb[0].mxu0
    %v650 = vadd.f32 0.0, %v649
    %v651 = vpop.f32.mrb[0].mxu0
    %652 = vdwg.mxu0
    %v653 = vmul.f32 %v650, 0.35355338
    %v654 = vlaneseq
    %v655 = vshrl.u32 %v654, 7
    %v656 = vsub.s32 0, %v655
    %v657 = vrot.slane %v299, %v656
    %v658 = vadd.f32 %v653, %v657
    %vm659 = vcmask 64512
    %v660 = vsel %vm659, %v658, -inf
    %661 = vmax.xlane.f32.xlu0 %v660
    %v662 = vpop.xlane.xlu0 %661
    %v663 = vsub.f32 %v658, %v662
    %v664 = vmul.f32 %v663, 1.442695
    %v665 = vpow.pop %v664
    %v666 = vsel %vm659, %v665, 0.0
    %667 = vadd.xlane.f32.xlu0 %v666
    %v668 = vpop.xlane.xlu0 %667
    %v669 = vrcp.pop %v668
    %v670 = vmul.f32 %v665, %v669
    %672 = vrot.lane.b32.xlu0 %v466, 64
    %v673 = vpop.permute.xlu0 %672
    %v675 = vmul.f32 %v566, %v673
    %v676 = vmul.f32 %v566, %v471
    %v678 = vsel %vm418, %v676, 0
    %680 = vmatprep.subr.mxu0 0.0
    %681 = vmatpush1.xpose.msra.mxu0 %v581
    %682 = vmatprep.subr.mxu0 0.0
    %683 = vmatpush1.xpose.msra.mxu0 0.0
    %684 = vmatprep.subr.mxu0 0.0
    %685 = vmatpush1.xpose.msra.mxu0 0.0
    %686 = vmatprep.subr.mxu0 0.0
    %687 = vmatpush1.xpose.msra.mxu0 0.0
    %688 = vmatprep.subr.mxu0 0.0
    %689 = vmatpush1.xpose.msra.mxu0 0.0
    %690 = vmatprep.subr.mxu0 0.0
    %691 = vmatpush1.xpose.msra.mxu0 0.0
    %692 = vmatprep.subr.mxu0 0.0
    %693 = vmatpush1.xpose.msra.mxu0 0.0
    %694 = vmatprep.subr.mxu0 0.0
    %695 = vmatpush1.xpose.msra.mxu0 0.0
    %696 = vmatprep.subr.mxu0 0.0
    %697 = vmatpush1.xpose.msra.mxu0 0.0
    %698 = vmatprep.subr.mxu0 0.0
    %699 = vmatpush1.xpose.msra.mxu0 0.0
    %700 = vmatprep.subr.mxu0 0.0
    %701 = vmatpush1.xpose.msra.mxu0 0.0
    %702 = vmatprep.subr.mxu0 0.0
    %703 = vmatpush1.xpose.msra.mxu0 0.0
    %704 = vmatprep.subr.mxu0 0.0
    %705 = vmatpush1.xpose.msra.mxu0 0.0
    %706 = vmatprep.subr.mxu0 0.0
    %707 = vmatpush1.xpose.msra.mxu0 0.0
    %708 = vmatprep.subr.mxu0 0.0
    %709 = vmatpush1.xpose.msra.mxu0 0.0
    %710 = vmatprep.subr.mxu0 0.0
    %711 = vmatpush1.xpose.msra.mxu0 0.0
    %712 = vmatprep.subr.mxu0 0.0
    %713 = vmatpush1.xpose.msra.mxu0 0.0
    %714 = vmatprep.subr.mxu0 0.0
    %715 = vmatpush1.xpose.msra.mxu0 0.0
    %716 = vmatprep.subr.mxu0 0.0
    %717 = vmatpush1.xpose.msra.mxu0 0.0
    %718 = vmatprep.subr.mxu0 0.0
    %719 = vmatpush1.xpose.msra.mxu0 0.0
    %720 = vmatprep.subr.mxu0 0.0
    %721 = vmatpush1.xpose.msra.mxu0 0.0
    %722 = vmatprep.subr.mxu0 0.0
    %723 = vmatpush1.xpose.msra.mxu0 0.0
    %724 = vmatprep.subr.mxu0 0.0
    %725 = vmatpush1.xpose.msra.mxu0 0.0
    %726 = vmatprep.subr.mxu0 0.0
    %727 = vmatpush1.xpose.msra.mxu0 0.0
    %728 = vmatprep.subr.mxu0 0.0
    %729 = vmatpush1.xpose.msra.mxu0 0.0
    %730 = vmatprep.subr.mxu0 0.0
    %731 = vmatpush1.xpose.msra.mxu0 0.0
    %732 = vmatprep.subr.mxu0 0.0
    %733 = vmatpush1.xpose.msra.mxu0 0.0
    %734 = vmatprep.subr.mxu0 0.0
    %735 = vmatpush1.xpose.msra.mxu0 0.0
    %736 = vmatprep.subr.mxu0 0.0
    %737 = vmatpush1.xpose.msra.mxu0 0.0
    %738 = vmatprep.subr.mxu0 0.0
    %739 = vmatpush1.xpose.msra.mxu0 0.0
    %740 = vmatprep.subr.mxu0 0.0
    %741 = vmatpush1.xpose.msra.mxu0 0.0
    %742 = vmatprep.subr.mxu0 0.0
    %743 = vmatpush1.xpose.msra.mxu0 0.0
    %744 = vmatprep.mubr.f32.mxu0 0.0
    %745 = vmatmul.mubr.f32.gmra.mrb[0].mxu0 %v678
    %v746 = vpop.f32.mrb[0].mxu0
    %v747 = vadd.f32 0.0, %v746
    %v748 = vpop.f32.mrb[0].mxu0
    %749 = vdwg.mxu0
    %v750 = vmul.f32 %v747, 0.35355338
    %v751 = vadd.f32 %v750, %v657
    %v752 = vsel %vm659, %v751, -inf
    %753 = vmax.xlane.f32.xlu0 %v752
    %v754 = vpop.xlane.xlu0 %753
    %v755 = vsub.f32 %v751, %v754
    %v756 = vmul.f32 %v755, 1.442695
    %v757 = vpow.pop %v756
    %v758 = vsel %vm659, %v757, 0.0
    %759 = vadd.xlane.f32.xlu0 %v758
    %v760 = vpop.xlane.xlu0 %759
    %v761 = vrcp.pop %v760
    %v762 = vmul.f32 %v757, %v761
    %764 = vrot.lane.b32.xlu0 %v471, 64
    %v765 = vpop.permute.xlu0 %764
    %v767 = vmul.f32 %v566, %v765
    %769 = vrot.lane.b32.xlu0 %v767, 64
    %v770 = vpop.permute.xlu0 %769
    %v773 = vsel %vm659, %v762, 0
    %775 = vmatprep.subr.mxu0 0.0
    %776 = vmatpush1.msra.mxu0 %v770
    %777 = vmatprep.subr.mxu0 0.0
    %778 = vmatpush1.msra.mxu0 0.0
    %779 = vmatprep.subr.mxu0 0.0
    %780 = vmatpush1.msra.mxu0 0.0
    %781 = vmatprep.subr.mxu0 0.0
    %782 = vmatpush1.msra.mxu0 0.0
    %783 = vmatprep.subr.mxu0 0.0
    %784 = vmatpush1.msra.mxu0 0.0
    %785 = vmatprep.subr.mxu0 0.0
    %786 = vmatpush1.msra.mxu0 0.0
    %787 = vmatprep.subr.mxu0 0.0
    %788 = vmatpush1.msra.mxu0 0.0
    %789 = vmatprep.subr.mxu0 0.0
    %790 = vmatpush1.msra.mxu0 0.0
    %791 = vmatprep.subr.mxu0 0.0
    %792 = vmatpush1.msra.mxu0 0.0
    %793 = vmatprep.subr.mxu0 0.0
    %794 = vmatpush1.msra.mxu0 0.0
    %795 = vmatprep.subr.mxu0 0.0
    %796 = vmatpush1.msra.mxu0 0.0
    %797 = vmatprep.subr.mxu0 0.0
    %798 = vmatpush1.msra.mxu0 0.0
    %799 = vmatprep.subr.mxu0 0.0
    %800 = vmatpush1.msra.mxu0 0.0
    %801 = vmatprep.subr.mxu0 0.0
    %802 = vmatpush1.msra.mxu0 0.0
    %803 = vmatprep.subr.mxu0 0.0
    %804 = vmatpush1.msra.mxu0 0.0
    %805 = vmatprep.subr.mxu0 0.0
    %806 = vmatpush1.msra.mxu0 0.0
    %807 = vmatprep.subr.mxu0 0.0
    %808 = vmatpush1.msra.mxu0 0.0
    %809 = vmatprep.subr.mxu0 0.0
    %810 = vmatpush1.msra.mxu0 0.0
    %811 = vmatprep.subr.mxu0 0.0
    %812 = vmatpush1.msra.mxu0 0.0
    %813 = vmatprep.subr.mxu0 0.0
    %814 = vmatpush1.msra.mxu0 0.0
    %815 = vmatprep.subr.mxu0 0.0
    %816 = vmatpush1.msra.mxu0 0.0
    %817 = vmatprep.subr.mxu0 0.0
    %818 = vmatpush1.msra.mxu0 0.0
    %819 = vmatprep.subr.mxu0 0.0
    %820 = vmatpush1.msra.mxu0 0.0
    %821 = vmatprep.subr.mxu0 0.0
    %822 = vmatpush1.msra.mxu0 0.0
    %823 = vmatprep.subr.mxu0 0.0
    %824 = vmatpush1.msra.mxu0 0.0
    %825 = vmatprep.subr.mxu0 0.0
    %826 = vmatpush1.msra.mxu0 0.0
    %827 = vmatprep.subr.mxu0 0.0
    %828 = vmatpush1.msra.mxu0 0.0
    %829 = vmatprep.subr.mxu0 0.0
    %830 = vmatpush1.msra.mxu0 0.0
    %831 = vmatprep.subr.mxu0 0.0
    %832 = vmatpush1.msra.mxu0 0.0
    %833 = vmatprep.subr.mxu0 0.0
    %834 = vmatpush1.msra.mxu0 0.0
    %835 = vmatprep.subr.mxu0 0.0
    %836 = vmatpush1.msra.mxu0 0.0
    %837 = vmatprep.subr.mxu0 0.0
    %838 = vmatpush1.msra.mxu0 0.0
    %839 = vmatprep.mubr.f32.mxu0 0.0
    %840 = vmatmul.mubr.f32.gmra.mrb[0].mxu0 %v773
    %v841 = vpop.f32.mrb[0].mxu0
    %v842 = vadd.f32 0.0, %v841
    %v843 = vpop.f32.mrb[0].mxu0
    %844 = vdwg.mxu0
    %846 = vrot.lane.b32.xlu0 %v675, 64
    %v847 = vpop.permute.xlu0 %846
    %v850 = vsel %vm659, %v670, 0
    %852 = vmatprep.subr.mxu0 0.0
    %853 = vmatpush1.msra.mxu0 %v847
    %854 = vmatprep.subr.mxu0 0.0
    %855 = vmatpush1.msra.mxu0 0.0
    %856 = vmatprep.subr.mxu0 0.0
    %857 = vmatpush1.msra.mxu0 0.0
    %858 = vmatprep.subr.mxu0 0.0
    %859 = vmatpush1.msra.mxu0 0.0
    %860 = vmatprep.subr.mxu0 0.0
    %861 = vmatpush1.msra.mxu0 0.0
    %862 = vmatprep.subr.mxu0 0.0
    %863 = vmatpush1.msra.mxu0 0.0
    %864 = vmatprep.subr.mxu0 0.0
    %865 = vmatpush1.msra.mxu0 0.0
    %866 = vmatprep.subr.mxu0 0.0
    %867 = vmatpush1.msra.mxu0 0.0
    %868 = vmatprep.subr.mxu0 0.0
    %869 = vmatpush1.msra.mxu0 0.0
    %870 = vmatprep.subr.mxu0 0.0
    %871 = vmatpush1.msra.mxu0 0.0
    %872 = vmatprep.subr.mxu0 0.0
    %873 = vmatpush1.msra.mxu0 0.0
    %874 = vmatprep.subr.mxu0 0.0
    %875 = vmatpush1.msra.mxu0 0.0
    %876 = vmatprep.subr.mxu0 0.0
    %877 = vmatpush1.msra.mxu0 0.0
    %878 = vmatprep.subr.mxu0 0.0
    %879 = vmatpush1.msra.mxu0 0.0
    %880 = vmatprep.subr.mxu0 0.0
    %881 = vmatpush1.msra.mxu0 0.0
    %882 = vmatprep.subr.mxu0 0.0
    %883 = vmatpush1.msra.mxu0 0.0
    %884 = vmatprep.subr.mxu0 0.0
    %885 = vmatpush1.msra.mxu0 0.0
    %886 = vmatprep.subr.mxu0 0.0
    %887 = vmatpush1.msra.mxu0 0.0
    %888 = vmatprep.subr.mxu0 0.0
    %889 = vmatpush1.msra.mxu0 0.0
    %890 = vmatprep.subr.mxu0 0.0
    %891 = vmatpush1.msra.mxu0 0.0
    %892 = vmatprep.subr.mxu0 0.0
    %893 = vmatpush1.msra.mxu0 0.0
    %894 = vmatprep.subr.mxu0 0.0
    %895 = vmatpush1.msra.mxu0 0.0
    %896 = vmatprep.subr.mxu0 0.0
    %897 = vmatpush1.msra.mxu0 0.0
    %898 = vmatprep.subr.mxu0 0.0
    %899 = vmatpush1.msra.mxu0 0.0
    %900 = vmatprep.subr.mxu0 0.0
    %901 = vmatpush1.msra.mxu0 0.0
    %902 = vmatprep.subr.mxu0 0.0
    %903 = vmatpush1.msra.mxu0 0.0
    %904 = vmatprep.subr.mxu0 0.0
    %905 = vmatpush1.msra.mxu0 0.0
    %906 = vmatprep.subr.mxu0 0.0
    %907 = vmatpush1.msra.mxu0 0.0
    %908 = vmatprep.subr.mxu0 0.0
    %909 = vmatpush1.msra.mxu0 0.0
    %910 = vmatprep.subr.mxu0 0.0
    %911 = vmatpush1.msra.mxu0 0.0
    %912 = vmatprep.subr.mxu0 0.0
    %913 = vmatpush1.msra.mxu0 0.0
    %914 = vmatprep.subr.mxu0 0.0
    %915 = vmatpush1.msra.mxu0 0.0
    %916 = vmatprep.mubr.f32.mxu0 0.0
    %917 = vmatmul.mubr.f32.gmra.mrb[0].mxu0 %v850
    %v918 = vpop.f32.mrb[0].mxu0
    %v919 = vadd.f32 %v842, %v918
    %v920 = vpop.f32.mrb[0].mxu0
    %921 = vdwg.mxu0
    %v922 = vmul.f32 %v566, %v476
    %v924 = vsel %vm418, %v922, 0
    %926 = vmatprep.subr.mxu0 0.0
    %927 = vmatpush1.xpose.msra.mxu0 %v581
    %928 = vmatprep.subr.mxu0 0.0
    %929 = vmatpush1.xpose.msra.mxu0 0.0
    %930 = vmatprep.subr.mxu0 0.0
    %931 = vmatpush1.xpose.msra.mxu0 0.0
    %932 = vmatprep.subr.mxu0 0.0
    %933 = vmatpush1.xpose.msra.mxu0 0.0
    %934 = vmatprep.subr.mxu0 0.0
    %935 = vmatpush1.xpose.msra.mxu0 0.0
    %936 = vmatprep.subr.mxu0 0.0
    %937 = vmatpush1.xpose.msra.mxu0 0.0
    %938 = vmatprep.subr.mxu0 0.0
    %939 = vmatpush1.xpose.msra.mxu0 0.0
    %940 = vmatprep.subr.mxu0 0.0
    %941 = vmatpush1.xpose.msra.mxu0 0.0
    %942 = vmatprep.subr.mxu0 0.0
    %943 = vmatpush1.xpose.msra.mxu0 0.0
    %944 = vmatprep.subr.mxu0 0.0
    %945 = vmatpush1.xpose.msra.mxu0 0.0
    %946 = vmatprep.subr.mxu0 0.0
    %947 = vmatpush1.xpose.msra.mxu0 0.0
    %948 = vmatprep.subr.mxu0 0.0
    %949 = vmatpush1.xpose.msra.mxu0 0.0
    %950 = vmatprep.subr.mxu0 0.0
    %951 = vmatpush1.xpose.msra.mxu0 0.0
    %952 = vmatprep.subr.mxu0 0.0
    %953 = vmatpush1.xpose.msra.mxu0 0.0
    %954 = vmatprep.subr.mxu0 0.0
    %955 = vmatpush1.xpose.msra.mxu0 0.0
    %956 = vmatprep.subr.mxu0 0.0
    %957 = vmatpush1.xpose.msra.mxu0 0.0
    %958 = vmatprep.subr.mxu0 0.0
    %959 = vmatpush1.xpose.msra.mxu0 0.0
    %960 = vmatprep.subr.mxu0 0.0
    %961 = vmatpush1.xpose.msra.mxu0 0.0
    %962 = vmatprep.subr.mxu0 0.0
    %963 = vmatpush1.xpose.msra.mxu0 0.0
    %964 = vmatprep.subr.mxu0 0.0
    %965 = vmatpush1.xpose.msra.mxu0 0.0
    %966 = vmatprep.subr.mxu0 0.0
    %967 = vmatpush1.xpose.msra.mxu0 0.0
    %968 = vmatprep.subr.mxu0 0.0
    %969 = vmatpush1.xpose.msra.mxu0 0.0
    %970 = vmatprep.subr.mxu0 0.0
    %971 = vmatpush1.xpose.msra.mxu0 0.0
    %972 = vmatprep.subr.mxu0 0.0
    %973 = vmatpush1.xpose.msra.mxu0 0.0
    %974 = vmatprep.subr.mxu0 0.0
    %975 = vmatpush1.xpose.msra.mxu0 0.0
    %976 = vmatprep.subr.mxu0 0.0
    %977 = vmatpush1.xpose.msra.mxu0 0.0
    %978 = vmatprep.subr.mxu0 0.0
    %979 = vmatpush1.xpose.msra.mxu0 0.0
    %980 = vmatprep.subr.mxu0 0.0
    %981 = vmatpush1.xpose.msra.mxu0 0.0
    %982 = vmatprep.subr.mxu0 0.0
    %983 = vmatpush1.xpose.msra.mxu0 0.0
    %984 = vmatprep.subr.mxu0 0.0
    %985 = vmatpush1.xpose.msra.mxu0 0.0
    %986 = vmatprep.subr.mxu0 0.0
    %987 = vmatpush1.xpose.msra.mxu0 0.0
    %988 = vmatprep.subr.mxu0 0.0
    %989 = vmatpush1.xpose.msra.mxu0 0.0
    %990 = vmatprep.mubr.f32.mxu0 0.0
    %991 = vmatmul.mubr.f32.gmra.mrb[0].mxu0 %v924
    %v992 = vpop.f32.mrb[0].mxu0
    %v993 = vadd.f32 0.0, %v992
    %v994 = vpop.f32.mrb[0].mxu0
    %995 = vdwg.mxu0
    %v996 = vmul.f32 %v993, 0.35355338
    %v997 = vadd.f32 %v996, %v657
    %v998 = vsel %vm659, %v997, -inf
    %999 = vmax.xlane.f32.xlu0 %v998
    %v1000 = vpop.xlane.xlu0 %999
    %v1001 = vsub.f32 %v997, %v1000
    %v1002 = vmul.f32 %v1001, 1.442695
    %v1003 = vpow.pop %v1002
    %v1004 = vsel %vm659, %v1003, 0.0
    %1005 = vadd.xlane.f32.xlu0 %v1004
    %v1006 = vpop.xlane.xlu0 %1005
    %v1007 = vrcp.pop %v1006
    %v1008 = vmul.f32 %v1003, %v1007
    %1010 = vrot.lane.b32.xlu0 %v476, 64
    %v1011 = vpop.permute.xlu0 %1010
    %v1013 = vmul.f32 %v566, %v1011
    %1015 = vrot.lane.b32.xlu0 %v1013, 64
    %v1016 = vpop.permute.xlu0 %1015
    %v1019 = vsel %vm659, %v1008, 0
    %1021 = vmatprep.subr.mxu0 0.0
    %1022 = vmatpush1.msra.mxu0 %v1016
    %1023 = vmatprep.subr.mxu0 0.0
    %1024 = vmatpush1.msra.mxu0 0.0
    %1025 = vmatprep.subr.mxu0 0.0
    %1026 = vmatpush1.msra.mxu0 0.0
    %1027 = vmatprep.subr.mxu0 0.0
    %1028 = vmatpush1.msra.mxu0 0.0
    %1029 = vmatprep.subr.mxu0 0.0
    %1030 = vmatpush1.msra.mxu0 0.0
    %1031 = vmatprep.subr.mxu0 0.0
    %1032 = vmatpush1.msra.mxu0 0.0
    %1033 = vmatprep.subr.mxu0 0.0
    %1034 = vmatpush1.msra.mxu0 0.0
    %1035 = vmatprep.subr.mxu0 0.0
    %1036 = vmatpush1.msra.mxu0 0.0
    %1037 = vmatprep.subr.mxu0 0.0
    %1038 = vmatpush1.msra.mxu0 0.0
    %1039 = vmatprep.subr.mxu0 0.0
    %1040 = vmatpush1.msra.mxu0 0.0
    %1041 = vmatprep.subr.mxu0 0.0
    %1042 = vmatpush1.msra.mxu0 0.0
    %1043 = vmatprep.subr.mxu0 0.0
    %1044 = vmatpush1.msra.mxu0 0.0
    %1045 = vmatprep.subr.mxu0 0.0
    %1046 = vmatpush1.msra.mxu0 0.0
    %1047 = vmatprep.subr.mxu0 0.0
    %1048 = vmatpush1.msra.mxu0 0.0
    %1049 = vmatprep.subr.mxu0 0.0
    %1050 = vmatpush1.msra.mxu0 0.0
    %1051 = vmatprep.subr.mxu0 0.0
    %1052 = vmatpush1.msra.mxu0 0.0
    %1053 = vmatprep.subr.mxu0 0.0
    %1054 = vmatpush1.msra.mxu0 0.0
    %1055 = vmatprep.subr.mxu0 0.0
    %1056 = vmatpush1.msra.mxu0 0.0
    %1057 = vmatprep.subr.mxu0 0.0
    %1058 = vmatpush1.msra.mxu0 0.0
    %1059 = vmatprep.subr.mxu0 0.0
    %1060 = vmatpush1.msra.mxu0 0.0
    %1061 = vmatprep.subr.mxu0 0.0
    %1062 = vmatpush1.msra.mxu0 0.0
    %1063 = vmatprep.subr.mxu0 0.0
    %1064 = vmatpush1.msra.mxu0 0.0
    %1065 = vmatprep.subr.mxu0 0.0
    %1066 = vmatpush1.msra.mxu0 0.0
    %1067 = vmatprep.subr.mxu0 0.0
    %1068 = vmatpush1.msra.mxu0 0.0
    %1069 = vmatprep.subr.mxu0 0.0
    %1070 = vmatpush1.msra.mxu0 0.0
    %1071 = vmatprep.subr.mxu0 0.0
    %1072 = vmatpush1.msra.mxu0 0.0
    %1073 = vmatprep.subr.mxu0 0.0
    %1074 = vmatpush1.msra.mxu0 0.0
    %1075 = vmatprep.subr.mxu0 0.0
    %1076 = vmatpush1.msra.mxu0 0.0
    %1077 = vmatprep.subr.mxu0 0.0
    %1078 = vmatpush1.msra.mxu0 0.0
    %1079 = vmatprep.subr.mxu0 0.0
    %1080 = vmatpush1.msra.mxu0 0.0
    %1081 = vmatprep.subr.mxu0 0.0
    %1082 = vmatpush1.msra.mxu0 0.0
    %1083 = vmatprep.subr.mxu0 0.0
    %1084 = vmatpush1.msra.mxu0 0.0
    %1085 = vmatprep.mubr.f32.mxu0 0.0
    %1086 = vmatmul.mubr.f32.gmra.mrb[0].mxu0 %v1019
    %v1087 = vpop.f32.mrb[0].mxu0
    %v1088 = vadd.f32 0.0, %v1087
    %v1089 = vpop.f32.mrb[0].mxu0
    %1090 = vdwg.mxu0
    %v1091 = vadd.f32 %v919, %v1088
    %v1092 = vmul.f32 %v566, %v481
    %v1094 = vsel %vm418, %v1092, 0
    %1096 = vmatprep.subr.mxu0 0.0
    %1097 = vmatpush1.xpose.msra.mxu0 %v581
    %1098 = vmatprep.subr.mxu0 0.0
    %1099 = vmatpush1.xpose.msra.mxu0 0.0
    %1100 = vmatprep.subr.mxu0 0.0
    %1101 = vmatpush1.xpose.msra.mxu0 0.0
    %1102 = vmatprep.subr.mxu0 0.0
    %1103 = vmatpush1.xpose.msra.mxu0 0.0
    %1104 = vmatprep.subr.mxu0 0.0
    %1105 = vmatpush1.xpose.msra.mxu0 0.0
    %1106 = vmatprep.subr.mxu0 0.0
    %1107 = vmatpush1.xpose.msra.mxu0 0.0
    %1108 = vmatprep.subr.mxu0 0.0
    %1109 = vmatpush1.xpose.msra.mxu0 0.0
    %1110 = vmatprep.subr.mxu0 0.0
    %1111 = vmatpush1.xpose.msra.mxu0 0.0
    %1112 = vmatprep.subr.mxu0 0.0
    %1113 = vmatpush1.xpose.msra.mxu0 0.0
    %1114 = vmatprep.subr.mxu0 0.0
    %1115 = vmatpush1.xpose.msra.mxu0 0.0
    %1116 = vmatprep.subr.mxu0 0.0
    %1117 = vmatpush1.xpose.msra.mxu0 0.0
    %1118 = vmatprep.subr.mxu0 0.0
    %1119 = vmatpush1.xpose.msra.mxu0 0.0
    %1120 = vmatprep.subr.mxu0 0.0
    %1121 = vmatpush1.xpose.msra.mxu0 0.0
    %1122 = vmatprep.subr.mxu0 0.0
    %1123 = vmatpush1.xpose.msra.mxu0 0.0
    %1124 = vmatprep.subr.mxu0 0.0
    %1125 = vmatpush1.xpose.msra.mxu0 0.0
    %1126 = vmatprep.subr.mxu0 0.0
    %1127 = vmatpush1.xpose.msra.mxu0 0.0
    %1128 = vmatprep.subr.mxu0 0.0
    %1129 = vmatpush1.xpose.msra.mxu0 0.0
    %1130 = vmatprep.subr.mxu0 0.0
    %1131 = vmatpush1.xpose.msra.mxu0 0.0
    %1132 = vmatprep.subr.mxu0 0.0
    %1133 = vmatpush1.xpose.msra.mxu0 0.0
    %1134 = vmatprep.subr.mxu0 0.0
    %1135 = vmatpush1.xpose.msra.mxu0 0.0
    %1136 = vmatprep.subr.mxu0 0.0
    %1137 = vmatpush1.xpose.msra.mxu0 0.0
    %1138 = vmatprep.subr.mxu0 0.0
    %1139 = vmatpush1.xpose.msra.mxu0 0.0
    %1140 = vmatprep.subr.mxu0 0.0
    %1141 = vmatpush1.xpose.msra.mxu0 0.0
    %1142 = vmatprep.subr.mxu0 0.0
    %1143 = vmatpush1.xpose.msra.mxu0 0.0
    %1144 = vmatprep.subr.mxu0 0.0
    %1145 = vmatpush1.xpose.msra.mxu0 0.0
    %1146 = vmatprep.subr.mxu0 0.0
    %1147 = vmatpush1.xpose.msra.mxu0 0.0
    %1148 = vmatprep.subr.mxu0 0.0
    %1149 = vmatpush1.xpose.msra.mxu0 0.0
    %1150 = vmatprep.subr.mxu0 0.0
    %1151 = vmatpush1.xpose.msra.mxu0 0.0
    %1152 = vmatprep.subr.mxu0 0.0
    %1153 = vmatpush1.xpose.msra.mxu0 0.0
    %1154 = vmatprep.subr.mxu0 0.0
    %1155 = vmatpush1.xpose.msra.mxu0 0.0
    %1156 = vmatprep.subr.mxu0 0.0
    %1157 = vmatpush1.xpose.msra.mxu0 0.0
    %1158 = vmatprep.subr.mxu0 0.0
    %1159 = vmatpush1.xpose.msra.mxu0 0.0
    %1160 = vmatprep.mubr.f32.mxu0 0.0
    %1161 = vmatmul.mubr.f32.gmra.mrb[0].mxu0 %v1094
    %v1162 = vpop.f32.mrb[0].mxu0
    %v1163 = vadd.f32 0.0, %v1162
    %v1164 = vpop.f32.mrb[0].mxu0
    %1165 = vdwg.mxu0
    %v1166 = vmul.f32 %v1163, 0.35355338
    %v1167 = vadd.f32 %v1166, %v657
    %v1168 = vsel %vm659, %v1167, -inf
    %1169 = vmax.xlane.f32.xlu0 %v1168
    %v1170 = vpop.xlane.xlu0 %1169
    %v1171 = vsub.f32 %v1167, %v1170
    %v1172 = vmul.f32 %v1171, 1.442695
    %v1173 = vpow.pop %v1172
    %v1174 = vsel %vm659, %v1173, 0.0
    %1175 = vadd.xlane.f32.xlu0 %v1174
    %v1176 = vpop.xlane.xlu0 %1175
    %v1177 = vrcp.pop %v1176
    %v1178 = vmul.f32 %v1173, %v1177
    %1180 = vrot.lane.b32.xlu0 %v481, 64
    %v1181 = vpop.permute.xlu0 %1180
    %v1183 = vmul.f32 %v566, %v1181
    %1185 = vrot.lane.b32.xlu0 %v1183, 64
    %v1186 = vpop.permute.xlu0 %1185
    %v1189 = vsel %vm659, %v1178, 0
    %1191 = vmatprep.subr.mxu0 0.0
    %1192 = vmatpush1.msra.mxu0 %v1186
    %1193 = vmatprep.subr.mxu0 0.0
    %1194 = vmatpush1.msra.mxu0 0.0
    %1195 = vmatprep.subr.mxu0 0.0
    %1196 = vmatpush1.msra.mxu0 0.0
    %1197 = vmatprep.subr.mxu0 0.0
    %1198 = vmatpush1.msra.mxu0 0.0
    %1199 = vmatprep.subr.mxu0 0.0
    %1200 = vmatpush1.msra.mxu0 0.0
    %1201 = vmatprep.subr.mxu0 0.0
    %1202 = vmatpush1.msra.mxu0 0.0
    %1203 = vmatprep.subr.mxu0 0.0
    %1204 = vmatpush1.msra.mxu0 0.0
    %1205 = vmatprep.subr.mxu0 0.0
    %1206 = vmatpush1.msra.mxu0 0.0
    %1207 = vmatprep.subr.mxu0 0.0
    %1208 = vmatpush1.msra.mxu0 0.0
    %1209 = vmatprep.subr.mxu0 0.0
    %1210 = vmatpush1.msra.mxu0 0.0
    %1211 = vmatprep.subr.mxu0 0.0
    %1212 = vmatpush1.msra.mxu0 0.0
    %1213 = vmatprep.subr.mxu0 0.0
    %1214 = vmatpush1.msra.mxu0 0.0
    %1215 = vmatprep.subr.mxu0 0.0
    %1216 = vmatpush1.msra.mxu0 0.0
    %1217 = vmatprep.subr.mxu0 0.0
    %1218 = vmatpush1.msra.mxu0 0.0
    %1219 = vmatprep.subr.mxu0 0.0
    %1220 = vmatpush1.msra.mxu0 0.0
    %1221 = vmatprep.subr.mxu0 0.0
    %1222 = vmatpush1.msra.mxu0 0.0
    %1223 = vmatprep.subr.mxu0 0.0
    %1224 = vmatpush1.msra.mxu0 0.0
    %1225 = vmatprep.subr.mxu0 0.0
    %1226 = vmatpush1.msra.mxu0 0.0
    %1227 = vmatprep.subr.mxu0 0.0
    %1228 = vmatpush1.msra.mxu0 0.0
    %1229 = vmatprep.subr.mxu0 0.0
    %1230 = vmatpush1.msra.mxu0 0.0
    %1231 = vmatprep.subr.mxu0 0.0
    %1232 = vmatpush1.msra.mxu0 0.0
    %1233 = vmatprep.subr.mxu0 0.0
    %1234 = vmatpush1.msra.mxu0 0.0
    %1235 = vmatprep.subr.mxu0 0.0
    %1236 = vmatpush1.msra.mxu0 0.0
    %1237 = vmatprep.subr.mxu0 0.0
    %1238 = vmatpush1.msra.mxu0 0.0
    %1239 = vmatprep.subr.mxu0 0.0
    %1240 = vmatpush1.msra.mxu0 0.0
    %1241 = vmatprep.subr.mxu0 0.0
    %1242 = vmatpush1.msra.mxu0 0.0
    %1243 = vmatprep.subr.mxu0 0.0
    %1244 = vmatpush1.msra.mxu0 0.0
    %1245 = vmatprep.subr.mxu0 0.0
    %1246 = vmatpush1.msra.mxu0 0.0
    %1247 = vmatprep.subr.mxu0 0.0
    %1248 = vmatpush1.msra.mxu0 0.0
    %1249 = vmatprep.subr.mxu0 0.0
    %1250 = vmatpush1.msra.mxu0 0.0
    %1251 = vmatprep.subr.mxu0 0.0
    %1252 = vmatpush1.msra.mxu0 0.0
    %1253 = vmatprep.subr.mxu0 0.0
    %1254 = vmatpush1.msra.mxu0 0.0
    %1255 = vmatprep.mubr.f32.mxu0 0.0
    %1256 = vmatmul.mubr.f32.gmra.mrb[0].mxu0 %v1189
    %v1257 = vpop.f32.mrb[0].mxu0
    %v1258 = vadd.f32 0.0, %v1257
    %v1259 = vpop.f32.mrb[0].mxu0
    %1260 = vdwg.mxu0
    %v1261 = vadd.f32 %v1091, %v1258
    %v1262 = vmul.f32 %v571, %v466
    %1264 = vrot.lane.b32.xlu0 %v571, 96
    %v1265 = vpop.permute.xlu0 %1264
    %v1267 = vsel %vm418, %v1262, 0
    %v1269 = vsel %vm418, %v1265, 0
    %1271 = vmatprep.subr.mxu0 0.0
    %1272 = vmatpush1.xpose.msra.mxu0 %v1269
    %1273 = vmatprep.subr.mxu0 0.0
    %1274 = vmatpush1.xpose.msra.mxu0 0.0
    %1275 = vmatprep.subr.mxu0 0.0
    %1276 = vmatpush1.xpose.msra.mxu0 0.0
    %1277 = vmatprep.subr.mxu0 0.0
    %1278 = vmatpush1.xpose.msra.mxu0 0.0
    %1279 = vmatprep.subr.mxu0 0.0
    %1280 = vmatpush1.xpose.msra.mxu0 0.0
    %1281 = vmatprep.subr.mxu0 0.0
    %1282 = vmatpush1.xpose.msra.mxu0 0.0
    %1283 = vmatprep.subr.mxu0 0.0
    %1284 = vmatpush1.xpose.msra.mxu0 0.0
    %1285 = vmatprep.subr.mxu0 0.0
    %1286 = vmatpush1.xpose.msra.mxu0 0.0
    %1287 = vmatprep.subr.mxu0 0.0
    %1288 = vmatpush1.xpose.msra.mxu0 0.0
    %1289 = vmatprep.subr.mxu0 0.0
    %1290 = vmatpush1.xpose.msra.mxu0 0.0
    %1291 = vmatprep.subr.mxu0 0.0
    %1292 = vmatpush1.xpose.msra.mxu0 0.0
    %1293 = vmatprep.subr.mxu0 0.0
    %1294 = vmatpush1.xpose.msra.mxu0 0.0
    %1295 = vmatprep.subr.mxu0 0.0
    %1296 = vmatpush1.xpose.msra.mxu0 0.0
    %1297 = vmatprep.subr.mxu0 0.0
    %1298 = vmatpush1.xpose.msra.mxu0 0.0
    %1299 = vmatprep.subr.mxu0 0.0
    %1300 = vmatpush1.xpose.msra.mxu0 0.0
    %1301 = vmatprep.subr.mxu0 0.0
    %1302 = vmatpush1.xpose.msra.mxu0 0.0
    %1303 = vmatprep.subr.mxu0 0.0
    %1304 = vmatpush1.xpose.msra.mxu0 0.0
    %1305 = vmatprep.subr.mxu0 0.0
    %1306 = vmatpush1.xpose.msra.mxu0 0.0
    %1307 = vmatprep.subr.mxu0 0.0
    %1308 = vmatpush1.xpose.msra.mxu0 0.0
    %1309 = vmatprep.subr.mxu0 0.0
    %1310 = vmatpush1.xpose.msra.mxu0 0.0
    %1311 = vmatprep.subr.mxu0 0.0
    %1312 = vmatpush1.xpose.msra.mxu0 0.0
    %1313 = vmatprep.subr.mxu0 0.0
    %1314 = vmatpush1.xpose.msra.mxu0 0.0
    %1315 = vmatprep.subr.mxu0 0.0
    %1316 = vmatpush1.xpose.msra.mxu0 0.0
    %1317 = vmatprep.subr.mxu0 0.0
    %1318 = vmatpush1.xpose.msra.mxu0 0.0
    %1319 = vmatprep.subr.mxu0 0.0
    %1320 = vmatpush1.xpose.msra.mxu0 0.0
    %1321 = vmatprep.subr.mxu0 0.0
    %1322 = vmatpush1.xpose.msra.mxu0 0.0
    %1323 = vmatprep.subr.mxu0 0.0
    %1324 = vmatpush1.xpose.msra.mxu0 0.0
    %1325 = vmatprep.subr.mxu0 0.0
    %1326 = vmatpush1.xpose.msra.mxu0 0.0
    %1327 = vmatprep.subr.mxu0 0.0
    %1328 = vmatpush1.xpose.msra.mxu0 0.0
    %1329 = vmatprep.subr.mxu0 0.0
    %1330 = vmatpush1.xpose.msra.mxu0 0.0
    %1331 = vmatprep.subr.mxu0 0.0
    %1332 = vmatpush1.xpose.msra.mxu0 0.0
    %1333 = vmatprep.subr.mxu0 0.0
    %1334 = vmatpush1.xpose.msra.mxu0 0.0
    %1335 = vmatprep.mubr.f32.mxu0 0.0
    %1336 = vmatmul.mubr.f32.gmra.mrb[0].mxu0 %v1267
    %v1337 = vpop.f32.mrb[0].mxu0
    %v1338 = vadd.f32 0.0, %v1337
    %v1339 = vpop.f32.mrb[0].mxu0
    %1340 = vdwg.mxu0
    %v1341 = vmul.f32 %v1338, 0.35355338
    %v1342 = vlaneseq
    %v1343 = vshrl.u32 %v1342, 7
    %v1344 = vsub.s32 1, %v1343
    %v1345 = vrot.slane %v299, %v1344
    %v1346 = vadd.f32 %v1341, %v1345
    %v1347 = vsel %vm659, %v1346, -inf
    %1348 = vmax.xlane.f32.xlu0 %v1347
    %v1349 = vpop.xlane.xlu0 %1348
    %v1350 = vsub.f32 %v1346, %v1349
    %v1351 = vmul.f32 %v1350, 1.442695
    %v1352 = vpow.pop %v1351
    %v1353 = vsel %vm659, %v1352, 0.0
    %1354 = vadd.xlane.f32.xlu0 %v1353
    %v1355 = vpop.xlane.xlu0 %1354
    %v1356 = vrcp.pop %v1355
    %v1357 = vmul.f32 %v1352, %v1356
    %v1358 = vmul.f32 %v571, %v673
    %v1359 = vmul.f32 %v571, %v471
    %v1361 = vsel %vm418, %v1359, 0
    %1363 = vmatprep.subr.mxu0 0.0
    %1364 = vmatpush1.xpose.msra.mxu0 %v1269
    %1365 = vmatprep.subr.mxu0 0.0
    %1366 = vmatpush1.xpose.msra.mxu0 0.0
    %1367 = vmatprep.subr.mxu0 0.0
    %1368 = vmatpush1.xpose.msra.mxu0 0.0
    %1369 = vmatprep.subr.mxu0 0.0
    %1370 = vmatpush1.xpose.msra.mxu0 0.0
    %1371 = vmatprep.subr.mxu0 0.0
    %1372 = vmatpush1.xpose.msra.mxu0 0.0
    %1373 = vmatprep.subr.mxu0 0.0
    %1374 = vmatpush1.xpose.msra.mxu0 0.0
    %1375 = vmatprep.subr.mxu0 0.0
    %1376 = vmatpush1.xpose.msra.mxu0 0.0
    %1377 = vmatprep.subr.mxu0 0.0
    %1378 = vmatpush1.xpose.msra.mxu0 0.0
    %1379 = vmatprep.subr.mxu0 0.0
    %1380 = vmatpush1.xpose.msra.mxu0 0.0
    %1381 = vmatprep.subr.mxu0 0.0
    %1382 = vmatpush1.xpose.msra.mxu0 0.0
    %1383 = vmatprep.subr.mxu0 0.0
    %1384 = vmatpush1.xpose.msra.mxu0 0.0
    %1385 = vmatprep.subr.mxu0 0.0
    %1386 = vmatpush1.xpose.msra.mxu0 0.0
    %1387 = vmatprep.subr.mxu0 0.0
    %1388 = vmatpush1.xpose.msra.mxu0 0.0
    %1389 = vmatprep.subr.mxu0 0.0
    %1390 = vmatpush1.xpose.msra.mxu0 0.0
    %1391 = vmatprep.subr.mxu0 0.0
    %1392 = vmatpush1.xpose.msra.mxu0 0.0
    %1393 = vmatprep.subr.mxu0 0.0
    %1394 = vmatpush1.xpose.msra.mxu0 0.0
    %1395 = vmatprep.subr.mxu0 0.0
    %1396 = vmatpush1.xpose.msra.mxu0 0.0
    %1397 = vmatprep.subr.mxu0 0.0
    %1398 = vmatpush1.xpose.msra.mxu0 0.0
    %1399 = vmatprep.subr.mxu0 0.0
    %1400 = vmatpush1.xpose.msra.mxu0 0.0
    %1401 = vmatprep.subr.mxu0 0.0
    %1402 = vmatpush1.xpose.msra.mxu0 0.0
    %1403 = vmatprep.subr.mxu0 0.0
    %1404 = vmatpush1.xpose.msra.mxu0 0.0
    %1405 = vmatprep.subr.mxu0 0.0
    %1406 = vmatpush1.xpose.msra.mxu0 0.0
    %1407 = vmatprep.subr.mxu0 0.0
    %1408 = vmatpush1.xpose.msra.mxu0 0.0
    %1409 = vmatprep.subr.mxu0 0.0
    %1410 = vmatpush1.xpose.msra.mxu0 0.0
    %1411 = vmatprep.subr.mxu0 0.0
    %1412 = vmatpush1.xpose.msra.mxu0 0.0
    %1413 = vmatprep.subr.mxu0 0.0
    %1414 = vmatpush1.xpose.msra.mxu0 0.0
    %1415 = vmatprep.subr.mxu0 0.0
    %1416 = vmatpush1.xpose.msra.mxu0 0.0
    %1417 = vmatprep.subr.mxu0 0.0
    %1418 = vmatpush1.xpose.msra.mxu0 0.0
    %1419 = vmatprep.subr.mxu0 0.0
    %1420 = vmatpush1.xpose.msra.mxu0 0.0
    %1421 = vmatprep.subr.mxu0 0.0
    %1422 = vmatpush1.xpose.msra.mxu0 0.0
    %1423 = vmatprep.subr.mxu0 0.0
    %1424 = vmatpush1.xpose.msra.mxu0 0.0
    %1425 = vmatprep.subr.mxu0 0.0
    %1426 = vmatpush1.xpose.msra.mxu0 0.0
    %1427 = vmatprep.mubr.f32.mxu0 0.0
    %1428 = vmatmul.mubr.f32.gmra.mrb[0].mxu0 %v1361
    %v1429 = vpop.f32.mrb[0].mxu0
    %v1430 = vadd.f32 0.0, %v1429
    %v1431 = vpop.f32.mrb[0].mxu0
    %1432 = vdwg.mxu0
    %v1433 = vmul.f32 %v1430, 0.35355338
    %v1434 = vadd.f32 %v1433, %v1345
    %v1435 = vsel %vm659, %v1434, -inf
    %1436 = vmax.xlane.f32.xlu0 %v1435
    %v1437 = vpop.xlane.xlu0 %1436
    %v1438 = vsub.f32 %v1434, %v1437
    %v1439 = vmul.f32 %v1438, 1.442695
    %v1440 = vpow.pop %v1439
    %v1441 = vsel %vm659, %v1440, 0.0
    %1442 = vadd.xlane.f32.xlu0 %v1441
    %v1443 = vpop.xlane.xlu0 %1442
    %v1444 = vrcp.pop %v1443
    %v1445 = vmul.f32 %v1440, %v1444
    %v1446 = vmul.f32 %v571, %v765
    %1448 = vrot.lane.b32.xlu0 %v1446, 64
    %v1449 = vpop.permute.xlu0 %1448
    %v1452 = vsel %vm659, %v1445, 0
    %1454 = vmatprep.subr.mxu0 0.0
    %1455 = vmatpush1.msra.mxu0 %v1449
    %1456 = vmatprep.subr.mxu0 0.0
    %1457 = vmatpush1.msra.mxu0 0.0
    %1458 = vmatprep.subr.mxu0 0.0
    %1459 = vmatpush1.msra.mxu0 0.0
    %1460 = vmatprep.subr.mxu0 0.0
    %1461 = vmatpush1.msra.mxu0 0.0
    %1462 = vmatprep.subr.mxu0 0.0
    %1463 = vmatpush1.msra.mxu0 0.0
    %1464 = vmatprep.subr.mxu0 0.0
    %1465 = vmatpush1.msra.mxu0 0.0
    %1466 = vmatprep.subr.mxu0 0.0
    %1467 = vmatpush1.msra.mxu0 0.0
    %1468 = vmatprep.subr.mxu0 0.0
    %1469 = vmatpush1.msra.mxu0 0.0
    %1470 = vmatprep.subr.mxu0 0.0
    %1471 = vmatpush1.msra.mxu0 0.0
    %1472 = vmatprep.subr.mxu0 0.0
    %1473 = vmatpush1.msra.mxu0 0.0
    %1474 = vmatprep.subr.mxu0 0.0
    %1475 = vmatpush1.msra.mxu0 0.0
    %1476 = vmatprep.subr.mxu0 0.0
    %1477 = vmatpush1.msra.mxu0 0.0
    %1478 = vmatprep.subr.mxu0 0.0
    %1479 = vmatpush1.msra.mxu0 0.0
    %1480 = vmatprep.subr.mxu0 0.0
    %1481 = vmatpush1.msra.mxu0 0.0
    %1482 = vmatprep.subr.mxu0 0.0
    %1483 = vmatpush1.msra.mxu0 0.0
    %1484 = vmatprep.subr.mxu0 0.0
    %1485 = vmatpush1.msra.mxu0 0.0
    %1486 = vmatprep.subr.mxu0 0.0
    %1487 = vmatpush1.msra.mxu0 0.0
    %1488 = vmatprep.subr.mxu0 0.0
    %1489 = vmatpush1.msra.mxu0 0.0
    %1490 = vmatprep.subr.mxu0 0.0
    %1491 = vmatpush1.msra.mxu0 0.0
    %1492 = vmatprep.subr.mxu0 0.0
    %1493 = vmatpush1.msra.mxu0 0.0
    %1494 = vmatprep.subr.mxu0 0.0
    %1495 = vmatpush1.msra.mxu0 0.0
    %1496 = vmatprep.subr.mxu0 0.0
    %1497 = vmatpush1.msra.mxu0 0.0
    %1498 = vmatprep.subr.mxu0 0.0
    %1499 = vmatpush1.msra.mxu0 0.0
    %1500 = vmatprep.subr.mxu0 0.0
    %1501 = vmatpush1.msra.mxu0 0.0
    %1502 = vmatprep.subr.mxu0 0.0
    %1503 = vmatpush1.msra.mxu0 0.0
    %1504 = vmatprep.subr.mxu0 0.0
    %1505 = vmatpush1.msra.mxu0 0.0
    %1506 = vmatprep.subr.mxu0 0.0
    %1507 = vmatpush1.msra.mxu0 0.0
    %1508 = vmatprep.subr.mxu0 0.0
    %1509 = vmatpush1.msra.mxu0 0.0
    %1510 = vmatprep.subr.mxu0 0.0
    %1511 = vmatpush1.msra.mxu0 0.0
    %1512 = vmatprep.subr.mxu0 0.0
    %1513 = vmatpush1.msra.mxu0 0.0
    %1514 = vmatprep.subr.mxu0 0.0
    %1515 = vmatpush1.msra.mxu0 0.0
    %1516 = vmatprep.subr.mxu0 0.0
    %1517 = vmatpush1.msra.mxu0 0.0
    %1518 = vmatprep.mubr.f32.mxu0 0.0
    %1519 = vmatmul.mubr.f32.gmra.mrb[0].mxu0 %v1452
    %v1520 = vpop.f32.mrb[0].mxu0
    %v1521 = vadd.f32 0.0, %v1520
    %v1522 = vpop.f32.mrb[0].mxu0
    %1523 = vdwg.mxu0
    %1525 = vrot.lane.b32.xlu0 %v1358, 64
    %v1526 = vpop.permute.xlu0 %1525
    %v1529 = vsel %vm659, %v1357, 0
    %1531 = vmatprep.subr.mxu0 0.0
    %1532 = vmatpush1.msra.mxu0 %v1526
    %1533 = vmatprep.subr.mxu0 0.0
    %1534 = vmatpush1.msra.mxu0 0.0
    %1535 = vmatprep.subr.mxu0 0.0
    %1536 = vmatpush1.msra.mxu0 0.0
    %1537 = vmatprep.subr.mxu0 0.0
    %1538 = vmatpush1.msra.mxu0 0.0
    %1539 = vmatprep.subr.mxu0 0.0
    %1540 = vmatpush1.msra.mxu0 0.0
    %1541 = vmatprep.subr.mxu0 0.0
    %1542 = vmatpush1.msra.mxu0 0.0
    %1543 = vmatprep.subr.mxu0 0.0
    %1544 = vmatpush1.msra.mxu0 0.0
    %1545 = vmatprep.subr.mxu0 0.0
    %1546 = vmatpush1.msra.mxu0 0.0
    %1547 = vmatprep.subr.mxu0 0.0
    %1548 = vmatpush1.msra.mxu0 0.0
    %1549 = vmatprep.subr.mxu0 0.0
    %1550 = vmatpush1.msra.mxu0 0.0
    %1551 = vmatprep.subr.mxu0 0.0
    %1552 = vmatpush1.msra.mxu0 0.0
    %1553 = vmatprep.subr.mxu0 0.0
    %1554 = vmatpush1.msra.mxu0 0.0
    %1555 = vmatprep.subr.mxu0 0.0
    %1556 = vmatpush1.msra.mxu0 0.0
    %1557 = vmatprep.subr.mxu0 0.0
    %1558 = vmatpush1.msra.mxu0 0.0
    %1559 = vmatprep.subr.mxu0 0.0
    %1560 = vmatpush1.msra.mxu0 0.0
    %1561 = vmatprep.subr.mxu0 0.0
    %1562 = vmatpush1.msra.mxu0 0.0
    %1563 = vmatprep.subr.mxu0 0.0
    %1564 = vmatpush1.msra.mxu0 0.0
    %1565 = vmatprep.subr.mxu0 0.0
    %1566 = vmatpush1.msra.mxu0 0.0
    %1567 = vmatprep.subr.mxu0 0.0
    %1568 = vmatpush1.msra.mxu0 0.0
    %1569 = vmatprep.subr.mxu0 0.0
    %1570 = vmatpush1.msra.mxu0 0.0
    %1571 = vmatprep.subr.mxu0 0.0
    %1572 = vmatpush1.msra.mxu0 0.0
    %1573 = vmatprep.subr.mxu0 0.0
    %1574 = vmatpush1.msra.mxu0 0.0
    %1575 = vmatprep.subr.mxu0 0.0
    %1576 = vmatpush1.msra.mxu0 0.0
    %1577 = vmatprep.subr.mxu0 0.0
    %1578 = vmatpush1.msra.mxu0 0.0
    %1579 = vmatprep.subr.mxu0 0.0
    %1580 = vmatpush1.msra.mxu0 0.0
    %1581 = vmatprep.subr.mxu0 0.0
    %1582 = vmatpush1.msra.mxu0 0.0
    %1583 = vmatprep.subr.mxu0 0.0
    %1584 = vmatpush1.msra.mxu0 0.0
    %1585 = vmatprep.subr.mxu0 0.0
    %1586 = vmatpush1.msra.mxu0 0.0
    %1587 = vmatprep.subr.mxu0 0.0
    %1588 = vmatpush1.msra.mxu0 0.0
    %1589 = vmatprep.subr.mxu0 0.0
    %1590 = vmatpush1.msra.mxu0 0.0
    %1591 = vmatprep.subr.mxu0 0.0
    %1592 = vmatpush1.msra.mxu0 0.0
    %1593 = vmatprep.subr.mxu0 0.0
    %1594 = vmatpush1.msra.mxu0 0.0
    %1595 = vmatprep.mubr.f32.mxu0 0.0
    %1596 = vmatmul.mubr.f32.gmra.mrb[0].mxu0 %v1529
    %v1597 = vpop.f32.mrb[0].mxu0
    %v1598 = vadd.f32 %v1521, %v1597
    %v1599 = vpop.f32.mrb[0].mxu0
    %1600 = vdwg.mxu0
    %v1601 = vmul.f32 %v571, %v476
    %v1603 = vsel %vm418, %v1601, 0
    %1605 = vmatprep.subr.mxu0 0.0
    %1606 = vmatpush1.xpose.msra.mxu0 %v1269
    %1607 = vmatprep.subr.mxu0 0.0
    %1608 = vmatpush1.xpose.msra.mxu0 0.0
    %1609 = vmatprep.subr.mxu0 0.0
    %1610 = vmatpush1.xpose.msra.mxu0 0.0
    %1611 = vmatprep.subr.mxu0 0.0
    %1612 = vmatpush1.xpose.msra.mxu0 0.0
    %1613 = vmatprep.subr.mxu0 0.0
    %1614 = vmatpush1.xpose.msra.mxu0 0.0
    %1615 = vmatprep.subr.mxu0 0.0
    %1616 = vmatpush1.xpose.msra.mxu0 0.0
    %1617 = vmatprep.subr.mxu0 0.0
    %1618 = vmatpush1.xpose.msra.mxu0 0.0
    %1619 = vmatprep.subr.mxu0 0.0
    %1620 = vmatpush1.xpose.msra.mxu0 0.0
    %1621 = vmatprep.subr.mxu0 0.0
    %1622 = vmatpush1.xpose.msra.mxu0 0.0
    %1623 = vmatprep.subr.mxu0 0.0
    %1624 = vmatpush1.xpose.msra.mxu0 0.0
    %1625 = vmatprep.subr.mxu0 0.0
    %1626 = vmatpush1.xpose.msra.mxu0 0.0
    %1627 = vmatprep.subr.mxu0 0.0
    %1628 = vmatpush1.xpose.msra.mxu0 0.0
    %1629 = vmatprep.subr.mxu0 0.0
    %1630 = vmatpush1.xpose.msra.mxu0 0.0
    %1631 = vmatprep.subr.mxu0 0.0
    %1632 = vmatpush1.xpose.msra.mxu0 0.0
    %1633 = vmatprep.subr.mxu0 0.0
    %1634 = vmatpush1.xpose.msra.mxu0 0.0
    %1635 = vmatprep.subr.mxu0 0.0
    %1636 = vmatpush1.xpose.msra.mxu0 0.0
    %1637 = vmatprep.subr.mxu0 0.0
    %1638 = vmatpush1.xpose.msra.mxu0 0.0
    %1639 = vmatprep.subr.mxu0 0.0
    %1640 = vmatpush1.xpose.msra.mxu0 0.0
    %1641 = vmatprep.subr.mxu0 0.0
    %1642 = vmatpush1.xpose.msra.mxu0 0.0
    %1643 = vmatprep.subr.mxu0 0.0
    %1644 = vmatpush1.xpose.msra.mxu0 0.0
    %1645 = vmatprep.subr.mxu0 0.0
    %1646 = vmatpush1.xpose.msra.mxu0 0.0
    %1647 = vmatprep.subr.mxu0 0.0
    %1648 = vmatpush1.xpose.msra.mxu0 0.0
    %1649 = vmatprep.subr.mxu0 0.0
    %1650 = vmatpush1.xpose.msra.mxu0 0.0
    %1651 = vmatprep.subr.mxu0 0.0
    %1652 = vmatpush1.xpose.msra.mxu0 0.0
    %1653 = vmatprep.subr.mxu0 0.0
    %1654 = vmatpush1.xpose.msra.mxu0 0.0
    %1655 = vmatprep.subr.mxu0 0.0
    %1656 = vmatpush1.xpose.msra.mxu0 0.0
    %1657 = vmatprep.subr.mxu0 0.0
    %1658 = vmatpush1.xpose.msra.mxu0 0.0
    %1659 = vmatprep.subr.mxu0 0.0
    %1660 = vmatpush1.xpose.msra.mxu0 0.0
    %1661 = vmatprep.subr.mxu0 0.0
    %1662 = vmatpush1.xpose.msra.mxu0 0.0
    %1663 = vmatprep.subr.mxu0 0.0
    %1664 = vmatpush1.xpose.msra.mxu0 0.0
    %1665 = vmatprep.subr.mxu0 0.0
    %1666 = vmatpush1.xpose.msra.mxu0 0.0
    %1667 = vmatprep.subr.mxu0 0.0
    %1668 = vmatpush1.xpose.msra.mxu0 0.0
    %1669 = vmatprep.mubr.f32.mxu0 0.0
    %1670 = vmatmul.mubr.f32.gmra.mrb[0].mxu0 %v1603
    %v1671 = vpop.f32.mrb[0].mxu0
    %v1672 = vadd.f32 0.0, %v1671
    %v1673 = vpop.f32.mrb[0].mxu0
    %1674 = vdwg.mxu0
    %v1675 = vmul.f32 %v1672, 0.35355338
    %v1676 = vadd.f32 %v1675, %v1345
    %v1677 = vsel %vm659, %v1676, -inf
    %1678 = vmax.xlane.f32.xlu0 %v1677
    %v1679 = vpop.xlane.xlu0 %1678
    %v1680 = vsub.f32 %v1676, %v1679
    %v1681 = vmul.f32 %v1680, 1.442695
    %v1682 = vpow.pop %v1681
    %v1683 = vsel %vm659, %v1682, 0.0
    %1684 = vadd.xlane.f32.xlu0 %v1683
    %v1685 = vpop.xlane.xlu0 %1684
    %v1686 = vrcp.pop %v1685
    %v1687 = vmul.f32 %v1682, %v1686
    %v1688 = vmul.f32 %v571, %v1011
    %1690 = vrot.lane.b32.xlu0 %v1688, 64
    %v1691 = vpop.permute.xlu0 %1690
    %v1694 = vsel %vm659, %v1687, 0
    %1696 = vmatprep.subr.mxu0 0.0
    %1697 = vmatpush1.msra.mxu0 %v1691
    %1698 = vmatprep.subr.mxu0 0.0
    %1699 = vmatpush1.msra.mxu0 0.0
    %1700 = vmatprep.subr.mxu0 0.0
    %1701 = vmatpush1.msra.mxu0 0.0
    %1702 = vmatprep.subr.mxu0 0.0
    %1703 = vmatpush1.msra.mxu0 0.0
    %1704 = vmatprep.subr.mxu0 0.0
    %1705 = vmatpush1.msra.mxu0 0.0
    %1706 = vmatprep.subr.mxu0 0.0
    %1707 = vmatpush1.msra.mxu0 0.0
    %1708 = vmatprep.subr.mxu0 0.0
    %1709 = vmatpush1.msra.mxu0 0.0
    %1710 = vmatprep.subr.mxu0 0.0
    %1711 = vmatpush1.msra.mxu0 0.0
    %1712 = vmatprep.subr.mxu0 0.0
    %1713 = vmatpush1.msra.mxu0 0.0
    %1714 = vmatprep.subr.mxu0 0.0
    %1715 = vmatpush1.msra.mxu0 0.0
    %1716 = vmatprep.subr.mxu0 0.0
    %1717 = vmatpush1.msra.mxu0 0.0
    %1718 = vmatprep.subr.mxu0 0.0
    %1719 = vmatpush1.msra.mxu0 0.0
    %1720 = vmatprep.subr.mxu0 0.0
    %1721 = vmatpush1.msra.mxu0 0.0
    %1722 = vmatprep.subr.mxu0 0.0
    %1723 = vmatpush1.msra.mxu0 0.0
    %1724 = vmatprep.subr.mxu0 0.0
    %1725 = vmatpush1.msra.mxu0 0.0
    %1726 = vmatprep.subr.mxu0 0.0
    %1727 = vmatpush1.msra.mxu0 0.0
    %1728 = vmatprep.subr.mxu0 0.0
    %1729 = vmatpush1.msra.mxu0 0.0
    %1730 = vmatprep.subr.mxu0 0.0
    %1731 = vmatpush1.msra.mxu0 0.0
    %1732 = vmatprep.subr.mxu0 0.0
    %1733 = vmatpush1.msra.mxu0 0.0
    %1734 = vmatprep.subr.mxu0 0.0
    %1735 = vmatpush1.msra.mxu0 0.0
    %1736 = vmatprep.subr.mxu0 0.0
    %1737 = vmatpush1.msra.mxu0 0.0
    %1738 = vmatprep.subr.mxu0 0.0
    %1739 = vmatpush1.msra.mxu0 0.0
    %1740 = vmatprep.subr.mxu0 0.0
    %1741 = vmatpush1.msra.mxu0 0.0
    %1742 = vmatprep.subr.mxu0 0.0
    %1743 = vmatpush1.msra.mxu0 0.0
    %1744 = vmatprep.subr.mxu0 0.0
    %1745 = vmatpush1.msra.mxu0 0.0
    %1746 = vmatprep.subr.mxu0 0.0
    %1747 = vmatpush1.msra.mxu0 0.0
    %1748 = vmatprep.subr.mxu0 0.0
    %1749 = vmatpush1.msra.mxu0 0.0
    %1750 = vmatprep.subr.mxu0 0.0
    %1751 = vmatpush1.msra.mxu0 0.0
    %1752 = vmatprep.subr.mxu0 0.0
    %1753 = vmatpush1.msra.mxu0 0.0
    %1754 = vmatprep.subr.mxu0 0.0
    %1755 = vmatpush1.msra.mxu0 0.0
    %1756 = vmatprep.subr.mxu0 0.0
    %1757 = vmatpush1.msra.mxu0 0.0
    %1758 = vmatprep.subr.mxu0 0.0
    %1759 = vmatpush1.msra.mxu0 0.0
    %1760 = vmatprep.mubr.f32.mxu0 0.0
    %1761 = vmatmul.mubr.f32.gmra.mrb[0].mxu0 %v1694
    %v1762 = vpop.f32.mrb[0].mxu0
    %v1763 = vadd.f32 0.0, %v1762
    %v1764 = vpop.f32.mrb[0].mxu0
    %1765 = vdwg.mxu0
    %v1766 = vadd.f32 %v1598, %v1763
    %v1767 = vmul.f32 %v571, %v481
    %v1769 = vsel %vm418, %v1767, 0
    %1771 = vmatprep.subr.mxu0 0.0
    %1772 = vmatpush1.xpose.msra.mxu0 %v1269
    %1773 = vmatprep.subr.mxu0 0.0
    %1774 = vmatpush1.xpose.msra.mxu0 0.0
    %1775 = vmatprep.subr.mxu0 0.0
    %1776 = vmatpush1.xpose.msra.mxu0 0.0
    %1777 = vmatprep.subr.mxu0 0.0
    %1778 = vmatpush1.xpose.msra.mxu0 0.0
    %1779 = vmatprep.subr.mxu0 0.0
    %1780 = vmatpush1.xpose.msra.mxu0 0.0
    %1781 = vmatprep.subr.mxu0 0.0
    %1782 = vmatpush1.xpose.msra.mxu0 0.0
    %1783 = vmatprep.subr.mxu0 0.0
    %1784 = vmatpush1.xpose.msra.mxu0 0.0
    %1785 = vmatprep.subr.mxu0 0.0
    %1786 = vmatpush1.xpose.msra.mxu0 0.0
    %1787 = vmatprep.subr.mxu0 0.0
    %1788 = vmatpush1.xpose.msra.mxu0 0.0
    %1789 = vmatprep.subr.mxu0 0.0
    %1790 = vmatpush1.xpose.msra.mxu0 0.0
    %1791 = vmatprep.subr.mxu0 0.0
    %1792 = vmatpush1.xpose.msra.mxu0 0.0
    %1793 = vmatprep.subr.mxu0 0.0
    %1794 = vmatpush1.xpose.msra.mxu0 0.0
    %1795 = vmatprep.subr.mxu0 0.0
    %1796 = vmatpush1.xpose.msra.mxu0 0.0
    %1797 = vmatprep.subr.mxu0 0.0
    %1798 = vmatpush1.xpose.msra.mxu0 0.0
    %1799 = vmatprep.subr.mxu0 0.0
    %1800 = vmatpush1.xpose.msra.mxu0 0.0
    %1801 = vmatprep.subr.mxu0 0.0
    %1802 = vmatpush1.xpose.msra.mxu0 0.0
    %1803 = vmatprep.subr.mxu0 0.0
    %1804 = vmatpush1.xpose.msra.mxu0 0.0
    %1805 = vmatprep.subr.mxu0 0.0
    %1806 = vmatpush1.xpose.msra.mxu0 0.0
    %1807 = vmatprep.subr.mxu0 0.0
    %1808 = vmatpush1.xpose.msra.mxu0 0.0
    %1809 = vmatprep.subr.mxu0 0.0
    %1810 = vmatpush1.xpose.msra.mxu0 0.0
    %1811 = vmatprep.subr.mxu0 0.0
    %1812 = vmatpush1.xpose.msra.mxu0 0.0
    %1813 = vmatprep.subr.mxu0 0.0
    %1814 = vmatpush1.xpose.msra.mxu0 0.0
    %1815 = vmatprep.subr.mxu0 0.0
    %1816 = vmatpush1.xpose.msra.mxu0 0.0
    %1817 = vmatprep.subr.mxu0 0.0
    %1818 = vmatpush1.xpose.msra.mxu0 0.0
    %1819 = vmatprep.subr.mxu0 0.0
    %1820 = vmatpush1.xpose.msra.mxu0 0.0
    %1821 = vmatprep.subr.mxu0 0.0
    %1822 = vmatpush1.xpose.msra.mxu0 0.0
    %1823 = vmatprep.subr.mxu0 0.0
    %1824 = vmatpush1.xpose.msra.mxu0 0.0
    %1825 = vmatprep.subr.mxu0 0.0
    %1826 = vmatpush1.xpose.msra.mxu0 0.0
    %1827 = vmatprep.subr.mxu0 0.0
    %1828 = vmatpush1.xpose.msra.mxu0 0.0
    %1829 = vmatprep.subr.mxu0 0.0
    %1830 = vmatpush1.xpose.msra.mxu0 0.0
    %1831 = vmatprep.subr.mxu0 0.0
    %1832 = vmatpush1.xpose.msra.mxu0 0.0
    %1833 = vmatprep.subr.mxu0 0.0
    %1834 = vmatpush1.xpose.msra.mxu0 0.0
    %1835 = vmatprep.mubr.f32.mxu0 0.0
    %1836 = vmatmul.mubr.f32.gmra.mrb[0].mxu0 %v1769
    %v1837 = vpop.f32.mrb[0].mxu0
    %v1838 = vadd.f32 0.0, %v1837
    %v1839 = vpop.f32.mrb[0].mxu0
    %1840 = vdwg.mxu0
    %v1841 = vmul.f32 %v1838, 0.35355338
    %v1842 = vadd.f32 %v1841, %v1345
    %v1843 = vsel %vm659, %v1842, -inf
    %1844 = vmax.xlane.f32.xlu0 %v1843
    %v1845 = vpop.xlane.xlu0 %1844
    %v1846 = vsub.f32 %v1842, %v1845
    %v1847 = vmul.f32 %v1846, 1.442695
    %v1848 = vpow.pop %v1847
    %v1849 = vsel %vm659, %v1848, 0.0
    %1850 = vadd.xlane.f32.xlu0 %v1849
    %v1851 = vpop.xlane.xlu0 %1850
    %v1852 = vrcp.pop %v1851
    %v1853 = vmul.f32 %v1848, %v1852
    %v1854 = vmul.f32 %v571, %v1181
    %1856 = vrot.lane.b32.xlu0 %v1854, 64
    %v1857 = vpop.permute.xlu0 %1856
    %v1860 = vsel %vm659, %v1853, 0
    %1862 = vmatprep.subr.mxu0 0.0
    %1863 = vmatpush1.msra.mxu0 %v1857
    %1864 = vmatprep.subr.mxu0 0.0
    %1865 = vmatpush1.msra.mxu0 0.0
    %1866 = vmatprep.subr.mxu0 0.0
    %1867 = vmatpush1.msra.mxu0 0.0
    %1868 = vmatprep.subr.mxu0 0.0
    %1869 = vmatpush1.msra.mxu0 0.0
    %1870 = vmatprep.subr.mxu0 0.0
    %1871 = vmatpush1.msra.mxu0 0.0
    %1872 = vmatprep.subr.mxu0 0.0
    %1873 = vmatpush1.msra.mxu0 0.0
    %1874 = vmatprep.subr.mxu0 0.0
    %1875 = vmatpush1.msra.mxu0 0.0
    %1876 = vmatprep.subr.mxu0 0.0
    %1877 = vmatpush1.msra.mxu0 0.0
    %1878 = vmatprep.subr.mxu0 0.0
    %1879 = vmatpush1.msra.mxu0 0.0
    %1880 = vmatprep.subr.mxu0 0.0
    %1881 = vmatpush1.msra.mxu0 0.0
    %1882 = vmatprep.subr.mxu0 0.0
    %1883 = vmatpush1.msra.mxu0 0.0
    %1884 = vmatprep.subr.mxu0 0.0
    %1885 = vmatpush1.msra.mxu0 0.0
    %1886 = vmatprep.subr.mxu0 0.0
    %1887 = vmatpush1.msra.mxu0 0.0
    %1888 = vmatprep.subr.mxu0 0.0
    %1889 = vmatpush1.msra.mxu0 0.0
    %1890 = vmatprep.subr.mxu0 0.0
    %1891 = vmatpush1.msra.mxu0 0.0
    %1892 = vmatprep.subr.mxu0 0.0
    %1893 = vmatpush1.msra.mxu0 0.0
    %1894 = vmatprep.subr.mxu0 0.0
    %1895 = vmatpush1.msra.mxu0 0.0
    %1896 = vmatprep.subr.mxu0 0.0
    %1897 = vmatpush1.msra.mxu0 0.0
    %1898 = vmatprep.subr.mxu0 0.0
    %1899 = vmatpush1.msra.mxu0 0.0
    %1900 = vmatprep.subr.mxu0 0.0
    %1901 = vmatpush1.msra.mxu0 0.0
    %1902 = vmatprep.subr.mxu0 0.0
    %1903 = vmatpush1.msra.mxu0 0.0
    %1904 = vmatprep.subr.mxu0 0.0
    %1905 = vmatpush1.msra.mxu0 0.0
    %1906 = vmatprep.subr.mxu0 0.0
    %1907 = vmatpush1.msra.mxu0 0.0
    %1908 = vmatprep.subr.mxu0 0.0
    %1909 = vmatpush1.msra.mxu0 0.0
    %1910 = vmatprep.subr.mxu0 0.0
    %1911 = vmatpush1.msra.mxu0 0.0
    %1912 = vmatprep.subr.mxu0 0.0
    %1913 = vmatpush1.msra.mxu0 0.0
    %1914 = vmatprep.subr.mxu0 0.0
    %1915 = vmatpush1.msra.mxu0 0.0
    %1916 = vmatprep.subr.mxu0 0.0
    %1917 = vmatpush1.msra.mxu0 0.0
    %1918 = vmatprep.subr.mxu0 0.0
    %1919 = vmatpush1.msra.mxu0 0.0
    %1920 = vmatprep.subr.mxu0 0.0
    %1921 = vmatpush1.msra.mxu0 0.0
    %1922 = vmatprep.subr.mxu0 0.0
    %1923 = vmatpush1.msra.mxu0 0.0
    %1924 = vmatprep.subr.mxu0 0.0
    %1925 = vmatpush1.msra.mxu0 0.0
    %1926 = vmatprep.mubr.f32.mxu0 0.0
    %1927 = vmatmul.mubr.f32.gmra.mrb[0].mxu0 %v1860
    %v1928 = vpop.f32.mrb[0].mxu0
    %v1929 = vadd.f32 0.0, %v1928
    %v1930 = vpop.f32.mrb[0].mxu0
    %1931 = vdwg.mxu0
    %v1932 = vadd.f32 %v1766, %v1929
    %v1933 = vld [vmem:[%s8] sm:$0xff]
    %v1934 = vld [vmem:[%s8 + $0x8] sm:$0xff]
    %v1935 = vld [vmem:[%s8 + $0x10] sm:$0xff]
    %v1936 = vld [vmem:[%s8 + $0x18] sm:$0xff]
    %v1937 = vld [vmem:[#allocation12] sm:$0x1]
    %v1939 = vlaneseq
    %v1940 = vshrl.u32 %v1939, 7
    %v1941 = vsub.s32 0, %v1940
    %v1942 = vrot.slane %v1937, %v1941
    %v1945 = vsel %vm418, %v1261, 0
    %v1948 = vsel %vm418, %v1932, 0
    %1950 = vmatprep.subr.mxu0 0.0
    %1951 = vmatpush1.msra.mxu0 %v1933
    %1952 = vmatprep.subr.mxu0 0.0
    %1953 = vmatpush1.msra.mxu0 %v1934
    %1954 = vmatprep.subr.mxu0 0.0
    %1955 = vmatpush1.msra.mxu0 %v1935
    %1956 = vmatprep.subr.mxu0 0.0
    %1957 = vmatpush1.msra.mxu0 %v1936
    %1958 = vmatprep.subr.mxu0 0.0
    %1959 = vmatpush1.msra.mxu0 0.0
    %1960 = vmatprep.subr.mxu0 0.0
    %1961 = vmatpush1.msra.mxu0 0.0
    %1962 = vmatprep.subr.mxu0 0.0
    %1963 = vmatpush1.msra.mxu0 0.0
    %1964 = vmatprep.subr.mxu0 0.0
    %1965 = vmatpush1.msra.mxu0 0.0
    %1966 = vmatprep.subr.mxu0 0.0
    %1967 = vmatpush1.msra.mxu0 0.0
    %1968 = vmatprep.subr.mxu0 0.0
    %1969 = vmatpush1.msra.mxu0 0.0
    %1970 = vmatprep.subr.mxu0 0.0
    %1971 = vmatpush1.msra.mxu0 0.0
    %1972 = vmatprep.subr.mxu0 0.0
    %1973 = vmatpush1.msra.mxu0 0.0
    %1974 = vmatprep.subr.mxu0 0.0
    %1975 = vmatpush1.msra.mxu0 0.0
    %1976 = vmatprep.subr.mxu0 0.0
    %1977 = vmatpush1.msra.mxu0 0.0
    %1978 = vmatprep.subr.mxu0 0.0
    %1979 = vmatpush1.msra.mxu0 0.0
    %1980 = vmatprep.subr.mxu0 0.0
    %1981 = vmatpush1.msra.mxu0 0.0
    %1982 = vmatprep.subr.mxu0 0.0
    %1983 = vmatpush1.msra.mxu0 0.0
    %1984 = vmatprep.subr.mxu0 0.0
    %1985 = vmatpush1.msra.mxu0 0.0
    %1986 = vmatprep.subr.mxu0 0.0
    %1987 = vmatpush1.msra.mxu0 0.0
    %1988 = vmatprep.subr.mxu0 0.0
    %1989 = vmatpush1.msra.mxu0 0.0
    %1990 = vmatprep.subr.mxu0 0.0
    %1991 = vmatpush1.msra.mxu0 0.0
    %1992 = vmatprep.subr.mxu0 0.0
    %1993 = vmatpush1.msra.mxu0 0.0
    %1994 = vmatprep.subr.mxu0 0.0
    %1995 = vmatpush1.msra.mxu0 0.0
    %1996 = vmatprep.subr.mxu0 0.0
    %1997 = vmatpush1.msra.mxu0 0.0
    %1998 = vmatprep.subr.mxu0 0.0
    %1999 = vmatpush1.msra.mxu0 0.0
    %2000 = vmatprep.subr.mxu0 0.0
    %2001 = vmatpush1.msra.mxu0 0.0
    %2002 = vmatprep.subr.mxu0 0.0
    %2003 = vmatpush1.msra.mxu0 0.0
    %2004 = vmatprep.subr.mxu0 0.0
    %2005 = vmatpush1.msra.mxu0 0.0
    %2006 = vmatprep.subr.mxu0 0.0
    %2007 = vmatpush1.msra.mxu0 0.0
    %2008 = vmatprep.subr.mxu0 0.0
    %2009 = vmatpush1.msra.mxu0 0.0
    %2010 = vmatprep.subr.mxu0 0.0
    %2011 = vmatpush1.msra.mxu0 0.0
    %2012 = vmatprep.subr.mxu0 0.0
    %2013 = vmatpush1.msra.mxu0 0.0
    %2014 = vmatprep.mubr.f32.mxu0 0.0
    %2015 = vmatmul.mubr.f32.gmra.mrb[0].mxu0 %v1945
    %v2016 = vpop.f32.mrb[0].mxu0
    %v2017 = vadd.f32 %v1942, %v2016
    %v2018 = vpop.f32.mrb[0].mxu0
    %2019 = vmatprep.mubr.f32.mxu0 0.0
    %2020 = vmatmul.mubr.f32.gmra.mrb[0].mxu0 %v1948
    %v2021 = vpop.f32.mrb[0].mxu0
    %v2022 = vadd.f32 %v1942, %v2021
    %v2023 = vpop.f32.mrb[0].mxu0
    %2024 = vdwg.mxu0
    %v2025 = vadd.f32 %v460, %v2017
    %v2026 = vadd.f32 %v461, %v2022
    %v2027 = vld [vmem:[#allocation13] sm:$0x1]
    %v2028 = vld [vmem:[#allocation15] sm:$0x1]
    %v2029 = vsel %vm418, %v2025, 0.0
    %2030 = vadd.xlane.f32.xlu0 %v2029
    %v2031 = vpop.xlane.xlu0 %2030
    %v2032 = vsel %vm418, %v2026, 0.0
    %2033 = vadd.xlane.f32.xlu0 %v2032
    %v2034 = vpop.xlane.xlu0 %2033
    %v2035 = vmul.f32 %v2031, %v425
    %v2036 = vmul.f32 %v2034, %v425
    %v2037 = vsub.f32 %v2025, %v2035
    %v2038 = vsub.f32 %v2026, %v2036
    %v2039 = vmul.f32 %v2037, %v2037
    %v2040 = vmul.f32 %v2038, %v2038
    %v2041 = vsel %vm418, %v2039, 0.0
    %2042 = vadd.xlane.f32.xlu0 %v2041
    %v2043 = vpop.xlane.xlu0 %2042
    %v2044 = vsel %vm418, %v2040, 0.0
    %2045 = vadd.xlane.f32.xlu0 %v2044
    %v2046 = vpop.xlane.xlu0 %2045
    %v2047 = vmul.f32 %v2043, %v425
    %v2048 = vmul.f32 %v2046, %v425
    %v2049 = vadd.f32 %v2047, 1e-12
    %v2050 = vadd.f32 %v2048, 1e-12
    %v2051 = vrsqrt.pop %v2049
    %v2052 = vrsqrt.pop %v2050
    %v2053 = vmul.f32 %v2037, %v2051
    %v2054 = vmul.f32 %v2038, %v2052
    %v2056 = vlaneseq
    %v2057 = vshrl.u32 %v2056, 7
    %v2058 = vsub.s32 0, %v2057
    %v2059 = vrot.slane %v2027, %v2058
    %v2061 = vmul.f32 %v2053, %v2059
    %v2062 = vmul.f32 %v2054, %v2059
    %v2064 = vlaneseq
    %v2065 = vshrl.u32 %v2064, 7
    %v2066 = vsub.s32 0, %v2065
    %v2067 = vrot.slane %v2028, %v2066
    %v2069 = vadd.f32 %v2061, %v2067
    %v2070 = vadd.f32 %v2062, %v2067
    %v2071 = vld [vmem:[%s12] sm:$0xff]
    %v2072 = vld [vmem:[%s12 + $0x8] sm:$0xff]
    %v2073 = vld [vmem:[%s12 + $0x10] sm:$0xff]
    %v2074 = vld [vmem:[%s12 + $0x18] sm:$0xff]
    %v2075 = vld [vmem:[#allocation16] sm:$0x1]
    %v2077 = vlaneseq
    %v2078 = vshrl.u32 %v2077, 7
    %v2079 = vsub.s32 0, %v2078
    %v2080 = vrot.slane %v2075, %v2079
    %v2083 = vsel %vm418, %v2069, 0
    %v2086 = vsel %vm418, %v2070, 0
    %2088 = vmatprep.subr.mxu0 0.0
    %2089 = vmatpush1.msra.mxu0 %v2071
    %2090 = vmatprep.subr.mxu0 0.0
    %2091 = vmatpush1.msra.mxu0 %v2072
    %2092 = vmatprep.subr.mxu0 0.0
    %2093 = vmatpush1.msra.mxu0 %v2073
    %2094 = vmatprep.subr.mxu0 0.0
    %2095 = vmatpush1.msra.mxu0 %v2074
    %2096 = vmatprep.subr.mxu0 0.0
    %2097 = vmatpush1.msra.mxu0 0.0
    %2098 = vmatprep.subr.mxu0 0.0
    %2099 = vmatpush1.msra.mxu0 0.0
    %2100 = vmatprep.subr.mxu0 0.0
    %2101 = vmatpush1.msra.mxu0 0.0
    %2102 = vmatprep.subr.mxu0 0.0
    %2103 = vmatpush1.msra.mxu0 0.0
    %2104 = vmatprep.subr.mxu0 0.0
    %2105 = vmatpush1.msra.mxu0 0.0
    %2106 = vmatprep.subr.mxu0 0.0
    %2107 = vmatpush1.msra.mxu0 0.0
    %2108 = vmatprep.subr.mxu0 0.0
    %2109 = vmatpush1.msra.mxu0 0.0
    %2110 = vmatprep.subr.mxu0 0.0
    %2111 = vmatpush1.msra.mxu0 0.0
    %2112 = vmatprep.subr.mxu0 0.0
    %2113 = vmatpush1.msra.mxu0 0.0
    %2114 = vmatprep.subr.mxu0 0.0
    %2115 = vmatpush1.msra.mxu0 0.0
    %2116 = vmatprep.subr.mxu0 0.0
    %2117 = vmatpush1.msra.mxu0 0.0
    %2118 = vmatprep.subr.mxu0 0.0
    %2119 = vmatpush1.msra.mxu0 0.0
    %2120 = vmatprep.subr.mxu0 0.0
    %2121 = vmatpush1.msra.mxu0 0.0
    %2122 = vmatprep.subr.mxu0 0.0
    %2123 = vmatpush1.msra.mxu0 0.0
    %2124 = vmatprep.subr.mxu0 0.0
    %2125 = vmatpush1.msra.mxu0 0.0
    %2126 = vmatprep.subr.mxu0 0.0
    %2127 = vmatpush1.msra.mxu0 0.0
    %2128 = vmatprep.subr.mxu0 0.0
    %2129 = vmatpush1.msra.mxu0 0.0
    %2130 = vmatprep.subr.mxu0 0.0
    %2131 = vmatpush1.msra.mxu0 0.0
    %2132 = vmatprep.subr.mxu0 0.0
    %2133 = vmatpush1.msra.mxu0 0.0
    %2134 = vmatprep.subr.mxu0 0.0
    %2135 = vmatpush1.msra.mxu0 0.0
    %2136 = vmatprep.subr.mxu0 0.0
    %2137 = vmatpush1.msra.mxu0 0.0
    %2138 = vmatprep.subr.mxu0 0.0
    %2139 = vmatpush1.msra.mxu0 0.0
    %2140 = vmatprep.subr.mxu0 0.0
    %2141 = vmatpush1.msra.mxu0 0.0
    %2142 = vmatprep.subr.mxu0 0.0
    %2143 = vmatpush1.msra.mxu0 0.0
    %2144 = vmatprep.subr.mxu0 0.0
    %2145 = vmatpush1.msra.mxu0 0.0
    %2146 = vmatprep.subr.mxu0 0.0
    %2147 = vmatpush1.msra.mxu0 0.0
    %2148 = vmatprep.subr.mxu0 0.0
    %2149 = vmatpush1.msra.mxu0 0.0
    %2150 = vmatprep.subr.mxu0 0.0
    %2151 = vmatpush1.msra.mxu0 0.0
    %2152 = vmatprep.mubr.f32.mxu0 0.0
    %2153 = vmatmul.mubr.f32.gmra.mrb[0].mxu0 %v2083
    %v2154 = vpop.f32.mrb[0].mxu0
    %v2155 = vadd.f32 %v2080, %v2154
    %v2156 = vpop.f32.mrb[0].mxu0
    %2157 = vmatprep.mubr.f32.mxu0 0.0
    %2158 = vmatmul.mubr.f32.gmra.mrb[0].mxu0 %v2086
    %v2159 = vpop.f32.mrb[0].mxu0
    %v2160 = vadd.f32 %v2080, %v2159
    %v2161 = vpop.f32.mrb[0].mxu0
    %2162 = vdwg.mxu0
    %v2163 = vmul.f32 %v2155, %v2155
    %v2164 = vmul.f32 %v2160, %v2160
    %v2165 = vmul.f32 %v2155, %v2163
    %v2166 = vmul.f32 %v2160, %v2164
    %v2167 = vmul.f32 %v2165, 0.044715
    %v2168 = vmul.f32 %v2166, 0.044715
    %v2169 = vadd.f32 %v2155, %v2167
    %v2170 = vadd.f32 %v2160, %v2168
    %v2171 = vmul.f32 %v2169, 0.7978846
    %v2172 = vmul.f32 %v2170, 0.7978846
    %v2173 = vtanh.pop %v2171
    %v2174 = vtanh.pop %v2172
    %v2175 = vadd.f32 %v2173, 1.0
    %v2176 = vadd.f32 %v2174, 1.0
    %v2177 = vmul.f32 %v2175, 0.5
    %v2178 = vmul.f32 %v2176, 0.5
    %v2179 = vmul.f32 %v2155, %v2177
    %v2180 = vmul.f32 %v2160, %v2178
    %v2181 = vld [vmem:[%s14] sm:$0xff]
    %v2182 = vld [vmem:[%s14 + $0x8] sm:$0xff]
    %v2183 = vld [vmem:[%s14 + $0x10] sm:$0xff]
    %v2184 = vld [vmem:[%s14 + $0x18] sm:$0xff]
    %v2185 = vld [vmem:[%s14 + $0x20] sm:$0xff]
    %v2186 = vld [vmem:[%s14 + $0x28] sm:$0xff]
    %v2187 = vld [vmem:[%s14 + $0x30] sm:$0xff]
    %v2188 = vld [vmem:[%s14 + $0x38] sm:$0xff]
    %v2189 = vld [vmem:[#allocation18] sm:$0x1]
    %v2191 = vlaneseq
    %v2192 = vshrl.u32 %v2191, 7
    %v2193 = vsub.s32 0, %v2192
    %v2194 = vrot.slane %v2189, %v2193
    %vm2196 = vcmask 523264
    %v2198 = vsel %vm2196, %v2179, 0
    %v2201 = vsel %vm2196, %v2180, 0
    %2203 = vmatprep.subr.mxu0 0.0
    %2204 = vmatpush1.msra.mxu0 %v2181
    %2205 = vmatprep.subr.mxu0 0.0
    %2206 = vmatpush1.msra.mxu0 %v2182
    %2207 = vmatprep.subr.mxu0 0.0
    %2208 = vmatpush1.msra.mxu0 %v2183
    %2209 = vmatprep.subr.mxu0 0.0
    %2210 = vmatpush1.msra.mxu0 %v2184
    %2211 = vmatprep.subr.mxu0 0.0
    %2212 = vmatpush1.msra.mxu0 %v2185
    %2213 = vmatprep.subr.mxu0 0.0
    %2214 = vmatpush1.msra.mxu0 %v2186
    %2215 = vmatprep.subr.mxu0 0.0
    %2216 = vmatpush1.msra.mxu0 %v2187
    %2217 = vmatprep.subr.mxu0 0.0
    %2218 = vmatpush1.msra.mxu0 %v2188
    %2219 = vmatprep.subr.mxu0 0.0
    %2220 = vmatpush1.msra.mxu0 0.0
    %2221 = vmatprep.subr.mxu0 0.0
    %2222 = vmatpush1.msra.mxu0 0.0
    %2223 = vmatprep.subr.mxu0 0.0
    %2224 = vmatpush1.msra.mxu0 0.0
    %2225 = vmatprep.subr.mxu0 0.0
    %2226 = vmatpush1.msra.mxu0 0.0
    %2227 = vmatprep.subr.mxu0 0.0
    %2228 = vmatpush1.msra.mxu0 0.0
    %2229 = vmatprep.subr.mxu0 0.0
    %2230 = vmatpush1.msra.mxu0 0.0
    %2231 = vmatprep.subr.mxu0 0.0
    %2232 = vmatpush1.msra.mxu0 0.0
    %2233 = vmatprep.subr.mxu0 0.0
    %2234 = vmatpush1.msra.mxu0 0.0
    %2235 = vmatprep.subr.mxu0 0.0
    %2236 = vmatpush1.msra.mxu0 0.0
    %2237 = vmatprep.subr.mxu0 0.0
    %2238 = vmatpush1.msra.mxu0 0.0
    %2239 = vmatprep.subr.mxu0 0.0
    %2240 = vmatpush1.msra.mxu0 0.0
    %2241 = vmatprep.subr.mxu0 0.0
    %2242 = vmatpush1.msra.mxu0 0.0
    %2243 = vmatprep.subr.mxu0 0.0
    %2244 = vmatpush1.msra.mxu0 0.0
    %2245 = vmatprep.subr.mxu0 0.0
    %2246 = vmatpush1.msra.mxu0 0.0
    %2247 = vmatprep.subr.mxu0 0.0
    %2248 = vmatpush1.msra.mxu0 0.0
    %2249 = vmatprep.subr.mxu0 0.0
    %2250 = vmatpush1.msra.mxu0 0.0
    %2251 = vmatprep.subr.mxu0 0.0
    %2252 = vmatpush1.msra.mxu0 0.0
    %2253 = vmatprep.subr.mxu0 0.0
    %2254 = vmatpush1.msra.mxu0 0.0
    %2255 = vmatprep.subr.mxu0 0.0
    %2256 = vmatpush1.msra.mxu0 0.0
    %2257 = vmatprep.subr.mxu0 0.0
    %2258 = vmatpush1.msra.mxu0 0.0
    %2259 = vmatprep.subr.mxu0 0.0
    %2260 = vmatpush1.msra.mxu0 0.0
    %2261 = vmatprep.subr.mxu0 0.0
    %2262 = vmatpush1.msra.mxu0 0.0
    %2263 = vmatprep.subr.mxu0 0.0
    %2264 = vmatpush1.msra.mxu0 0.0
    %2265 = vmatprep.subr.mxu0 0.0
    %2266 = vmatpush1.msra.mxu0 0.0
    %2267 = vmatprep.mubr.f32.mxu0 0.0
    %2268 = vmatmul.mubr.f32.gmra.mrb[0].mxu0 %v2198
    %v2269 = vpop.f32.mrb[0].mxu0
    %v2270 = vadd.f32 %v2194, %v2269
    %v2271 = vpop.f32.mrb[0].mxu0
    %2272 = vmatprep.mubr.f32.mxu0 0.0
    %2273 = vmatmul.mubr.f32.gmra.mrb[0].mxu0 %v2201
    %v2274 = vpop.f32.mrb[0].mxu0
    %v2275 = vadd.f32 %v2194, %v2274
    %v2276 = vpop.f32.mrb[0].mxu0
    %2277 = vdwg.mxu0
    %v2278 = vadd.f32 %v2069, %v2270
    %v2279 = vadd.f32 %v2070, %v2275
    %v2280 = vld [vmem:[#allocation19] sm:$0x1]
    %v2281 = vld [vmem:[#allocation21] sm:$0x1]
    %v2282 = vsel %vm418, %v2278, 0.0
    %2283 = vadd.xlane.f32.xlu0 %v2282
    %v2284 = vpop.xlane.xlu0 %2283
    %v2285 = vsel %vm418, %v2279, 0.0
    %2286 = vadd.xlane.f32.xlu0 %v2285
    %v2287 = vpop.xlane.xlu0 %2286
    %v2288 = vmul.f32 %v2284, %v425
    %v2289 = vmul.f32 %v2287, %v425
    %v2290 = vsub.f32 %v2278, %v2288
    %v2291 = vsub.f32 %v2279, %v2289
    %v2292 = vmul.f32 %v2290, %v2290
    %v2293 = vmul.f32 %v2291, %v2291
    %v2294 = vsel %vm418, %v2292, 0.0
    %2295 = vadd.xlane.f32.xlu0 %v2294
    %v2296 = vpop.xlane.xlu0 %2295
    %v2297 = vsel %vm418, %v2293, 0.0
    %2298 = vadd.xlane.f32.xlu0 %v2297
    %v2299 = vpop.xlane.xlu0 %2298
    %v2300 = vmul.f32 %v2296, %v425
    %v2301 = vmul.f32 %v2299, %v425
    %v2302 = vadd.f32 %v2300, 1e-12
    %v2303 = vadd.f32 %v2301, 1e-12
    %v2304 = vrsqrt.pop %v2302
    %v2305 = vrsqrt.pop %v2303
    %v2306 = vmul.f32 %v2290, %v2304
    %v2307 = vmul.f32 %v2291, %v2305
    %v2309 = vlaneseq
    %v2310 = vshrl.u32 %v2309, 7
    %v2311 = vsub.s32 0, %v2310
    %v2312 = vrot.slane %v2280, %v2311
    %v2314 = vmul.f32 %v2306, %v2312
    %v2315 = vmul.f32 %v2307, %v2312
    %v2317 = vlaneseq
    %v2318 = vshrl.u32 %v2317, 7
    %v2319 = vsub.s32 0, %v2318
    %v2320 = vrot.slane %v2281, %v2319
    %v2322 = vadd.f32 %v2314, %v2320
    %v2323 = vadd.f32 %v2315, %v2320
    %s2324 = scalar_lea.vmem %s6, 32
    %v2325 = vld [vmem:[%s2324] sm:$0xff]
    %v2326 = vld [vmem:[%s2324 + $0x8] sm:$0xff]
    %v2327 = vld [vmem:[%s2324 + $0x10] sm:$0xff]
    %v2328 = vld [vmem:[%s2324 + $0x18] sm:$0xff]
    %s2329 = scalar_lea.vmem [#allocation10], 1
    %v2330 = vld [vmem:[%s2329] sm:$0x1]
    %v2332 = vlaneseq
    %v2333 = vshrl.u32 %v2332, 7
    %v2334 = vsub.s32 0, %v2333
    %v2335 = vrot.slane %v2330, %v2334
    %v2338 = vsel %vm418, %v2322, 0
    %v2341 = vsel %vm418, %v2323, 0
    %2343 = vmatprep.subr.mxu0 0.0
    %2344 = vmatpush1.msra.mxu0 %v2325
    %2345 = vmatprep.subr.mxu0 0.0
    %2346 = vmatpush1.msra.mxu0 %v2326
    %2347 = vmatprep.subr.mxu0 0.0
    %2348 = vmatpush1.msra.mxu0 %v2327
    %2349 = vmatprep.subr.mxu0 0.0
    %2350 = vmatpush1.msra.mxu0 %v2328
    %2351 = vmatprep.subr.mxu0 0.0
    %2352 = vmatpush1.msra.mxu0 0.0
    %2353 = vmatprep.subr.mxu0 0.0
    %2354 = vmatpush1.msra.mxu0 0.0
    %2355 = vmatprep.subr.mxu0 0.0
    %2356 = vmatpush1.msra.mxu0 0.0
    %2357 = vmatprep.subr.mxu0 0.0
    %2358 = vmatpush1.msra.mxu0 0.0
    %2359 = vmatprep.subr.mxu0 0.0
    %2360 = vmatpush1.msra.mxu0 0.0
    %2361 = vmatprep.subr.mxu0 0.0
    %2362 = vmatpush1.msra.mxu0 0.0
    %2363 = vmatprep.subr.mxu0 0.0
    %2364 = vmatpush1.msra.mxu0 0.0
    %2365 = vmatprep.subr.mxu0 0.0
    %2366 = vmatpush1.msra.mxu0 0.0
    %2367 = vmatprep.subr.mxu0 0.0
    %2368 = vmatpush1.msra.mxu0 0.0
    %2369 = vmatprep.subr.mxu0 0.0
    %2370 = vmatpush1.msra.mxu0 0.0
    %2371 = vmatprep.subr.mxu0 0.0
    %2372 = vmatpush1.msra.mxu0 0.0
    %2373 = vmatprep.subr.mxu0 0.0
    %2374 = vmatpush1.msra.mxu0 0.0
    %2375 = vmatprep.subr.mxu0 0.0
    %2376 = vmatpush1.msra.mxu0 0.0
    %2377 = vmatprep.subr.mxu0 0.0
    %2378 = vmatpush1.msra.mxu0 0.0
    %2379 = vmatprep.subr.mxu0 0.0
    %2380 = vmatpush1.msra.mxu0 0.0
    %2381 = vmatprep.subr.mxu0 0.0
    %2382 = vmatpush1.msra.mxu0 0.0
    %2383 = vmatprep.subr.mxu0 0.0
    %2384 = vmatpush1.msra.mxu0 0.0
    %2385 = vmatprep.subr.mxu0 0.0
    %2386 = vmatpush1.msra.mxu0 0.0
    %2387 = vmatprep.subr.mxu0 0.0
    %2388 = vmatpush1.msra.mxu0 0.0
    %2389 = vmatprep.subr.mxu0 0.0
    %2390 = vmatpush1.msra.mxu0 0.0
    %2391 = vmatprep.subr.mxu0 0.0
    %2392 = vmatpush1.msra.mxu0 0.0
    %2393 = vmatprep.subr.mxu0 0.0
    %2394 = vmatpush1.msra.mxu0 0.0
    %2395 = vmatprep.subr.mxu0 0.0
    %2396 = vmatpush1.msra.mxu0 0.0
    %2397 = vmatprep.subr.mxu0 0.0
    %2398 = vmatpush1.msra.mxu0 0.0
    %2399 = vmatprep.subr.mxu0 0.0
    %2400 = vmatpush1.msra.mxu0 0.0
    %2401 = vmatprep.subr.mxu0 0.0
    %2402 = vmatpush1.msra.mxu0 0.0
    %2403 = vmatprep.subr.mxu0 0.0
    %2404 = vmatpush1.msra.mxu0 0.0
    %2405 = vmatprep.subr.mxu0 0.0
    %2406 = vmatpush1.msra.mxu0 0.0
    %2407 = vmatprep.mubr.f32.mxu0 0.0
    %2408 = vmatmul.mubr.f32.gmra.mrb[0].mxu0 %v2338
    %v2409 = vpop.f32.mrb[0].mxu0
    %v2410 = vadd.f32 %v2335, %v2409
    %v2411 = vpop.f32.mrb[0].mxu0
    %2412 = vmatprep.mubr.f32.mxu0 0.0
    %2413 = vmatmul.mubr.f32.gmra.mrb[0].mxu0 %v2341
    %v2414 = vpop.f32.mrb[0].mxu0
    %v2415 = vadd.f32 %v2335, %v2414
    %v2416 = vpop.f32.mrb[0].mxu0
    %2417 = vdwg.mxu0
    %v2418 = vmul.f32 %v2410, %v466
    %2420 = vrot.lane.b32.xlu0 %v2410, 96
    %v2421 = vpop.permute.xlu0 %2420
    %v2423 = vsel %vm418, %v2418, 0
    %v2425 = vsel %vm418, %v2421, 0
    %2427 = vmatprep.subr.mxu0 0.0
    %2428 = vmatpush1.xpose.msra.mxu0 %v2425
    %2429 = vmatprep.subr.mxu0 0.0
    %2430 = vmatpush1.xpose.msra.mxu0 0.0
    %2431 = vmatprep.subr.mxu0 0.0
    %2432 = vmatpush1.xpose.msra.mxu0 0.0
    %2433 = vmatprep.subr.mxu0 0.0
    %2434 = vmatpush1.xpose.msra.mxu0 0.0
    %2435 = vmatprep.subr.mxu0 0.0
    %2436 = vmatpush1.xpose.msra.mxu0 0.0
    %2437 = vmatprep.subr.mxu0 0.0
    %2438 = vmatpush1.xpose.msra.mxu0 0.0
    %2439 = vmatprep.subr.mxu0 0.0
    %2440 = vmatpush1.xpose.msra.mxu0 0.0
    %2441 = vmatprep.subr.mxu0 0.0
    %2442 = vmatpush1.xpose.msra.mxu0 0.0
    %2443 = vmatprep.subr.mxu0 0.0
    %2444 = vmatpush1.xpose.msra.mxu0 0.0
    %2445 = vmatprep.subr.mxu0 0.0
    %2446 = vmatpush1.xpose.msra.mxu0 0.0
    %2447 = vmatprep.subr.mxu0 0.0
    %2448 = vmatpush1.xpose.msra.mxu0 0.0
    %2449 = vmatprep.subr.mxu0 0.0
    %2450 = vmatpush1.xpose.msra.mxu0 0.0
    %2451 = vmatprep.subr.mxu0 0.0
    %2452 = vmatpush1.xpose.msra.mxu0 0.0
    %2453 = vmatprep.subr.mxu0 0.0
    %2454 = vmatpush1.xpose.msra.mxu0 0.0
    %2455 = vmatprep.subr.mxu0 0.0
    %2456 = vmatpush1.xpose.msra.mxu0 0.0
    %2457 = vmatprep.subr.mxu0 0.0
    %2458 = vmatpush1.xpose.msra.mxu0 0.0
    %2459 = vmatprep.subr.mxu0 0.0
    %2460 = vmatpush1.xpose.msra.mxu0 0.0
    %2461 = vmatprep.subr.mxu0 0.0
    %2462 = vmatpush1.xpose.msra.mxu0 0.0
    %2463 = vmatprep.subr.mxu0 0.0
    %2464 = vmatpush1.xpose.msra.mxu0 0.0
    %2465 = vmatprep.subr.mxu0 0.0
    %2466 = vmatpush1.xpose.msra.mxu0 0.0
    %2467 = vmatprep.subr.mxu0 0.0
    %2468 = vmatpush1.xpose.msra.mxu0 0.0
    %2469 = vmatprep.subr.mxu0 0.0
    %2470 = vmatpush1.xpose.msra.mxu0 0.0
    %2471 = vmatprep.subr.mxu0 0.0
    %2472 = vmatpush1.xpose.msra.mxu0 0.0
    %2473 = vmatprep.subr.mxu0 0.0
    %2474 = vmatpush1.xpose.msra.mxu0 0.0
    %2475 = vmatprep.subr.mxu0 0.0
    %2476 = vmatpush1.xpose.msra.mxu0 0.0
    %2477 = vmatprep.subr.mxu0 0.0
    %2478 = vmatpush1.xpose.msra.mxu0 0.0
    %2479 = vmatprep.subr.mxu0 0.0
    %2480 = vmatpush1.xpose.msra.mxu0 0.0
    %2481 = vmatprep.subr.mxu0 0.0
    %2482 = vmatpush1.xpose.msra.mxu0 0.0
    %2483 = vmatprep.subr.mxu0 0.0
    %2484 = vmatpush1.xpose.msra.mxu0 0.0
    %2485 = vmatprep.subr.mxu0 0.0
    %2486 = vmatpush1.xpose.msra.mxu0 0.0
    %2487 = vmatprep.subr.mxu0 0.0
    %2488 = vmatpush1.xpose.msra.mxu0 0.0
    %2489 = vmatprep.subr.mxu0 0.0
    %2490 = vmatpush1.xpose.msra.mxu0 0.0
    %2491 = vmatprep.mubr.f32.mxu0 0.0
    %2492 = vmatmul.mubr.f32.gmra.mrb[0].mxu0 %v2423
    %v2493 = vpop.f32.mrb[0].mxu0
    %v2494 = vadd.f32 0.0, %v2493
    %v2495 = vpop.f32.mrb[0].mxu0
    %2496 = vdwg.mxu0
    %v2497 = vmul.f32 %v2494, 0.35355338
    %v2498 = vadd.f32 %v2497, %v657
    %v2499 = vsel %vm659, %v2498, -inf
    %2500 = vmax.xlane.f32.xlu0 %v2499
    %v2501 = vpop.xlane.xlu0 %2500
    %v2502 = vsub.f32 %v2498, %v2501
    %v2503 = vmul.f32 %v2502, 1.442695
    %v2504 = vpow.pop %v2503
    %v2505 = vsel %vm659, %v2504, 0.0
    %2506 = vadd.xlane.f32.xlu0 %v2505
    %v2507 = vpop.xlane.xlu0 %2506
    %v2508 = vrcp.pop %v2507
    %v2509 = vmul.f32 %v2504, %v2508
    %v2510 = vmul.f32 %v2410, %v673
    %v2511 = vmul.f32 %v2410, %v471
    %v2513 = vsel %vm418, %v2511, 0
    %2515 = vmatprep.subr.mxu0 0.0
    %2516 = vmatpush1.xpose.msra.mxu0 %v2425
    %2517 = vmatprep.subr.mxu0 0.0
    %2518 = vmatpush1.xpose.msra.mxu0 0.0
    %2519 = vmatprep.subr.mxu0 0.0
    %2520 = vmatpush1.xpose.msra.mxu0 0.0
    %2521 = vmatprep.subr.mxu0 0.0
    %2522 = vmatpush1.xpose.msra.mxu0 0.0
    %2523 = vmatprep.subr.mxu0 0.0
    %2524 = vmatpush1.xpose.msra.mxu0 0.0
    %2525 = vmatprep.subr.mxu0 0.0
    %2526 = vmatpush1.xpose.msra.mxu0 0.0
    %2527 = vmatprep.subr.mxu0 0.0
    %2528 = vmatpush1.xpose.msra.mxu0 0.0
    %2529 = vmatprep.subr.mxu0 0.0
    %2530 = vmatpush1.xpose.msra.mxu0 0.0
    %2531 = vmatprep.subr.mxu0 0.0
    %2532 = vmatpush1.xpose.msra.mxu0 0.0
    %2533 = vmatprep.subr.mxu0 0.0
    %2534 = vmatpush1.xpose.msra.mxu0 0.0
    %2535 = vmatprep.subr.mxu0 0.0
    %2536 = vmatpush1.xpose.msra.mxu0 0.0
    %2537 = vmatprep.subr.mxu0 0.0
    %2538 = vmatpush1.xpose.msra.mxu0 0.0
    %2539 = vmatprep.subr.mxu0 0.0
    %2540 = vmatpush1.xpose.msra.mxu0 0.0
    %2541 = vmatprep.subr.mxu0 0.0
    %2542 = vmatpush1.xpose.msra.mxu0 0.0
    %2543 = vmatprep.subr.mxu0 0.0
    %2544 = vmatpush1.xpose.msra.mxu0 0.0
    %2545 = vmatprep.subr.mxu0 0.0
    %2546 = vmatpush1.xpose.msra.mxu0 0.0
    %2547 = vmatprep.subr.mxu0 0.0
    %2548 = vmatpush1.xpose.msra.mxu0 0.0
    %2549 = vmatprep.subr.mxu0 0.0
    %2550 = vmatpush1.xpose.msra.mxu0 0.0
    %2551 = vmatprep.subr.mxu0 0.0
    %2552 = vmatpush1.xpose.msra.mxu0 0.0
    %2553 = vmatprep.subr.mxu0 0.0
    %2554 = vmatpush1.xpose.msra.mxu0 0.0
    %2555 = vmatprep.subr.mxu0 0.0
    %2556 = vmatpush1.xpose.msra.mxu0 0.0
    %2557 = vmatprep.subr.mxu0 0.0
    %2558 = vmatpush1.xpose.msra.mxu0 0.0
    %2559 = vmatprep.subr.mxu0 0.0
    %2560 = vmatpush1.xpose.msra.mxu0 0.0
    %2561 = vmatprep.subr.mxu0 0.0
    %2562 = vmatpush1.xpose.msra.mxu0 0.0
    %2563 = vmatprep.subr.mxu0 0.0
    %2564 = vmatpush1.xpose.msra.mxu0 0.0
    %2565 = vmatprep.subr.mxu0 0.0
    %2566 = vmatpush1.xpose.msra.mxu0 0.0
    %2567 = vmatprep.subr.mxu0 0.0
    %2568 = vmatpush1.xpose.msra.mxu0 0.0
    %2569 = vmatprep.subr.mxu0 0.0
    %2570 = vmatpush1.xpose.msra.mxu0 0.0
    %2571 = vmatprep.subr.mxu0 0.0
    %2572 = vmatpush1.xpose.msra.mxu0 0.0
    %2573 = vmatprep.subr.mxu0 0.0
    %2574 = vmatpush1.xpose.msra.mxu0 0.0
    %2575 = vmatprep.subr.mxu0 0.0
    %2576 = vmatpush1.xpose.msra.mxu0 0.0
    %2577 = vmatprep.subr.mxu0 0.0
    %2578 = vmatpush1.xpose.msra.mxu0 0.0
    %2579 = vmatprep.mubr.f32.mxu0 0.0
    %2580 = vmatmul.mubr.f32.gmra.mrb[0].mxu0 %v2513
    %v2581 = vpop.f32.mrb[0].mxu0
    %v2582 = vadd.f32 0.0, %v2581
    %v2583 = vpop.f32.mrb[0].mxu0
    %2584 = vdwg.mxu0
    %v2585 = vmul.f32 %v2582, 0.35355338
    %v2586 = vadd.f32 %v2585, %v657
    %v2587 = vsel %vm659, %v2586, -inf
    %2588 = vmax.xlane.f32.xlu0 %v2587
    %v2589 = vpop.xlane.xlu0 %2588
    %v2590 = vsub.f32 %v2586, %v2589
    %v2591 = vmul.f32 %v2590, 1.442695
    %v2592 = vpow.pop %v2591
    %v2593 = vsel %vm659, %v2592, 0.0
    %2594 = vadd.xlane.f32.xlu0 %v2593
    %v2595 = vpop.xlane.xlu0 %2594
    %v2596 = vrcp.pop %v2595
    %v2597 = vmul.f32 %v2592, %v2596
    %v2598 = vmul.f32 %v2410, %v765
    %2600 = vrot.lane.b32.xlu0 %v2598, 64
    %v2601 = vpop.permute.xlu0 %2600
    %v2604 = vsel %vm659, %v2597, 0
    %2606 = vmatprep.subr.mxu0 0.0
    %2607 = vmatpush1.msra.mxu0 %v2601
    %2608 = vmatprep.subr.mxu0 0.0
    %2609 = vmatpush1.msra.mxu0 0.0
    %2610 = vmatprep.subr.mxu0 0.0
    %2611 = vmatpush1.msra.mxu0 0.0
    %2612 = vmatprep.subr.mxu0 0.0
    %2613 = vmatpush1.msra.mxu0 0.0
    %2614 = vmatprep.subr.mxu0 0.0
    %2615 = vmatpush1.msra.mxu0 0.0
    %2616 = vmatprep.subr.mxu0 0.0
    %2617 = vmatpush1.msra.mxu0 0.0
    %2618 = vmatprep.subr.mxu0 0.0
    %2619 = vmatpush1.msra.mxu0 0.0
    %2620 = vmatprep.subr.mxu0 0.0
    %2621 = vmatpush1.msra.mxu0 0.0
    %2622 = vmatprep.subr.mxu0 0.0
    %2623 = vmatpush1.msra.mxu0 0.0
    %2624 = vmatprep.subr.mxu0 0.0
    %2625 = vmatpush1.msra.mxu0 0.0
    %2626 = vmatprep.subr.mxu0 0.0
    %2627 = vmatpush1.msra.mxu0 0.0
    %2628 = vmatprep.subr.mxu0 0.0
    %2629 = vmatpush1.msra.mxu0 0.0
    %2630 = vmatprep.subr.mxu0 0.0
    %2631 = vmatpush1.msra.mxu0 0.0
    %2632 = vmatprep.subr.mxu0 0.0
    %2633 = vmatpush1.msra.mxu0 0.0
    %2634 = vmatprep.subr.mxu0 0.0
    %2635 = vmatpush1.msra.mxu0 0.0
    %2636 = vmatprep.subr.mxu0 0.0
    %2637 = vmatpush1.msra.mxu0 0.0
    %2638 = vmatprep.subr.mxu0 0.0
    %2639 = vmatpush1.msra.mxu0 0.0
    %2640 = vmatprep.subr.mxu0 0.0
    %2641 = vmatpush1.msra.mxu0 0.0
    %2642 = vmatprep.subr.mxu0 0.0
    %2643 = vmatpush1.msra.mxu0 0.0
    %2644 = vmatprep.subr.mxu0 0.0
    %2645 = vmatpush1.msra.mxu0 0.0
    %2646 = vmatprep.subr.mxu0 0.0
    %2647 = vmatpush1.msra.mxu0 0.0
    %2648 = vmatprep.subr.mxu0 0.0
    %2649 = vmatpush1.msra.mxu0 0.0
    %2650 = vmatprep.subr.mxu0 0.0
    %2651 = vmatpush1.msra.mxu0 0.0
    %2652 = vmatprep.subr.mxu0 0.0
    %2653 = vmatpush1.msra.mxu0 0.0
    %2654 = vmatprep.subr.mxu0 0.0
    %2655 = vmatpush1.msra.mxu0 0.0
    %2656 = vmatprep.subr.mxu0 0.0
    %2657 = vmatpush1.msra.mxu0 0.0
    %2658 = vmatprep.subr.mxu0 0.0
    %2659 = vmatpush1.msra.mxu0 0.0
    %2660 = vmatprep.subr.mxu0 0.0
    %2661 = vmatpush1.msra.mxu0 0.0
    %2662 = vmatprep.subr.mxu0 0.0
    %2663 = vmatpush1.msra.mxu0 0.0
    %2664 = vmatprep.subr.mxu0 0.0
    %2665 = vmatpush1.msra.mxu0 0.0
    %2666 = vmatprep.subr.mxu0 0.0
    %2667 = vmatpush1.msra.mxu0 0.0
    %2668 = vmatprep.subr.mxu0 0.0
    %2669 = vmatpush1.msra.mxu0 0.0
    %2670 = vmatprep.mubr.f32.mxu0 0.0
    %2671 = vmatmul.mubr.f32.gmra.mrb[0].mxu0 %v2604
    %v2672 = vpop.f32.mrb[0].mxu0
    %v2673 = vadd.f32 0.0, %v2672
    %v2674 = vpop.f32.mrb[0].mxu0
    %2675 = vdwg.mxu0
    %2677 = vrot.lane.b32.xlu0 %v2510, 64
    %v2678 = vpop.permute.xlu0 %2677
    %v2681 = vsel %vm659, %v2509, 0
    %2683 = vmatprep.subr.mxu0 0.0
    %2684 = vmatpush1.msra.mxu0 %v2678
    %2685 = vmatprep.subr.mxu0 0.0
    %2686 = vmatpush1.msra.mxu0 0.0
    %2687 = vmatprep.subr.mxu0 0.0
    %2688 = vmatpush1.msra.mxu0 0.0
    %2689 = vmatprep.subr.mxu0 0.0
    %2690 = vmatpush1.msra.mxu0 0.0
    %2691 = vmatprep.subr.mxu0 0.0
    %2692 = vmatpush1.msra.mxu0 0.0
    %2693 = vmatprep.subr.mxu0 0.0
    %2694 = vmatpush1.msra.mxu0 0.0
    %2695 = vmatprep.subr.mxu0 0.0
    %2696 = vmatpush1.msra.mxu0 0.0
    %2697 = vmatprep.subr.mxu0 0.0
    %2698 = vmatpush1.msra.mxu0 0.0
    %2699 = vmatprep.subr.mxu0 0.0
    %2700 = vmatpush1.msra.mxu0 0.0
    %2701 = vmatprep.subr.mxu0 0.0
    %2702 = vmatpush1.msra.mxu0 0.0
    %2703 = vmatprep.subr.mxu0 0.0
    %2704 = vmatpush1.msra.mxu0 0.0
    %2705 = vmatprep.subr.mxu0 0.0
    %2706 = vmatpush1.msra.mxu0 0.0
    %2707 = vmatprep.subr.mxu0 0.0
    %2708 = vmatpush1.msra.mxu0 0.0
    %2709 = vmatprep.subr.mxu0 0.0
    %2710 = vmatpush1.msra.mxu0 0.0
    %2711 = vmatprep.subr.mxu0 0.0
    %2712 = vmatpush1.msra.mxu0 0.0
    %2713 = vmatprep.subr.mxu0 0.0
    %2714 = vmatpush1.msra.mxu0 0.0
    %2715 = vmatprep.subr.mxu0 0.0
    %2716 = vmatpush1.msra.mxu0 0.0
    %2717 = vmatprep.subr.mxu0 0.0
    %2718 = vmatpush1.msra.mxu0 0.0
    %2719 = vmatprep.subr.mxu0 0.0
    %2720 = vmatpush1.msra.mxu0 0.0
    %2721 = vmatprep.subr.mxu0 0.0
    %2722 = vmatpush1.msra.mxu0 0.0
    %2723 = vmatprep.subr.mxu0 0.0
    %2724 = vmatpush1.msra.mxu0 0.0
    %2725 = vmatprep.subr.mxu0 0.0
    %2726 = vmatpush1.msra.mxu0 0.0
    %2727 = vmatprep.subr.mxu0 0.0
    %2728 = vmatpush1.msra.mxu0 0.0
    %2729 = vmatprep.subr.mxu0 0.0
    %2730 = vmatpush1.msra.mxu0 0.0
    %2731 = vmatprep.subr.mxu0 0.0
    %2732 = vmatpush1.msra.mxu0 0.0
    %2733 = vmatprep.subr.mxu0 0.0
    %2734 = vmatpush1.msra.mxu0 0.0
    %2735 = vmatprep.subr.mxu0 0.0
    %2736 = vmatpush1.msra.mxu0 0.0
    %2737 = vmatprep.subr.mxu0 0.0
    %2738 = vmatpush1.msra.mxu0 0.0
    %2739 = vmatprep.subr.mxu0 0.0
    %2740 = vmatpush1.msra.mxu0 0.0
    %2741 = vmatprep.subr.mxu0 0.0
    %2742 = vmatpush1.msra.mxu0 0.0
    %2743 = vmatprep.subr.mxu0 0.0
    %2744 = vmatpush1.msra.mxu0 0.0
    %2745 = vmatprep.subr.mxu0 0.0
    %2746 = vmatpush1.msra.mxu0 0.0
    %2747 = vmatprep.mubr.f32.mxu0 0.0
    %2748 = vmatmul.mubr.f32.gmra.mrb[0].mxu0 %v2681
    %v2749 = vpop.f32.mrb[0].mxu0
    %v2750 = vadd.f32 %v2673, %v2749
    %v2751 = vpop.f32.mrb[0].mxu0
    %2752 = vdwg.mxu0
    %v2753 = vmul.f32 %v2410, %v476
    %v2755 = vsel %vm418, %v2753, 0
    %2757 = vmatprep.subr.mxu0 0.0
    %2758 = vmatpush1.xpose.msra.mxu0 %v2425
    %2759 = vmatprep.subr.mxu0 0.0
    %2760 = vmatpush1.xpose.msra.mxu0 0.0
    %2761 = vmatprep.subr.mxu0 0.0
    %2762 = vmatpush1.xpose.msra.mxu0 0.0
    %2763 = vmatprep.subr.mxu0 0.0
    %2764 = vmatpush1.xpose.msra.mxu0 0.0
    %2765 = vmatprep.subr.mxu0 0.0
    %2766 = vmatpush1.xpose.msra.mxu0 0.0
    %2767 = vmatprep.subr.mxu0 0.0
    %2768 = vmatpush1.xpose.msra.mxu0 0.0
    %2769 = vmatprep.subr.mxu0 0.0
    %2770 = vmatpush1.xpose.msra.mxu0 0.0
    %2771 = vmatprep.subr.mxu0 0.0
    %2772 = vmatpush1.xpose.msra.mxu0 0.0
    %2773 = vmatprep.subr.mxu0 0.0
    %2774 = vmatpush1.xpose.msra.mxu0 0.0
    %2775 = vmatprep.subr.mxu0 0.0
    %2776 = vmatpush1.xpose.msra.mxu0 0.0
    %2777 = vmatprep.subr.mxu0 0.0
    %2778 = vmatpush1.xpose.msra.mxu0 0.0
    %2779 = vmatprep.subr.mxu0 0.0
    %2780 = vmatpush1.xpose.msra.mxu0 0.0
    %2781 = vmatprep.subr.mxu0 0.0
    %2782 = vmatpush1.xpose.msra.mxu0 0.0
    %2783 = vmatprep.subr.mxu0 0.0
    %2784 = vmatpush1.xpose.msra.mxu0 0.0
    %2785 = vmatprep.subr.mxu0 0.0
    %2786 = vmatpush1.xpose.msra.mxu0 0.0
    %2787 = vmatprep.subr.mxu0 0.0
    %2788 = vmatpush1.xpose.msra.mxu0 0.0
    %2789 = vmatprep.subr.mxu0 0.0
    %2790 = vmatpush1.xpose.msra.mxu0 0.0
    %2791 = vmatprep.subr.mxu0 0.0
    %2792 = vmatpush1.xpose.msra.mxu0 0.0
    %2793 = vmatprep.subr.mxu0 0.0
    %2794 = vmatpush1.xpose.msra.mxu0 0.0
    %2795 = vmatprep.subr.mxu0 0.0
    %2796 = vmatpush1.xpose.msra.mxu0 0.0
    %2797 = vmatprep.subr.mxu0 0.0
    %2798 = vmatpush1.xpose.msra.mxu0 0.0
    %2799 = vmatprep.subr.mxu0 0.0
    %2800 = vmatpush1.xpose.msra.mxu0 0.0
    %2801 = vmatprep.subr.mxu0 0.0
    %2802 = vmatpush1.xpose.msra.mxu0 0.0
    %2803 = vmatprep.subr.mxu0 0.0
    %2804 = vmatpush1.xpose.msra.mxu0 0.0
    %2805 = vmatprep.subr.mxu0 0.0
    %2806 = vmatpush1.xpose.msra.mxu0 0.0
    %2807 = vmatprep.subr.mxu0 0.0
    %2808 = vmatpush1.xpose.msra.mxu0 0.0
    %2809 = vmatprep.subr.mxu0 0.0
    %2810 = vmatpush1.xpose.msra.mxu0 0.0
    %2811 = vmatprep.subr.mxu0 0.0
    %2812 = vmatpush1.xpose.msra.mxu0 0.0
    %2813 = vmatprep.subr.mxu0 0.0
    %2814 = vmatpush1.xpose.msra.mxu0 0.0
    %2815 = vmatprep.subr.mxu0 0.0
    %2816 = vmatpush1.xpose.msra.mxu0 0.0
    %2817 = vmatprep.subr.mxu0 0.0
    %2818 = vmatpush1.xpose.msra.mxu0 0.0
    %2819 = vmatprep.subr.mxu0 0.0
    %2820 = vmatpush1.xpose.msra.mxu0 0.0
    %2821 = vmatprep.mubr.f32.mxu0 0.0
    %2822 = vmatmul.mubr.f32.gmra.mrb[0].mxu0 %v2755
    %v2823 = vpop.f32.mrb[0].mxu0
    %v2824 = vadd.f32 0.0, %v2823
    %v2825 = vpop.f32.mrb[0].mxu0
    %2826 = vdwg.mxu0
    %v2827 = vmul.f32 %v2824, 0.35355338
    %v2828 = vadd.f32 %v2827, %v657
    %v2829 = vsel %vm659, %v2828, -inf
    %2830 = vmax.xlane.f32.xlu0 %v2829
    %v2831 = vpop.xlane.xlu0 %2830
    %v2832 = vsub.f32 %v2828, %v2831
    %v2833 = vmul.f32 %v2832, 1.442695
    %v2834 = vpow.pop %v2833
    %v2835 = vsel %vm659, %v2834, 0.0
    %2836 = vadd.xlane.f32.xlu0 %v2835
    %v2837 = vpop.xlane.xlu0 %2836
    %v2838 = vrcp.pop %v2837
    %v2839 = vmul.f32 %v2834, %v2838
    %v2840 = vmul.f32 %v2410, %v1011
    %2842 = vrot.lane.b32.xlu0 %v2840, 64
    %v2843 = vpop.permute.xlu0 %2842
    %v2846 = vsel %vm659, %v2839, 0
    %2848 = vmatprep.subr.mxu0 0.0
    %2849 = vmatpush1.msra.mxu0 %v2843
    %2850 = vmatprep.subr.mxu0 0.0
    %2851 = vmatpush1.msra.mxu0 0.0
    %2852 = vmatprep.subr.mxu0 0.0
    %2853 = vmatpush1.msra.mxu0 0.0
    %2854 = vmatprep.subr.mxu0 0.0
    %2855 = vmatpush1.msra.mxu0 0.0
    %2856 = vmatprep.subr.mxu0 0.0
    %2857 = vmatpush1.msra.mxu0 0.0
    %2858 = vmatprep.subr.mxu0 0.0
    %2859 = vmatpush1.msra.mxu0 0.0
    %2860 = vmatprep.subr.mxu0 0.0
    %2861 = vmatpush1.msra.mxu0 0.0
    %2862 = vmatprep.subr.mxu0 0.0
    %2863 = vmatpush1.msra.mxu0 0.0
    %2864 = vmatprep.subr.mxu0 0.0
    %2865 = vmatpush1.msra.mxu0 0.0
    %2866 = vmatprep.subr.mxu0 0.0
    %2867 = vmatpush1.msra.mxu0 0.0
    %2868 = vmatprep.subr.mxu0 0.0
    %2869 = vmatpush1.msra.mxu0 0.0
    %2870 = vmatprep.subr.mxu0 0.0
    %2871 = vmatpush1.msra.mxu0 0.0
    %2872 = vmatprep.subr.mxu0 0.0
    %2873 = vmatpush1.msra.mxu0 0.0
    %2874 = vmatprep.subr.mxu0 0.0
    %2875 = vmatpush1.msra.mxu0 0.0
    %2876 = vmatprep.subr.mxu0 0.0
    %2877 = vmatpush1.msra.mxu0 0.0
    %2878 = vmatprep.subr.mxu0 0.0
    %2879 = vmatpush1.msra.mxu0 0.0
    %2880 = vmatprep.subr.mxu0 0.0
    %2881 = vmatpush1.msra.mxu0 0.0
    %2882 = vmatprep.subr.mxu0 0.0
    %2883 = vmatpush1.msra.mxu0 0.0
    %2884 = vmatprep.subr.mxu0 0.0
    %2885 = vmatpush1.msra.mxu0 0.0
    %2886 = vmatprep.subr.mxu0 0.0
    %2887 = vmatpush1.msra.mxu0 0.0
    %2888 = vmatprep.subr.mxu0 0.0
    %2889 = vmatpush1.msra.mxu0 0.0
    %2890 = vmatprep.subr.mxu0 0.0
    %2891 = vmatpush1.msra.mxu0 0.0
    %2892 = vmatprep.subr.mxu0 0.0
    %2893 = vmatpush1.msra.mxu0 0.0
    %2894 = vmatprep.subr.mxu0 0.0
    %2895 = vmatpush1.msra.mxu0 0.0
    %2896 = vmatprep.subr.mxu0 0.0
    %2897 = vmatpush1.msra.mxu0 0.0
    %2898 = vmatprep.subr.mxu0 0.0
    %2899 = vmatpush1.msra.mxu0 0.0
    %2900 = vmatprep.subr.mxu0 0.0
    %2901 = vmatpush1.msra.mxu0 0.0
    %2902 = vmatprep.subr.mxu0 0.0
    %2903 = vmatpush1.msra.mxu0 0.0
    %2904 = vmatprep.subr.mxu0 0.0
    %2905 = vmatpush1.msra.mxu0 0.0
    %2906 = vmatprep.subr.mxu0 0.0
    %2907 = vmatpush1.msra.mxu0 0.0
    %2908 = vmatprep.subr.mxu0 0.0
    %2909 = vmatpush1.msra.mxu0 0.0
    %2910 = vmatprep.subr.mxu0 0.0
    %2911 = vmatpush1.msra.mxu0 0.0
    %2912 = vmatprep.mubr.f32.mxu0 0.0
    %2913 = vmatmul.mubr.f32.gmra.mrb[0].mxu0 %v2846
    %v2914 = vpop.f32.mrb[0].mxu0
    %v2915 = vadd.f32 0.0, %v2914
    %v2916 = vpop.f32.mrb[0].mxu0
    %2917 = vdwg.mxu0
    %v2918 = vadd.f32 %v2750, %v2915
    %v2919 = vmul.f32 %v2410, %v481
    %v2921 = vsel %vm418, %v2919, 0
    %2923 = vmatprep.subr.mxu0 0.0
    %2924 = vmatpush1.xpose.msra.mxu0 %v2425
    %2925 = vmatprep.subr.mxu0 0.0
    %2926 = vmatpush1.xpose.msra.mxu0 0.0
    %2927 = vmatprep.subr.mxu0 0.0
    %2928 = vmatpush1.xpose.msra.mxu0 0.0
    %2929 = vmatprep.subr.mxu0 0.0
    %2930 = vmatpush1.xpose.msra.mxu0 0.0
    %2931 = vmatprep.subr.mxu0 0.0
    %2932 = vmatpush1.xpose.msra.mxu0 0.0
    %2933 = vmatprep.subr.mxu0 0.0
    %2934 = vmatpush1.xpose.msra.mxu0 0.0
    %2935 = vmatprep.subr.mxu0 0.0
    %2936 = vmatpush1.xpose.msra.mxu0 0.0
    %2937 = vmatprep.subr.mxu0 0.0
    %2938 = vmatpush1.xpose.msra.mxu0 0.0
    %2939 = vmatprep.subr.mxu0 0.0
    %2940 = vmatpush1.xpose.msra.mxu0 0.0
    %2941 = vmatprep.subr.mxu0 0.0
    %2942 = vmatpush1.xpose.msra.mxu0 0.0
    %2943 = vmatprep.subr.mxu0 0.0
    %2944 = vmatpush1.xpose.msra.mxu0 0.0
    %2945 = vmatprep.subr.mxu0 0.0
    %2946 = vmatpush1.xpose.msra.mxu0 0.0
    %2947 = vmatprep.subr.mxu0 0.0
    %2948 = vmatpush1.xpose.msra.mxu0 0.0
    %2949 = vmatprep.subr.mxu0 0.0
    %2950 = vmatpush1.xpose.msra.mxu0 0.0
    %2951 = vmatprep.subr.mxu0 0.0
    %2952 = vmatpush1.xpose.msra.mxu0 0.0
    %2953 = vmatprep.subr.mxu0 0.0
    %2954 = vmatpush1.xpose.msra.mxu0 0.0
    %2955 = vmatprep.subr.mxu0 0.0
    %2956 = vmatpush1.xpose.msra.mxu0 0.0
    %2957 = vmatprep.subr.mxu0 0.0
    %2958 = vmatpush1.xpose.msra.mxu0 0.0
    %2959 = vmatprep.subr.mxu0 0.0
    %2960 = vmatpush1.xpose.msra.mxu0 0.0
    %2961 = vmatprep.subr.mxu0 0.0
    %2962 = vmatpush1.xpose.msra.mxu0 0.0
    %2963 = vmatprep.subr.mxu0 0.0
    %2964 = vmatpush1.xpose.msra.mxu0 0.0
    %2965 = vmatprep.subr.mxu0 0.0
    %2966 = vmatpush1.xpose.msra.mxu0 0.0
    %2967 = vmatprep.subr.mxu0 0.0
    %2968 = vmatpush1.xpose.msra.mxu0 0.0
    %2969 = vmatprep.subr.mxu0 0.0
    %2970 = vmatpush1.xpose.msra.mxu0 0.0
    %2971 = vmatprep.subr.mxu0 0.0
    %2972 = vmatpush1.xpose.msra.mxu0 0.0
    %2973 = vmatprep.subr.mxu0 0.0
    %2974 = vmatpush1.xpose.msra.mxu0 0.0
    %2975 = vmatprep.subr.mxu0 0.0
    %2976 = vmatpush1.xpose.msra.mxu0 0.0
    %2977 = vmatprep.subr.mxu0 0.0
    %2978 = vmatpush1.xpose.msra.mxu0 0.0
    %2979 = vmatprep.subr.mxu0 0.0
    %2980 = vmatpush1.xpose.msra.mxu0 0.0
    %2981 = vmatprep.subr.mxu0 0.0
    %2982 = vmatpush1.xpose.msra.mxu0 0.0
    %2983 = vmatprep.subr.mxu0 0.0
    %2984 = vmatpush1.xpose.msra.mxu0 0.0
    %2985 = vmatprep.subr.mxu0 0.0
    %2986 = vmatpush1.xpose.msra.mxu0 0.0
    %2987 = vmatprep.mubr.f32.mxu0 0.0
    %2988 = vmatmul.mubr.f32.gmra.mrb[0].mxu0 %v2921
    %v2989 = vpop.f32.mrb[0].mxu0
    %v2990 = vadd.f32 0.0, %v2989
    %v2991 = vpop.f32.mrb[0].mxu0
    %2992 = vdwg.mxu0
    %v2993 = vmul.f32 %v2990, 0.35355338
    %v2994 = vadd.f32 %v2993, %v657
    %v2995 = vsel %vm659, %v2994, -inf
    %2996 = vmax.xlane.f32.xlu0 %v2995
    %v2997 = vpop.xlane.xlu0 %2996
    %v2998 = vsub.f32 %v2994, %v2997
    %v2999 = vmul.f32 %v2998, 1.442695
    %v3000 = vpow.pop %v2999
    %v3001 = vsel %vm659, %v3000, 0.0
    %3002 = vadd.xlane.f32.xlu0 %v3001
    %v3003 = vpop.xlane.xlu0 %3002
    %v3004 = vrcp.pop %v3003
    %v3005 = vmul.f32 %v3000, %v3004
    %v3006 = vmul.f32 %v2410, %v1181
    %3008 = vrot.lane.b32.xlu0 %v3006, 64
    %v3009 = vpop.permute.xlu0 %3008
    %v3012 = vsel %vm659, %v3005, 0
    %3014 = vmatprep.subr.mxu0 0.0
    %3015 = vmatpush1.msra.mxu0 %v3009
    %3016 = vmatprep.subr.mxu0 0.0
    %3017 = vmatpush1.msra.mxu0 0.0
    %3018 = vmatprep.subr.mxu0 0.0
    %3019 = vmatpush1.msra.mxu0 0.0
    %3020 = vmatprep.subr.mxu0 0.0
    %3021 = vmatpush1.msra.mxu0 0.0
    %3022 = vmatprep.subr.mxu0 0.0
    %3023 = vmatpush1.msra.mxu0 0.0
    %3024 = vmatprep.subr.mxu0 0.0
    %3025 = vmatpush1.msra.mxu0 0.0
    %3026 = vmatprep.subr.mxu0 0.0
    %3027 = vmatpush1.msra.mxu0 0.0
    %3028 = vmatprep.subr.mxu0 0.0
    %3029 = vmatpush1.msra.mxu0 0.0
    %3030 = vmatprep.subr.mxu0 0.0
    %3031 = vmatpush1.msra.mxu0 0.0
    %3032 = vmatprep.subr.mxu0 0.0
    %3033 = vmatpush1.msra.mxu0 0.0
    %3034 = vmatprep.subr.mxu0 0.0
    %3035 = vmatpush1.msra.mxu0 0.0
    %3036 = vmatprep.subr.mxu0 0.0
    %3037 = vmatpush1.msra.mxu0 0.0
    %3038 = vmatprep.subr.mxu0 0.0
    %3039 = vmatpush1.msra.mxu0 0.0
    %3040 = vmatprep.subr.mxu0 0.0
    %3041 = vmatpush1.msra.mxu0 0.0
    %3042 = vmatprep.subr.mxu0 0.0
    %3043 = vmatpush1.msra.mxu0 0.0
    %3044 = vmatprep.subr.mxu0 0.0
    %3045 = vmatpush1.msra.mxu0 0.0
    %3046 = vmatprep.subr.mxu0 0.0
    %3047 = vmatpush1.msra.mxu0 0.0
    %3048 = vmatprep.subr.mxu0 0.0
    %3049 = vmatpush1.msra.mxu0 0.0
    %3050 = vmatprep.subr.mxu0 0.0
    %3051 = vmatpush1.msra.mxu0 0.0
    %3052 = vmatprep.subr.mxu0 0.0
    %3053 = vmatpush1.msra.mxu0 0.0
    %3054 = vmatprep.subr.mxu0 0.0
    %3055 = vmatpush1.msra.mxu0 0.0
    %3056 = vmatprep.subr.mxu0 0.0
    %3057 = vmatpush1.msra.mxu0 0.0
    %3058 = vmatprep.subr.mxu0 0.0
    %3059 = vmatpush1.msra.mxu0 0.0
    %3060 = vmatprep.subr.mxu0 0.0
    %3061 = vmatpush1.msra.mxu0 0.0
    %3062 = vmatprep.subr.mxu0 0.0
    %3063 = vmatpush1.msra.mxu0 0.0
    %3064 = vmatprep.subr.mxu0 0.0
    %3065 = vmatpush1.msra.mxu0 0.0
    %3066 = vmatprep.subr.mxu0 0.0
    %3067 = vmatpush1.msra.mxu0 0.0
    %3068 = vmatprep.subr.mxu0 0.0
    %3069 = vmatpush1.msra.mxu0 0.0
    %3070 = vmatprep.subr.mxu0 0.0
    %3071 = vmatpush1.msra.mxu0 0.0
    %3072 = vmatprep.subr.mxu0 0.0
    %3073 = vmatpush1.msra.mxu0 0.0
    %3074 = vmatprep.subr.mxu0 0.0
    %3075 = vmatpush1.msra.mxu0 0.0
    %3076 = vmatprep.subr.mxu0 0.0
    %3077 = vmatpush1.msra.mxu0 0.0
    %3078 = vmatprep.mubr.f32.mxu0 0.0
    %3079 = vmatmul.mubr.f32.gmra.mrb[0].mxu0 %v3012
    %v3080 = vpop.f32.mrb[0].mxu0
    %v3081 = vadd.f32 0.0, %v3080
    %v3082 = vpop.f32.mrb[0].mxu0
    %3083 = vdwg.mxu0
    %v3084 = vadd.f32 %v2918, %v3081
    %v3085 = vmul.f32 %v2415, %v466
    %3087 = vrot.lane.b32.xlu0 %v2415, 96
    %v3088 = vpop.permute.xlu0 %3087
    %v3090 = vsel %vm418, %v3085, 0
    %v3092 = vsel %vm418, %v3088, 0
    %3094 = vmatprep.subr.mxu0 0.0
    %3095 = vmatpush1.xpose.msra.mxu0 %v3092
    %3096 = vmatprep.subr.mxu0 0.0
    %3097 = vmatpush1.xpose.msra.mxu0 0.0
    %3098 = vmatprep.subr.mxu0 0.0
    %3099 = vmatpush1.xpose.msra.mxu0 0.0
    %3100 = vmatprep.subr.mxu0 0.0
    %3101 = vmatpush1.xpose.msra.mxu0 0.0
    %3102 = vmatprep.subr.mxu0 0.0
    %3103 = vmatpush1.xpose.msra.mxu0 0.0
    %3104 = vmatprep.subr.mxu0 0.0
    %3105 = vmatpush1.xpose.msra.mxu0 0.0
    %3106 = vmatprep.subr.mxu0 0.0
    %3107 = vmatpush1.xpose.msra.mxu0 0.0
    %3108 = vmatprep.subr.mxu0 0.0
    %3109 = vmatpush1.xpose.msra.mxu0 0.0
    %3110 = vmatprep.subr.mxu0 0.0
    %3111 = vmatpush1.xpose.msra.mxu0 0.0
    %3112 = vmatprep.subr.mxu0 0.0
    %3113 = vmatpush1.xpose.msra.mxu0 0.0
    %3114 = vmatprep.subr.mxu0 0.0
    %3115 = vmatpush1.xpose.msra.mxu0 0.0
    %3116 = vmatprep.subr.mxu0 0.0
    %3117 = vmatpush1.xpose.msra.mxu0 0.0
    %3118 = vmatprep.subr.mxu0 0.0
    %3119 = vmatpush1.xpose.msra.mxu0 0.0
    %3120 = vmatprep.subr.mxu0 0.0
    %3121 = vmatpush1.xpose.msra.mxu0 0.0
    %3122 = vmatprep.subr.mxu0 0.0
    %3123 = vmatpush1.xpose.msra.mxu0 0.0
    %3124 = vmatprep.subr.mxu0 0.0
    %3125 = vmatpush1.xpose.msra.mxu0 0.0
    %3126 = vmatprep.subr.mxu0 0.0
    %3127 = vmatpush1.xpose.msra.mxu0 0.0
    %3128 = vmatprep.subr.mxu0 0.0
    %3129 = vmatpush1.xpose.msra.mxu0 0.0
    %3130 = vmatprep.subr.mxu0 0.0
    %3131 = vmatpush1.xpose.msra.mxu0 0.0
    %3132 = vmatprep.subr.mxu0 0.0
    %3133 = vmatpush1.xpose.msra.mxu0 0.0
    %3134 = vmatprep.subr.mxu0 0.0
    %3135 = vmatpush1.xpose.msra.mxu0 0.0
    %3136 = vmatprep.subr.mxu0 0.0
    %3137 = vmatpush1.xpose.msra.mxu0 0.0
    %3138 = vmatprep.subr.mxu0 0.0
    %3139 = vmatpush1.xpose.msra.mxu0 0.0
    %3140 = vmatprep.subr.mxu0 0.0
    %3141 = vmatpush1.xpose.msra.mxu0 0.0
    %3142 = vmatprep.subr.mxu0 0.0
    %3143 = vmatpush1.xpose.msra.mxu0 0.0
    %3144 = vmatprep.subr.mxu0 0.0
    %3145 = vmatpush1.xpose.msra.mxu0 0.0
    %3146 = vmatprep.subr.mxu0 0.0
    %3147 = vmatpush1.xpose.msra.mxu0 0.0
    %3148 = vmatprep.subr.mxu0 0.0
    %3149 = vmatpush1.xpose.msra.mxu0 0.0
    %3150 = vmatprep.subr.mxu0 0.0
    %3151 = vmatpush1.xpose.msra.mxu0 0.0
    %3152 = vmatprep.subr.mxu0 0.0
    %3153 = vmatpush1.xpose.msra.mxu0 0.0
    %3154 = vmatprep.subr.mxu0 0.0
    %3155 = vmatpush1.xpose.msra.mxu0 0.0
    %3156 = vmatprep.subr.mxu0 0.0
    %3157 = vmatpush1.xpose.msra.mxu0 0.0
    %3158 = vmatprep.mubr.f32.mxu0 0.0
    %3159 = vmatmul.mubr.f32.gmra.mrb[0].mxu0 %v3090
    %v3160 = vpop.f32.mrb[0].mxu0
    %v3161 = vadd.f32 0.0, %v3160
    %v3162 = vpop.f32.mrb[0].mxu0
    %3163 = vdwg.mxu0
    %v3164 = vmul.f32 %v3161, 0.35355338
    %v3165 = vadd.f32 %v3164, %v1345
    %v3166 = vsel %vm659, %v3165, -inf
    %3167 = vmax.xlane.f32.xlu0 %v3166
    %v3168 = vpop.xlane.xlu0 %3167
    %v3169 = vsub.f32 %v3165, %v3168
    %v3170 = vmul.f32 %v3169, 1.442695
    %v3171 = vpow.pop %v3170
    %v3172 = vsel %vm659, %v3171, 0.0
    %3173 = vadd.xlane.f32.xlu0 %v3172
    %v3174 = vpop.xlane.xlu0 %3173
    %v3175 = vrcp.pop %v3174
    %v3176 = vmul.f32 %v3171, %v3175
    %v3177 = vmul.f32 %v2415, %v673
    %v3178 = vmul.f32 %v2415, %v471
    %v3180 = vsel %vm418, %v3178, 0
    %3182 = vmatprep.subr.mxu0 0.0
    %3183 = vmatpush1.xpose.msra.mxu0 %v3092
    %3184 = vmatprep.subr.mxu0 0.0
    %3185 = vmatpush1.xpose.msra.mxu0 0.0
    %3186 = vmatprep.subr.mxu0 0.0
    %3187 = vmatpush1.xpose.msra.mxu0 0.0
    %3188 = vmatprep.subr.mxu0 0.0
    %3189 = vmatpush1.xpose.msra.mxu0 0.0
    %3190 = vmatprep.subr.mxu0 0.0
    %3191 = vmatpush1.xpose.msra.mxu0 0.0
    %3192 = vmatprep.subr.mxu0 0.0
    %3193 = vmatpush1.xpose.msra.mxu0 0.0
    %3194 = vmatprep.subr.mxu0 0.0
    %3195 = vmatpush1.xpose.msra.mxu0 0.0
    %3196 = vmatprep.subr.mxu0 0.0
    %3197 = vmatpush1.xpose.msra.mxu0 0.0
    %3198 = vmatprep.subr.mxu0 0.0
    %3199 = vmatpush1.xpose.msra.mxu0 0.0
    %3200 = vmatprep.subr.mxu0 0.0
    %3201 = vmatpush1.xpose.msra.mxu0 0.0
    %3202 = vmatprep.subr.mxu0 0.0
    %3203 = vmatpush1.xpose.msra.mxu0 0.0
    %3204 = vmatprep.subr.mxu0 0.0
    %3205 = vmatpush1.xpose.msra.mxu0 0.0
    %3206 = vmatprep.subr.mxu0 0.0
    %3207 = vmatpush1.xpose.msra.mxu0 0.0
    %3208 = vmatprep.subr.mxu0 0.0
    %3209 = vmatpush1.xpose.msra.mxu0 0.0
    %3210 = vmatprep.subr.mxu0 0.0
    %3211 = vmatpush1.xpose.msra.mxu0 0.0
    %3212 = vmatprep.subr.mxu0 0.0
    %3213 = vmatpush1.xpose.msra.mxu0 0.0
    %3214 = vmatprep.subr.mxu0 0.0
    %3215 = vmatpush1.xpose.msra.mxu0 0.0
    %3216 = vmatprep.subr.mxu0 0.0
    %3217 = vmatpush1.xpose.msra.mxu0 0.0
    %3218 = vmatprep.subr.mxu0 0.0
    %3219 = vmatpush1.xpose.msra.mxu0 0.0
    %3220 = vmatprep.subr.mxu0 0.0
    %3221 = vmatpush1.xpose.msra.mxu0 0.0
    %3222 = vmatprep.subr.mxu0 0.0
    %3223 = vmatpush1.xpose.msra.mxu0 0.0
    %3224 = vmatprep.subr.mxu0 0.0
    %3225 = vmatpush1.xpose.msra.mxu0 0.0
    %3226 = vmatprep.subr.mxu0 0.0
    %3227 = vmatpush1.xpose.msra.mxu0 0.0
    %3228 = vmatprep.subr.mxu0 0.0
    %3229 = vmatpush1.xpose.msra.mxu0 0.0
    %3230 = vmatprep.subr.mxu0 0.0
    %3231 = vmatpush1.xpose.msra.mxu0 0.0
    %3232 = vmatprep.subr.mxu0 0.0
    %3233 = vmatpush1.xpose.msra.mxu0 0.0
    %3234 = vmatprep.subr.mxu0 0.0
    %3235 = vmatpush1.xpose.msra.mxu0 0.0
    %3236 = vmatprep.subr.mxu0 0.0
    %3237 = vmatpush1.xpose.msra.mxu0 0.0
    %3238 = vmatprep.subr.mxu0 0.0
    %3239 = vmatpush1.xpose.msra.mxu0 0.0
    %3240 = vmatprep.subr.mxu0 0.0
    %3241 = vmatpush1.xpose.msra.mxu0 0.0
    %3242 = vmatprep.subr.mxu0 0.0
    %3243 = vmatpush1.xpose.msra.mxu0 0.0
    %3244 = vmatprep.subr.mxu0 0.0
    %3245 = vmatpush1.xpose.msra.mxu0 0.0
    %3246 = vmatprep.mubr.f32.mxu0 0.0
    %3247 = vmatmul.mubr.f32.gmra.mrb[0].mxu0 %v3180
    %v3248 = vpop.f32.mrb[0].mxu0
    %v3249 = vadd.f32 0.0, %v3248
    %v3250 = vpop.f32.mrb[0].mxu0
    %3251 = vdwg.mxu0
    %v3252 = vmul.f32 %v3249, 0.35355338
    %v3253 = vadd.f32 %v3252, %v1345
    %v3254 = vsel %vm659, %v3253, -inf
    %3255 = vmax.xlane.f32.xlu0 %v3254
    %v3256 = vpop.xlane.xlu0 %3255
    %v3257 = vsub.f32 %v3253, %v3256
    %v3258 = vmul.f32 %v3257, 1.442695
    %v3259 = vpow.pop %v3258
    %v3260 = vsel %vm659, %v3259, 0.0
    %3261 = vadd.xlane.f32.xlu0 %v3260
    %v3262 = vpop.xlane.xlu0 %3261
    %v3263 = vrcp.pop %v3262
    %v3264 = vmul.f32 %v3259, %v3263
    %v3265 = vmul.f32 %v2415, %v765
    %3267 = vrot.lane.b32.xlu0 %v3265, 64
    %v3268 = vpop.permute.xlu0 %3267
    %v3271 = vsel %vm659, %v3264, 0
    %3273 = vmatprep.subr.mxu0 0.0
    %3274 = vmatpush1.msra.mxu0 %v3268
    %3275 = vmatprep.subr.mxu0 0.0
    %3276 = vmatpush1.msra.mxu0 0.0
    %3277 = vmatprep.subr.mxu0 0.0
    %3278 = vmatpush1.msra.mxu0 0.0
    %3279 = vmatprep.subr.mxu0 0.0
    %3280 = vmatpush1.msra.mxu0 0.0
    %3281 = vmatprep.subr.mxu0 0.0
    %3282 = vmatpush1.msra.mxu0 0.0
    %3283 = vmatprep.subr.mxu0 0.0
    %3284 = vmatpush1.msra.mxu0 0.0
    %3285 = vmatprep.subr.mxu0 0.0
    %3286 = vmatpush1.msra.mxu0 0.0
    %3287 = vmatprep.subr.mxu0 0.0
    %3288 = vmatpush1.msra.mxu0 0.0
    %3289 = vmatprep.subr.mxu0 0.0
    %3290 = vmatpush1.msra.mxu0 0.0
    %3291 = vmatprep.subr.mxu0 0.0
    %3292 = vmatpush1.msra.mxu0 0.0
    %3293 = vmatprep.subr.mxu0 0.0
    %3294 = vmatpush1.msra.mxu0 0.0
    %3295 = vmatprep.subr.mxu0 0.0
    %3296 = vmatpush1.msra.mxu0 0.0
    %3297 = vmatprep.subr.mxu0 0.0
    %3298 = vmatpush1.msra.mxu0 0.0
    %3299 = vmatprep.subr.mxu0 0.0
    %3300 = vmatpush1.msra.mxu0 0.0
    %3301 = vmatprep.subr.mxu0 0.0
    %3302 = vmatpush1.msra.mxu0 0.0
    %3303 = vmatprep.subr.mxu0 0.0
    %3304 = vmatpush1.msra.mxu0 0.0
    %3305 = vmatprep.subr.mxu0 0.0
    %3306 = vmatpush1.msra.mxu0 0.0
    %3307 = vmatprep.subr.mxu0 0.0
    %3308 = vmatpush1.msra.mxu0 0.0
    %3309 = vmatprep.subr.mxu0 0.0
    %3310 = vmatpush1.msra.mxu0 0.0
    %3311 = vmatprep.subr.mxu0 0.0
    %3312 = vmatpush1.msra.mxu0 0.0
    %3313 = vmatprep.subr.mxu0 0.0
    %3314 = vmatpush1.msra.mxu0 0.0
    %3315 = vmatprep.subr.mxu0 0.0
    %3316 = vmatpush1.msra.mxu0 0.0
    %3317 = vmatprep.subr.mxu0 0.0
    %3318 = vmatpush1.msra.mxu0 0.0
    %3319 = vmatprep.subr.mxu0 0.0
    %3320 = vmatpush1.msra.mxu0 0.0
    %3321 = vmatprep.subr.mxu0 0.0
    %3322 = vmatpush1.msra.mxu0 0.0
    %3323 = vmatprep.subr.mxu0 0.0
    %3324 = vmatpush1.msra.mxu0 0.0
    %3325 = vmatprep.subr.mxu0 0.0
    %3326 = vmatpush1.msra.mxu0 0.0
    %3327 = vmatprep.subr.mxu0 0.0
    %3328 = vmatpush1.msra.mxu0 0.0
    %3329 = vmatprep.subr.mxu0 0.0
    %3330 = vmatpush1.msra.mxu0 0.0
    %3331 = vmatprep.subr.mxu0 0.0
    %3332 = vmatpush1.msra.mxu0 0.0
    %3333 = vmatprep.subr.mxu0 0.0
    %3334 = vmatpush1.msra.mxu0 0.0
    %3335 = vmatprep.subr.mxu0 0.0
    %3336 = vmatpush1.msra.mxu0 0.0
    %3337 = vmatprep.mubr.f32.mxu0 0.0
    %3338 = vmatmul.mubr.f32.gmra.mrb[0].mxu0 %v3271
    %v3339 = vpop.f32.mrb[0].mxu0
    %v3340 = vadd.f32 0.0, %v3339
    %v3341 = vpop.f32.mrb[0].mxu0
    %3342 = vdwg.mxu0
    %3344 = vrot.lane.b32.xlu0 %v3177, 64
    %v3345 = vpop.permute.xlu0 %3344
    %v3348 = vsel %vm659, %v3176, 0
    %3350 = vmatprep.subr.mxu0 0.0
    %3351 = vmatpush1.msra.mxu0 %v3345
    %3352 = vmatprep.subr.mxu0 0.0
    %3353 = vmatpush1.msra.mxu0 0.0
    %3354 = vmatprep.subr.mxu0 0.0
    %3355 = vmatpush1.msra.mxu0 0.0
    %3356 = vmatprep.subr.mxu0 0.0
    %3357 = vmatpush1.msra.mxu0 0.0
    %3358 = vmatprep.subr.mxu0 0.0
    %3359 = vmatpush1.msra.mxu0 0.0
    %3360 = vmatprep.subr.mxu0 0.0
    %3361 = vmatpush1.msra.mxu0 0.0
    %3362 = vmatprep.subr.mxu0 0.0
    %3363 = vmatpush1.msra.mxu0 0.0
    %3364 = vmatprep.subr.mxu0 0.0
    %3365 = vmatpush1.msra.mxu0 0.0
    %3366 = vmatprep.subr.mxu0 0.0
    %3367 = vmatpush1.msra.mxu0 0.0
    %3368 = vmatprep.subr.mxu0 0.0
    %3369 = vmatpush1.msra.mxu0 0.0
    %3370 = vmatprep.subr.mxu0 0.0
    %3371 = vmatpush1.msra.mxu0 0.0
    %3372 = vmatprep.subr.mxu0 0.0
    %3373 = vmatpush1.msra.mxu0 0.0
    %3374 = vmatprep.subr.mxu0 0.0
    %3375 = vmatpush1.msra.mxu0 0.0
    %3376 = vmatprep.subr.mxu0 0.0
    %3377 = vmatpush1.msra.mxu0 0.0
    %3378 = vmatprep.subr.mxu0 0.0
    %3379 = vmatpush1.msra.mxu0 0.0
    %3380 = vmatprep.subr.mxu0 0.0
    %3381 = vmatpush1.msra.mxu0 0.0
    %3382 = vmatprep.subr.mxu0 0.0
    %3383 = vmatpush1.msra.mxu0 0.0
    %3384 = vmatprep.subr.mxu0 0.0
    %3385 = vmatpush1.msra.mxu0 0.0
    %3386 = vmatprep.subr.mxu0 0.0
    %3387 = vmatpush1.msra.mxu0 0.0
    %3388 = vmatprep.subr.mxu0 0.0
    %3389 = vmatpush1.msra.mxu0 0.0
    %3390 = vmatprep.subr.mxu0 0.0
    %3391 = vmatpush1.msra.mxu0 0.0
    %3392 = vmatprep.subr.mxu0 0.0
    %3393 = vmatpush1.msra.mxu0 0.0
    %3394 = vmatprep.subr.mxu0 0.0
    %3395 = vmatpush1.msra.mxu0 0.0
    %3396 = vmatprep.subr.mxu0 0.0
    %3397 = vmatpush1.msra.mxu0 0.0
    %3398 = vmatprep.subr.mxu0 0.0
    %3399 = vmatpush1.msra.mxu0 0.0
    %3400 = vmatprep.subr.mxu0 0.0
    %3401 = vmatpush1.msra.mxu0 0.0
    %3402 = vmatprep.subr.mxu0 0.0
    %3403 = vmatpush1.msra.mxu0 0.0
    %3404 = vmatprep.subr.mxu0 0.0
    %3405 = vmatpush1.msra.mxu0 0.0
    %3406 = vmatprep.subr.mxu0 0.0
    %3407 = vmatpush1.msra.mxu0 0.0
    %3408 = vmatprep.subr.mxu0 0.0
    %3409 = vmatpush1.msra.mxu0 0.0
    %3410 = vmatprep.subr.mxu0 0.0
    %3411 = vmatpush1.msra.mxu0 0.0
    %3412 = vmatprep.subr.mxu0 0.0
    %3413 = vmatpush1.msra.mxu0 0.0
    %3414 = vmatprep.mubr.f32.mxu0 0.0
    %3415 = vmatmul.mubr.f32.gmra.mrb[0].mxu0 %v3348
    %v3416 = vpop.f32.mrb[0].mxu0
    %v3417 = vadd.f32 %v3340, %v3416
    %v3418 = vpop.f32.mrb[0].mxu0
    %3419 = vdwg.mxu0
    %v3420 = vmul.f32 %v2415, %v476
    %v3422 = vsel %vm418, %v3420, 0
    %3424 = vmatprep.subr.mxu0 0.0
    %3425 = vmatpush1.xpose.msra.mxu0 %v3092
    %3426 = vmatprep.subr.mxu0 0.0
    %3427 = vmatpush1.xpose.msra.mxu0 0.0
    %3428 = vmatprep.subr.mxu0 0.0
    %3429 = vmatpush1.xpose.msra.mxu0 0.0
    %3430 = vmatprep.subr.mxu0 0.0
    %3431 = vmatpush1.xpose.msra.mxu0 0.0
    %3432 = vmatprep.subr.mxu0 0.0
    %3433 = vmatpush1.xpose.msra.mxu0 0.0
    %3434 = vmatprep.subr.mxu0 0.0
    %3435 = vmatpush1.xpose.msra.mxu0 0.0
    %3436 = vmatprep.subr.mxu0 0.0
    %3437 = vmatpush1.xpose.msra.mxu0 0.0
    %3438 = vmatprep.subr.mxu0 0.0
    %3439 = vmatpush1.xpose.msra.mxu0 0.0
    %3440 = vmatprep.subr.mxu0 0.0
    %3441 = vmatpush1.xpose.msra.mxu0 0.0
    %3442 = vmatprep.subr.mxu0 0.0
    %3443 = vmatpush1.xpose.msra.mxu0 0.0
    %3444 = vmatprep.subr.mxu0 0.0
    %3445 = vmatpush1.xpose.msra.mxu0 0.0
    %3446 = vmatprep.subr.mxu0 0.0
    %3447 = vmatpush1.xpose.msra.mxu0 0.0
    %3448 = vmatprep.subr.mxu0 0.0
    %3449 = vmatpush1.xpose.msra.mxu0 0.0
    %3450 = vmatprep.subr.mxu0 0.0
    %3451 = vmatpush1.xpose.msra.mxu0 0.0
    %3452 = vmatprep.subr.mxu0 0.0
    %3453 = vmatpush1.xpose.msra.mxu0 0.0
    %3454 = vmatprep.subr.mxu0 0.0
    %3455 = vmatpush1.xpose.msra.mxu0 0.0
    %3456 = vmatprep.subr.mxu0 0.0
    %3457 = vmatpush1.xpose.msra.mxu0 0.0
    %3458 = vmatprep.subr.mxu0 0.0
    %3459 = vmatpush1.xpose.msra.mxu0 0.0
    %3460 = vmatprep.subr.mxu0 0.0
    %3461 = vmatpush1.xpose.msra.mxu0 0.0
    %3462 = vmatprep.subr.mxu0 0.0
    %3463 = vmatpush1.xpose.msra.mxu0 0.0
    %3464 = vmatprep.subr.mxu0 0.0
    %3465 = vmatpush1.xpose.msra.mxu0 0.0
    %3466 = vmatprep.subr.mxu0 0.0
    %3467 = vmatpush1.xpose.msra.mxu0 0.0
    %3468 = vmatprep.subr.mxu0 0.0
    %3469 = vmatpush1.xpose.msra.mxu0 0.0
    %3470 = vmatprep.subr.mxu0 0.0
    %3471 = vmatpush1.xpose.msra.mxu0 0.0
    %3472 = vmatprep.subr.mxu0 0.0
    %3473 = vmatpush1.xpose.msra.mxu0 0.0
    %3474 = vmatprep.subr.mxu0 0.0
    %3475 = vmatpush1.xpose.msra.mxu0 0.0
    %3476 = vmatprep.subr.mxu0 0.0
    %3477 = vmatpush1.xpose.msra.mxu0 0.0
    %3478 = vmatprep.subr.mxu0 0.0
    %3479 = vmatpush1.xpose.msra.mxu0 0.0
    %3480 = vmatprep.subr.mxu0 0.0
    %3481 = vmatpush1.xpose.msra.mxu0 0.0
    %3482 = vmatprep.subr.mxu0 0.0
    %3483 = vmatpush1.xpose.msra.mxu0 0.0
    %3484 = vmatprep.subr.mxu0 0.0
    %3485 = vmatpush1.xpose.msra.mxu0 0.0
    %3486 = vmatprep.subr.mxu0 0.0
    %3487 = vmatpush1.xpose.msra.mxu0 0.0
    %3488 = vmatprep.mubr.f32.mxu0 0.0
    %3489 = vmatmul.mubr.f32.gmra.mrb[0].mxu0 %v3422
    %v3490 = vpop.f32.mrb[0].mxu0
    %v3491 = vadd.f32 0.0, %v3490
    %v3492 = vpop.f32.mrb[0].mxu0
    %3493 = vdwg.mxu0
    %v3494 = vmul.f32 %v3491, 0.35355338
    %v3495 = vadd.f32 %v3494, %v1345
    %v3496 = vsel %vm659, %v3495, -inf
    %3497 = vmax.xlane.f32.xlu0 %v3496
    %v3498 = vpop.xlane.xlu0 %3497
    %v3499 = vsub.f32 %v3495, %v3498
    %v3500 = vmul.f32 %v3499, 1.442695
    %v3501 = vpow.pop %v3500
    %v3502 = vsel %vm659, %v3501, 0.0
    %3503 = vadd.xlane.f32.xlu0 %v3502
    %v3504 = vpop.xlane.xlu0 %3503
    %v3505 = vrcp.pop %v3504
    %v3506 = vmul.f32 %v3501, %v3505
    %v3507 = vmul.f32 %v2415, %v1011
    %3509 = vrot.lane.b32.xlu0 %v3507, 64
    %v3510 = vpop.permute.xlu0 %3509
    %v3513 = vsel %vm659, %v3506, 0
    %3515 = vmatprep.subr.mxu0 0.0
    %3516 = vmatpush1.msra.mxu0 %v3510
    %3517 = vmatprep.subr.mxu0 0.0
    %3518 = vmatpush1.msra.mxu0 0.0
    %3519 = vmatprep.subr.mxu0 0.0
    %3520 = vmatpush1.msra.mxu0 0.0
    %3521 = vmatprep.subr.mxu0 0.0
    %3522 = vmatpush1.msra.mxu0 0.0
    %3523 = vmatprep.subr.mxu0 0.0
    %3524 = vmatpush1.msra.mxu0 0.0
    %3525 = vmatprep.subr.mxu0 0.0
    %3526 = vmatpush1.msra.mxu0 0.0
    %3527 = vmatprep.subr.mxu0 0.0
    %3528 = vmatpush1.msra.mxu0 0.0
    %3529 = vmatprep.subr.mxu0 0.0
    %3530 = vmatpush1.msra.mxu0 0.0
    %3531 = vmatprep.subr.mxu0 0.0
    %3532 = vmatpush1.msra.mxu0 0.0
    %3533 = vmatprep.subr.mxu0 0.0
    %3534 = vmatpush1.msra.mxu0 0.0
    %3535 = vmatprep.subr.mxu0 0.0
    %3536 = vmatpush1.msra.mxu0 0.0
    %3537 = vmatprep.subr.mxu0 0.0
    %3538 = vmatpush1.msra.mxu0 0.0
    %3539 = vmatprep.subr.mxu0 0.0
    %3540 = vmatpush1.msra.mxu0 0.0
    %3541 = vmatprep.subr.mxu0 0.0
    %3542 = vmatpush1.msra.mxu0 0.0
    %3543 = vmatprep.subr.mxu0 0.0
    %3544 = vmatpush1.msra.mxu0 0.0
    %3545 = vmatprep.subr.mxu0 0.0
    %3546 = vmatpush1.msra.mxu0 0.0
    %3547 = vmatprep.subr.mxu0 0.0
    %3548 = vmatpush1.msra.mxu0 0.0
    %3549 = vmatprep.subr.mxu0 0.0
    %3550 = vmatpush1.msra.mxu0 0.0
    %3551 = vmatprep.subr.mxu0 0.0
    %3552 = vmatpush1.msra.mxu0 0.0
    %3553 = vmatprep.subr.mxu0 0.0
    %3554 = vmatpush1.msra.mxu0 0.0
    %3555 = vmatprep.subr.mxu0 0.0
    %3556 = vmatpush1.msra.mxu0 0.0
    %3557 = vmatprep.subr.mxu0 0.0
    %3558 = vmatpush1.msra.mxu0 0.0
    %3559 = vmatprep.subr.mxu0 0.0
    %3560 = vmatpush1.msra.mxu0 0.0
    %3561 = vmatprep.subr.mxu0 0.0
    %3562 = vmatpush1.msra.mxu0 0.0
    %3563 = vmatprep.subr.mxu0 0.0
    %3564 = vmatpush1.msra.mxu0 0.0
    %3565 = vmatprep.subr.mxu0 0.0
    %3566 = vmatpush1.msra.mxu0 0.0
    %3567 = vmatprep.subr.mxu0 0.0
    %3568 = vmatpush1.msra.mxu0 0.0
    %3569 = vmatprep.subr.mxu0 0.0
    %3570 = vmatpush1.msra.mxu0 0.0
    %3571 = vmatprep.subr.mxu0 0.0
    %3572 = vmatpush1.msra.mxu0 0.0
    %3573 = vmatprep.subr.mxu0 0.0
    %3574 = vmatpush1.msra.mxu0 0.0
    %3575 = vmatprep.subr.mxu0 0.0
    %3576 = vmatpush1.msra.mxu0 0.0
    %3577 = vmatprep.subr.mxu0 0.0
    %3578 = vmatpush1.msra.mxu0 0.0
    %3579 = vmatprep.mubr.f32.mxu0 0.0
    %3580 = vmatmul.mubr.f32.gmra.mrb[0].mxu0 %v3513
    %v3581 = vpop.f32.mrb[0].mxu0
    %v3582 = vadd.f32 0.0, %v3581
    %v3583 = vpop.f32.mrb[0].mxu0
    %3584 = vdwg.mxu0
    %v3585 = vadd.f32 %v3417, %v3582
    %v3586 = vmul.f32 %v2415, %v481
    %v3588 = vsel %vm418, %v3586, 0
    %3590 = vmatprep.subr.mxu0 0.0
    %3591 = vmatpush1.xpose.msra.mxu0 %v3092
    %3592 = vmatprep.subr.mxu0 0.0
    %3593 = vmatpush1.xpose.msra.mxu0 0.0
    %3594 = vmatprep.subr.mxu0 0.0
    %3595 = vmatpush1.xpose.msra.mxu0 0.0
    %3596 = vmatprep.subr.mxu0 0.0
    %3597 = vmatpush1.xpose.msra.mxu0 0.0
    %3598 = vmatprep.subr.mxu0 0.0
    %3599 = vmatpush1.xpose.msra.mxu0 0.0
    %3600 = vmatprep.subr.mxu0 0.0
    %3601 = vmatpush1.xpose.msra.mxu0 0.0
    %3602 = vmatprep.subr.mxu0 0.0
    %3603 = vmatpush1.xpose.msra.mxu0 0.0
    %3604 = vmatprep.subr.mxu0 0.0
    %3605 = vmatpush1.xpose.msra.mxu0 0.0
    %3606 = vmatprep.subr.mxu0 0.0
    %3607 = vmatpush1.xpose.msra.mxu0 0.0
    %3608 = vmatprep.subr.mxu0 0.0
    %3609 = vmatpush1.xpose.msra.mxu0 0.0
    %3610 = vmatprep.subr.mxu0 0.0
    %3611 = vmatpush1.xpose.msra.mxu0 0.0
    %3612 = vmatprep.subr.mxu0 0.0
    %3613 = vmatpush1.xpose.msra.mxu0 0.0
    %3614 = vmatprep.subr.mxu0 0.0
    %3615 = vmatpush1.xpose.msra.mxu0 0.0
    %3616 = vmatprep.subr.mxu0 0.0
    %3617 = vmatpush1.xpose.msra.mxu0 0.0
    %3618 = vmatprep.subr.mxu0 0.0
    %3619 = vmatpush1.xpose.msra.mxu0 0.0
    %3620 = vmatprep.subr.mxu0 0.0
    %3621 = vmatpush1.xpose.msra.mxu0 0.0
    %3622 = vmatprep.subr.mxu0 0.0
    %3623 = vmatpush1.xpose.msra.mxu0 0.0
    %3624 = vmatprep.subr.mxu0 0.0
    %3625 = vmatpush1.xpose.msra.mxu0 0.0
    %3626 = vmatprep.subr.mxu0 0.0
    %3627 = vmatpush1.xpose.msra.mxu0 0.0
    %3628 = vmatprep.subr.mxu0 0.0
    %3629 = vmatpush1.xpose.msra.mxu0 0.0
    %3630 = vmatprep.subr.mxu0 0.0
    %3631 = vmatpush1.xpose.msra.mxu0 0.0
    %3632 = vmatprep.subr.mxu0 0.0
    %3633 = vmatpush1.xpose.msra.mxu0 0.0
    %3634 = vmatprep.subr.mxu0 0.0
    %3635 = vmatpush1.xpose.msra.mxu0 0.0
    %3636 = vmatprep.subr.mxu0 0.0
    %3637 = vmatpush1.xpose.msra.mxu0 0.0
    %3638 = vmatprep.subr.mxu0 0.0
    %3639 = vmatpush1.xpose.msra.mxu0 0.0
    %3640 = vmatprep.subr.mxu0 0.0
    %3641 = vmatpush1.xpose.msra.mxu0 0.0
    %3642 = vmatprep.subr.mxu0 0.0
    %3643 = vmatpush1.xpose.msra.mxu0 0.0
    %3644 = vmatprep.subr.mxu0 0.0
    %3645 = vmatpush1.xpose.msra.mxu0 0.0
    %3646 = vmatprep.subr.mxu0 0.0
    %3647 = vmatpush1.xpose.msra.mxu0 0.0
    %3648 = vmatprep.subr.mxu0 0.0
    %3649 = vmatpush1.xpose.msra.mxu0 0.0
    %3650 = vmatprep.subr.mxu0 0.0
    %3651 = vmatpush1.xpose.msra.mxu0 0.0
    %3652 = vmatprep.subr.mxu0 0.0
    %3653 = vmatpush1.xpose.msra.mxu0 0.0
    %3654 = vmatprep.mubr.f32.mxu0 0.0
    %3655 = vmatmul.mubr.f32.gmra.mrb[0].mxu0 %v3588
    %v3656 = vpop.f32.mrb[0].mxu0
    %v3657 = vadd.f32 0.0, %v3656
    %v3658 = vpop.f32.mrb[0].mxu0
    %3659 = vdwg.mxu0
    %v3660 = vmul.f32 %v3657, 0.35355338
    %v3661 = vadd.f32 %v3660, %v1345
    %v3662 = vsel %vm659, %v3661, -inf
    %3663 = vmax.xlane.f32.xlu0 %v3662
    %v3664 = vpop.xlane.xlu0 %3663
    %v3665 = vsub.f32 %v3661, %v3664
    %v3666 = vmul.f32 %v3665, 1.442695
    %v3667 = vpow.pop %v3666
    %v3668 = vsel %vm659, %v3667, 0.0
    %3669 = vadd.xlane.f32.xlu0 %v3668
    %v3670 = vpop.xlane.xlu0 %3669
    %v3671 = vrcp.pop %v3670
    %v3672 = vmul.f32 %v3667, %v3671
    %v3673 = vmul.f32 %v2415, %v1181
    %3675 = vrot.lane.b32.xlu0 %v3673, 64
    %v3676 = vpop.permute.xlu0 %3675
    %v3679 = vsel %vm659, %v3672, 0
    %3681 = vmatprep.subr.mxu0 0.0
    %3682 = vmatpush1.msra.mxu0 %v3676
    %3683 = vmatprep.subr.mxu0 0.0
    %3684 = vmatpush1.msra.mxu0 0.0
    %3685 = vmatprep.subr.mxu0 0.0
    %3686 = vmatpush1.msra.mxu0 0.0
    %3687 = vmatprep.subr.mxu0 0.0
    %3688 = vmatpush1.msra.mxu0 0.0
    %3689 = vmatprep.subr.mxu0 0.0
    %3690 = vmatpush1.msra.mxu0 0.0
    %3691 = vmatprep.subr.mxu0 0.0
    %3692 = vmatpush1.msra.mxu0 0.0
    %3693 = vmatprep.subr.mxu0 0.0
    %3694 = vmatpush1.msra.mxu0 0.0
    %3695 = vmatprep.subr.mxu0 0.0
    %3696 = vmatpush1.msra.mxu0 0.0
    %3697 = vmatprep.subr.mxu0 0.0
    %3698 = vmatpush1.msra.mxu0 0.0
    %3699 = vmatprep.subr.mxu0 0.0
    %3700 = vmatpush1.msra.mxu0 0.0
    %3701 = vmatprep.subr.mxu0 0.0
    %3702 = vmatpush1.msra.mxu0 0.0
    %3703 = vmatprep.subr.mxu0 0.0
    %3704 = vmatpush1.msra.mxu0 0.0
    %3705 = vmatprep.subr.mxu0 0.0
    %3706 = vmatpush1.msra.mxu0 0.0
    %3707 = vmatprep.subr.mxu0 0.0
    %3708 = vmatpush1.msra.mxu0 0.0
    %3709 = vmatprep.subr.mxu0 0.0
    %3710 = vmatpush1.msra.mxu0 0.0
    %3711 = vmatprep.subr.mxu0 0.0
    %3712 = vmatpush1.msra.mxu0 0.0
    %3713 = vmatprep.subr.mxu0 0.0
    %3714 = vmatpush1.msra.mxu0 0.0
    %3715 = vmatprep.subr.mxu0 0.0
    %3716 = vmatpush1.msra.mxu0 0.0
    %3717 = vmatprep.subr.mxu0 0.0
    %3718 = vmatpush1.msra.mxu0 0.0
    %3719 = vmatprep.subr.mxu0 0.0
    %3720 = vmatpush1.msra.mxu0 0.0
    %3721 = vmatprep.subr.mxu0 0.0
    %3722 = vmatpush1.msra.mxu0 0.0
    %3723 = vmatprep.subr.mxu0 0.0
    %3724 = vmatpush1.msra.mxu0 0.0
    %3725 = vmatprep.subr.mxu0 0.0
    %3726 = vmatpush1.msra.mxu0 0.0
    %3727 = vmatprep.subr.mxu0 0.0
    %3728 = vmatpush1.msra.mxu0 0.0
    %3729 = vmatprep.subr.mxu0 0.0
    %3730 = vmatpush1.msra.mxu0 0.0
    %3731 = vmatprep.subr.mxu0 0.0
    %3732 = vmatpush1.msra.mxu0 0.0
    %3733 = vmatprep.subr.mxu0 0.0
    %3734 = vmatpush1.msra.mxu0 0.0
    %3735 = vmatprep.subr.mxu0 0.0
    %3736 = vmatpush1.msra.mxu0 0.0
    %3737 = vmatprep.subr.mxu0 0.0
    %3738 = vmatpush1.msra.mxu0 0.0
    %3739 = vmatprep.subr.mxu0 0.0
    %3740 = vmatpush1.msra.mxu0 0.0
    %3741 = vmatprep.subr.mxu0 0.0
    %3742 = vmatpush1.msra.mxu0 0.0
    %3743 = vmatprep.subr.mxu0 0.0
    %3744 = vmatpush1.msra.mxu0 0.0
    %3745 = vmatprep.mubr.f32.mxu0 0.0
    %3746 = vmatmul.mubr.f32.gmra.mrb[0].mxu0 %v3679
    %v3747 = vpop.f32.mrb[0].mxu0
    %v3748 = vadd.f32 0.0, %v3747
    %v3749 = vpop.f32.mrb[0].mxu0
    %3750 = vdwg.mxu0
    %v3751 = vadd.f32 %v3585, %v3748
    %s3752 = scalar_lea.vmem %s8, 32
    %v3753 = vld [vmem:[%s3752] sm:$0xff]
    %v3754 = vld [vmem:[%s3752 + $0x8] sm:$0xff]
    %v3755 = vld [vmem:[%s3752 + $0x10] sm:$0xff]
    %v3756 = vld [vmem:[%s3752 + $0x18] sm:$0xff]
    %s3757 = scalar_lea.vmem [#allocation12], 1
    %v3758 = vld [vmem:[%s3757] sm:$0x1]
    %v3760 = vlaneseq
    %v3761 = vshrl.u32 %v3760, 7
    %v3762 = vsub.s32 0, %v3761
    %v3763 = vrot.slane %v3758, %v3762
    %v3766 = vsel %vm418, %v3084, 0
    %v3769 = vsel %vm418, %v3751, 0
    %3771 = vmatprep.subr.mxu0 0.0
    %3772 = vmatpush1.msra.mxu0 %v3753
    %3773 = vmatprep.subr.mxu0 0.0
    %3774 = vmatpush1.msra.mxu0 %v3754
    %3775 = vmatprep.subr.mxu0 0.0
    %3776 = vmatpush1.msra.mxu0 %v3755
    %3777 = vmatprep.subr.mxu0 0.0
    %3778 = vmatpush1.msra.mxu0 %v3756
    %3779 = vmatprep.subr.mxu0 0.0
    %3780 = vmatpush1.msra.mxu0 0.0
    %3781 = vmatprep.subr.mxu0 0.0
    %3782 = vmatpush1.msra.mxu0 0.0
    %3783 = vmatprep.subr.mxu0 0.0
    %3784 = vmatpush1.msra.mxu0 0.0
    %3785 = vmatprep.subr.mxu0 0.0
    %3786 = vmatpush1.msra.mxu0 0.0
    %3787 = vmatprep.subr.mxu0 0.0
    %3788 = vmatpush1.msra.mxu0 0.0
    %3789 = vmatprep.subr.mxu0 0.0
    %3790 = vmatpush1.msra.mxu0 0.0
    %3791 = vmatprep.subr.mxu0 0.0
    %3792 = vmatpush1.msra.mxu0 0.0
    %3793 = vmatprep.subr.mxu0 0.0
    %3794 = vmatpush1.msra.mxu0 0.0
    %3795 = vmatprep.subr.mxu0 0.0
    %3796 = vmatpush1.msra.mxu0 0.0
    %3797 = vmatprep.subr.mxu0 0.0
    %3798 = vmatpush1.msra.mxu0 0.0
    %3799 = vmatprep.subr.mxu0 0.0
    %3800 = vmatpush1.msra.mxu0 0.0
    %3801 = vmatprep.subr.mxu0 0.0
    %3802 = vmatpush1.msra.mxu0 0.0
    %3803 = vmatprep.subr.mxu0 0.0
    %3804 = vmatpush1.msra.mxu0 0.0
    %3805 = vmatprep.subr.mxu0 0.0
    %3806 = vmatpush1.msra.mxu0 0.0
    %3807 = vmatprep.subr.mxu0 0.0
    %3808 = vmatpush1.msra.mxu0 0.0
    %3809 = vmatprep.subr.mxu0 0.0
    %3810 = vmatpush1.msra.mxu0 0.0
    %3811 = vmatprep.subr.mxu0 0.0
    %3812 = vmatpush1.msra.mxu0 0.0
    %3813 = vmatprep.subr.mxu0 0.0
    %3814 = vmatpush1.msra.mxu0 0.0
    %3815 = vmatprep.subr.mxu0 0.0
    %3816 = vmatpush1.msra.mxu0 0.0
    %3817 = vmatprep.subr.mxu0 0.0
    %3818 = vmatpush1.msra.mxu0 0.0
    %3819 = vmatprep.subr.mxu0 0.0
    %3820 = vmatpush1.msra.mxu0 0.0
    %3821 = vmatprep.subr.mxu0 0.0
    %3822 = vmatpush1.msra.mxu0 0.0
    %3823 = vmatprep.subr.mxu0 0.0
    %3824 = vmatpush1.msra.mxu0 0.0
    %3825 = vmatprep.subr.mxu0 0.0
    %3826 = vmatpush1.msra.mxu0 0.0
    %3827 = vmatprep.subr.mxu0 0.0
    %3828 = vmatpush1.msra.mxu0 0.0
    %3829 = vmatprep.subr.mxu0 0.0
    %3830 = vmatpush1.msra.mxu0 0.0
    %3831 = vmatprep.subr.mxu0 0.0
    %3832 = vmatpush1.msra.mxu0 0.0
    %3833 = vmatprep.subr.mxu0 0.0
    %3834 = vmatpush1.msra.mxu0 0.0
    %3835 = vmatprep.mubr.f32.mxu0 0.0
    %3836 = vmatmul.mubr.f32.gmra.mrb[0].mxu0 %v3766
    %v3837 = vpop.f32.mrb[0].mxu0
    %v3838 = vadd.f32 %v3763, %v3837
    %v3839 = vpop.f32.mrb[0].mxu0
    %3840 = vmatprep.mubr.f32.mxu0 0.0
    %3841 = vmatmul.mubr.f32.gmra.mrb[0].mxu0 %v3769
    %v3842 = vpop.f32.mrb[0].mxu0
    %v3843 = vadd.f32 %v3763, %v3842
    %v3844 = vpop.f32.mrb[0].mxu0
    %3845 = vdwg.mxu0
    %v3846 = vadd.f32 %v2322, %v3838
    %v3847 = vadd.f32 %v2323, %v3843
    %s3848 = scalar_lea.vmem [#allocation13], 1
    %v3849 = vld [vmem:[%s3848] sm:$0x1]
    %s3850 = scalar_lea.vmem [#allocation15], 1
    %v3851 = vld [vmem:[%s3850] sm:$0x1]
    %v3852 = vsel %vm418, %v3846, 0.0
    %3853 = vadd.xlane.f32.xlu0 %v3852
    %v3854 = vpop.xlane.xlu0 %3853
    %v3855 = vsel %vm418, %v3847, 0.0
    %3856 = vadd.xlane.f32.xlu0 %v3855
    %v3857 = vpop.xlane.xlu0 %3856
    %v3858 = vmul.f32 %v3854, %v425
    %v3859 = vmul.f32 %v3857, %v425
    %v3860 = vsub.f32 %v3846, %v3858
    %v3861 = vsub.f32 %v3847, %v3859
    %v3862 = vmul.f32 %v3860, %v3860
    %v3863 = vmul.f32 %v3861, %v3861
    %v3864 = vsel %vm418, %v3862, 0.0
    %3865 = vadd.xlane.f32.xlu0 %v3864
    %v3866 = vpop.xlane.xlu0 %3865
    %v3867 = vsel %vm418, %v3863, 0.0
    %3868 = vadd.xlane.f32.xlu0 %v3867
    %v3869 = vpop.xlane.xlu0 %3868
    %v3870 = vmul.f32 %v3866, %v425
    %v3871 = vmul.f32 %v3869, %v425
    %v3872 = vadd.f32 %v3870, 1e-12
    %v3873 = vadd.f32 %v3871, 1e-12
    %v3874 = vrsqrt.pop %v3872
    %v3875 = vrsqrt.pop %v3873
    %v3876 = vmul.f32 %v3860, %v3874
    %v3877 = vmul.f32 %v3861, %v3875
    %v3879 = vlaneseq
    %v3880 = vshrl.u32 %v3879, 7
    %v3881 = vsub.s32 0, %v3880
    %v3882 = vrot.slane %v3849, %v3881
    %v3884 = vmul.f32 %v3876, %v3882
    %v3885 = vmul.f32 %v3877, %v3882
    %v3887 = vlaneseq
    %v3888 = vshrl.u32 %v3887, 7
    %v3889 = vsub.s32 0, %v3888
    %v3890 = vrot.slane %v3851, %v3889
    %v3892 = vadd.f32 %v3884, %v3890
    %v3893 = vadd.f32 %v3885, %v3890
    %s3894 = scalar_lea.vmem %s12, 32
    %v3895 = vld [vmem:[%s3894] sm:$0xff]
    %v3896 = vld [vmem:[%s3894 + $0x8] sm:$0xff]
    %v3897 = vld [vmem:[%s3894 + $0x10] sm:$0xff]
    %v3898 = vld [vmem:[%s3894 + $0x18] sm:$0xff]
    %s3899 = scalar_lea.vmem [#allocation16], 1
    %v3900 = vld [vmem:[%s3899] sm:$0x1]
    %v3902 = vlaneseq
    %v3903 = vshrl.u32 %v3902, 7
    %v3904 = vsub.s32 0, %v3903
    %v3905 = vrot.slane %v3900, %v3904
    %v3908 = vsel %vm418, %v3892, 0
    %v3911 = vsel %vm418, %v3893, 0
    %3913 = vmatprep.subr.mxu0 0.0
    %3914 = vmatpush1.msra.mxu0 %v3895
    %3915 = vmatprep.subr.mxu0 0.0
    %3916 = vmatpush1.msra.mxu0 %v3896
    %3917 = vmatprep.subr.mxu0 0.0
    %3918 = vmatpush1.msra.mxu0 %v3897
    %3919 = vmatprep.subr.mxu0 0.0
    %3920 = vmatpush1.msra.mxu0 %v3898
    %3921 = vmatprep.subr.mxu0 0.0
    %3922 = vmatpush1.msra.mxu0 0.0
    %3923 = vmatprep.subr.mxu0 0.0
    %3924 = vmatpush1.msra.mxu0 0.0
    %3925 = vmatprep.subr.mxu0 0.0
    %3926 = vmatpush1.msra.mxu0 0.0
    %3927 = vmatprep.subr.mxu0 0.0
    %3928 = vmatpush1.msra.mxu0 0.0
    %3929 = vmatprep.subr.mxu0 0.0
    %3930 = vmatpush1.msra.mxu0 0.0
    %3931 = vmatprep.subr.mxu0 0.0
    %3932 = vmatpush1.msra.mxu0 0.0
    %3933 = vmatprep.subr.mxu0 0.0
    %3934 = vmatpush1.msra.mxu0 0.0
    %3935 = vmatprep.subr.mxu0 0.0
    %3936 = vmatpush1.msra.mxu0 0.0
    %3937 = vmatprep.subr.mxu0 0.0
    %3938 = vmatpush1.msra.mxu0 0.0
    %3939 = vmatprep.subr.mxu0 0.0
    %3940 = vmatpush1.msra.mxu0 0.0
    %3941 = vmatprep.subr.mxu0 0.0
    %3942 = vmatpush1.msra.mxu0 0.0
    %3943 = vmatprep.subr.mxu0 0.0
    %3944 = vmatpush1.msra.mxu0 0.0
    %3945 = vmatprep.subr.mxu0 0.0
    %3946 = vmatpush1.msra.mxu0 0.0
    %3947 = vmatprep.subr.mxu0 0.0
    %3948 = vmatpush1.msra.mxu0 0.0
    %3949 = vmatprep.subr.mxu0 0.0
    %3950 = vmatpush1.msra.mxu0 0.0
    %3951 = vmatprep.subr.mxu0 0.0
    %3952 = vmatpush1.msra.mxu0 0.0
    %3953 = vmatprep.subr.mxu0 0.0
    %3954 = vmatpush1.msra.mxu0 0.0
    %3955 = vmatprep.subr.mxu0 0.0
    %3956 = vmatpush1.msra.mxu0 0.0
    %3957 = vmatprep.subr.mxu0 0.0
    %3958 = vmatpush1.msra.mxu0 0.0
    %3959 = vmatprep.subr.mxu0 0.0
    %3960 = vmatpush1.msra.mxu0 0.0
    %3961 = vmatprep.subr.mxu0 0.0
    %3962 = vmatpush1.msra.mxu0 0.0
    %3963 = vmatprep.subr.mxu0 0.0
    %3964 = vmatpush1.msra.mxu0 0.0
    %3965 = vmatprep.subr.mxu0 0.0
    %3966 = vmatpush1.msra.mxu0 0.0
    %3967 = vmatprep.subr.mxu0 0.0
    %3968 = vmatpush1.msra.mxu0 0.0
    %3969 = vmatprep.subr.mxu0 0.0
    %3970 = vmatpush1.msra.mxu0 0.0
    %3971 = vmatprep.subr.mxu0 0.0
    %3972 = vmatpush1.msra.mxu0 0.0
    %3973 = vmatprep.subr.mxu0 0.0
    %3974 = vmatpush1.msra.mxu0 0.0
    %3975 = vmatprep.subr.mxu0 0.0
    %3976 = vmatpush1.msra.mxu0 0.0
    %3977 = vmatprep.mubr.f32.mxu0 0.0
    %3978 = vmatmul.mubr.f32.gmra.mrb[0].mxu0 %v3908
    %v3979 = vpop.f32.mrb[0].mxu0
    %v3980 = vadd.f32 %v3905, %v3979
    %v3981 = vpop.f32.mrb[0].mxu0
    %3982 = vmatprep.mubr.f32.mxu0 0.0
    %3983 = vmatmul.mubr.f32.gmra.mrb[0].mxu0 %v3911
    %v3984 = vpop.f32.mrb[0].mxu0
    %v3985 = vadd.f32 %v3905, %v3984
    %v3986 = vpop.f32.mrb[0].mxu0
    %3987 = vdwg.mxu0
    %v3988 = vmul.f32 %v3980, %v3980
    %v3989 = vmul.f32 %v3985, %v3985
    %v3990 = vmul.f32 %v3980, %v3988
    %v3991 = vmul.f32 %v3985, %v3989
    %v3992 = vmul.f32 %v3990, 0.044715
    %v3993 = vmul.f32 %v3991, 0.044715
    %v3994 = vadd.f32 %v3980, %v3992
    %v3995 = vadd.f32 %v3985, %v3993
    %v3996 = vmul.f32 %v3994, 0.7978846
    %v3997 = vmul.f32 %v3995, 0.7978846
    %v3998 = vtanh.pop %v3996
    %v3999 = vtanh.pop %v3997
    %v4000 = vadd.f32 %v3998, 1.0
    %v4001 = vadd.f32 %v3999, 1.0
    %v4002 = vmul.f32 %v4000, 0.5
    %v4003 = vmul.f32 %v4001, 0.5
    %v4004 = vmul.f32 %v3980, %v4002
    %v4005 = vmul.f32 %v3985, %v4003
    %s4006 = scalar_lea.vmem %s14, 64
    %v4007 = vld [vmem:[%s4006] sm:$0xff]
    %v4008 = vld [vmem:[%s4006 + $0x8] sm:$0xff]
    %v4009 = vld [vmem:[%s4006 + $0x10] sm:$0xff]
    %v4010 = vld [vmem:[%s4006 + $0x18] sm:$0xff]
    %v4011 = vld [vmem:[%s4006 + $0x20] sm:$0xff]
    %v4012 = vld [vmem:[%s4006 + $0x28] sm:$0xff]
    %v4013 = vld [vmem:[%s4006 + $0x30] sm:$0xff]
    %v4014 = vld [vmem:[%s4006 + $0x38] sm:$0xff]
    %s4015 = scalar_lea.vmem [#allocation18], 1
    %v4016 = vld [vmem:[%s4015] sm:$0x1]
    %v4018 = vlaneseq
    %v4019 = vshrl.u32 %v4018, 7
    %v4020 = vsub.s32 0, %v4019
    %v4021 = vrot.slane %v4016, %v4020
    %v4024 = vsel %vm2196, %v4004, 0
    %v4027 = vsel %vm2196, %v4005, 0
    %4029 = vmatprep.subr.mxu0 0.0
    %4030 = vmatpush1.msra.mxu0 %v4007
    %4031 = vmatprep.subr.mxu0 0.0
    %4032 = vmatpush1.msra.mxu0 %v4008
    %4033 = vmatprep.subr.mxu0 0.0
    %4034 = vmatpush1.msra.mxu0 %v4009
    %4035 = vmatprep.subr.mxu0 0.0
    %4036 = vmatpush1.msra.mxu0 %v4010
    %4037 = vmatprep.subr.mxu0 0.0
    %4038 = vmatpush1.msra.mxu0 %v4011
    %4039 = vmatprep.subr.mxu0 0.0
    %4040 = vmatpush1.msra.mxu0 %v4012
    %4041 = vmatprep.subr.mxu0 0.0
    %4042 = vmatpush1.msra.mxu0 %v4013
    %4043 = vmatprep.subr.mxu0 0.0
    %4044 = vmatpush1.msra.mxu0 %v4014
    %4045 = vmatprep.subr.mxu0 0.0
    %4046 = vmatpush1.msra.mxu0 0.0
    %4047 = vmatprep.subr.mxu0 0.0
    %4048 = vmatpush1.msra.mxu0 0.0
    %4049 = vmatprep.subr.mxu0 0.0
    %4050 = vmatpush1.msra.mxu0 0.0
    %4051 = vmatprep.subr.mxu0 0.0
    %4052 = vmatpush1.msra.mxu0 0.0
    %4053 = vmatprep.subr.mxu0 0.0
    %4054 = vmatpush1.msra.mxu0 0.0
    %4055 = vmatprep.subr.mxu0 0.0
    %4056 = vmatpush1.msra.mxu0 0.0
    %4057 = vmatprep.subr.mxu0 0.0
    %4058 = vmatpush1.msra.mxu0 0.0
    %4059 = vmatprep.subr.mxu0 0.0
    %4060 = vmatpush1.msra.mxu0 0.0
    %4061 = vmatprep.subr.mxu0 0.0
    %4062 = vmatpush1.msra.mxu0 0.0
    %4063 = vmatprep.subr.mxu0 0.0
    %4064 = vmatpush1.msra.mxu0 0.0
    %4065 = vmatprep.subr.mxu0 0.0
    %4066 = vmatpush1.msra.mxu0 0.0
    %4067 = vmatprep.subr.mxu0 0.0
    %4068 = vmatpush1.msra.mxu0 0.0
    %4069 = vmatprep.subr.mxu0 0.0
    %4070 = vmatpush1.msra.mxu0 0.0
    %4071 = vmatprep.subr.mxu0 0.0
    %4072 = vmatpush1.msra.mxu0 0.0
    %4073 = vmatprep.subr.mxu0 0.0
    %4074 = vmatpush1.msra.mxu0 0.0
    %4075 = vmatprep.subr.mxu0 0.0
    %4076 = vmatpush1.msra.mxu0 0.0
    %4077 = vmatprep.subr.mxu0 0.0
    %4078 = vmatpush1.msra.mxu0 0.0
    %4079 = vmatprep.subr.mxu0 0.0
    %4080 = vmatpush1.msra.mxu0 0.0
    %4081 = vmatprep.subr.mxu0 0.0
    %4082 = vmatpush1.msra.mxu0 0.0
    %4083 = vmatprep.subr.mxu0 0.0
    %4084 = vmatpush1.msra.mxu0 0.0
    %4085 = vmatprep.subr.mxu0 0.0
    %4086 = vmatpush1.msra.mxu0 0.0
    %4087 = vmatprep.subr.mxu0 0.0
    %4088 = vmatpush1.msra.mxu0 0.0
    %4089 = vmatprep.subr.mxu0 0.0
    %4090 = vmatpush1.msra.mxu0 0.0
    %4091 = vmatprep.subr.mxu0 0.0
    %4092 = vmatpush1.msra.mxu0 0.0
    %4093 = vmatprep.mubr.f32.mxu0 0.0
    %4094 = vmatmul.mubr.f32.gmra.mrb[0].mxu0 %v4024
    %v4095 = vpop.f32.mrb[0].mxu0
    %v4096 = vadd.f32 %v4021, %v4095
    %v4097 = vpop.f32.mrb[0].mxu0
    %4098 = vmatprep.mubr.f32.mxu0 0.0
    %4099 = vmatmul.mubr.f32.gmra.mrb[0].mxu0 %v4027
    %v4100 = vpop.f32.mrb[0].mxu0
    %v4101 = vadd.f32 %v4021, %v4100
    %v4102 = vpop.f32.mrb[0].mxu0
    %4103 = vdwg.mxu0
    %v4104 = vadd.f32 %v3892, %v4096
    %v4105 = vadd.f32 %v3893, %v4101
    %s4106 = scalar_lea.vmem [#allocation19], 1
    %v4107 = vld [vmem:[%s4106] sm:$0x1]
    %s4108 = scalar_lea.vmem [#allocation21], 1
    %v4109 = vld [vmem:[%s4108] sm:$0x1]
    %v4110 = vsel %vm418, %v4104, 0.0
    %4111 = vadd.xlane.f32.xlu0 %v4110
    %v4112 = vpop.xlane.xlu0 %4111
    %v4113 = vsel %vm418, %v4105, 0.0
    %4114 = vadd.xlane.f32.xlu0 %v4113
    %v4115 = vpop.xlane.xlu0 %4114
    %v4116 = vmul.f32 %v4112, %v425
    %v4117 = vmul.f32 %v4115, %v425
    %v4118 = vsub.f32 %v4104, %v4116
    %v4119 = vsub.f32 %v4105, %v4117
    %v4120 = vmul.f32 %v4118, %v4118
    %v4121 = vmul.f32 %v4119, %v4119
    %v4122 = vsel %vm418, %v4120, 0.0
    %4123 = vadd.xlane.f32.xlu0 %v4122
    %v4124 = vpop.xlane.xlu0 %4123
    %v4125 = vsel %vm418, %v4121, 0.0
    %4126 = vadd.xlane.f32.xlu0 %v4125
    %v4127 = vpop.xlane.xlu0 %4126
    %v4128 = vmul.f32 %v4124, %v425
    %v4129 = vmul.f32 %v4127, %v425
    %v4130 = vadd.f32 %v4128, 1e-12
    %v4131 = vadd.f32 %v4129, 1e-12
    %v4132 = vrsqrt.pop %v4130
    %v4133 = vrsqrt.pop %v4131
    %v4134 = vmul.f32 %v4118, %v4132
    %v4135 = vmul.f32 %v4119, %v4133
    %v4137 = vlaneseq
    %v4138 = vshrl.u32 %v4137, 7
    %v4139 = vsub.s32 0, %v4138
    %v4140 = vrot.slane %v4107, %v4139
    %v4142 = vmul.f32 %v4134, %v4140
    %v4143 = vmul.f32 %v4135, %v4140
    %v4145 = vlaneseq
    %v4146 = vshrl.u32 %v4145, 7
    %v4147 = vsub.s32 0, %v4146
    %v4148 = vrot.slane %v4109, %v4147
    %v4150 = vadd.f32 %v4142, %v4148
    %v4151 = vadd.f32 %v4143, %v4148
    %v4152 = vld [vmem:[%s18] sm:$0xff]
    %v4153 = vld [vmem:[%s18 + $0x8] sm:$0xff]
    %v4154 = vld [vmem:[%s18 + $0x10] sm:$0xff]
    %v4155 = vld [vmem:[%s18 + $0x18] sm:$0xff]
    %v4156 = vld [vmem:[%s18 + $0x20] sm:$0xff]
    %v4157 = vld [vmem:[%s18 + $0x28] sm:$0xff]
    %v4158 = vld [vmem:[%s18 + $0x30] sm:$0xff]
    %v4159 = vld [vmem:[%s18 + $0x38] sm:$0xff]
    %v4160 = vld [vmem:[#allocation24] sm:$0x3]
    %v4162 = vlaneseq
    %v4163 = vshrl.u32 %v4162, 7
    %v4164 = vsub.s32 0, %v4163
    %v4165 = vrot.slane %v4160, %v4164
    %v4166 = vlaneseq
    %v4167 = vshrl.u32 %v4166, 7
    %v4168 = vsub.s32 1, %v4167
    %v4169 = vrot.slane %v4160, %v4168
    %v4173 = vsel %vm418, %v4150, 0
    %v4176 = vsel %vm418, %v4151, 0
    %4178 = vmatprep.subr.mxu0 %v4153
    %4179 = vmatpush1.msra.mxu0 %v4152
    %4180 = vmatprep.subr.mxu0 %v4155
    %4181 = vmatpush1.msra.mxu0 %v4154
    %4182 = vmatprep.subr.mxu0 %v4157
    %4183 = vmatpush1.msra.mxu0 %v4156
    %4184 = vmatprep.subr.mxu0 %v4159
    %4185 = vmatpush1.msra.mxu0 %v4158
    %4186 = vmatprep.subr.mxu0 0.0
    %4187 = vmatpush1.msra.mxu0 0.0
    %4188 = vmatprep.subr.mxu0 0.0
    %4189 = vmatpush1.msra.mxu0 0.0
    %4190 = vmatprep.subr.mxu0 0.0
    %4191 = vmatpush1.msra.mxu0 0.0
    %4192 = vmatprep.subr.mxu0 0.0
    %4193 = vmatpush1.msra.mxu0 0.0
    %4194 = vmatprep.subr.mxu0 0.0
    %4195 = vmatpush1.msra.mxu0 0.0
    %4196 = vmatprep.subr.mxu0 0.0
    %4197 = vmatpush1.msra.mxu0 0.0
    %4198 = vmatprep.subr.mxu0 0.0
    %4199 = vmatpush1.msra.mxu0 0.0
    %4200 = vmatprep.subr.mxu0 0.0
    %4201 = vmatpush1.msra.mxu0 0.0
    %4202 = vmatprep.subr.mxu0 0.0
    %4203 = vmatpush1.msra.mxu0 0.0
    %4204 = vmatprep.subr.mxu0 0.0
    %4205 = vmatpush1.msra.mxu0 0.0
    %4206 = vmatprep.subr.mxu0 0.0
    %4207 = vmatpush1.msra.mxu0 0.0
    %4208 = vmatprep.subr.mxu0 0.0
    %4209 = vmatpush1.msra.mxu0 0.0
    %4210 = vmatprep.subr.mxu0 0.0
    %4211 = vmatpush1.msra.mxu0 0.0
    %4212 = vmatprep.subr.mxu0 0.0
    %4213 = vmatpush1.msra.mxu0 0.0
    %4214 = vmatprep.subr.mxu0 0.0
    %4215 = vmatpush1.msra.mxu0 0.0
    %4216 = vmatprep.subr.mxu0 0.0
    %4217 = vmatpush1.msra.mxu0 0.0
    %4218 = vmatprep.subr.mxu0 0.0
    %4219 = vmatpush1.msra.mxu0 0.0
    %4220 = vmatprep.subr.mxu0 0.0
    %4221 = vmatpush1.msra.mxu0 0.0
    %4222 = vmatprep.subr.mxu0 0.0
    %4223 = vmatpush1.msra.mxu0 0.0
    %4224 = vmatprep.subr.mxu0 0.0
    %4225 = vmatpush1.msra.mxu0 0.0
    %4226 = vmatprep.subr.mxu0 0.0
    %4227 = vmatpush1.msra.mxu0 0.0
    %4228 = vmatprep.subr.mxu0 0.0
    %4229 = vmatpush1.msra.mxu0 0.0
    %4230 = vmatprep.subr.mxu0 0.0
    %4231 = vmatpush1.msra.mxu0 0.0
    %4232 = vmatprep.subr.mxu0 0.0
    %4233 = vmatpush1.msra.mxu0 0.0
    %4234 = vmatprep.subr.mxu0 0.0
    %4235 = vmatpush1.msra.mxu0 0.0
    %4236 = vmatprep.subr.mxu0 0.0
    %4237 = vmatpush1.msra.mxu0 0.0
    %4238 = vmatprep.subr.mxu0 0.0
    %4239 = vmatpush1.msra.mxu0 0.0
    %4240 = vmatprep.subr.mxu0 0.0
    %4241 = vmatpush1.msra.mxu0 0.0
    %4242 = vmatprep.mubr.f32.mxu0 0.0
    %4243 = vmatmul.mubr.f32.gmra.mrb[0].mxu0 %v4173
    %v4244 = vpop.f32.mrb[0].mxu0
    %v4245 = vadd.f32 %v4165, %v4244
    %v4246 = vpop.f32.mrb[0].mxu0
    %v4247 = vadd.f32 %v4169, %v4246
    %4248 = vmatprep.mubr.f32.mxu0 0.0
    %4249 = vmatmul.mubr.f32.gmra.mrb[0].mxu0 %v4176
    %v4250 = vpop.f32.mrb[0].mxu0
    %v4251 = vadd.f32 %v4165, %v4250
    %v4252 = vpop.f32.mrb[0].mxu0
    %v4253 = vadd.f32 %v4169, %v4252
    %4254 = vdwg.mxu0
    %v4255 = vld [vmem:[#allocation22] sm:$0xff]
    %v4256 = vld [vmem:[#allocation22 + $0x8] sm:$0xff]
    %v4257 = vld [vmem:[#allocation22 + $0x10] sm:$0xff]
    %v4258 = vld [vmem:[#allocation22 + $0x18] sm:$0xff]
    %v4259 = vld [vmem:[#allocation22 + $0x20] sm:$0xff]
    %v4260 = vld [vmem:[#allocation22 + $0x28] sm:$0xff]
    %v4261 = vld [vmem:[#allocation22 + $0x30] sm:$0xff]
    %v4262 = vld [vmem:[#allocation22 + $0x38] sm:$0xff]
    %4263 = vmatprep.subr.mxu0 %v4256
    %4264 = vmatpush1.msra.mxu0 %v4255
    %4265 = vmatprep.subr.mxu0 %v4258
    %4266 = vmatpush1.msra.mxu0 %v4257
    %4267 = vmatprep.subr.mxu0 %v4260
    %4268 = vmatpush1.msra.mxu0 %v4259
    %4269 = vmatprep.subr.mxu0 %v4262
    %4270 = vmatpush1.msra.mxu0 %v4261
    %4271 = vmatprep.subr.mxu0 0.0
    %4272 = vmatpush1.msra.mxu0 0.0
    %4273 = vmatprep.subr.mxu0 0.0
    %4274 = vmatpush1.msra.mxu0 0.0
    %4275 = vmatprep.subr.mxu0 0.0
    %4276 = vmatpush1.msra.mxu0 0.0
    %4277 = vmatprep.subr.mxu0 0.0
    %4278 = vmatpush1.msra.mxu0 0.0
    %4279 = vmatprep.subr.mxu0 0.0
    %4280 = vmatpush1.msra.mxu0 0.0
    %4281 = vmatprep.subr.mxu0 0.0
    %4282 = vmatpush1.msra.mxu0 0.0
    %4283 = vmatprep.subr.mxu0 0.0
    %4284 = vmatpush1.msra.mxu0 0.0
    %4285 = vmatprep.subr.mxu0 0.0
    %4286 = vmatpush1.msra.mxu0 0.0
    %4287 = vmatprep.subr.mxu0 0.0
    %4288 = vmatpush1.msra.mxu0 0.0
    %4289 = vmatprep.subr.mxu0 0.0
    %4290 = vmatpush1.msra.mxu0 0.0
    %4291 = vmatprep.subr.mxu0 0.0
    %4292 = vmatpush1.msra.mxu0 0.0
    %4293 = vmatprep.subr.mxu0 0.0
    %4294 = vmatpush1.msra.mxu0 0.0
    %4295 = vmatprep.subr.mxu0 0.0
    %4296 = vmatpush1.msra.mxu0 0.0
    %4297 = vmatprep.subr.mxu0 0.0
    %4298 = vmatpush1.msra.mxu0 0.0
    %4299 = vmatprep.subr.mxu0 0.0
    %4300 = vmatpush1.msra.mxu0 0.0
    %4301 = vmatprep.subr.mxu0 0.0
    %4302 = vmatpush1.msra.mxu0 0.0
    %4303 = vmatprep.subr.mxu0 0.0
    %4304 = vmatpush1.msra.mxu0 0.0
    %4305 = vmatprep.subr.mxu0 0.0
    %4306 = vmatpush1.msra.mxu0 0.0
    %4307 = vmatprep.subr.mxu0 0.0
    %4308 = vmatpush1.msra.mxu0 0.0
    %4309 = vmatprep.subr.mxu0 0.0
    %4310 = vmatpush1.msra.mxu0 0.0
    %4311 = vmatprep.subr.mxu0 0.0
    %4312 = vmatpush1.msra.mxu0 0.0
    %4313 = vmatprep.subr.mxu0 0.0
    %4314 = vmatpush1.msra.mxu0 0.0
    %4315 = vmatprep.subr.mxu0 0.0
    %4316 = vmatpush1.msra.mxu0 0.0
    %4317 = vmatprep.subr.mxu0 0.0
    %4318 = vmatpush1.msra.mxu0 0.0
    %4319 = vmatprep.subr.mxu0 0.0
    %4320 = vmatpush1.msra.mxu0 0.0
    %4321 = vmatprep.subr.mxu0 0.0
    %4322 = vmatpush1.msra.mxu0 0.0
    %4323 = vmatprep.subr.mxu0 0.0
    %4324 = vmatpush1.msra.mxu0 0.0
    %4325 = vmatprep.subr.mxu0 0.0
    %4326 = vmatpush1.msra.mxu0 0.0
    %4327 = vmatprep.mubr.f32.mxu0 0.0
    %4328 = vmatmul.mubr.f32.gmra.mrb[0].mxu0 %v4173
    %v4329 = vpop.f32.mrb[0].mxu0
    %v4330 = vadd.f32 0.0, %v4329
    %v4331 = vpop.f32.mrb[0].mxu0
    %v4332 = vadd.f32 0.0, %v4331
    %4333 = vmatprep.mubr.f32.mxu0 0.0
    %4334 = vmatmul.mubr.f32.gmra.mrb[0].mxu0 %v4176
    %v4335 = vpop.f32.mrb[0].mxu0
    %v4336 = vadd.f32 0.0, %v4335
    %v4337 = vpop.f32.mrb[0].mxu0
    %v4338 = vadd.f32 0.0, %v4337
    %4339 = vdwg.mxu0
    %v4340 = vld [vmem:[%s21] sm:$0xff]
    %v4341 = vld [vmem:[%s21 + $0x8] sm:$0xff]
    %v4342 = vld [vmem:[%s21 + $0x10] sm:$0xff]
    %v4343 = vld [vmem:[%s21 + $0x18] sm:$0xff]
    %v4344 = vld [vmem:[%s21 + $0x20] sm:$0xff]
    %v4345 = vld [vmem:[%s21 + $0x28] sm:$0xff]
    %v4346 = vld [vmem:[%s21 + $0x30] sm:$0xff]
    %v4347 = vld [vmem:[%s21 + $0x38] sm:$0xff]
    %v4348 = vld [vmem:[%s21 + $0x40] sm:$0xff]
    %v4349 = vld [vmem:[%s21 + $0x48] sm:$0xff]
    %v4350 = vld [vmem:[%s21 + $0x50] sm:$0xff]
    %v4351 = vld [vmem:[%s21 + $0x58] sm:$0xff]
    %v4352 = vld [vmem:[%s21 + $0x60] sm:$0xff]
    %v4353 = vld [vmem:[%s21 + $0x68] sm:$0xff]
    %v4354 = vld [vmem:[%s21 + $0x70] sm:$0xff]
    %v4355 = vld [vmem:[%s21 + $0x78] sm:$0xff]
    %v4356 = vld [vmem:[#allocation25] sm:$0x3]
    %v4359 = vrot.slane %v4330, 7
    %v4360 = vrot.slane %v4332, 7
    %v4363 = vadd.f32 %v4245, %v4359
    %v4364 = vadd.f32 %v4247, %v4360
    %v4367 = vrot.slane %v4336, 7
    %v4368 = vrot.slane %v4338, 7
    %v4371 = vadd.f32 %v4251, %v4367
    %v4372 = vadd.f32 %v4253, %v4368
    %v4375 = vrot.slane %v4371, 7
    %v4376 = vrot.slane %v4372, 7
    %vm4379 = vcmask 1040384
    %v4380 = vsel %vm4379, %v4363, %v4375
    %v4381 = vsel %vm4379, %v4364, %v4376
    %v4383 = vlaneseq
    %v4384 = vshrl.u32 %v4383, 7
    %v4385 = vsub.s32 0, %v4384
    %v4386 = vrot.slane %v4356, %v4385
    %v4387 = vlaneseq
    %v4388 = vshrl.u32 %v4387, 7
    %v4389 = vsub.s32 1, %v4388
    %v4390 = vrot.slane %v4356, %v4389
    %v4394 = vsel %vm2196, 0.0, 0
    %4396 = vmatprep.subr.mxu0 %v4341
    %4397 = vmatpush1.msra.mxu0 %v4340
    %4398 = vmatprep.subr.mxu0 %v4343
    %4399 = vmatpush1.msra.mxu0 %v4342
    %4400 = vmatprep.subr.mxu0 %v4345
    %4401 = vmatpush1.msra.mxu0 %v4344
    %4402 = vmatprep.subr.mxu0 %v4347
    %4403 = vmatpush1.msra.mxu0 %v4346
    %4404 = vmatprep.subr.mxu0 %v4349
    %4405 = vmatpush1.msra.mxu0 %v4348
    %4406 = vmatprep.subr.mxu0 %v4351
    %4407 = vmatpush1.msra.mxu0 %v4350
    %4408 = vmatprep.subr.mxu0 %v4353
    %4409 = vmatpush1.msra.mxu0 %v4352
    %4410 = vmatprep.subr.mxu0 %v4355
    %4411 = vmatpush1.msra.mxu0 %v4354
    %4412 = vmatprep.subr.mxu0 0.0
    %4413 = vmatpush1.msra.mxu0 0.0
    %4414 = vmatprep.subr.mxu0 0.0
    %4415 = vmatpush1.msra.mxu0 0.0
    %4416 = vmatprep.subr.mxu0 0.0
    %4417 = vmatpush1.msra.mxu0 0.0
    %4418 = vmatprep.subr.mxu0 0.0
    %4419 = vmatpush1.msra.mxu0 0.0
    %4420 = vmatprep.subr.mxu0 0.0
    %4421 = vmatpush1.msra.mxu0 0.0
    %4422 = vmatprep.subr.mxu0 0.0
    %4423 = vmatpush1.msra.mxu0 0.0
    %4424 = vmatprep.subr.mxu0 0.0
    %4425 = vmatpush1.msra.mxu0 0.0
    %4426 = vmatprep.subr.mxu0 0.0
    %4427 = vmatpush1.msra.mxu0 0.0
    %4428 = vmatprep.subr.mxu0 0.0
    %4429 = vmatpush1.msra.mxu0 0.0
    %4430 = vmatprep.subr.mxu0 0.0
    %4431 = vmatpush1.msra.mxu0 0.0
    %4432 = vmatprep.subr.mxu0 0.0
    %4433 = vmatpush1.msra.mxu0 0.0
    %4434 = vmatprep.subr.mxu0 0.0
    %4435 = vmatpush1.msra.mxu0 0.0
    %4436 = vmatprep.subr.mxu0 0.0
    %4437 = vmatpush1.msra.mxu0 0.0
    %4438 = vmatprep.subr.mxu0 0.0
    %4439 = vmatpush1.msra.mxu0 0.0
    %4440 = vmatprep.subr.mxu0 0.0
    %4441 = vmatpush1.msra.mxu0 0.0
    %4442 = vmatprep.subr.mxu0 0.0
    %4443 = vmatpush1.msra.mxu0 0.0
    %4444 = vmatprep.subr.mxu0 0.0
    %4445 = vmatpush1.msra.mxu0 0.0
    %4446 = vmatprep.subr.mxu0 0.0
    %4447 = vmatpush1.msra.mxu0 0.0
    %4448 = vmatprep.subr.mxu0 0.0
    %4449 = vmatpush1.msra.mxu0 0.0
    %4450 = vmatprep.subr.mxu0 0.0
    %4451 = vmatpush1.msra.mxu0 0.0
    %4452 = vmatprep.subr.mxu0 0.0
    %4453 = vmatpush1.msra.mxu0 0.0
    %4454 = vmatprep.subr.mxu0 0.0
    %4455 = vmatpush1.msra.mxu0 0.0
    %4456 = vmatprep.subr.mxu0 0.0
    %4457 = vmatpush1.msra.mxu0 0.0
    %4458 = vmatprep.subr.mxu0 0.0
    %4459 = vmatpush1.msra.mxu0 0.0
    %4460 = vmatprep.mubr.f32.mxu0 0.0
    %4461 = vmatmul.mubr.f32.gmra.mrb[0].mxu0 %v4394
    %v4462 = vpop.f32.mrb[0].mxu0
    %v4463 = vadd.f32 %v4386, %v4462
    %v4464 = vpop.f32.mrb[0].mxu0
    %v4465 = vadd.f32 %v4390, %v4464
    %4466 = vdwg.mxu0
    %v4467 = vadd.f32 %v4380, %v4463
    %v4468 = vxor.u32 %v4467, 2147483648
    %v4469 = vmul.f32 %v4468, 1.442695
    %v4470 = vpow.pop %v4469
    %v4471 = vadd.f32 %v4470, 1.0
    %v4472 = vrcp.pop %v4471
    %v4473 = vmul.f32 1.0, %v4472
    %v4474 = vmul.f32 %v4473, %v4465
    %v4475 = vadd.f32 %v4381, %v4474
    %v4476 = vtanh.pop %v4475
    %v4477 = vsub.f32 1.0, %v4473
    %4479 = vrot.lane.b32.xlu0 %v4476, 64
    %v4480 = vpop.permute.xlu0 %4479
    %v4482 = vmul.f32 %v4477, %v4480
    %v4483 = vmul.f32 %v4473, 0.0
    %v4484 = vadd.f32 %v4482, %v4483
    %4486 = vrot.lane.b32.xlu0 %v4484, 64
    %v4487 = vpop.permute.xlu0 %4486
    %vm4489 = vcmask 253952
    %4490 = vst.msk [vmem:[#allocation2] sm:$0x1] %vm4489, %v4487
    %vm4491 = vcmask 516352
    %4492 = vst.msk [vmem:[#allocation2 + $0x7] sm:$0x1] %vm4491, %v4487
    %vm4493 = vcmask 254977
    %4494 = vst.msk [vmem:[#allocation2 + $0x7] sm:$0x2] %vm4493, %v4487
    %vm4495 = vcmask 517377
    %4496 = vst.msk [vmem:[#allocation2 + $0xe] sm:$0x2] %vm4495, %v4487
    %v4497 = vrot.slane %v4330, 5
    %v4498 = vrot.slane %v4332, 5
    %v4501 = vadd.f32 %v4245, %v4497
    %v4502 = vadd.f32 %v4247, %v4498
    %v4503 = vrot.slane %v4336, 5
    %v4504 = vrot.slane %v4338, 5
    %v4507 = vadd.f32 %v4251, %v4503
    %v4508 = vadd.f32 %v4253, %v4504
    %v4511 = vrot.slane %v4501, 1
    %v4512 = vrot.slane %v4502, 1
    %v4515 = vsel %vm4379, %v4511, %v4507
    %v4516 = vsel %vm4379, %v4512, %v4508
    %v4517 = vsel %vm2196, %v4487, 0
    %4519 = vmatprep.subr.mxu0 %v4341
    %4520 = vmatpush1.msra.mxu0 %v4340
    %4521 = vmatprep.subr.mxu0 %v4343
    %4522 = vmatpush1.msra.mxu0 %v4342
    %4523 = vmatprep.subr.mxu0 %v4345
    %4524 = vmatpush1.msra.mxu0 %v4344
    %4525 = vmatprep.subr.mxu0 %v4347
    %4526 = vmatpush1.msra.mxu0 %v4346
    %4527 = vmatprep.subr.mxu0 %v4349
    %4528 = vmatpush1.msra.mxu0 %v4348
    %4529 = vmatprep.subr.mxu0 %v4351
    %4530 = vmatpush1.msra.mxu0 %v4350
    %4531 = vmatprep.subr.mxu0 %v4353
    %4532 = vmatpush1.msra.mxu0 %v4352
    %4533 = vmatprep.subr.mxu0 %v4355
    %4534 = vmatpush1.msra.mxu0 %v4354
    %4535 = vmatprep.subr.mxu0 0.0
    %4536 = vmatpush1.msra.mxu0 0.0
    %4537 = vmatprep.subr.mxu0 0.0
    %4538 = vmatpush1.msra.mxu0 0.0
    %4539 = vmatprep.subr.mxu0 0.0
    %4540 = vmatpush1.msra.mxu0 0.0
    %4541 = vmatprep.subr.mxu0 0.0
    %4542 = vmatpush1.msra.mxu0 0.0
    %4543 = vmatprep.subr.mxu0 0.0
    %4544 = vmatpush1.msra.mxu0 0.0
    %4545 = vmatprep.subr.mxu0 0.0
    %4546 = vmatpush1.msra.mxu0 0.0
    %4547 = vmatprep.subr.mxu0 0.0
    %4548 = vmatpush1.msra.mxu0 0.0
    %4549 = vmatprep.subr.mxu0 0.0
    %4550 = vmatpush1.msra.mxu0 0.0
    %4551 = vmatprep.subr.mxu0 0.0
    %4552 = vmatpush1.msra.mxu0 0.0
    %4553 = vmatprep.subr.mxu0 0.0
    %4554 = vmatpush1.msra.mxu0 0.0
    %4555 = vmatprep.subr.mxu0 0.0
    %4556 = vmatpush1.msra.mxu0 0.0
    %4557 = vmatprep.subr.mxu0 0.0
    %4558 = vmatpush1.msra.mxu0 0.0
    %4559 = vmatprep.subr.mxu0 0.0
    %4560 = vmatpush1.msra.mxu0 0.0
    %4561 = vmatprep.subr.mxu0 0.0
    %4562 = vmatpush1.msra.mxu0 0.0
    %4563 = vmatprep.subr.mxu0 0.0
    %4564 = vmatpush1.msra.mxu0 0.0
    %4565 = vmatprep.subr.mxu0 0.0
    %4566 = vmatpush1.msra.mxu0 0.0
    %4567 = vmatprep.subr.mxu0 0.0
    %4568 = vmatpush1.msra.mxu0 0.0
    %4569 = vmatprep.subr.mxu0 0.0
    %4570 = vmatpush1.msra.mxu0 0.0
    %4571 = vmatprep.subr.mxu0 0.0
    %4572 = vmatpush1.msra.mxu0 0.0
    %4573 = vmatprep.subr.mxu0 0.0
    %4574 = vmatpush1.msra.mxu0 0.0
    %4575 = vmatprep.subr.mxu0 0.0
    %4576 = vmatpush1.msra.mxu0 0.0
    %4577 = vmatprep.subr.mxu0 0.0
    %4578 = vmatpush1.msra.mxu0 0.0
    %4579 = vmatprep.subr.mxu0 0.0
    %4580 = vmatpush1.msra.mxu0 0.0
    %4581 = vmatprep.subr.mxu0 0.0
    %4582 = vmatpush1.msra.mxu0 0.0
    %4583 = vmatprep.mubr.f32.mxu0 0.0
    %4584 = vmatmul.mubr.f32.gmra.mrb[0].mxu0 %v4517
    %v4585 = vpop.f32.mrb[0].mxu0
    %v4586 = vadd.f32 %v4386, %v4585
    %v4587 = vpop.f32.mrb[0].mxu0
    %v4588 = vadd.f32 %v4390, %v4587
    %4589 = vdwg.mxu0
    %v4590 = vadd.f32 %v4515, %v4586
    %v4591 = vxor.u32 %v4590, 2147483648
    %v4592 = vmul.f32 %v4591, 1.442695
    %v4593 = vpow.pop %v4592
    %v4594 = vadd.f32 %v4593, 1.0
    %v4595 = vrcp.pop %v4594
    %v4596 = vmul.f32 1.0, %v4595
    %v4597 = vmul.f32 %v4596, %v4588
    %v4598 = vadd.f32 %v4516, %v4597
    %v4599 = vtanh.pop %v4598
    %v4600 = vsub.f32 1.0, %v4596
    %4602 = vrot.lane.b32.xlu0 %v4599, 64
    %v4603 = vpop.permute.xlu0 %4602
    %v4605 = vmul.f32 %v4600, %v4603
    %v4606 = vmul.f32 %v4596, %v4484
    %v4607 = vadd.f32 %v4605, %v4606
    %4609 = vrot.lane.b32.xlu0 %v4607, 64
    %v4610 = vpop.permute.xlu0 %4609
    %4612 = vst.msk [vmem:[#allocation2 + $0x1] sm:$0x1] %vm4489, %v4610
    %4613 = vst.msk [vmem:[#allocation2 + $0x6] sm:$0x1] %vm4491, %v4610
    %4614 = vst.msk [vmem:[#allocation2 + $0x8] sm:$0x2] %vm4493, %v4610
    %4615 = vst.msk [vmem:[#allocation2 + $0xd] sm:$0x2] %vm4495, %v4610
    %v4616 = vrot.slane %v4330, 3
    %v4617 = vrot.slane %v4332, 3
    %v4620 = vadd.f32 %v4245, %v4616
    %v4621 = vadd.f32 %v4247, %v4617
    %v4622 = vrot.slane %v4336, 3
    %v4623 = vrot.slane %v4338, 3
    %v4626 = vadd.f32 %v4251, %v4622
    %v4627 = vadd.f32 %v4253, %v4623
    %v4630 = vrot.slane %v4620, 2
    %v4631 = vrot.slane %v4621, 2
    %v4636 = vrot.slane %v4626, 1
    %v4637 = vrot.slane %v4627, 1
    %v4640 = vsel %vm4379, %v4630, %v4636
    %v4641 = vsel %vm4379, %v4631, %v4637
    %v4642 = vsel %vm2196, %v4610, 0
    %4644 = vmatprep.subr.mxu0 %v4341
    %4645 = vmatpush1.msra.mxu0 %v4340
    %4646 = vmatprep.subr.mxu0 %v4343
    %4647 = vmatpush1.msra.mxu0 %v4342
    %4648 = vmatprep.subr.mxu0 %v4345
    %4649 = vmatpush1.msra.mxu0 %v4344
    %4650 = vmatprep.subr.mxu0 %v4347
    %4651 = vmatpush1.msra.mxu0 %v4346
    %4652 = vmatprep.subr.mxu0 %v4349
    %4653 = vmatpush1.msra.mxu0 %v4348
    %4654 = vmatprep.subr.mxu0 %v4351
    %4655 = vmatpush1.msra.mxu0 %v4350
    %4656 = vmatprep.subr.mxu0 %v4353
    %4657 = vmatpush1.msra.mxu0 %v4352
    %4658 = vmatprep.subr.mxu0 %v4355
    %4659 = vmatpush1.msra.mxu0 %v4354
    %4660 = vmatprep.subr.mxu0 0.0
    %4661 = vmatpush1.msra.mxu0 0.0
    %4662 = vmatprep.subr.mxu0 0.0
    %4663 = vmatpush1.msra.mxu0 0.0
    %4664 = vmatprep.subr.mxu0 0.0
    %4665 = vmatpush1.msra.mxu0 0.0
    %4666 = vmatprep.subr.mxu0 0.0
    %4667 = vmatpush1.msra.mxu0 0.0
    %4668 = vmatprep.subr.mxu0 0.0
    %4669 = vmatpush1.msra.mxu0 0.0
    %4670 = vmatprep.subr.mxu0 0.0
    %4671 = vmatpush1.msra.mxu0 0.0
    %4672 = vmatprep.subr.mxu0 0.0
    %4673 = vmatpush1.msra.mxu0 0.0
    %4674 = vmatprep.subr.mxu0 0.0
    %4675 = vmatpush1.msra.mxu0 0.0
    %4676 = vmatprep.subr.mxu0 0.0
    %4677 = vmatpush1.msra.mxu0 0.0
    %4678 = vmatprep.subr.mxu0 0.0
    %4679 = vmatpush1.msra.mxu0 0.0
    %4680 = vmatprep.subr.mxu0 0.0
    %4681 = vmatpush1.msra.mxu0 0.0
    %4682 = vmatprep.subr.mxu0 0.0
    %4683 = vmatpush1.msra.mxu0 0.0
    %4684 = vmatprep.subr.mxu0 0.0
    %4685 = vmatpush1.msra.mxu0 0.0
    %4686 = vmatprep.subr.mxu0 0.0
    %4687 = vmatpush1.msra.mxu0 0.0
    %4688 = vmatprep.subr.mxu0 0.0
    %4689 = vmatpush1.msra.mxu0 0.0
    %4690 = vmatprep.subr.mxu0 0.0
    %4691 = vmatpush1.msra.mxu0 0.0
    %4692 = vmatprep.subr.mxu0 0.0
    %4693 = vmatpush1.msra.mxu0 0.0
    %4694 = vmatprep.subr.mxu0 0.0
    %4695 = vmatpush1.msra.mxu0 0.0
    %4696 = vmatprep.subr.mxu0 0.0
    %4697 = vmatpush1.msra.mxu0 0.0
    %4698 = vmatprep.subr.mxu0 0.0
    %4699 = vmatpush1.msra.mxu0 0.0
    %4700 = vmatprep.subr.mxu0 0.0
    %4701 = vmatpush1.msra.mxu0 0.0
    %4702 = vmatprep.subr.mxu0 0.0
    %4703 = vmatpush1.msra.mxu0 0.0
    %4704 = vmatprep.subr.mxu0 0.0
    %4705 = vmatpush1.msra.mxu0 0.0
    %4706 = vmatprep.subr.mxu0 0.0
    %4707 = vmatpush1.msra.mxu0 0.0
    %4708 = vmatprep.mubr.f32.mxu0 0.0
    %4709 = vmatmul.mubr.f32.gmra.mrb[0].mxu0 %v4642
    %v4710 = vpop.f32.mrb[0].mxu0
    %v4711 = vadd.f32 %v4386, %v4710
    %v4712 = vpop.f32.mrb[0].mxu0
    %v4713 = vadd.f32 %v4390, %v4712
    %4714 = vdwg.mxu0
    %v4715 = vadd.f32 %v4640, %v4711
    %v4716 = vxor.u32 %v4715, 2147483648
    %v4717 = vmul.f32 %v4716, 1.442695
    %v4718 = vpow.pop %v4717
    %v4719 = vadd.f32 %v4718, 1.0
    %v4720 = vrcp.pop %v4719
    %v4721 = vmul.f32 1.0, %v4720
    %v4722 = vmul.f32 %v4721, %v4713
    %v4723 = vadd.f32 %v4641, %v4722
    %v4724 = vtanh.pop %v4723
    %v4725 = vsub.f32 1.0, %v4721
    %4727 = vrot.lane.b32.xlu0 %v4724, 64
    %v4728 = vpop.permute.xlu0 %4727
    %v4730 = vmul.f32 %v4725, %v4728
    %v4731 = vmul.f32 %v4721, %v4607
    %v4732 = vadd.f32 %v4730, %v4731
    %4734 = vrot.lane.b32.xlu0 %v4732, 64
    %v4735 = vpop.permute.xlu0 %4734
    %4737 = vst.msk [vmem:[#allocation2 + $0x2] sm:$0x1] %vm4489, %v4735
    %4738 = vst.msk [vmem:[#allocation2 + $0x5] sm:$0x1] %vm4491, %v4735
    %4739 = vst.msk [vmem:[#allocation2 + $0x9] sm:$0x2] %vm4493, %v4735
    %4740 = vst.msk [vmem:[#allocation2 + $0xc] sm:$0x2] %vm4495, %v4735
    %v4741 = vrot.slane %v4330, 1
    %v4742 = vrot.slane %v4332, 1
    %v4745 = vadd.f32 %v4245, %v4741
    %v4746 = vadd.f32 %v4247, %v4742
    %v4747 = vrot.slane %v4336, 1
    %v4748 = vrot.slane %v4338, 1
    %v4751 = vadd.f32 %v4251, %v4747
    %v4752 = vadd.f32 %v4253, %v4748
    %v4755 = vrot.slane %v4745, 3
    %v4756 = vrot.slane %v4746, 3
    %v4761 = vrot.slane %v4751, 2
    %v4762 = vrot.slane %v4752, 2
    %v4765 = vsel %vm4379, %v4755, %v4761
    %v4766 = vsel %vm4379, %v4756, %v4762
    %v4767 = vsel %vm2196, %v4735, 0
    %4769 = vmatprep.subr.mxu0 %v4341
    %4770 = vmatpush1.msra.mxu0 %v4340
    %4771 = vmatprep.subr.mxu0 %v4343
    %4772 = vmatpush1.msra.mxu0 %v4342
    %4773 = vmatprep.subr.mxu0 %v4345
    %4774 = vmatpush1.msra.mxu0 %v4344
    %4775 = vmatprep.subr.mxu0 %v4347
    %4776 = vmatpush1.msra.mxu0 %v4346
    %4777 = vmatprep.subr.mxu0 %v4349
    %4778 = vmatpush1.msra.mxu0 %v4348
    %4779 = vmatprep.subr.mxu0 %v4351
    %4780 = vmatpush1.msra.mxu0 %v4350
    %4781 = vmatprep.subr.mxu0 %v4353
    %4782 = vmatpush1.msra.mxu0 %v4352
    %4783 = vmatprep.subr.mxu0 %v4355
    %4784 = vmatpush1.msra.mxu0 %v4354
    %4785 = vmatprep.subr.mxu0 0.0
    %4786 = vmatpush1.msra.mxu0 0.0
    %4787 = vmatprep.subr.mxu0 0.0
    %4788 = vmatpush1.msra.mxu0 0.0
    %4789 = vmatprep.subr.mxu0 0.0
    %4790 = vmatpush1.msra.mxu0 0.0
    %4791 = vmatprep.subr.mxu0 0.0
    %4792 = vmatpush1.msra.mxu0 0.0
    %4793 = vmatprep.subr.mxu0 0.0
    %4794 = vmatpush1.msra.mxu0 0.0
    %4795 = vmatprep.subr.mxu0 0.0
    %4796 = vmatpush1.msra.mxu0 0.0
    %4797 = vmatprep.subr.mxu0 0.0
    %4798 = vmatpush1.msra.mxu0 0.0
    %4799 = vmatprep.subr.mxu0 0.0
    %4800 = vmatpush1.msra.mxu0 0.0
    %4801 = vmatprep.subr.mxu0 0.0
    %4802 = vmatpush1.msra.mxu0 0.0
    %4803 = vmatprep.subr.mxu0 0.0
    %4804 = vmatpush1.msra.mxu0 0.0
    %4805 = vmatprep.subr.mxu0 0.0
    %4806 = vmatpush1.msra.mxu0 0.0
    %4807 = vmatprep.subr.mxu0 0.0
    %4808 = vmatpush1.msra.mxu0 0.0
    %4809 = vmatprep.subr.mxu0 0.0
    %4810 = vmatpush1.msra.mxu0 0.0
    %4811 = vmatprep.subr.mxu0 0.0
    %4812 = vmatpush1.msra.mxu0 0.0
    %4813 = vmatprep.subr.mxu0 0.0
    %4814 = vmatpush1.msra.mxu0 0.0
    %4815 = vmatprep.subr.mxu0 0.0
    %4816 = vmatpush1.msra.mxu0 0.0
    %4817 = vmatprep.subr.mxu0 0.0
    %4818 = vmatpush1.msra.mxu0 0.0
    %4819 = vmatprep.subr.mxu0 0.0
    %4820 = vmatpush1.msra.mxu0 0.0
    %4821 = vmatprep.subr.mxu0 0.0
    %4822 = vmatpush1.msra.mxu0 0.0
    %4823 = vmatprep.subr.mxu0 0.0
    %4824 = vmatpush1.msra.mxu0 0.0
    %4825 = vmatprep.subr.mxu0 0.0
    %4826 = vmatpush1.msra.mxu0 0.0
    %4827 = vmatprep.subr.mxu0 0.0
    %4828 = vmatpush1.msra.mxu0 0.0
    %4829 = vmatprep.subr.mxu0 0.0
    %4830 = vmatpush1.msra.mxu0 0.0
    %4831 = vmatprep.subr.mxu0 0.0
    %4832 = vmatpush1.msra.mxu0 0.0
    %4833 = vmatprep.mubr.f32.mxu0 0.0
    %4834 = vmatmul.mubr.f32.gmra.mrb[0].mxu0 %v4767
    %v4835 = vpop.f32.mrb[0].mxu0
    %v4836 = vadd.f32 %v4386, %v4835
    %v4837 = vpop.f32.mrb[0].mxu0
    %v4838 = vadd.f32 %v4390, %v4837
    %4839 = vdwg.mxu0
    %v4840 = vadd.f32 %v4765, %v4836
    %v4841 = vxor.u32 %v4840, 2147483648
    %v4842 = vmul.f32 %v4841, 1.442695
    %v4843 = vpow.pop %v4842
    %v4844 = vadd.f32 %v4843, 1.0
    %v4845 = vrcp.pop %v4844
    %v4846 = vmul.f32 1.0, %v4845
    %v4847 = vmul.f32 %v4846, %v4838
    %v4848 = vadd.f32 %v4766, %v4847
    %v4849 = vtanh.pop %v4848
    %v4850 = vsub.f32 1.0, %v4846
    %4852 = vrot.lane.b32.xlu0 %v4849, 64
    %v4853 = vpop.permute.xlu0 %4852
    %v4855 = vmul.f32 %v4850, %v4853
    %v4856 = vmul.f32 %v4846, %v4732
    %v4857 = vadd.f32 %v4855, %v4856
    %4859 = vrot.lane.b32.xlu0 %v4857, 64
    %v4860 = vpop.permute.xlu0 %4859
    %4862 = vst.msk [vmem:[#allocation2 + $0x3] sm:$0x1] %vm4489, %v4860
    %4863 = vst.msk [vmem:[#allocation2 + $0x4] sm:$0x1] %vm4491, %v4860
    %4864 = vst.msk [vmem:[#allocation2 + $0xa] sm:$0x2] %vm4493, %v4860
    %4865 = vst.msk [vmem:[#allocation2 + $0xb] sm:$0x2] %vm4495, %v4860
    %v4868 = vrot.slane %v4363, 4
    %v4869 = vrot.slane %v4364, 4
    %v4872 = vrot.slane %v4371, 3
    %v4873 = vrot.slane %v4372, 3
    %v4876 = vsel %vm4379, %v4868, %v4872
    %v4877 = vsel %vm4379, %v4869, %v4873
    %v4878 = vsel %vm2196, %v4860, 0
    %4880 = vmatprep.subr.mxu0 %v4341
    %4881 = vmatpush1.msra.mxu0 %v4340
    %4882 = vmatprep.subr.mxu0 %v4343
    %4883 = vmatpush1.msra.mxu0 %v4342
    %4884 = vmatprep.subr.mxu0 %v4345
    %4885 = vmatpush1.msra.mxu0 %v4344
    %4886 = vmatprep.subr.mxu0 %v4347
    %4887 = vmatpush1.msra.mxu0 %v4346
    %4888 = vmatprep.subr.mxu0 %v4349
    %4889 = vmatpush1.msra.mxu0 %v4348
    %4890 = vmatprep.subr.mxu0 %v4351
    %4891 = vmatpush1.msra.mxu0 %v4350
    %4892 = vmatprep.subr.mxu0 %v4353
    %4893 = vmatpush1.msra.mxu0 %v4352
    %4894 = vmatprep.subr.mxu0 %v4355
    %4895 = vmatpush1.msra.mxu0 %v4354
    %4896 = vmatprep.subr.mxu0 0.0
    %4897 = vmatpush1.msra.mxu0 0.0
    %4898 = vmatprep.subr.mxu0 0.0
    %4899 = vmatpush1.msra.mxu0 0.0
    %4900 = vmatprep.subr.mxu0 0.0
    %4901 = vmatpush1.msra.mxu0 0.0
    %4902 = vmatprep.subr.mxu0 0.0
    %4903 = vmatpush1.msra.mxu0 0.0
    %4904 = vmatprep.subr.mxu0 0.0
    %4905 = vmatpush1.msra.mxu0 0.0
    %4906 = vmatprep.subr.mxu0 0.0
    %4907 = vmatpush1.msra.mxu0 0.0
    %4908 = vmatprep.subr.mxu0 0.0
    %4909 = vmatpush1.msra.mxu0 0.0
    %4910 = vmatprep.subr.mxu0 0.0
    %4911 = vmatpush1.msra.mxu0 0.0
    %4912 = vmatprep.subr.mxu0 0.0
    %4913 = vmatpush1.msra.mxu0 0.0
    %4914 = vmatprep.subr.mxu0 0.0
    %4915 = vmatpush1.msra.mxu0 0.0
    %4916 = vmatprep.subr.mxu0 0.0
    %4917 = vmatpush1.msra.mxu0 0.0
    %4918 = vmatprep.subr.mxu0 0.0
    %4919 = vmatpush1.msra.mxu0 0.0
    %4920 = vmatprep.subr.mxu0 0.0
    %4921 = vmatpush1.msra.mxu0 0.0
    %4922 = vmatprep.subr.mxu0 0.0
    %4923 = vmatpush1.msra.mxu0 0.0
    %4924 = vmatprep.subr.mxu0 0.0
    %4925 = vmatpush1.msra.mxu0 0.0
    %4926 = vmatprep.subr.mxu0 0.0
    %4927 = vmatpush1.msra.mxu0 0.0
    %4928 = vmatprep.subr.mxu0 0.0
    %4929 = vmatpush1.msra.mxu0 0.0
    %4930 = vmatprep.subr.mxu0 0.0
    %4931 = vmatpush1.msra.mxu0 0.0
    %4932 = vmatprep.subr.mxu0 0.0
    %4933 = vmatpush1.msra.mxu0 0.0
    %4934 = vmatprep.subr.mxu0 0.0
    %4935 = vmatpush1.msra.mxu0 0.0
    %4936 = vmatprep.subr.mxu0 0.0
    %4937 = vmatpush1.msra.mxu0 0.0
    %4938 = vmatprep.subr.mxu0 0.0
    %4939 = vmatpush1.msra.mxu0 0.0
    %4940 = vmatprep.subr.mxu0 0.0
    %4941 = vmatpush1.msra.mxu0 0.0
    %4942 = vmatprep.subr.mxu0 0.0
    %4943 = vmatpush1.msra.mxu0 0.0
    %4944 = vmatprep.mubr.f32.mxu0 0.0
    %4945 = vmatmul.mubr.f32.gmra.mrb[0].mxu0 %v4878
    %v4946 = vpop.f32.mrb[0].mxu0
    %v4947 = vadd.f32 %v4386, %v4946
    %v4948 = vpop.f32.mrb[0].mxu0
    %v4949 = vadd.f32 %v4390, %v4948
    %4950 = vdwg.mxu0
    %v4951 = vadd.f32 %v4876, %v4947
    %v4952 = vxor.u32 %v4951, 2147483648
    %v4953 = vmul.f32 %v4952, 1.442695
    %v4954 = vpow.pop %v4953
    %v4955 = vadd.f32 %v4954, 1.0
    %v4956 = vrcp.pop %v4955
    %v4957 = vmul.f32 1.0, %v4956
    %v4958 = vmul.f32 %v4957, %v4949
    %v4959 = vadd.f32 %v4877, %v4958
    %v4960 = vtanh.pop %v4959
    %v4961 = vsub.f32 1.0, %v4957
    %4963 = vrot.lane.b32.xlu0 %v4960, 64
    %v4964 = vpop.permute.xlu0 %4963
    %v4966 = vmul.f32 %v4961, %v4964
    %v4967 = vmul.f32 %v4957, %v4857
    %v4968 = vadd.f32 %v4966, %v4967
    %4970 = vrot.lane.b32.xlu0 %v4968, 64
    %v4971 = vpop.permute.xlu0 %4970
    %4973 = vst.msk [vmem:[#allocation2 + $0x4] sm:$0x1] %vm4489, %v4971
    %4974 = vst.msk [vmem:[#allocation2 + $0x3] sm:$0x1] %vm4491, %v4971
    %4975 = vst.msk [vmem:[#allocation2 + $0xb] sm:$0x2] %vm4493, %v4971
    %4976 = vst.msk [vmem:[#allocation2 + $0xa] sm:$0x2] %vm4495, %v4971
    %v4977 = vrot.slane %v4501, 5
    %v4978 = vrot.slane %v4502, 5
    %v4983 = vrot.slane %v4507, 4
    %v4984 = vrot.slane %v4508, 4
    %v4987 = vsel %vm4379, %v4977, %v4983
    %v4988 = vsel %vm4379, %v4978, %v4984
    %v4989 = vsel %vm2196, %v4971, 0
    %4991 = vmatprep.subr.mxu0 %v4341
    %4992 = vmatpush1.msra.mxu0 %v4340
    %4993 = vmatprep.subr.mxu0 %v4343
    %4994 = vmatpush1.msra.mxu0 %v4342
    %4995 = vmatprep.subr.mxu0 %v4345
    %4996 = vmatpush1.msra.mxu0 %v4344
    %4997 = vmatprep.subr.mxu0 %v4347
    %4998 = vmatpush1.msra.mxu0 %v4346
    %4999 = vmatprep.subr.mxu0 %v4349
    %5000 = vmatpush1.msra.mxu0 %v4348
    %5001 = vmatprep.subr.mxu0 %v4351
    %5002 = vmatpush1.msra.mxu0 %v4350
    %5003 = vmatprep.subr.mxu0 %v4353
    %5004 = vmatpush1.msra.mxu0 %v4352
    %5005 = vmatprep.subr.mxu0 %v4355
    %5006 = vmatpush1.msra.mxu0 %v4354
    %5007 = vmatprep.subr.mxu0 0.0
    %5008 = vmatpush1.msra.mxu0 0.0
    %5009 = vmatprep.subr.mxu0 0.0
    %5010 = vmatpush1.msra.mxu0 0.0
    %5011 = vmatprep.subr.mxu0 0.0
    %5012 = vmatpush1.msra.mxu0 0.0
    %5013 = vmatprep.subr.mxu0 0.0
    %5014 = vmatpush1.msra.mxu0 0.0
    %5015 = vmatprep.subr.mxu0 0.0
    %5016 = vmatpush1.msra.mxu0 0.0
    %5017 = vmatprep.subr.mxu0 0.0
    %5018 = vmatpush1.msra.mxu0 0.0
    %5019 = vmatprep.subr.mxu0 0.0
    %5020 = vmatpush1.msra.mxu0 0.0
    %5021 = vmatprep.subr.mxu0 0.0
    %5022 = vmatpush1.msra.mxu0 0.0
    %5023 = vmatprep.subr.mxu0 0.0
    %5024 = vmatpush1.msra.mxu0 0.0
    %5025 = vmatprep.subr.mxu0 0.0
    %5026 = vmatpush1.msra.mxu0 0.0
    %5027 = vmatprep.subr.mxu0 0.0
    %5028 = vmatpush1.msra.mxu0 0.0
    %5029 = vmatprep.subr.mxu0 0.0
    %5030 = vmatpush1.msra.mxu0 0.0
    %5031 = vmatprep.subr.mxu0 0.0
    %5032 = vmatpush1.msra.mxu0 0.0
    %5033 = vmatprep.subr.mxu0 0.0
    %5034 = vmatpush1.msra.mxu0 0.0
    %5035 = vmatprep.subr.mxu0 0.0
    %5036 = vmatpush1.msra.mxu0 0.0
    %5037 = vmatprep.subr.mxu0 0.0
    %5038 = vmatpush1.msra.mxu0 0.0
    %5039 = vmatprep.subr.mxu0 0.0
    %5040 = vmatpush1.msra.mxu0 0.0
    %5041 = vmatprep.subr.mxu0 0.0
    %5042 = vmatpush1.msra.mxu0 0.0
    %5043 = vmatprep.subr.mxu0 0.0
    %5044 = vmatpush1.msra.mxu0 0.0
    %5045 = vmatprep.subr.mxu0 0.0
    %5046 = vmatpush1.msra.mxu0 0.0
    %5047 = vmatprep.subr.mxu0 0.0
    %5048 = vmatpush1.msra.mxu0 0.0
    %5049 = vmatprep.subr.mxu0 0.0
    %5050 = vmatpush1.msra.mxu0 0.0
    %5051 = vmatprep.subr.mxu0 0.0
    %5052 = vmatpush1.msra.mxu0 0.0
    %5053 = vmatprep.subr.mxu0 0.0
    %5054 = vmatpush1.msra.mxu0 0.0
    %5055 = vmatprep.mubr.f32.mxu0 0.0
    %5056 = vmatmul.mubr.f32.gmra.mrb[0].mxu0 %v4989
    %v5057 = vpop.f32.mrb[0].mxu0
    %v5058 = vadd.f32 %v4386, %v5057
    %v5059 = vpop.f32.mrb[0].mxu0
    %v5060 = vadd.f32 %v4390, %v5059
    %5061 = vdwg.mxu0
    %v5062 = vadd.f32 %v4987, %v5058
    %v5063 = vxor.u32 %v5062, 2147483648
    %v5064 = vmul.f32 %v5063, 1.442695
    %v5065 = vpow.pop %v5064
    %v5066 = vadd.f32 %v5065, 1.0
    %v5067 = vrcp.pop %v5066
    %v5068 = vmul.f32 1.0, %v5067
    %v5069 = vmul.f32 %v5068, %v5060
    %v5070 = vadd.f32 %v4988, %v5069
    %v5071 = vtanh.pop %v5070
    %v5072 = vsub.f32 1.0, %v5068
    %5074 = vrot.lane.b32.xlu0 %v5071, 64
    %v5075 = vpop.permute.xlu0 %5074
    %v5077 = vmul.f32 %v5072, %v5075
    %v5078 = vmul.f32 %v5068, %v4968
    %v5079 = vadd.f32 %v5077, %v5078
    %5081 = vrot.lane.b32.xlu0 %v5079, 64
    %v5082 = vpop.permute.xlu0 %5081
    %5084 = vst.msk [vmem:[#allocation2 + $0x5] sm:$0x1] %vm4489, %v5082
    %5085 = vst.msk [vmem:[#allocation2 + $0x2] sm:$0x1] %vm4491, %v5082
    %5086 = vst.msk [vmem:[#allocation2 + $0xc] sm:$0x2] %vm4493, %v5082
    %5087 = vst.msk [vmem:[#allocation2 + $0x9] sm:$0x2] %vm4495, %v5082
    %v5088 = vrot.slane %v4620, 6
    %v5089 = vrot.slane %v4621, 6
    %v5092 = vrot.slane %v4626, 5
    %v5093 = vrot.slane %v4627, 5
    %v5096 = vsel %vm4379, %v5088, %v5092
    %v5097 = vsel %vm4379, %v5089, %v5093
    %v5098 = vsel %vm2196, %v5082, 0
    %5100 = vmatprep.subr.mxu0 %v4341
    %5101 = vmatpush1.msra.mxu0 %v4340
    %5102 = vmatprep.subr.mxu0 %v4343
    %5103 = vmatpush1.msra.mxu0 %v4342
    %5104 = vmatprep.subr.mxu0 %v4345
    %5105 = vmatpush1.msra.mxu0 %v4344
    %5106 = vmatprep.subr.mxu0 %v4347
    %5107 = vmatpush1.msra.mxu0 %v4346
    %5108 = vmatprep.subr.mxu0 %v4349
    %5109 = vmatpush1.msra.mxu0 %v4348
    %5110 = vmatprep.subr.mxu0 %v4351
    %5111 = vmatpush1.msra.mxu0 %v4350
    %5112 = vmatprep.subr.mxu0 %v4353
    %5113 = vmatpush1.msra.mxu0 %v4352
    %5114 = vmatprep.subr.mxu0 %v4355
    %5115 = vmatpush1.msra.mxu0 %v4354
    %5116 = vmatprep.subr.mxu0 0.0
    %5117 = vmatpush1.msra.mxu0 0.0
    %5118 = vmatprep.subr.mxu0 0.0
    %5119 = vmatpush1.msra.mxu0 0.0
    %5120 = vmatprep.subr.mxu0 0.0
    %5121 = vmatpush1.msra.mxu0 0.0
    %5122 = vmatprep.subr.mxu0 0.0
    %5123 = vmatpush1.msra.mxu0 0.0
    %5124 = vmatprep.subr.mxu0 0.0
    %5125 = vmatpush1.msra.mxu0 0.0
    %5126 = vmatprep.subr.mxu0 0.0
    %5127 = vmatpush1.msra.mxu0 0.0
    %5128 = vmatprep.subr.mxu0 0.0
    %5129 = vmatpush1.msra.mxu0 0.0
    %5130 = vmatprep.subr.mxu0 0.0
    %5131 = vmatpush1.msra.mxu0 0.0
    %5132 = vmatprep.subr.mxu0 0.0
    %5133 = vmatpush1.msra.mxu0 0.0
    %5134 = vmatprep.subr.mxu0 0.0
    %5135 = vmatpush1.msra.mxu0 0.0
    %5136 = vmatprep.subr.mxu0 0.0
    %5137 = vmatpush1.msra.mxu0 0.0
    %5138 = vmatprep.subr.mxu0 0.0
    %5139 = vmatpush1.msra.mxu0 0.0
    %5140 = vmatprep.subr.mxu0 0.0
    %5141 = vmatpush1.msra.mxu0 0.0
    %5142 = vmatprep.subr.mxu0 0.0
    %5143 = vmatpush1.msra.mxu0 0.0
    %5144 = vmatprep.subr.mxu0 0.0
    %5145 = vmatpush1.msra.mxu0 0.0
    %5146 = vmatprep.subr.mxu0 0.0
    %5147 = vmatpush1.msra.mxu0 0.0
    %5148 = vmatprep.subr.mxu0 0.0
    %5149 = vmatpush1.msra.mxu0 0.0
    %5150 = vmatprep.subr.mxu0 0.0
    %5151 = vmatpush1.msra.mxu0 0.0
    %5152 = vmatprep.subr.mxu0 0.0
    %5153 = vmatpush1.msra.mxu0 0.0
    %5154 = vmatprep.subr.mxu0 0.0
    %5155 = vmatpush1.msra.mxu0 0.0
    %5156 = vmatprep.subr.mxu0 0.0
    %5157 = vmatpush1.msra.mxu0 0.0
    %5158 = vmatprep.subr.mxu0 0.0
    %5159 = vmatpush1.msra.mxu0 0.0
    %5160 = vmatprep.subr.mxu0 0.0
    %5161 = vmatpush1.msra.mxu0 0.0
    %5162 = vmatprep.subr.mxu0 0.0
    %5163 = vmatpush1.msra.mxu0 0.0
    %5164 = vmatprep.mubr.f32.mxu0 0.0
    %5165 = vmatmul.mubr.f32.gmra.mrb[0].mxu0 %v5098
    %v5166 = vpop.f32.mrb[0].mxu0
    %v5167 = vadd.f32 %v4386, %v5166
    %v5168 = vpop.f32.mrb[0].mxu0
    %v5169 = vadd.f32 %v4390, %v5168
    %5170 = vdwg.mxu0
    %v5171 = vadd.f32 %v5096, %v5167
    %v5172 = vxor.u32 %v5171, 2147483648
    %v5173 = vmul.f32 %v5172, 1.442695
    %v5174 = vpow.pop %v5173
    %v5175 = vadd.f32 %v5174, 1.0
    %v5176 = vrcp.pop %v5175
    %v5177 = vmul.f32 1.0, %v5176
    %v5178 = vmul.f32 %v5177, %v5169
    %v5179 = vadd.f32 %v5097, %v5178
    %v5180 = vtanh.pop %v5179
    %v5181 = vsub.f32 1.0, %v5177
    %5183 = vrot.lane.b32.xlu0 %v5180, 64
    %v5184 = vpop.permute.xlu0 %5183
    %v5186 = vmul.f32 %v5181, %v5184
    %v5187 = vmul.f32 %v5177, %v5079
    %v5188 = vadd.f32 %v5186, %v5187
    %5190 = vrot.lane.b32.xlu0 %v5188, 64
    %v5191 = vpop.permute.xlu0 %5190
    %5193 = vst.msk [vmem:[#allocation2 + $0x6] sm:$0x1] %vm4489, %v5191
    %5194 = vst.msk [vmem:[#allocation2 + $0x1] sm:$0x1] %vm4491, %v5191
    %5195 = vst.msk [vmem:[#allocation2 + $0xd] sm:$0x2] %vm4493, %v5191
    %5196 = vst.msk [vmem:[#allocation2 + $0x8] sm:$0x2] %vm4495, %v5191
    %v5197 = vrot.slane %v4745, 7
    %v5198 = vrot.slane %v4746, 7
    %v5201 = vrot.slane %v4751, 6
    %v5202 = vrot.slane %v4752, 6
    %v5205 = vsel %vm4379, %v5197, %v5201
    %v5206 = vsel %vm4379, %v5198, %v5202
    %v5207 = vsel %vm2196, %v5191, 0
    %5209 = vmatprep.subr.mxu0 %v4341
    %5210 = vmatpush1.msra.mxu0 %v4340
    %5211 = vmatprep.subr.mxu0 %v4343
    %5212 = vmatpush1.msra.mxu0 %v4342
    %5213 = vmatprep.subr.mxu0 %v4345
    %5214 = vmatpush1.msra.mxu0 %v4344
    %5215 = vmatprep.subr.mxu0 %v4347
    %5216 = vmatpush1.msra.mxu0 %v4346
    %5217 = vmatprep.subr.mxu0 %v4349
    %5218 = vmatpush1.msra.mxu0 %v4348
    %5219 = vmatprep.subr.mxu0 %v4351
    %5220 = vmatpush1.msra.mxu0 %v4350
    %5221 = vmatprep.subr.mxu0 %v4353
    %5222 = vmatpush1.msra.mxu0 %v4352
    %5223 = vmatprep.subr.mxu0 %v4355
    %5224 = vmatpush1.msra.mxu0 %v4354
    %5225 = vmatprep.subr.mxu0 0.0
    %5226 = vmatpush1.msra.mxu0 0.0
    %5227 = vmatprep.subr.mxu0 0.0
    %5228 = vmatpush1.msra.mxu0 0.0
    %5229 = vmatprep.subr.mxu0 0.0
    %5230 = vmatpush1.msra.mxu0 0.0
    %5231 = vmatprep.subr.mxu0 0.0
    %5232 = vmatpush1.msra.mxu0 0.0
    %5233 = vmatprep.subr.mxu0 0.0
    %5234 = vmatpush1.msra.mxu0 0.0
    %5235 = vmatprep.subr.mxu0 0.0
    %5236 = vmatpush1.msra.mxu0 0.0
    %5237 = vmatprep.subr.mxu0 0.0
    %5238 = vmatpush1.msra.mxu0 0.0
    %5239 = vmatprep.subr.mxu0 0.0
    %5240 = vmatpush1.msra.mxu0 0.0
    %5241 = vmatprep.subr.mxu0 0.0
    %5242 = vmatpush1.msra.mxu0 0.0
    %5243 = vmatprep.subr.mxu0 0.0
    %5244 = vmatpush1.msra.mxu0 0.0
    %5245 = vmatprep.subr.mxu0 0.0
    %5246 = vmatpush1.msra.mxu0 0.0
    %5247 = vmatprep.subr.mxu0 0.0
    %5248 = vmatpush1.msra.mxu0 0.0
    %5249 = vmatprep.subr.mxu0 0.0
    %5250 = vmatpush1.msra.mxu0 0.0
    %5251 = vmatprep.subr.mxu0 0.0
    %5252 = vmatpush1.msra.mxu0 0.0
    %5253 = vmatprep.subr.mxu0 0.0
    %5254 = vmatpush1.msra.mxu0 0.0
    %5255 = vmatprep.subr.mxu0 0.0
    %5256 = vmatpush1.msra.mxu0 0.0
    %5257 = vmatprep.subr.mxu0 0.0
    %5258 = vmatpush1.msra.mxu0 0.0
    %5259 = vmatprep.subr.mxu0 0.0
    %5260 = vmatpush1.msra.mxu0 0.0
    %5261 = vmatprep.subr.mxu0 0.0
    %5262 = vmatpush1.msra.mxu0 0.0
    %5263 = vmatprep.subr.mxu0 0.0
    %5264 = vmatpush1.msra.mxu0 0.0
    %5265 = vmatprep.subr.mxu0 0.0
    %5266 = vmatpush1.msra.mxu0 0.0
    %5267 = vmatprep.subr.mxu0 0.0
    %5268 = vmatpush1.msra.mxu0 0.0
    %5269 = vmatprep.subr.mxu0 0.0
    %5270 = vmatpush1.msra.mxu0 0.0
    %5271 = vmatprep.subr.mxu0 0.0
    %5272 = vmatpush1.msra.mxu0 0.0
    %5273 = vmatprep.mubr.f32.mxu0 0.0
    %5274 = vmatmul.mubr.f32.gmra.mrb[0].mxu0 %v5207
    %v5275 = vpop.f32.mrb[0].mxu0
    %v5276 = vadd.f32 %v4386, %v5275
    %v5277 = vpop.f32.mrb[0].mxu0
    %v5278 = vadd.f32 %v4390, %v5277
    %5279 = vdwg.mxu0
    %v5280 = vadd.f32 %v5205, %v5276
    %v5281 = vxor.u32 %v5280, 2147483648
    %v5282 = vmul.f32 %v5281, 1.442695
    %v5283 = vpow.pop %v5282
    %v5284 = vadd.f32 %v5283, 1.0
    %v5285 = vrcp.pop %v5284
    %v5286 = vmul.f32 1.0, %v5285
    %v5287 = vmul.f32 %v5286, %v5278
    %v5288 = vadd.f32 %v5206, %v5287
    %v5289 = vtanh.pop %v5288
    %v5290 = vsub.f32 1.0, %v5286
    %5292 = vrot.lane.b32.xlu0 %v5289, 64
    %v5293 = vpop.permute.xlu0 %5292
    %v5295 = vmul.f32 %v5290, %v5293
    %v5296 = vmul.f32 %v5286, %v5188
    %v5297 = vadd.f32 %v5295, %v5296
    %5299 = vrot.lane.b32.xlu0 %v5297, 64
    %v5300 = vpop.permute.xlu0 %5299
    %5302 = vst.msk [vmem:[#allocation2 + $0x7] sm:$0x1] %vm4489, %v5300
    %5303 = vst.msk [vmem:[#allocation2] sm:$0x1] %vm4491, %v5300
    %5304 = vst.msk [vmem:[#allocation2 + $0xe] sm:$0x2] %vm4493, %v5300
    %5305 = vst.msk [vmem:[#allocation2 + $0x7] sm:$0x2] %vm4495, %v5300
    %v5306 = vld [vmem:[#allocation2] sm:$0xff]
    %v5307 = vld [vmem:[#allocation2 + $0x8] sm:$0xff]
    %v5308 = vld [vmem:[#allocation27] sm:$0x1]
    %v5310 = vlaneseq
    %v5311 = vshrl.u32 %v5310, 7
    %v5312 = vsub.s32 0, %v5311
    %v5313 = vrot.slane %v5308, %v5312
    %v5315 = vmul.f32 %v5306, %v5313
    %v5316 = vmul.f32 %v5307, %v5313
    %v5317 = vsel %vm2196, %v5315, 0.0
    %5318 = vadd.xlane.f32.xlu0 %v5317
    %v5319 = vpop.xlane.xlu0 %5318
    %v5320 = vsel %vm2196, %v5316, 0.0
    %5321 = vadd.xlane.f32.xlu0 %v5320
    %v5322 = vpop.xlane.xlu0 %5321
    %v5323 = vld [vmem:[#allocation3] sm:$0x1]
    %v5325 = vlaneseq
    %v5326 = vshrl.u32 %v5325, 7
    %v5327 = vsub.s32 0, %v5326
    %v5328 = vrot.slane %v5323, %v5327
    %5329 = vset.pattern.permute.xlu0 0
    %5330 = vperm.xlu0 %5329, %v5328
    %v5331 = vpop.permute.xlu0 %5330
    %v5333 = vadd.f32 %v5319, %v5331
    %v5334 = vadd.f32 %v5322, %v5331
    %v5337 = vlaneseq
    %v5338 = vshrl.u32 %v5337, 7
    %v5339 = vsub.s32 %v303, %v5338
    %v5340 = vrot.slane %v5333, %v5339
    %v5341 = vlaneseq
    %v5342 = vshrl.u32 %v5341, 7
    %v5343 = vsub.s32 %v303, %v5342
    %v5344 = vrot.slane %v5334, %v5343
    %vm5345 = vcmask 1041409
    %v5346 = vsel %vm5345, %v5344, %v5340
    %v5348 = vsel %vm298, %v5346, -1e+09
    %vm5349 = vcmask 58368
    %v5350 = vsel %vm5349, %v5348, -inf
    %5351 = vmax.xlane.f32.xlu0 %v5350
    %v5352 = vpop.xlane.xlu0 %5351
    %v5353 = vsub.f32 %v5348, %v5352
    %v5354 = vmul.f32 %v5353, 1.442695
    %v5355 = vpow.pop %v5354
    %v5356 = vsel %vm5349, %v5355, 0.0
    %5357 = vadd.xlane.f32.xlu0 %v5356
    %v5358 = vpop.xlane.xlu0 %5357
    %v5359 = vrcp.pop %v5358
    %v5360 = vmul.f32 %v5355, %v5359
    %5361 = vst.msk [vmem:[#allocation31] sm:$0x3] %vm5349, %v5360
    %v5363 = vsel %vm659, %v5360, 0
    %5365 = vmatprep.subr.mxu0 0.0
    %5366 = vmatpush1.msra.mxu0 %v5306
    %5367 = vmatprep.subr.mxu0 0.0
    %5368 = vmatpush1.msra.mxu0 0.0
    %5369 = vmatprep.subr.mxu0 0.0
    %5370 = vmatpush1.msra.mxu0 0.0
    %5371 = vmatprep.subr.mxu0 0.0
    %5372 = vmatpush1.msra.mxu0 0.0
    %5373 = vmatprep.subr.mxu0 0.0
    %5374 = vmatpush1.msra.mxu0 0.0
    %5375 = vmatprep.subr.mxu0 0.0
    %5376 = vmatpush1.msra.mxu0 0.0
    %5377 = vmatprep.subr.mxu0 0.0
    %5378 = vmatpush1.msra.mxu0 0.0
    %5379 = vmatprep.subr.mxu0 0.0
    %5380 = vmatpush1.msra.mxu0 0.0
    %5381 = vmatprep.subr.mxu0 0.0
    %5382 = vmatpush1.msra.mxu0 0.0
    %5383 = vmatprep.subr.mxu0 0.0
    %5384 = vmatpush1.msra.mxu0 0.0
    %5385 = vmatprep.subr.mxu0 0.0
    %5386 = vmatpush1.msra.mxu0 0.0
    %5387 = vmatprep.subr.mxu0 0.0
    %5388 = vmatpush1.msra.mxu0 0.0
    %5389 = vmatprep.subr.mxu0 0.0
    %5390 = vmatpush1.msra.mxu0 0.0
    %5391 = vmatprep.subr.mxu0 0.0
    %5392 = vmatpush1.msra.mxu0 0.0
    %5393 = vmatprep.subr.mxu0 0.0
    %5394 = vmatpush1.msra.mxu0 0.0
    %5395 = vmatprep.subr.mxu0 0.0
    %5396 = vmatpush1.msra.mxu0 0.0
    %5397 = vmatprep.subr.mxu0 0.0
    %5398 = vmatpush1.msra.mxu0 0.0
    %5399 = vmatprep.subr.mxu0 0.0
    %5400 = vmatpush1.msra.mxu0 0.0
    %5401 = vmatprep.subr.mxu0 0.0
    %5402 = vmatpush1.msra.mxu0 0.0
    %5403 = vmatprep.subr.mxu0 0.0
    %5404 = vmatpush1.msra.mxu0 0.0
    %5405 = vmatprep.subr.mxu0 0.0
    %5406 = vmatpush1.msra.mxu0 0.0
    %5407 = vmatprep.subr.mxu0 0.0
    %5408 = vmatpush1.msra.mxu0 0.0
    %5409 = vmatprep.subr.mxu0 0.0
    %5410 = vmatpush1.msra.mxu0 0.0
    %5411 = vmatprep.subr.mxu0 0.0
    %5412 = vmatpush1.msra.mxu0 0.0
    %5413 = vmatprep.subr.mxu0 0.0
    %5414 = vmatpush1.msra.mxu0 0.0
    %5415 = vmatprep.subr.mxu0 0.0
    %5416 = vmatpush1.msra.mxu0 0.0
    %5417 = vmatprep.subr.mxu0 0.0
    %5418 = vmatpush1.msra.mxu0 0.0
    %5419 = vmatprep.subr.mxu0 0.0
    %5420 = vmatpush1.msra.mxu0 0.0
    %5421 = vmatprep.subr.mxu0 0.0
    %5422 = vmatpush1.msra.mxu0 0.0
    %5423 = vmatprep.subr.mxu0 0.0
    %5424 = vmatpush1.msra.mxu0 0.0
    %5425 = vmatprep.subr.mxu0 0.0
    %5426 = vmatpush1.msra.mxu0 0.0
    %5427 = vmatprep.subr.mxu0 0.0
    %5428 = vmatpush1.msra.mxu0 0.0
    %5429 = vmatprep.mubr.f32.mxu0 0.0
    %5430 = vmatmul.mubr.f32.gmra.mrb[0].mxu0 %v5363
    %v5431 = vpop.f32.mrb[0].mxu0
    %v5432 = vadd.f32 0.0, %v5431
    %v5433 = vpop.f32.mrb[0].mxu0
    %5434 = vdwg.mxu0
    %v5435 = vrot.slane %v5360, 1
    %v5436 = vsel %vm659, %v5435, 0
    %5438 = vmatprep.subr.mxu0 0.0
    %5439 = vmatpush1.msra.mxu0 %v5307
    %5440 = vmatprep.subr.mxu0 0.0
    %5441 = vmatpush1.msra.mxu0 0.0
    %5442 = vmatprep.subr.mxu0 0.0
    %5443 = vmatpush1.msra.mxu0 0.0
    %5444 = vmatprep.subr.mxu0 0.0
    %5445 = vmatpush1.msra.mxu0 0.0
    %5446 = vmatprep.subr.mxu0 0.0
    %5447 = vmatpush1.msra.mxu0 0.0
    %5448 = vmatprep.subr.mxu0 0.0
    %5449 = vmatpush1.msra.mxu0 0.0
    %5450 = vmatprep.subr.mxu0 0.0
    %5451 = vmatpush1.msra.mxu0 0.0
    %5452 = vmatprep.subr.mxu0 0.0
    %5453 = vmatpush1.msra.mxu0 0.0
    %5454 = vmatprep.subr.mxu0 0.0
    %5455 = vmatpush1.msra.mxu0 0.0
    %5456 = vmatprep.subr.mxu0 0.0
    %5457 = vmatpush1.msra.mxu0 0.0
    %5458 = vmatprep.subr.mxu0 0.0
    %5459 = vmatpush1.msra.mxu0 0.0
    %5460 = vmatprep.subr.mxu0 0.0
    %5461 = vmatpush1.msra.mxu0 0.0
    %5462 = vmatprep.subr.mxu0 0.0
    %5463 = vmatpush1.msra.mxu0 0.0
    %5464 = vmatprep.subr.mxu0 0.0
    %5465 = vmatpush1.msra.mxu0 0.0
    %5466 = vmatprep.subr.mxu0 0.0
    %5467 = vmatpush1.msra.mxu0 0.0
    %5468 = vmatprep.subr.mxu0 0.0
    %5469 = vmatpush1.msra.mxu0 0.0
    %5470 = vmatprep.subr.mxu0 0.0
    %5471 = vmatpush1.msra.mxu0 0.0
    %5472 = vmatprep.subr.mxu0 0.0
    %5473 = vmatpush1.msra.mxu0 0.0
    %5474 = vmatprep.subr.mxu0 0.0
    %5475 = vmatpush1.msra.mxu0 0.0
    %5476 = vmatprep.subr.mxu0 0.0
    %5477 = vmatpush1.msra.mxu0 0.0
    %5478 = vmatprep.subr.mxu0 0.0
    %5479 = vmatpush1.msra.mxu0 0.0
    %5480 = vmatprep.subr.mxu0 0.0
    %5481 = vmatpush1.msra.mxu0 0.0
    %5482 = vmatprep.subr.mxu0 0.0
    %5483 = vmatpush1.msra.mxu0 0.0
    %5484 = vmatprep.subr.mxu0 0.0
    %5485 = vmatpush1.msra.mxu0 0.0
    %5486 = vmatprep.subr.mxu0 0.0
    %5487 = vmatpush1.msra.mxu0 0.0
    %5488 = vmatprep.subr.mxu0 0.0
    %5489 = vmatpush1.msra.mxu0 0.0
    %5490 = vmatprep.subr.mxu0 0.0
    %5491 = vmatpush1.msra.mxu0 0.0
    %5492 = vmatprep.subr.mxu0 0.0
    %5493 = vmatpush1.msra.mxu0 0.0
    %5494 = vmatprep.subr.mxu0 0.0
    %5495 = vmatpush1.msra.mxu0 0.0
    %5496 = vmatprep.subr.mxu0 0.0
    %5497 = vmatpush1.msra.mxu0 0.0
    %5498 = vmatprep.subr.mxu0 0.0
    %5499 = vmatpush1.msra.mxu0 0.0
    %5500 = vmatprep.subr.mxu0 0.0
    %5501 = vmatpush1.msra.mxu0 0.0
    %5502 = vmatprep.mubr.f32.mxu0 0.0
    %5503 = vmatmul.mubr.f32.gmra.mrb[0].mxu0 %v5436
    %v5504 = vpop.f32.mrb[0].mxu0
    %v5505 = vadd.f32 0.0, %v5504
    %v5506 = vpop.f32.mrb[0].mxu0
    %5507 = vdwg.mxu0
    %v5509 = vrot.slane %v5505, 7
    %v5511 = vsel %vm4379, %v5432, %v5509
    %v5512 = vld [vmem:[%s25] sm:$0xff]
    %v5513 = vld [vmem:[%s25 + $0x8] sm:$0xff]
    %v5514 = vld [vmem:[%s25 + $0x10] sm:$0xff]
    %v5515 = vld [vmem:[%s25 + $0x18] sm:$0xff]
    %v5516 = vld [vmem:[%s25 + $0x20] sm:$0xff]
    %v5517 = vld [vmem:[%s25 + $0x28] sm:$0xff]
    %v5518 = vld [vmem:[%s25 + $0x30] sm:$0xff]
    %v5519 = vld [vmem:[%s25 + $0x38] sm:$0xff]
    %v5520 = vld [vmem:[#allocation28] sm:$0x1]
    %v5522 = vlaneseq
    %v5523 = vshrl.u32 %v5522, 7
    %v5524 = vsub.s32 0, %v5523
    %v5525 = vrot.slane %v5520, %v5524
    %v5528 = vsel %vm2196, %v5511, 0
    %5530 = vmatprep.subr.mxu0 0.0
    %5531 = vmatpush1.msra.mxu0 %v5512
    %5532 = vmatprep.subr.mxu0 0.0
    %5533 = vmatpush1.msra.mxu0 %v5513
    %5534 = vmatprep.subr.mxu0 0.0
    %5535 = vmatpush1.msra.mxu0 %v5514
    %5536 = vmatprep.subr.mxu0 0.0
    %5537 = vmatpush1.msra.mxu0 %v5515
    %5538 = vmatprep.subr.mxu0 0.0
    %5539 = vmatpush1.msra.mxu0 %v5516
    %5540 = vmatprep.subr.mxu0 0.0
    %5541 = vmatpush1.msra.mxu0 %v5517
    %5542 = vmatprep.subr.mxu0 0.0
    %5543 = vmatpush1.msra.mxu0 %v5518
    %5544 = vmatprep.subr.mxu0 0.0
    %5545 = vmatpush1.msra.mxu0 %v5519
    %5546 = vmatprep.subr.mxu0 0.0
    %5547 = vmatpush1.msra.mxu0 0.0
    %5548 = vmatprep.subr.mxu0 0.0
    %5549 = vmatpush1.msra.mxu0 0.0
    %5550 = vmatprep.subr.mxu0 0.0
    %5551 = vmatpush1.msra.mxu0 0.0
    %5552 = vmatprep.subr.mxu0 0.0
    %5553 = vmatpush1.msra.mxu0 0.0
    %5554 = vmatprep.subr.mxu0 0.0
    %5555 = vmatpush1.msra.mxu0 0.0
    %5556 = vmatprep.subr.mxu0 0.0
    %5557 = vmatpush1.msra.mxu0 0.0
    %5558 = vmatprep.subr.mxu0 0.0
    %5559 = vmatpush1.msra.mxu0 0.0
    %5560 = vmatprep.subr.mxu0 0.0
    %5561 = vmatpush1.msra.mxu0 0.0
    %5562 = vmatprep.subr.mxu0 0.0
    %5563 = vmatpush1.msra.mxu0 0.0
    %5564 = vmatprep.subr.mxu0 0.0
    %5565 = vmatpush1.msra.mxu0 0.0
    %5566 = vmatprep.subr.mxu0 0.0
    %5567 = vmatpush1.msra.mxu0 0.0
    %5568 = vmatprep.subr.mxu0 0.0
    %5569 = vmatpush1.msra.mxu0 0.0
    %5570 = vmatprep.subr.mxu0 0.0
    %5571 = vmatpush1.msra.mxu0 0.0
    %5572 = vmatprep.subr.mxu0 0.0
    %5573 = vmatpush1.msra.mxu0 0.0
    %5574 = vmatprep.subr.mxu0 0.0
    %5575 = vmatpush1.msra.mxu0 0.0
    %5576 = vmatprep.subr.mxu0 0.0
    %5577 = vmatpush1.msra.mxu0 0.0
    %5578 = vmatprep.subr.mxu0 0.0
    %5579 = vmatpush1.msra.mxu0 0.0
    %5580 = vmatprep.subr.mxu0 0.0
    %5581 = vmatpush1.msra.mxu0 0.0
    %5582 = vmatprep.subr.mxu0 0.0
    %5583 = vmatpush1.msra.mxu0 0.0
    %5584 = vmatprep.subr.mxu0 0.0
    %5585 = vmatpush1.msra.mxu0 0.0
    %5586 = vmatprep.subr.mxu0 0.0
    %5587 = vmatpush1.msra.mxu0 0.0
    %5588 = vmatprep.subr.mxu0 0.0
    %5589 = vmatpush1.msra.mxu0 0.0
    %5590 = vmatprep.subr.mxu0 0.0
    %5591 = vmatpush1.msra.mxu0 0.0
    %5592 = vmatprep.subr.mxu0 0.0
    %5593 = vmatpush1.msra.mxu0 0.0
    %5594 = vmatprep.mubr.f32.mxu0 0.0
    %5595 = vmatmul.mubr.f32.gmra.mrb[0].mxu0 %v5528
    %v5596 = vpop.f32.mrb[0].mxu0
    %v5597 = vadd.f32 %v5525, %v5596
    %v5598 = vpop.f32.mrb[0].mxu0
    %5599 = vdwg.mxu0
    %vm5600 = vcmask 9216
    %5601 = vst.msk [vmem:[#allocation30] sm:$0x3] %vm5600, %v5597
    // Predicated region
    $region174: #{forward.1} parent=1 // pred_check
      _
    $region175: #{forward.1} parent=1 // pred_check_branch
      %5603 = sbr.rel (0) target = $region177
    $region176: #{forward.1} parent=1 // pred_region
      %s5605 = ssub.s32 32, 32
      %5606 = vsyncadd [#allocation6], %s5605
      %s5608 = sshll.u32 [#allocation30], 4
      %s5609 = int_to_ptr.vmem [resolvable:$true] %s5608
      %5611 = dma.vmem_to_hbm [thread:$0]  %s5609, 32, %s27, [#allocation6]
    $region177: #{forward.1} parent=1 // pred_fallthru
      _
    // Predicated region
    $region178: #{forward.1} parent=1 // pred_check
      _
    $region179: #{forward.1} parent=1 // pred_check_branch
      %5613 = sbr.rel (0) target = $region181
    $region180: #{forward.1} parent=1 // pred_region
      %s5615 = ssub.s32 32, 32
      %5616 = vsyncadd [#allocation32], %s5615
      %s5618 = sshll.u32 [#allocation31], 4
      %s5619 = int_to_ptr.vmem [resolvable:$true] %s5618
      %5621 = dma.vmem_to_hbm [thread:$0]  %s5619, 32, %s28, [#allocation32]
    $region181: #{forward.1} parent=1 // pred_fallthru
      _
    // Predicated region
    $region182: #{forward.1} parent=1 // pred_check
      _
    $region183: #{forward.1} parent=1 // pred_check_branch
      %5623 = sbr.rel (0) target = $region185
    $region184: #{forward.1} parent=1 // pred_region
      %5624 = dma.done [#allocation6], 32
    $region185: #{forward.1} parent=1 // pred_fallthru
      _
    // Predicated region
    $region186: #{forward.1} parent=1 // pred_check
      _
    $region187: #{forward.1} parent=1 // pred_check_branch
      %5626 = sbr.rel (0) target = $region189
    $region188: #{forward.1} parent=1 // pred_region
      %5627 = dma.done [#allocation32], 32
    $region189: #{forward.1} parent=1 // pred_fallthru
      _
    %5628 = vsyncpa [#allocation5], 1
    %5629 = vsyncpa [#allocation8], 1
    %5630 = vsyncpa [#allocation11], 1
    %5631 = vsyncpa [#allocation14], 1
    %5632 = vsyncpa [#allocation17], 1
    %5633 = vsyncpa [#allocation20], 1
    %5634 = vsyncpa [#allocation23], 1
    %5635 = vsyncpa [#allocation26], 1
    %5636 = vsyncpa [#allocation29], 1
    %5637 = vsyncpa [#allocation6], 1
    %5638 = vsyncpa [#allocation32], 1

</llo_original>
